<compile_context>
chip_gen: v6e
topology: v6e:2x2x1
jax: 0.10.0
libtpu: 0.0.40
codegen_flags: <defaults>
</compile_context>

<pallas_src>
import functools

import jax
import jax.numpy as jnp
from jax.experimental import pallas as pl
from jax.experimental.pallas import tpu as pltpu

EPS = 1e-5                      # PyTorch BatchNorm2d default eps
LANE = 128                      # channel padding target (TPU lane width)
VMEM_LIMIT = 32 * 1024 * 1024   # > v5e 16 MiB scoped default, <= v7x physical


def _round_up(x, m):
    return ((x + m - 1) // m) * m


# --------------------------------------------------------------------------
# In-kernel helpers
# --------------------------------------------------------------------------
def _conv3x3_acc(x_ref, w_ref, ho, wo, stride):
    """3x3 'SAME' conv over a spatially pre-padded block: 9 accumulating dots.

    x_ref: (Hp, Wp, Cin) ref, zero-padded by 1 pixel on each spatial side.
    w_ref: (9, Cin, Cout) bf16 ref, BN scale folded into output columns.
    Returns f32 (ho*wo, Cout).
    """
    cin = x_ref.shape[-1]
    acc = None
    for kh in range(3):
        for kw in range(3):
            if stride == 1:
                tap = x_ref[kh:kh + ho, kw:kw + wo, :]
            else:
                # TODO(synk): strided tap path implemented but not exercised
                # by the demo below (both demo cases use stride=1).
                tap = x_ref[pl.ds(kh, ho, stride=stride),
                            pl.ds(kw, wo, stride=stride), :]
            lhs = tap.reshape(ho * wo, cin).astype(w_ref.dtype)
            d = jnp.dot(lhs, w_ref[kh * 3 + kw],
                        preferred_element_type=jnp.float32)
            acc = d if acc is None else acc + d
    return acc


# --------------------------------------------------------------------------
# Fused BasicBlock kernels (one image per grid step)
# --------------------------------------------------------------------------
def fused_identity_kernel(xp_ref, xres_ref, w1_ref, b1_ref, w2_ref, b2_ref,
                          out_ref, y1p_ref, *, ho, wo, stride):
    cp = out_ref.shape[-1]
    # y1 = relu(conv1(x) * bn1_scale + bn1_bias)   (scale folded into w1)
    acc1 = _conv3x3_acc(xp_ref, w1_ref, ho, wo, stride)
    y1 = jnp.maximum(acc1 + b1_ref[...], 0.0)
    # 1-pixel zero halo for conv2, kept entirely in VMEM (no HBM round trip)
    y1p_ref[...] = jnp.zeros_like(y1p_ref)
    y1p_ref[1:ho + 1, 1:wo + 1, :] = y1.reshape(ho, wo, cp)
    # out = relu(conv2(y1) + bn2_bias + x)   -- identity shortcut: plain add
    acc2 = _conv3x3_acc(y1p_ref, w2_ref, ho, wo, 1) + b2_ref[...]
    acc2 = acc2 + xres_ref[...].astype(jnp.float32)
    out_ref[...] = jnp.maximum(acc2, 0.0).astype(out_ref.dtype)


def fused_proj_kernel(xp_ref, xsc_ref, w1_ref, b1_ref, w2_ref, b2_ref,
                      wsc_ref, bsc_ref, out_ref, y1p_ref, *, ho, wo, stride):
    cp = out_ref.shape[-1]
    acc1 = _conv3x3_acc(xp_ref, w1_ref, ho, wo, stride)
    y1 = jnp.maximum(acc1 + b1_ref[...], 0.0)
    y1p_ref[...] = jnp.zeros_like(y1p_ref)
    y1p_ref[1:ho + 1, 1:wo + 1, :] = y1.reshape(ho, wo, cp)
    # out = relu(conv2(y1) + bn2_bias + (x_dec @ wsc + bnsc_bias))
    acc2 = _conv3x3_acc(y1p_ref, w2_ref, ho, wo, 1) + b2_ref[...]
    sc = jnp.dot(xsc_ref[...], wsc_ref[...],
                 preferred_element_type=jnp.float32) + bsc_ref[...]
    out_ref[...] = jnp.maximum(acc2 + sc, 0.0).astype(out_ref.dtype)


# --------------------------------------------------------------------------
# pallas_call wrappers (grid over batch, whole image per step)
# --------------------------------------------------------------------------
def _compiler_params():
    return pltpu.CompilerParams(dimension_semantics=("parallel",),
                                vmem_limit_bytes=VMEM_LIMIT)


def _fused_identity_call(xp, xres, w1, b1, w2, b2, ho, wo, stride):
    n, hp, wp, cin_p = xp.shape
    cp = w1.shape[-1]
    flops = 2 * n * ho * wo * 9 * (cin_p + cp) * cp
    byts = (xp.size * 2 + xres.size * 2 + (w1.size + w2.size) * 2
            + (b1.size + b2.size) * 4 + n * ho * wo * cp * 4)
    return pl.pallas_call(
        functools.partial(fused_identity_kernel, ho=ho, wo=wo, stride=stride),
        out_shape=jax.ShapeDtypeStruct((n, ho * wo, cp), jnp.float32),
        grid=(n,),
        in_specs=[
            pl.BlockSpec((None, hp, wp, cin_p), lambda i: (i, 0, 0, 0)),
            pl.BlockSpec((None, ho * wo, cin_p), lambda i: (i, 0, 0)),
            pl.BlockSpec((9, cin_p, cp), lambda i: (0, 0, 0)),
            pl.BlockSpec((1, cp), lambda i: (0, 0)),
            pl.BlockSpec((9, cp, cp), lambda i: (0, 0, 0)),
            pl.BlockSpec((1, cp), lambda i: (0, 0)),
        ],
        out_specs=pl.BlockSpec((None, ho * wo, cp), lambda i: (i, 0, 0)),
        scratch_shapes=[pltpu.VMEM((ho + 2, wo + 2, cp), jnp.float32)],
        compiler_params=_compiler_params(),
        cost_estimate=pl.CostEstimate(flops=flops, transcendentals=0,
                                      bytes_accessed=byts),
    )(xp, xres, w1, b1, w2, b2)


def _fused_proj_call(xp, xsc, w1, b1, w2, b2, wsc, bsc, ho, wo, stride):
    n, hp, wp, cin_p = xp.shape
    cp = w1.shape[-1]
    flops = 2 * n * ho * wo * (9 * (cin_p + cp) + cin_p) * cp
    byts = (xp.size * 2 + xsc.size * 2 + (w1.size + w2.size + wsc.size) * 2
            + (b1.size + b2.size + bsc.size) * 4 + n * ho * wo * cp * 4)
    return pl.pallas_call(
        functools.partial(fused_proj_kernel, ho=ho, wo=wo, stride=stride),
        out_shape=jax.ShapeDtypeStruct((n, ho * wo, cp), jnp.float32),
        grid=(n,),
        in_specs=[
            pl.BlockSpec((None, hp, wp, cin_p), lambda i: (i, 0, 0, 0)),
            pl.BlockSpec((None, ho * wo, cin_p), lambda i: (i, 0, 0)),
            pl.BlockSpec((9, cin_p, cp), lambda i: (0, 0, 0)),
            pl.BlockSpec((1, cp), lambda i: (0, 0)),
            pl.BlockSpec((9, cp, cp), lambda i: (0, 0, 0)),
            pl.BlockSpec((1, cp), lambda i: (0, 0)),
            pl.BlockSpec((cin_p, cp), lambda i: (0, 0)),
            pl.BlockSpec((1, cp), lambda i: (0, 0)),
        ],
        out_specs=pl.BlockSpec((None, ho * wo, cp), lambda i: (i, 0, 0)),
        scratch_shapes=[pltpu.VMEM((ho + 2, wo + 2, cp), jnp.float32)],
        compiler_params=_compiler_params(),
        cost_estimate=pl.CostEstimate(flops=flops, transcendentals=0,
                                      bytes_accessed=byts),
    )(xp, xsc, w1, b1, w2, b2, wsc, bsc)


# --------------------------------------------------------------------------
# Parameters: raw (PyTorch-like) init, BN folding + channel padding + bf16
# --------------------------------------------------------------------------
def init_basic_block_params(key, in_planes, planes, stride):
    ks = jax.random.split(key, 6)

    def bn_init(k, c):
        k0, k1, k2, k3 = jax.random.split(k, 4)
        gamma = 1.0 + 0.1 * jax.random.normal(k0, (c,), jnp.float32)
        beta = 0.1 * jax.random.normal(k1, (c,), jnp.float32)
        mean = 0.1 * jax.random.normal(k2, (c,), jnp.float32)
        var = jax.random.uniform(k3, (c,), jnp.float32, 0.5, 1.5)
        return (gamma, beta, mean, var)

    raw = {
        "w1": 0.1 * jax.random.normal(ks[0], (3, 3, in_planes, planes), jnp.float32),
        "bn1": bn_init(ks[1], planes),
        "w2": 0.1 * jax.random.normal(ks[2], (3, 3, planes, planes), jnp.float32),
        "bn2": bn_init(ks[3], planes),
    }
    identity = (stride == 1 and in_planes == planes)
    if not identity:
        raw["wsc"] = 0.1 * jax.random.normal(ks[4], (1, 1, in_planes, planes), jnp.float32)
        raw["bnsc"] = bn_init(ks[5], planes)
    return raw, identity


def prepare_kernel_params(raw, in_planes, planes, identity_shortcut):
    """Fold BN scale into conv weight columns, pad channels to 128, cast bf16."""
    cin_p = _round_up(in_planes, LANE)
    cp = _round_up(planes, LANE)

    def fold(w_hwio, bn, ci_pad, co_pad):
        gamma, beta, mean, var = bn
        s = gamma / jnp.sqrt(var + EPS)
        b = beta - mean * s
        kh, kw, ci, co = w_hwio.shape
        wf = w_hwio * s[None, None, None, :]
        wf = jnp.pad(wf, ((0, 0), (0, 0), (0, ci_pad - ci), (0, co_pad - co)))
        wf = wf.reshape(kh * kw, ci_pad, co_pad).astype(jnp.bfloat16)
        bf = jnp.pad(b, (0, co_pad - co)).reshape(1, co_pad).astype(jnp.float32)
        return wf, bf

    w1k, b1k = fold(raw["w1"], raw["bn1"], cin_p, cp)
    w2k, b2k = fold(raw["w2"], raw["bn2"], cp, cp)
    kp = {"w1k": w1k, "b1k": b1k, "w2k": w2k, "b2k": b2k}
    if not identity_shortcut:
        wsck, bsck = fold(raw["wsc"], raw["bnsc"], cin_p, cp)
        kp["wsck"] = wsck.reshape(cin_p, cp)
        kp["bsck"] = bsck
    return kp


# --------------------------------------------------------------------------
# Forward pass
# --------------------------------------------------------------------------
@functools.partial(jax.jit, static_argnames=("stride", "planes", "identity_shortcut"))
def basic_block_forward_nhwc(x_nhwc, kparams, *, stride, planes, identity_shortcut):
    n, h, w, cin = x_nhwc.shape
    cin_p = kparams["w1k"].shape[1]
    cp = kparams["w1k"].shape[2]
    ho = (h - 1) // stride + 1
    wo = (w - 1) // stride + 1

    # bf16 + lane-dense channel pad; 1-pixel spatial zero-pad for conv1.
    xb = jnp.pad(x_nhwc.astype(jnp.bfloat16),
                 ((0, 0), (0, 0), (0, 0), (0, cin_p - cin)))
    xp = jnp.pad(xb, ((0, 0), (1, 1), (1, 1), (0, 0)))

    if identity_shortcut:
        xres = xb.reshape(n, h * w, cin_p)              # stride==1, cin_p==cp
        out = _fused_identity_call(xp, xres, kparams["w1k"], kparams["b1k"],
                                   kparams["w2k"], kparams["b2k"],
                                   ho, wo, stride)
    else:
        xsc = xb[:, ::stride, ::stride, :].reshape(n, ho * wo, cin_p)
        out = _fused_proj_call(xp, xsc, kparams["w1k"], kparams["b1k"],
                               kparams["w2k"], kparams["b2k"],
                               kparams["wsck"], kparams["bsck"],
                               ho, wo, stride)
    return out.reshape(n, ho, wo, cp)[..., :planes]


@functools.partial(jax.jit, static_argnames=("stride", "planes", "identity_shortcut"))
def basic_block_forward(x_nchw, kparams, *, stride, planes, identity_shortcut):
    # NCHW wrapper for PyTorch parity; full networks should stay in NHWC and
    # call basic_block_forward_nhwc to avoid per-block transposes.
    x = jnp.transpose(x_nchw, (0, 2, 3, 1)).astype(jnp.float32)
    out = basic_block_forward_nhwc(x, kparams, stride=stride, planes=planes,
                                   identity_shortcut=identity_shortcut)
    return jnp.transpose(out, (0, 3, 1, 2))


# --------------------------------------------------------------------------
# Pure-JAX f32 reference (mirrors the PyTorch module) + demo
# --------------------------------------------------------------------------
def reference_forward(x_nchw, raw, stride, identity_shortcut):
    def conv(x, w, s, pad):
        return jax.lax.conv_general_dilated(
            x, w, window_strides=(s, s), padding=pad,
            dimension_numbers=("NCHW", "HWIO", "NCHW"),
            precision=jax.lax.Precision.HIGHEST)

    def bn(x, p):
        gamma, beta, mean, var = p
        s = gamma / jnp.sqrt(var + EPS)
        b = beta - mean * s
        return x * s[None, :, None, None] + b[None, :, None, None]

    out = jax.nn.relu(bn(conv(x_nchw, raw["w1"], stride, ((1, 1), (1, 1))), raw["bn1"]))
    out = bn(conv(out, raw["w2"], 1, ((1, 1), (1, 1))), raw["bn2"])
    if identity_shortcut:
        out = out + x_nchw
    else:
        out = out + bn(conv(x_nchw, raw["wsc"], stride, "VALID"), raw["bnsc"])
    return jax.nn.relu(out)


def _run_case(key_x, key_p, in_planes, planes, stride):
    x = jax.random.normal(key_x, (2, in_planes, 16, 16), jnp.float32)
    raw, identity = init_basic_block_params(key_p, in_planes, planes, stride)
    kp = prepare_kernel_params(raw, in_planes, planes, identity)
    out = basic_block_forward(x, kp, stride=stride, planes=planes,
                              identity_shortcut=identity)
    out = jax.block_until_ready(out)
    ho = (16 - 1) // stride + 1
    assert out.shape == (2, planes, ho, ho), out.shape
    assert bool(jnp.all(out >= 0.0))             # final ReLU
    ref = reference_forward(x, raw, stride, identity)
    max_err = float(jnp.max(jnp.abs(out - ref)))
    mean_err = float(jnp.mean(jnp.abs(out - ref)))
    # bf16 MXU inputs with f32 accumulation -> relaxed tolerance vs f32 ref.
    assert max_err < 0.5 and mean_err < 0.08, (max_err, mean_err)


if __name__ == "__main__":
    key = jax.random.PRNGKey(0)
    kx1, kx2, kp1, kp2 = jax.random.split(key, 4)
    # projection-shortcut path (1x1 conv + BN fused into the same kernel)
    _run_case(kx1, kp1, in_planes=8, planes=16, stride=1)
    # identity-shortcut path (plain residual add, no shortcut matmul)
    _run_case(kx2, kp2, in_planes=16, planes=16, stride=1)
    print("KERNEL_OK")
</pallas_src>

<mosaic_0001>
module attributes {stable_mosaic.version = 11 : i64} {
  func.func @fused_proj_kernel(%arg0: i32, %arg1: memref<1x18x18x128xbf16, #tpu.memory_space<vmem>>, %arg2: memref<1x256x128xbf16, #tpu.memory_space<vmem>>, %arg3: memref<9x128x128xbf16, #tpu.memory_space<vmem>>, %arg4: memref<1x128xf32, #tpu.memory_space<vmem>>, %arg5: memref<9x128x128xbf16, #tpu.memory_space<vmem>>, %arg6: memref<1x128xf32, #tpu.memory_space<vmem>>, %arg7: memref<128x128xbf16, #tpu.memory_space<vmem>>, %arg8: memref<1x128xf32, #tpu.memory_space<vmem>>, %arg9: memref<1x256x128xf32, #tpu.memory_space<vmem>>, %arg10: memref<18x18x128xf32, #tpu.memory_space<vmem>>) attributes {dimension_semantics = [#tpu.dimension_semantics<parallel>], iteration_bounds = array<i64: 2>, scalar_prefetch = 0 : i64, scratch_operands = 1 : i64, tpu.core_type = #tpu.core_type<tc>, window_params = [{transform_indices = @transform_0, window_bounds = array<i64: 1, 18, 18, 128>}, {transform_indices = @transform_1, window_bounds = array<i64: 1, 256, 128>}, {pipeline_mode = #tpu.pipeline_mode<synchronous>, transform_indices = @transform_2, window_bounds = array<i64: 9, 128, 128>}, {pipeline_mode = #tpu.pipeline_mode<synchronous>, transform_indices = @transform_3, window_bounds = array<i64: 1, 128>}, {pipeline_mode = #tpu.pipeline_mode<synchronous>, transform_indices = @transform_4, window_bounds = array<i64: 9, 128, 128>}, {pipeline_mode = #tpu.pipeline_mode<synchronous>, transform_indices = @transform_5, window_bounds = array<i64: 1, 128>}, {pipeline_mode = #tpu.pipeline_mode<synchronous>, transform_indices = @transform_6, window_bounds = array<i64: 128, 128>}, {pipeline_mode = #tpu.pipeline_mode<synchronous>, transform_indices = @transform_7, window_bounds = array<i64: 1, 128>}, {transform_indices = @transform_8, window_bounds = array<i64: 1, 256, 128>}]} {
    %c0 = arith.constant 0 : index
    %c0_0 = arith.constant 0 : index
    %c0_1 = arith.constant 0 : index
    %c0_2 = arith.constant 0 : index
    %0 = vector.load %arg1[%c0, %c0_0, %c0_1, %c0_2] : memref<1x18x18x128xbf16, #tpu.memory_space<vmem>>, vector<1x16x16x128xbf16>
    %1 = vector.shape_cast %0 : vector<1x16x16x128xbf16> to vector<16x16x128xbf16>
    %2 = vector.shape_cast %1 : vector<16x16x128xbf16> to vector<256x128xbf16>
    %c0_3 = arith.constant 0 : index
    %c0_4 = arith.constant 0 : index
    %c0_5 = arith.constant 0 : index
    %3 = vector.load %arg3[%c0_3, %c0_4, %c0_5] : memref<9x128x128xbf16, #tpu.memory_space<vmem>>, vector<1x128x128xbf16>
    %4 = vector.shape_cast %3 : vector<1x128x128xbf16> to vector<128x128xbf16>
    %cst = arith.constant dense<0.000000e+00> : vector<256x128xf32>
    %5 = tpu.matmul %2, %4, %cst {dimension_numbers = #tpu.dot_dimension_numbers<[1], [0], [0], [1], [0, 0, 1, 1], [], []>} : vector<256x128xbf16>, vector<128x128xbf16>, vector<256x128xf32> -> vector<256x128xf32>
    %c0_6 = arith.constant 0 : index
    %c0_7 = arith.constant 0 : index
    %c1 = arith.constant 1 : index
    %c0_8 = arith.constant 0 : index
    %6 = vector.load %arg1[%c0_6, %c0_7, %c1, %c0_8] : memref<1x18x18x128xbf16, #tpu.memory_space<vmem>>, vector<1x16x16x128xbf16>
    %7 = vector.shape_cast %6 : vector<1x16x16x128xbf16> to vector<16x16x128xbf16>
    %8 = vector.shape_cast %7 : vector<16x16x128xbf16> to vector<256x128xbf16>
    %c1_9 = arith.constant 1 : index
    %c0_10 = arith.constant 0 : index
    %c0_11 = arith.constant 0 : index
    %9 = vector.load %arg3[%c1_9, %c0_10, %c0_11] : memref<9x128x128xbf16, #tpu.memory_space<vmem>>, vector<1x128x128xbf16>
    %10 = vector.shape_cast %9 : vector<1x128x128xbf16> to vector<128x128xbf16>
    %cst_12 = arith.constant dense<0.000000e+00> : vector<256x128xf32>
    %11 = tpu.matmul %8, %10, %cst_12 {dimension_numbers = #tpu.dot_dimension_numbers<[1], [0], [0], [1], [0, 0, 1, 1], [], []>} : vector<256x128xbf16>, vector<128x128xbf16>, vector<256x128xf32> -> vector<256x128xf32>
    %12 = arith.addf %5, %11 : vector<256x128xf32>
    %c0_13 = arith.constant 0 : index
    %c0_14 = arith.constant 0 : index
    %c2 = arith.constant 2 : index
    %c0_15 = arith.constant 0 : index
    %13 = vector.load %arg1[%c0_13, %c0_14, %c2, %c0_15] : memref<1x18x18x128xbf16, #tpu.memory_space<vmem>>, vector<1x16x16x128xbf16>
    %14 = vector.shape_cast %13 : vector<1x16x16x128xbf16> to vector<16x16x128xbf16>
    %15 = vector.shape_cast %14 : vector<16x16x128xbf16> to vector<256x128xbf16>
    %c2_16 = arith.constant 2 : index
    %c0_17 = arith.constant 0 : index
    %c0_18 = arith.constant 0 : index
    %16 = vector.load %arg3[%c2_16, %c0_17, %c0_18] : memref<9x128x128xbf16, #tpu.memory_space<vmem>>, vector<1x128x128xbf16>
    %17 = vector.shape_cast %16 : vector<1x128x128xbf16> to vector<128x128xbf16>
    %cst_19 = arith.constant dense<0.000000e+00> : vector<256x128xf32>
    %18 = tpu.matmul %15, %17, %cst_19 {dimension_numbers = #tpu.dot_dimension_numbers<[1], [0], [0], [1], [0, 0, 1, 1], [], []>} : vector<256x128xbf16>, vector<128x128xbf16>, vector<256x128xf32> -> vector<256x128xf32>
    %19 = arith.addf %12, %18 : vector<256x128xf32>
    %c0_20 = arith.constant 0 : index
    %c1_21 = arith.constant 1 : index
    %c0_22 = arith.constant 0 : index
    %c0_23 = arith.constant 0 : index
    %20 = vector.load %arg1[%c0_20, %c1_21, %c0_22, %c0_23] : memref<1x18x18x128xbf16, #tpu.memory_space<vmem>>, vector<1x16x16x128xbf16>
    %21 = vector.shape_cast %20 : vector<1x16x16x128xbf16> to vector<16x16x128xbf16>
    %22 = vector.shape_cast %21 : vector<16x16x128xbf16> to vector<256x128xbf16>
    %c3 = arith.constant 3 : index
    %c0_24 = arith.constant 0 : index
    %c0_25 = arith.constant 0 : index
    %23 = vector.load %arg3[%c3, %c0_24, %c0_25] : memref<9x128x128xbf16, #tpu.memory_space<vmem>>, vector<1x128x128xbf16>
    %24 = vector.shape_cast %23 : vector<1x128x128xbf16> to vector<128x128xbf16>
    %cst_26 = arith.constant dense<0.000000e+00> : vector<256x128xf32>
    %25 = tpu.matmul %22, %24, %cst_26 {dimension_numbers = #tpu.dot_dimension_numbers<[1], [0], [0], [1], [0, 0, 1, 1], [], []>} : vector<256x128xbf16>, vector<128x128xbf16>, vector<256x128xf32> -> vector<256x128xf32>
    %26 = arith.addf %19, %25 : vector<256x128xf32>
    %c0_27 = arith.constant 0 : index
    %c1_28 = arith.constant 1 : index
    %c1_29 = arith.constant 1 : index
    %c0_30 = arith.constant 0 : index
    %27 = vector.load %arg1[%c0_27, %c1_28, %c1_29, %c0_30] : memref<1x18x18x128xbf16, #tpu.memory_space<vmem>>, vector<1x16x16x128xbf16>
    %28 = vector.shape_cast %27 : vector<1x16x16x128xbf16> to vector<16x16x128xbf16>
    %29 = vector.shape_cast %28 : vector<16x16x128xbf16> to vector<256x128xbf16>
    %c4 = arith.constant 4 : index
    %c0_31 = arith.constant 0 : index
    %c0_32 = arith.constant 0 : index
    %30 = vector.load %arg3[%c4, %c0_31, %c0_32] : memref<9x128x128xbf16, #tpu.memory_space<vmem>>, vector<1x128x128xbf16>
    %31 = vector.shape_cast %30 : vector<1x128x128xbf16> to vector<128x128xbf16>
    %cst_33 = arith.constant dense<0.000000e+00> : vector<256x128xf32>
    %32 = tpu.matmul %29, %31, %cst_33 {dimension_numbers = #tpu.dot_dimension_numbers<[1], [0], [0], [1], [0, 0, 1, 1], [], []>} : vector<256x128xbf16>, vector<128x128xbf16>, vector<256x128xf32> -> vector<256x128xf32>
    %33 = arith.addf %26, %32 : vector<256x128xf32>
    %c0_34 = arith.constant 0 : index
    %c1_35 = arith.constant 1 : index
    %c2_36 = arith.constant 2 : index
    %c0_37 = arith.constant 0 : index
    %34 = vector.load %arg1[%c0_34, %c1_35, %c2_36, %c0_37] : memref<1x18x18x128xbf16, #tpu.memory_space<vmem>>, vector<1x16x16x128xbf16>
    %35 = vector.shape_cast %34 : vector<1x16x16x128xbf16> to vector<16x16x128xbf16>
    %36 = vector.shape_cast %35 : vector<16x16x128xbf16> to vector<256x128xbf16>
    %c5 = arith.constant 5 : index
    %c0_38 = arith.constant 0 : index
    %c0_39 = arith.constant 0 : index
    %37 = vector.load %arg3[%c5, %c0_38, %c0_39] : memref<9x128x128xbf16, #tpu.memory_space<vmem>>, vector<1x128x128xbf16>
    %38 = vector.shape_cast %37 : vector<1x128x128xbf16> to vector<128x128xbf16>
    %cst_40 = arith.constant dense<0.000000e+00> : vector<256x128xf32>
    %39 = tpu.matmul %36, %38, %cst_40 {dimension_numbers = #tpu.dot_dimension_numbers<[1], [0], [0], [1], [0, 0, 1, 1], [], []>} : vector<256x128xbf16>, vector<128x128xbf16>, vector<256x128xf32> -> vector<256x128xf32>
    %40 = arith.addf %33, %39 : vector<256x128xf32>
    %c0_41 = arith.constant 0 : index
    %c2_42 = arith.constant 2 : index
    %c0_43 = arith.constant 0 : index
    %c0_44 = arith.constant 0 : index
    %41 = vector.load %arg1[%c0_41, %c2_42, %c0_43, %c0_44] : memref<1x18x18x128xbf16, #tpu.memory_space<vmem>>, vector<1x16x16x128xbf16>
    %42 = vector.shape_cast %41 : vector<1x16x16x128xbf16> to vector<16x16x128xbf16>
    %43 = vector.shape_cast %42 : vector<16x16x128xbf16> to vector<256x128xbf16>
    %c6 = arith.constant 6 : index
    %c0_45 = arith.constant 0 : index
    %c0_46 = arith.constant 0 : index
    %44 = vector.load %arg3[%c6, %c0_45, %c0_46] : memref<9x128x128xbf16, #tpu.memory_space<vmem>>, vector<1x128x128xbf16>
    %45 = vector.shape_cast %44 : vector<1x128x128xbf16> to vector<128x128xbf16>
    %cst_47 = arith.constant dense<0.000000e+00> : vector<256x128xf32>
    %46 = tpu.matmul %43, %45, %cst_47 {dimension_numbers = #tpu.dot_dimension_numbers<[1], [0], [0], [1], [0, 0, 1, 1], [], []>} : vector<256x128xbf16>, vector<128x128xbf16>, vector<256x128xf32> -> vector<256x128xf32>
    %47 = arith.addf %40, %46 : vector<256x128xf32>
    %c0_48 = arith.constant 0 : index
    %c2_49 = arith.constant 2 : index
    %c1_50 = arith.constant 1 : index
    %c0_51 = arith.constant 0 : index
    %48 = vector.load %arg1[%c0_48, %c2_49, %c1_50, %c0_51] : memref<1x18x18x128xbf16, #tpu.memory_space<vmem>>, vector<1x16x16x128xbf16>
    %49 = vector.shape_cast %48 : vector<1x16x16x128xbf16> to vector<16x16x128xbf16>
    %50 = vector.shape_cast %49 : vector<16x16x128xbf16> to vector<256x128xbf16>
    %c7 = arith.constant 7 : index
    %c0_52 = arith.constant 0 : index
    %c0_53 = arith.constant 0 : index
    %51 = vector.load %arg3[%c7, %c0_52, %c0_53] : memref<9x128x128xbf16, #tpu.memory_space<vmem>>, vector<1x128x128xbf16>
    %52 = vector.shape_cast %51 : vector<1x128x128xbf16> to vector<128x128xbf16>
    %cst_54 = arith.constant dense<0.000000e+00> : vector<256x128xf32>
    %53 = tpu.matmul %50, %52, %cst_54 {dimension_numbers = #tpu.dot_dimension_numbers<[1], [0], [0], [1], [0, 0, 1, 1], [], []>} : vector<256x128xbf16>, vector<128x128xbf16>, vector<256x128xf32> -> vector<256x128xf32>
    %54 = arith.addf %47, %53 : vector<256x128xf32>
    %c0_55 = arith.constant 0 : index
    %c2_56 = arith.constant 2 : index
    %c2_57 = arith.constant 2 : index
    %c0_58 = arith.constant 0 : index
    %55 = vector.load %arg1[%c0_55, %c2_56, %c2_57, %c0_58] : memref<1x18x18x128xbf16, #tpu.memory_space<vmem>>, vector<1x16x16x128xbf16>
    %56 = vector.shape_cast %55 : vector<1x16x16x128xbf16> to vector<16x16x128xbf16>
    %57 = vector.shape_cast %56 : vector<16x16x128xbf16> to vector<256x128xbf16>
    %c8 = arith.constant 8 : index
    %c0_59 = arith.constant 0 : index
    %c0_60 = arith.constant 0 : index
    %58 = vector.load %arg3[%c8, %c0_59, %c0_60] : memref<9x128x128xbf16, #tpu.memory_space<vmem>>, vector<1x128x128xbf16>
    %59 = vector.shape_cast %58 : vector<1x128x128xbf16> to vector<128x128xbf16>
    %cst_61 = arith.constant dense<0.000000e+00> : vector<256x128xf32>
    %60 = tpu.matmul %57, %59, %cst_61 {dimension_numbers = #tpu.dot_dimension_numbers<[1], [0], [0], [1], [0, 0, 1, 1], [], []>} : vector<256x128xbf16>, vector<128x128xbf16>, vector<256x128xf32> -> vector<256x128xf32>
    %61 = arith.addf %54, %60 : vector<256x128xf32>
    %c0_62 = arith.constant 0 : index
    %c0_63 = arith.constant 0 : index
    %62 = vector.load %arg4[%c0_62, %c0_63] : memref<1x128xf32, #tpu.memory_space<vmem>>, vector<1x128xf32>
    %63 = vector.broadcast %62 : vector<1x128xf32> to vector<256x128xf32>
    %64 = arith.addf %61, %63 : vector<256x128xf32>
    %cst_64 = arith.constant 0.000000e+00 : f32
    %65 = vector.broadcast %cst_64 : f32 to vector<256x128xf32>
    %66 = arith.maximumf %64, %65 : vector<256x128xf32>
    %cst_65 = arith.constant 0.000000e+00 : f32
    %67 = vector.broadcast %cst_65 : f32 to vector<18x18x128xf32>
    %c0_66 = arith.constant 0 : index
    %c0_67 = arith.constant 0 : index
    %c0_68 = arith.constant 0 : index
    %68 = vector.load %arg10[%c0_66, %c0_67, %c0_68] : memref<18x18x128xf32, #tpu.memory_space<vmem>>, vector<18x18x128xf32>
    tpu.vector_store %arg10[%c0_66, %c0_67, %c0_68], %67 {strides = array<i32>} : memref<18x18x128xf32, #tpu.memory_space<vmem>>, vector<18x18x128xf32>,
    %69 = vector.shape_cast %66 : vector<256x128xf32> to vector<16x16x128xf32>
    %c1_69 = arith.constant 1 : index
    %c1_70 = arith.constant 1 : index
    %c0_71 = arith.constant 0 : index
    %70 = vector.load %arg10[%c1_69, %c1_70, %c0_71] : memref<18x18x128xf32, #tpu.memory_space<vmem>>, vector<16x16x128xf32>
    tpu.vector_store %arg10[%c1_69, %c1_70, %c0_71], %69 {strides = array<i32>} : memref<18x18x128xf32, #tpu.memory_space<vmem>>, vector<16x16x128xf32>,
    %c0_72 = arith.constant 0 : index
    %c0_73 = arith.constant 0 : index
    %c0_74 = arith.constant 0 : index
    %71 = vector.load %arg10[%c0_72, %c0_73, %c0_74] : memref<18x18x128xf32, #tpu.memory_space<vmem>>, vector<16x16x128xf32>
    %72 = vector.shape_cast %71 : vector<16x16x128xf32> to vector<256x128xf32>
    %73 = arith.truncf %72 : vector<256x128xf32> to vector<256x128xbf16>
    %c0_75 = arith.constant 0 : index
    %c0_76 = arith.constant 0 : index
    %c0_77 = arith.constant 0 : index
    %74 = vector.load %arg5[%c0_75, %c0_76, %c0_77] : memref<9x128x128xbf16, #tpu.memory_space<vmem>>, vector<1x128x128xbf16>
    %75 = vector.shape_cast %74 : vector<1x128x128xbf16> to vector<128x128xbf16>
    %cst_78 = arith.constant dense<0.000000e+00> : vector<256x128xf32>
    %76 = tpu.matmul %73, %75, %cst_78 {dimension_numbers = #tpu.dot_dimension_numbers<[1], [0], [0], [1], [0, 0, 1, 1], [], []>} : vector<256x128xbf16>, vector<128x128xbf16>, vector<256x128xf32> -> vector<256x128xf32>
    %c0_79 = arith.constant 0 : index
    %c1_80 = arith.constant 1 : index
    %c0_81 = arith.constant 0 : index
    %77 = vector.load %arg10[%c0_79, %c1_80, %c0_81] : memref<18x18x128xf32, #tpu.memory_space<vmem>>, vector<16x16x128xf32>
    %78 = vector.shape_cast %77 : vector<16x16x128xf32> to vector<256x128xf32>
    %79 = arith.truncf %78 : vector<256x128xf32> to vector<256x128xbf16>
    %c1_82 = arith.constant 1 : index
    %c0_83 = arith.constant 0 : index
    %c0_84 = arith.constant 0 : index
    %80 = vector.load %arg5[%c1_82, %c0_83, %c0_84] : memref<9x128x128xbf16, #tpu.memory_space<vmem>>, vector<1x128x128xbf16>
    %81 = vector.shape_cast %80 : vector<1x128x128xbf16> to vector<128x128xbf16>
    %cst_85 = arith.constant dense<0.000000e+00> : vector<256x128xf32>
    %82 = tpu.matmul %79, %81, %cst_85 {dimension_numbers = #tpu.dot_dimension_numbers<[1], [0], [0], [1], [0, 0, 1, 1], [], []>} : vector<256x128xbf16>, vector<128x128xbf16>, vector<256x128xf32> -> vector<256x128xf32>
    %83 = arith.addf %76, %82 : vector<256x128xf32>
    %c0_86 = arith.constant 0 : index
    %c2_87 = arith.constant 2 : index
    %c0_88 = arith.constant 0 : index
    %84 = vector.load %arg10[%c0_86, %c2_87, %c0_88] : memref<18x18x128xf32, #tpu.memory_space<vmem>>, vector<16x16x128xf32>
    %85 = vector.shape_cast %84 : vector<16x16x128xf32> to vector<256x128xf32>
    %86 = arith.truncf %85 : vector<256x128xf32> to vector<256x128xbf16>
    %c2_89 = arith.constant 2 : index
    %c0_90 = arith.constant 0 : index
    %c0_91 = arith.constant 0 : index
    %87 = vector.load %arg5[%c2_89, %c0_90, %c0_91] : memref<9x128x128xbf16, #tpu.memory_space<vmem>>, vector<1x128x128xbf16>
    %88 = vector.shape_cast %87 : vector<1x128x128xbf16> to vector<128x128xbf16>
    %cst_92 = arith.constant dense<0.000000e+00> : vector<256x128xf32>
    %89 = tpu.matmul %86, %88, %cst_92 {dimension_numbers = #tpu.dot_dimension_numbers<[1], [0], [0], [1], [0, 0, 1, 1], [], []>} : vector<256x128xbf16>, vector<128x128xbf16>, vector<256x128xf32> -> vector<256x128xf32>
    %90 = arith.addf %83, %89 : vector<256x128xf32>
    %c1_93 = arith.constant 1 : index
    %c0_94 = arith.constant 0 : index
    %c0_95 = arith.constant 0 : index
    %91 = vector.load %arg10[%c1_93, %c0_94, %c0_95] : memref<18x18x128xf32, #tpu.memory_space<vmem>>, vector<16x16x128xf32>
    %92 = vector.shape_cast %91 : vector<16x16x128xf32> to vector<256x128xf32>
    %93 = arith.truncf %92 : vector<256x128xf32> to vector<256x128xbf16>
    %c3_96 = arith.constant 3 : index
    %c0_97 = arith.constant 0 : index
    %c0_98 = arith.constant 0 : index
    %94 = vector.load %arg5[%c3_96, %c0_97, %c0_98] : memref<9x128x128xbf16, #tpu.memory_space<vmem>>, vector<1x128x128xbf16>
    %95 = vector.shape_cast %94 : vector<1x128x128xbf16> to vector<128x128xbf16>
    %cst_99 = arith.constant dense<0.000000e+00> : vector<256x128xf32>
    %96 = tpu.matmul %93, %95, %cst_99 {dimension_numbers = #tpu.dot_dimension_numbers<[1], [0], [0], [1], [0, 0, 1, 1], [], []>} : vector<256x128xbf16>, vector<128x128xbf16>, vector<256x128xf32> -> vector<256x128xf32>
    %97 = arith.addf %90, %96 : vector<256x128xf32>
    %c1_100 = arith.constant 1 : index
    %c1_101 = arith.constant 1 : index
    %c0_102 = arith.constant 0 : index
    %98 = vector.load %arg10[%c1_100, %c1_101, %c0_102] : memref<18x18x128xf32, #tpu.memory_space<vmem>>, vector<16x16x128xf32>
    %99 = vector.shape_cast %98 : vector<16x16x128xf32> to vector<256x128xf32>
    %100 = arith.truncf %99 : vector<256x128xf32> to vector<256x128xbf16>
    %c4_103 = arith.constant 4 : index
    %c0_104 = arith.constant 0 : index
    %c0_105 = arith.constant 0 : index
    %101 = vector.load %arg5[%c4_103, %c0_104, %c0_105] : memref<9x128x128xbf16, #tpu.memory_space<vmem>>, vector<1x128x128xbf16>
    %102 = vector.shape_cast %101 : vector<1x128x128xbf16> to vector<128x128xbf16>
    %cst_106 = arith.constant dense<0.000000e+00> : vector<256x128xf32>
    %103 = tpu.matmul %100, %102, %cst_106 {dimension_numbers = #tpu.dot_dimension_numbers<[1], [0], [0], [1], [0, 0, 1, 1], [], []>} : vector<256x128xbf16>, vector<128x128xbf16>, vector<256x128xf32> -> vector<256x128xf32>
    %104 = arith.addf %97, %103 : vector<256x128xf32>
    %c1_107 = arith.constant 1 : index
    %c2_108 = arith.constant 2 : index
    %c0_109 = arith.constant 0 : index
    %105 = vector.load %arg10[%c1_107, %c2_108, %c0_109] : memref<18x18x128xf32, #tpu.memory_space<vmem>>, vector<16x16x128xf32>
    %106 = vector.shape_cast %105 : vector<16x16x128xf32> to vector<256x128xf32>
    %107 = arith.truncf %106 : vector<256x128xf32> to vector<256x128xbf16>
    %c5_110 = arith.constant 5 : index
    %c0_111 = arith.constant 0 : index
    %c0_112 = arith.constant 0 : index
    %108 = vector.load %arg5[%c5_110, %c0_111, %c0_112] : memref<9x128x128xbf16, #tpu.memory_space<vmem>>, vector<1x128x128xbf16>
    %109 = vector.shape_cast %108 : vector<1x128x128xbf16> to vector<128x128xbf16>
    %cst_113 = arith.constant dense<0.000000e+00> : vector<256x128xf32>
    %110 = tpu.matmul %107, %109, %cst_113 {dimension_numbers = #tpu.dot_dimension_numbers<[1], [0], [0], [1], [0, 0, 1, 1], [], []>} : vector<256x128xbf16>, vector<128x128xbf16>, vector<256x128xf32> -> vector<256x128xf32>
    %111 = arith.addf %104, %110 : vector<256x128xf32>
    %c2_114 = arith.constant 2 : index
    %c0_115 = arith.constant 0 : index
    %c0_116 = arith.constant 0 : index
    %112 = vector.load %arg10[%c2_114, %c0_115, %c0_116] : memref<18x18x128xf32, #tpu.memory_space<vmem>>, vector<16x16x128xf32>
    %113 = vector.shape_cast %112 : vector<16x16x128xf32> to vector<256x128xf32>
    %114 = arith.truncf %113 : vector<256x128xf32> to vector<256x128xbf16>
    %c6_117 = arith.constant 6 : index
    %c0_118 = arith.constant 0 : index
    %c0_119 = arith.constant 0 : index
    %115 = vector.load %arg5[%c6_117, %c0_118, %c0_119] : memref<9x128x128xbf16, #tpu.memory_space<vmem>>, vector<1x128x128xbf16>
    %116 = vector.shape_cast %115 : vector<1x128x128xbf16> to vector<128x128xbf16>
    %cst_120 = arith.constant dense<0.000000e+00> : vector<256x128xf32>
    %117 = tpu.matmul %114, %116, %cst_120 {dimension_numbers = #tpu.dot_dimension_numbers<[1], [0], [0], [1], [0, 0, 1, 1], [], []>} : vector<256x128xbf16>, vector<128x128xbf16>, vector<256x128xf32> -> vector<256x128xf32>
    %118 = arith.addf %111, %117 : vector<256x128xf32>
    %c2_121 = arith.constant 2 : index
    %c1_122 = arith.constant 1 : index
    %c0_123 = arith.constant 0 : index
    %119 = vector.load %arg10[%c2_121, %c1_122, %c0_123] : memref<18x18x128xf32, #tpu.memory_space<vmem>>, vector<16x16x128xf32>
    %120 = vector.shape_cast %119 : vector<16x16x128xf32> to vector<256x128xf32>
    %121 = arith.truncf %120 : vector<256x128xf32> to vector<256x128xbf16>
    %c7_124 = arith.constant 7 : index
    %c0_125 = arith.constant 0 : index
    %c0_126 = arith.constant 0 : index
    %122 = vector.load %arg5[%c7_124, %c0_125, %c0_126] : memref<9x128x128xbf16, #tpu.memory_space<vmem>>, vector<1x128x128xbf16>
    %123 = vector.shape_cast %122 : vector<1x128x128xbf16> to vector<128x128xbf16>
    %cst_127 = arith.constant dense<0.000000e+00> : vector<256x128xf32>
    %124 = tpu.matmul %121, %123, %cst_127 {dimension_numbers = #tpu.dot_dimension_numbers<[1], [0], [0], [1], [0, 0, 1, 1], [], []>} : vector<256x128xbf16>, vector<128x128xbf16>, vector<256x128xf32> -> vector<256x128xf32>
    %125 = arith.addf %118, %124 : vector<256x128xf32>
    %c2_128 = arith.constant 2 : index
    %c2_129 = arith.constant 2 : index
    %c0_130 = arith.constant 0 : index
    %126 = vector.load %arg10[%c2_128, %c2_129, %c0_130] : memref<18x18x128xf32, #tpu.memory_space<vmem>>, vector<16x16x128xf32>
    %127 = vector.shape_cast %126 : vector<16x16x128xf32> to vector<256x128xf32>
    %128 = arith.truncf %127 : vector<256x128xf32> to vector<256x128xbf16>
    %c8_131 = arith.constant 8 : index
    %c0_132 = arith.constant 0 : index
    %c0_133 = arith.constant 0 : index
    %129 = vector.load %arg5[%c8_131, %c0_132, %c0_133] : memref<9x128x128xbf16, #tpu.memory_space<vmem>>, vector<1x128x128xbf16>
    %130 = vector.shape_cast %129 : vector<1x128x128xbf16> to vector<128x128xbf16>
    %cst_134 = arith.constant dense<0.000000e+00> : vector<256x128xf32>
    %131 = tpu.matmul %128, %130, %cst_134 {dimension_numbers = #tpu.dot_dimension_numbers<[1], [0], [0], [1], [0, 0, 1, 1], [], []>} : vector<256x128xbf16>, vector<128x128xbf16>, vector<256x128xf32> -> vector<256x128xf32>
    %132 = arith.addf %125, %131 : vector<256x128xf32>
    %c0_135 = arith.constant 0 : index
    %c0_136 = arith.constant 0 : index
    %133 = vector.load %arg6[%c0_135, %c0_136] : memref<1x128xf32, #tpu.memory_space<vmem>>, vector<1x128xf32>
    %134 = vector.broadcast %133 : vector<1x128xf32> to vector<256x128xf32>
    %135 = arith.addf %132, %134 : vector<256x128xf32>
    %c0_137 = arith.constant 0 : index
    %c0_138 = arith.constant 0 : index
    %c0_139 = arith.constant 0 : index
    %136 = vector.load %arg2[%c0_137, %c0_138, %c0_139] : memref<1x256x128xbf16, #tpu.memory_space<vmem>>, vector<1x256x128xbf16>
    %137 = vector.shape_cast %136 : vector<1x256x128xbf16> to vector<256x128xbf16>
    %c0_140 = arith.constant 0 : index
    %c0_141 = arith.constant 0 : index
    %138 = vector.load %arg7[%c0_140, %c0_141] : memref<128x128xbf16, #tpu.memory_space<vmem>>, vector<128x128xbf16>
    %cst_142 = arith.constant dense<0.000000e+00> : vector<256x128xf32>
    %139 = tpu.matmul %137, %138, %cst_142 {dimension_numbers = #tpu.dot_dimension_numbers<[1], [0], [0], [1], [0, 0, 1, 1], [], []>} : vector<256x128xbf16>, vector<128x128xbf16>, vector<256x128xf32> -> vector<256x128xf32>
    %c0_143 = arith.constant 0 : index
    %c0_144 = arith.constant 0 : index
    %140 = vector.load %arg8[%c0_143, %c0_144] : memref<1x128xf32, #tpu.memory_space<vmem>>, vector<1x128xf32>
    %141 = vector.broadcast %140 : vector<1x128xf32> to vector<256x128xf32>
    %142 = arith.addf %139, %141 : vector<256x128xf32>
    %143 = arith.addf %135, %142 : vector<256x128xf32>
    %cst_145 = arith.constant 0.000000e+00 : f32
    %144 = vector.broadcast %cst_145 : f32 to vector<256x128xf32>
    %145 = arith.maximumf %143, %144 : vector<256x128xf32>
    %c0_146 = arith.constant 0 : index
    %c0_147 = arith.constant 0 : index
    %c0_148 = arith.constant 0 : index
    %146 = vector.load %arg9[%c0_146, %c0_147, %c0_148] : memref<1x256x128xf32, #tpu.memory_space<vmem>>, vector<1x256x128xf32>
    %147 = vector.shape_cast %146 : vector<1x256x128xf32> to vector<256x128xf32>
    %148 = vector.shape_cast %145 : vector<256x128xf32> to vector<1x256x128xf32>
    tpu.vector_store %arg9[%c0_146, %c0_147, %c0_148], %148 {strides = array<i32>} : memref<1x256x128xf32, #tpu.memory_space<vmem>>, vector<1x256x128xf32>,
    return
  }
  func.func @transform_0(%arg0: i32) -> (i32, i32, i32, i32) {
    %c0_i32 = arith.constant 0 : i32
    %c0_i32_0 = arith.constant 0 : i32
    %c0_i32_1 = arith.constant 0 : i32
    %c0_i32_2 = arith.constant 0 : i32
    return %arg0, %c0_i32, %c0_i32_0, %c0_i32_1 : i32, i32, i32, i32
  }
  func.func @transform_1(%arg0: i32) -> (i32, i32, i32) {
    %c0_i32 = arith.constant 0 : i32
    %c0_i32_0 = arith.constant 0 : i32
    %c0_i32_1 = arith.constant 0 : i32
    return %arg0, %c0_i32, %c0_i32_0 : i32, i32, i32
  }
  func.func @transform_2(%arg0: i32) -> (i32, i32, i32) {
    %c0_i32 = arith.constant 0 : i32
    %c0_i32_0 = arith.constant 0 : i32
    %c0_i32_1 = arith.constant 0 : i32
    %c0_i32_2 = arith.constant 0 : i32
    return %c0_i32, %c0_i32_0, %c0_i32_1 : i32, i32, i32
  }
  func.func @transform_3(%arg0: i32) -> (i32, i32) {
    %c0_i32 = arith.constant 0 : i32
    %c0_i32_0 = arith.constant 0 : i32
    %c0_i32_1 = arith.constant 0 : i32
    return %c0_i32, %c0_i32_0 : i32, i32
  }
  func.func @transform_4(%arg0: i32) -> (i32, i32, i32) {
    %c0_i32 = arith.constant 0 : i32
    %c0_i32_0 = arith.constant 0 : i32
    %c0_i32_1 = arith.constant 0 : i32
    %c0_i32_2 = arith.constant 0 : i32
    return %c0_i32, %c0_i32_0, %c0_i32_1 : i32, i32, i32
  }
  func.func @transform_5(%arg0: i32) -> (i32, i32) {
    %c0_i32 = arith.constant 0 : i32
    %c0_i32_0 = arith.constant 0 : i32
    %c0_i32_1 = arith.constant 0 : i32
    return %c0_i32, %c0_i32_0 : i32, i32
  }
  func.func @transform_6(%arg0: i32) -> (i32, i32) {
    %c0_i32 = arith.constant 0 : i32
    %c0_i32_0 = arith.constant 0 : i32
    %c0_i32_1 = arith.constant 0 : i32
    return %c0_i32, %c0_i32_0 : i32, i32
  }
  func.func @transform_7(%arg0: i32) -> (i32, i32) {
    %c0_i32 = arith.constant 0 : i32
    %c0_i32_0 = arith.constant 0 : i32
    %c0_i32_1 = arith.constant 0 : i32
    return %c0_i32, %c0_i32_0 : i32, i32
  }
  func.func @transform_8(%arg0: i32) -> (i32, i32, i32) {
    %c0_i32 = arith.constant 0 : i32
    %c0_i32_0 = arith.constant 0 : i32
    %c0_i32_1 = arith.constant 0 : i32
    return %arg0, %c0_i32, %c0_i32_0 : i32, i32, i32
  }
}

</mosaic_0001>

<llo_original>
// kernel: basic_block_forward_nhwc.1
$region0: #{basic_block_forward_nhwc.1}
  #allocation0 [shape = 'u32[]', space=smem, size = 0x4, offset = 0x4, fixed_abs, tag = 'smem constant byte address 0x4 - core index']
  #allocation1 [shape = 'u32[144,128]{1,0:T(1,128)}', space=vmem, size = 0x12000, scoped, tag = 'internal scratch']
  #allocation2 [shape = 'f32[18,18,128]{2,1,0:T(8,128)}', space=vmem, size = 0x36000, scoped, tag = 'scratch operand']
  %s0 = inlined_call_operand.vmem [shape: bf16[2,18,18,128], index: 0, kind: input, shape index: {}]
  %s1 = inlined_call_operand.vmem [shape: bf16[2,256,128], index: 1, kind: input, shape index: {}]
  %s2 = inlined_call_operand.vmem [shape: bf16[9,128,128], index: 2, kind: input, shape index: {}]
  %s3 = inlined_call_operand.vmem [shape: f32[1,128], index: 3, kind: input, shape index: {}]
  %s4 = inlined_call_operand.vmem [shape: bf16[9,128,128], index: 4, kind: input, shape index: {}]
  %s5 = inlined_call_operand.vmem [shape: f32[1,128], index: 5, kind: input, shape index: {}]
  %s6 = inlined_call_operand.vmem [shape: bf16[128,128], index: 6, kind: input, shape index: {}]
  %s7 = inlined_call_operand.vmem [shape: f32[1,128], index: 7, kind: input, shape index: {}]
  %s8 = inlined_call_operand.hbm [shape: f32[2,256,128], index: 8, kind: output, shape index: {}]
  %s9 = sld [smem:[#allocation0]]
  $region65: #{basic_block_forward_nhwc.1} parent=0
    _
  %s11 = ssub.s32 1, %s9
  %s12 = scalar_select 0, %s11, %s9
  $region1: #{basic_block_forward_nhwc.1} parent=0
    #allocation3 [shape = 'u8[262144]{0}', space=vmem, size = 0x40000, scoped, tag = 'output window, operand 0']
    #allocation4 [shape = 's32[2]{0}', space=sflag, size = 0x8, scoped, tag = 'scoped memory for basic_block_forward_nhwc.1']
    %13 = vsyncpa [#allocation4], 0
    %s14 = scalar_lea.sflag [#allocation4], 1
    %15 = vsyncpa %s14, 0
    loop: start=0, step=1, limit=4
    $region2: #{basic_block_forward_nhwc.1} parent=1 // loop_pre_header
      _
    $region3: #{basic_block_forward_nhwc.1} parent=1 // loop_header
      %s17 = sphi 0, %s21
      %p18 = scmp.ge.s32.totalorder %s17, 4
      %s27 = sphi 0, %s29
      %s30 = sphi 0, %s27
      %s31 = sphi 0, %s30
      %s47 = sphi 0, %s31
      %s53 = sphi 0, %s55
      %s56 = sphi 0, %s53
      %s57 = sphi 0, %s56
      %s73 = sphi 0, %s57
      %s77 = sphi 0, %s77
      %s79 = sphi 0, %s77
      %s80 = sphi 0, %s79
      %s94 = sphi 0, %s80
      %s98 = sphi 0, %s98
      %s100 = sphi 0, %s98
      %s101 = sphi 0, %s100
      %s115 = sphi 0, %s101
      %s119 = sphi 0, %s119
      %s121 = sphi 0, %s119
      %s122 = sphi 0, %s121
      %s136 = sphi 0, %s122
      %s140 = sphi 0, %s140
      %s142 = sphi 0, %s140
      %s143 = sphi 0, %s142
      %s157 = sphi 0, %s143
      %s161 = sphi 0, %s161
      %s163 = sphi 0, %s161
      %s164 = sphi 0, %s163
      %s178 = sphi 0, %s164
      %s182 = sphi 0, %s182
      %s184 = sphi 0, %s182
      %s185 = sphi 0, %s184
      %s199 = sphi 0, %s185
      %s205 = sphi 0, %s207
      %s208 = sphi 0, %s205
      %s209 = sphi 0, %s208
      %s225 = sphi 0, %s209
    $region4: #{basic_block_forward_nhwc.1} parent=1 // loop_header_branch
      %20 = sbr.rel (%p18) target = $region8
    $region5: #{basic_block_forward_nhwc.1} parent=1 // loop_body
      %s22 = ssub.s32 %s17, 1
      %s23 = ssub.s32 %s17, 2
      %s24 = sadd.s32 %s17, 1
      %s25 = ssub.s32 %s17, %s24
      %p26 = scmp.eq.s32.totalorder %s25, 0
      %s28 = sadd.s32 %s27, 1
      %s29 = scalar_select %p26, %s27, %s28
      %p32 = pneg %p26
      %p33 = scmp.eq.s32.totalorder %s17, 1
      %p34 = por %p32, %p33
      %p35 = scmp.ne.s32.totalorder %s27, %s30
      %p36 = scmp.eq.s32.totalorder %s17, 0
      %p37 = por %p35, %p36
      %p38 = scmp.ne.s32.totalorder %s27, %s30
      %p39 = scmp.eq.s32.totalorder %s22, 1
      %p40 = por %p38, %p39
      %p41 = scmp.ne.s32.totalorder %s30, %s31
      %p42 = scmp.eq.s32.totalorder %s22, 0
      %p43 = por %p41, %p42
      %p44 = scmp.ne.s32.totalorder %s30, %s31
      %p45 = scmp.eq.s32.totalorder %s23, 1
      %p46 = por %p44, %p45
      %p48 = scmp.ne.s32.totalorder %s31, %s47
      %p49 = scmp.eq.s32.totalorder %s23, 0
      %p50 = por %p48, %p49
      %s51 = ssub.s32 %s17, %s24
      %p52 = scmp.eq.s32.totalorder %s51, 0
      %s54 = sadd.s32 %s53, 1
      %s55 = scalar_select %p52, %s53, %s54
      %p58 = pneg %p52
      %p59 = scmp.eq.s32.totalorder %s17, 1
      %p60 = por %p58, %p59
      %p61 = scmp.ne.s32.totalorder %s53, %s56
      %p62 = scmp.eq.s32.totalorder %s17, 0
      %p63 = por %p61, %p62
      %p64 = scmp.ne.s32.totalorder %s53, %s56
      %p65 = scmp.eq.s32.totalorder %s22, 1
      %p66 = por %p64, %p65
      %p67 = scmp.ne.s32.totalorder %s56, %s57
      %p68 = scmp.eq.s32.totalorder %s22, 0
      %p69 = por %p67, %p68
      %p70 = scmp.ne.s32.totalorder %s56, %s57
      %p71 = scmp.eq.s32.totalorder %s23, 1
      %p72 = por %p70, %p71
      %p74 = scmp.ne.s32.totalorder %s57, %s73
      %p75 = scmp.eq.s32.totalorder %s23, 0
      %p76 = por %p74, %p75
      %s78 = sadd.s32 %s77, 1
      %p81 = scmp.eq.s32.totalorder %s17, 1
      %p82 = scmp.ne.s32.totalorder %s77, %s79
      %p83 = scmp.eq.s32.totalorder %s17, 0
      %p84 = por %p82, %p83
      %p85 = scmp.ne.s32.totalorder %s77, %s79
      %p86 = scmp.eq.s32.totalorder %s22, 1
      %p87 = por %p85, %p86
      %p88 = scmp.ne.s32.totalorder %s79, %s80
      %p89 = scmp.eq.s32.totalorder %s22, 0
      %p90 = por %p88, %p89
      %p91 = scmp.ne.s32.totalorder %s79, %s80
      %p92 = scmp.eq.s32.totalorder %s23, 1
      %p93 = por %p91, %p92
      %p95 = scmp.ne.s32.totalorder %s80, %s94
      %p96 = scmp.eq.s32.totalorder %s23, 0
      %p97 = por %p95, %p96
      %s99 = sadd.s32 %s98, 1
      %p102 = scmp.eq.s32.totalorder %s17, 1
      %p103 = scmp.ne.s32.totalorder %s98, %s100
      %p104 = scmp.eq.s32.totalorder %s17, 0
      %p105 = por %p103, %p104
      %p106 = scmp.ne.s32.totalorder %s98, %s100
      %p107 = scmp.eq.s32.totalorder %s22, 1
      %p108 = por %p106, %p107
      %p109 = scmp.ne.s32.totalorder %s100, %s101
      %p110 = scmp.eq.s32.totalorder %s22, 0
      %p111 = por %p109, %p110
      %p112 = scmp.ne.s32.totalorder %s100, %s101
      %p113 = scmp.eq.s32.totalorder %s23, 1
      %p114 = por %p112, %p113
      %p116 = scmp.ne.s32.totalorder %s101, %s115
      %p117 = scmp.eq.s32.totalorder %s23, 0
      %p118 = por %p116, %p117
      %s120 = sadd.s32 %s119, 1
      %p123 = scmp.eq.s32.totalorder %s17, 1
      %p124 = scmp.ne.s32.totalorder %s119, %s121
      %p125 = scmp.eq.s32.totalorder %s17, 0
      %p126 = por %p124, %p125
      %p127 = scmp.ne.s32.totalorder %s119, %s121
      %p128 = scmp.eq.s32.totalorder %s22, 1
      %p129 = por %p127, %p128
      %p130 = scmp.ne.s32.totalorder %s121, %s122
      %p131 = scmp.eq.s32.totalorder %s22, 0
      %p132 = por %p130, %p131
      %p133 = scmp.ne.s32.totalorder %s121, %s122
      %p134 = scmp.eq.s32.totalorder %s23, 1
      %p135 = por %p133, %p134
      %p137 = scmp.ne.s32.totalorder %s122, %s136
      %p138 = scmp.eq.s32.totalorder %s23, 0
      %p139 = por %p137, %p138
      %s141 = sadd.s32 %s140, 1
      %p144 = scmp.eq.s32.totalorder %s17, 1
      %p145 = scmp.ne.s32.totalorder %s140, %s142
      %p146 = scmp.eq.s32.totalorder %s17, 0
      %p147 = por %p145, %p146
      %p148 = scmp.ne.s32.totalorder %s140, %s142
      %p149 = scmp.eq.s32.totalorder %s22, 1
      %p150 = por %p148, %p149
      %p151 = scmp.ne.s32.totalorder %s142, %s143
      %p152 = scmp.eq.s32.totalorder %s22, 0
      %p153 = por %p151, %p152
      %p154 = scmp.ne.s32.totalorder %s142, %s143
      %p155 = scmp.eq.s32.totalorder %s23, 1
      %p156 = por %p154, %p155
      %p158 = scmp.ne.s32.totalorder %s143, %s157
      %p159 = scmp.eq.s32.totalorder %s23, 0
      %p160 = por %p158, %p159
      %s162 = sadd.s32 %s161, 1
      %p165 = scmp.eq.s32.totalorder %s17, 1
      %p166 = scmp.ne.s32.totalorder %s161, %s163
      %p167 = scmp.eq.s32.totalorder %s17, 0
      %p168 = por %p166, %p167
      %p169 = scmp.ne.s32.totalorder %s161, %s163
      %p170 = scmp.eq.s32.totalorder %s22, 1
      %p171 = por %p169, %p170
      %p172 = scmp.ne.s32.totalorder %s163, %s164
      %p173 = scmp.eq.s32.totalorder %s22, 0
      %p174 = por %p172, %p173
      %p175 = scmp.ne.s32.totalorder %s163, %s164
      %p176 = scmp.eq.s32.totalorder %s23, 1
      %p177 = por %p175, %p176
      %p179 = scmp.ne.s32.totalorder %s164, %s178
      %p180 = scmp.eq.s32.totalorder %s23, 0
      %p181 = por %p179, %p180
      %s183 = sadd.s32 %s182, 1
      %p186 = scmp.eq.s32.totalorder %s17, 1
      %p187 = scmp.ne.s32.totalorder %s182, %s184
      %p188 = scmp.eq.s32.totalorder %s17, 0
      %p189 = por %p187, %p188
      %p190 = scmp.ne.s32.totalorder %s182, %s184
      %p191 = scmp.eq.s32.totalorder %s22, 1
      %p192 = por %p190, %p191
      %p193 = scmp.ne.s32.totalorder %s184, %s185
      %p194 = scmp.eq.s32.totalorder %s22, 0
      %p195 = por %p193, %p194
      %p196 = scmp.ne.s32.totalorder %s184, %s185
      %p197 = scmp.eq.s32.totalorder %s23, 1
      %p198 = por %p196, %p197
      %p200 = scmp.ne.s32.totalorder %s185, %s199
      %p201 = scmp.eq.s32.totalorder %s23, 0
      %p202 = por %p200, %p201
      %s203 = ssub.s32 %s17, %s24
      %p204 = scmp.eq.s32.totalorder %s203, 0
      %s206 = sadd.s32 %s205, 1
      %s207 = scalar_select %p204, %s205, %s206
      %p210 = pneg %p204
      %p211 = scmp.eq.s32.totalorder %s17, 1
      %p212 = por %p210, %p211
      %p213 = scmp.ne.s32.totalorder %s205, %s208
      %p214 = scmp.eq.s32.totalorder %s17, 0
      %p215 = por %p213, %p214
      %p216 = scmp.ne.s32.totalorder %s205, %s208
      %p217 = scmp.eq.s32.totalorder %s22, 1
      %p218 = por %p216, %p217
      %p219 = scmp.ne.s32.totalorder %s208, %s209
      %p220 = scmp.eq.s32.totalorder %s22, 0
      %p221 = por %p219, %p220
      %p222 = scmp.ne.s32.totalorder %s208, %s209
      %p223 = scmp.eq.s32.totalorder %s23, 1
      %p224 = por %p222, %p223
      %p226 = scmp.ne.s32.totalorder %s209, %s225
      %p227 = scmp.eq.s32.totalorder %s23, 0
      %p228 = por %p226, %p227
      %p229 = scmp.le.s32.totalorder 1, %s17
      %p230 = scmp.lt.s32.totalorder %s17, 3
      %p231 = pnand %p229, %p230
      %p232 = pneg %p231
      // Predicated region
      $region9: #{basic_block_forward_nhwc.1} parent=5 // pred_check
        _
      $region10: #{basic_block_forward_nhwc.1} parent=5 // pred_check_branch
        %234 = sbr.rel (%p231) target = $region12
      $region11: #{basic_block_forward_nhwc.1} parent=5 // pred_region
        %s235 = ssub.s32 %s17, 1
        // Predicated region
        $region13: #{basic_block_forward_nhwc.1} parent=11 // pred_check
          %p236 = pneg %p90
        $region14: #{basic_block_forward_nhwc.1} parent=11 // pred_check_branch
          %238 = sbr.rel (%p236) target = $region16
        $region15: #{basic_block_forward_nhwc.1} parent=11 // pred_region
          _
        $region16: #{basic_block_forward_nhwc.1} parent=11 // pred_fallthru
          _
        // Predicated region
        $region17: #{basic_block_forward_nhwc.1} parent=11 // pred_check
          %p239 = pneg %p111
        $region18: #{basic_block_forward_nhwc.1} parent=11 // pred_check_branch
          %241 = sbr.rel (%p239) target = $region20
        $region19: #{basic_block_forward_nhwc.1} parent=11 // pred_region
          _
        $region20: #{basic_block_forward_nhwc.1} parent=11 // pred_fallthru
          _
        // Predicated region
        $region21: #{basic_block_forward_nhwc.1} parent=11 // pred_check
          %p242 = pneg %p132
        $region22: #{basic_block_forward_nhwc.1} parent=11 // pred_check_branch
          %244 = sbr.rel (%p242) target = $region24
        $region23: #{basic_block_forward_nhwc.1} parent=11 // pred_region
          _
        $region24: #{basic_block_forward_nhwc.1} parent=11 // pred_fallthru
          _
        // Predicated region
        $region25: #{basic_block_forward_nhwc.1} parent=11 // pred_check
          %p245 = pneg %p153
        $region26: #{basic_block_forward_nhwc.1} parent=11 // pred_check_branch
          %247 = sbr.rel (%p245) target = $region28
        $region27: #{basic_block_forward_nhwc.1} parent=11 // pred_region
          _
        $region28: #{basic_block_forward_nhwc.1} parent=11 // pred_fallthru
          _
        // Predicated region
        $region29: #{basic_block_forward_nhwc.1} parent=11 // pred_check
          %p248 = pneg %p174
        $region30: #{basic_block_forward_nhwc.1} parent=11 // pred_check_branch
          %250 = sbr.rel (%p248) target = $region32
        $region31: #{basic_block_forward_nhwc.1} parent=11 // pred_region
          _
        $region32: #{basic_block_forward_nhwc.1} parent=11 // pred_fallthru
          _
        // Predicated region
        $region33: #{basic_block_forward_nhwc.1} parent=11 // pred_check
          %p251 = pneg %p195
        $region34: #{basic_block_forward_nhwc.1} parent=11 // pred_check_branch
          %253 = sbr.rel (%p251) target = $region36
        $region35: #{basic_block_forward_nhwc.1} parent=11 // pred_region
          _
        $region36: #{basic_block_forward_nhwc.1} parent=11 // pred_fallthru
          _
      $region12: #{basic_block_forward_nhwc.1} parent=5 // pred_fallthru
        _
      %p254 = scmp.lt.s32.totalorder %s17, 2
      // Predicated region
      $region37: #{basic_block_forward_nhwc.1} parent=5 // pred_check
        %p255 = pneg %p254
      $region38: #{basic_block_forward_nhwc.1} parent=5 // pred_check_branch
        %257 = sbr.rel (%p255) target = $region40
      $region39: #{basic_block_forward_nhwc.1} parent=5 // pred_region
        // Predicated region
        $region41: #{basic_block_forward_nhwc.1} parent=39 // pred_check
          %p258 = pneg %p37
        $region42: #{basic_block_forward_nhwc.1} parent=39 // pred_check_branch
          %260 = sbr.rel (%p258) target = $region44
        $region43: #{basic_block_forward_nhwc.1} parent=39 // pred_region
          %p261 = scmp.lt.s32.totalorder %s17, 1
          %s262 = scalar_select %p261, %s17, 1
          %s263 = smul.addr %s262, 54
          %s264 = smul.addr %s263, 4
          %s265 = scalar_lea.vmem %s0, %s264
        $region44: #{basic_block_forward_nhwc.1} parent=39 // pred_fallthru
          _
        // Predicated region
        $region45: #{basic_block_forward_nhwc.1} parent=39 // pred_check
          %p266 = pneg %p63
        $region46: #{basic_block_forward_nhwc.1} parent=39 // pred_check_branch
          %268 = sbr.rel (%p266) target = $region48
        $region47: #{basic_block_forward_nhwc.1} parent=39 // pred_region
          %p269 = scmp.lt.s32.totalorder %s17, 1
          %s270 = scalar_select %p269, %s17, 1
          %s271 = smul.addr %s270, 32
          %s272 = smul.addr %s271, 4
          %s273 = scalar_lea.vmem %s1, %s272
        $region48: #{basic_block_forward_nhwc.1} parent=39 // pred_fallthru
          _
      $region40: #{basic_block_forward_nhwc.1} parent=5 // pred_fallthru
        _
      %p274 = scmp.le.s32.totalorder 1, %s17
      %p275 = scmp.lt.s32.totalorder %s17, 3
      %p276 = pnand %p274, %p275
      %p277 = pneg %p276
      // Predicated region
      $region49: #{basic_block_forward_nhwc.1} parent=5 // pred_check
        _
      $region50: #{basic_block_forward_nhwc.1} parent=5 // pred_check_branch
        %279 = sbr.rel (%p276) target = $region52
      $region51: #{basic_block_forward_nhwc.1} parent=5 // pred_region
        %s280 = ssub.s32 %s17, 1
        %p281 = scmp.lt.s32.totalorder %s22, 1
        %s282 = scalar_select %p281, %s22, 1
        %s283 = smul.addr %s282, 54
        %s284 = smul.addr %s283, 4
        %s285 = scalar_lea.vmem %s0, %s284
        %p286 = pneg %p43
        %p287 = pneg %p40
        %p288 = scmp.lt.s32.totalorder %s22, 1
        %s289 = scalar_select %p288, %s22, 1
        %s290 = smul.addr %s289, 32
        %s291 = smul.addr %s290, 4
        %s292 = scalar_lea.vmem %s1, %s291
        %p293 = pneg %p69
        %p294 = pneg %p66
        %p295 = pneg %p90
        %p296 = pneg %p87
        %p297 = pneg %p111
        %p298 = pneg %p108
        %p299 = pneg %p132
        %p300 = pneg %p129
        %p301 = pneg %p153
        %p302 = pneg %p150
        %p303 = pneg %p174
        %p304 = pneg %p171
        %p305 = pneg %p195
        %p306 = pneg %p192
        %p307 = pneg %p221
        %p308 = pneg %p218
        %s309 = sand.u32 %s208, 1
        %s310 = scalar_lea.sflag [#allocation4], %s309
        %s311 = sand.u32 %s208, 1
        %s312 = smul.addr %s311, 256
        %s313 = scalar_lea.vmem [#allocation3], %s312
        %p314 = scmp.lt.s32.totalorder %s22, 1
        %s315 = scalar_select %p314, %s22, 1
        %s316 = smul.addr %s315, 54
        %s317 = smul.addr %s316, 4
        %s318 = scalar_lea.vmem %s0, %s317
        %p319 = scmp.lt.s32.totalorder %s22, 1
        %s320 = scalar_select %p319, %s22, 1
        %s321 = smul.addr %s320, 32
        %s322 = smul.addr %s321, 4
        %s323 = scalar_lea.vmem %s1, %s322
        %v325 = vld [vmem:[%s318] sm:$0xf]
        %v326 = vld [vmem:[%s318 + $0x4] sm:$0xf]
        %v327 = vld [vmem:[%s318 + $0xc] sm:$0xf]
        %v328 = vld [vmem:[%s318 + $0x10] sm:$0xf]
        %v329 = vld [vmem:[%s318 + $0x18] sm:$0xf]
        %v330 = vld [vmem:[%s318 + $0x1c] sm:$0xf]
        %v331 = vld [vmem:[%s318 + $0x24] sm:$0xf]
        %v332 = vld [vmem:[%s318 + $0x28] sm:$0xf]
        %v333 = vld [vmem:[%s318 + $0x30] sm:$0xf]
        %v334 = vld [vmem:[%s318 + $0x34] sm:$0xf]
        %v335 = vld [vmem:[%s318 + $0x3c] sm:$0xf]
        %v336 = vld [vmem:[%s318 + $0x40] sm:$0xf]
        %v337 = vld [vmem:[%s318 + $0x48] sm:$0xf]
        %v338 = vld [vmem:[%s318 + $0x4c] sm:$0xf]
        %v339 = vld [vmem:[%s318 + $0x54] sm:$0xf]
        %v340 = vld [vmem:[%s318 + $0x58] sm:$0xf]
        %v341 = vld [vmem:[%s318 + $0x60] sm:$0xf]
        %v342 = vld [vmem:[%s318 + $0x64] sm:$0xf]
        %v343 = vld [vmem:[%s318 + $0x6c] sm:$0xf]
        %v344 = vld [vmem:[%s318 + $0x70] sm:$0xf]
        %v345 = vld [vmem:[%s318 + $0x78] sm:$0xf]
        %v346 = vld [vmem:[%s318 + $0x7c] sm:$0xf]
        %v347 = vld [vmem:[%s318 + $0x84] sm:$0xf]
        %v348 = vld [vmem:[%s318 + $0x88] sm:$0xf]
        %v349 = vld [vmem:[%s318 + $0x90] sm:$0xf]
        %v350 = vld [vmem:[%s318 + $0x94] sm:$0xf]
        %v351 = vld [vmem:[%s318 + $0x9c] sm:$0xf]
        %v352 = vld [vmem:[%s318 + $0xa0] sm:$0xf]
        %v353 = vld [vmem:[%s318 + $0xa8] sm:$0xf]
        %v354 = vld [vmem:[%s318 + $0xac] sm:$0xf]
        %v355 = vld [vmem:[%s318 + $0xb4] sm:$0xf]
        %v356 = vld [vmem:[%s318 + $0xb8] sm:$0xf]
        %v357 = vld [vmem:[%s2] sm:$0xf]
        %v358 = vld [vmem:[%s2 + $0x4] sm:$0xf]
        %v359 = vld [vmem:[%s2 + $0x8] sm:$0xf]
        %v360 = vld [vmem:[%s2 + $0xc] sm:$0xf]
        %v361 = vld [vmem:[%s2 + $0x10] sm:$0xf]
        %v362 = vld [vmem:[%s2 + $0x14] sm:$0xf]
        %v363 = vld [vmem:[%s2 + $0x18] sm:$0xf]
        %v364 = vld [vmem:[%s2 + $0x1c] sm:$0xf]
        %v365 = vld [vmem:[%s2 + $0x20] sm:$0xf]
        %v366 = vld [vmem:[%s2 + $0x24] sm:$0xf]
        %v367 = vld [vmem:[%s2 + $0x28] sm:$0xf]
        %v368 = vld [vmem:[%s2 + $0x2c] sm:$0xf]
        %v369 = vld [vmem:[%s2 + $0x30] sm:$0xf]
        %v370 = vld [vmem:[%s2 + $0x34] sm:$0xf]
        %v371 = vld [vmem:[%s2 + $0x38] sm:$0xf]
        %v372 = vld [vmem:[%s2 + $0x3c] sm:$0xf]
        %v373 = vld [vmem:[%s318 + $0x8] sm:$0x1]
        %v374 = vld [vmem:[%s318 + $0x14] sm:$0x1]
        %v375 = vld [vmem:[%s318 + $0x20] sm:$0x1]
        %v376 = vld [vmem:[%s318 + $0x2c] sm:$0x1]
        %v377 = vld [vmem:[%s318 + $0x38] sm:$0x1]
        %v378 = vld [vmem:[%s318 + $0x44] sm:$0x1]
        %v379 = vld [vmem:[%s318 + $0x50] sm:$0x1]
        %v380 = vld [vmem:[%s318 + $0x5c] sm:$0x1]
        %v381 = vld [vmem:[%s318 + $0x68] sm:$0x1]
        %v382 = vld [vmem:[%s318 + $0x74] sm:$0x1]
        %v383 = vld [vmem:[%s318 + $0x80] sm:$0x1]
        %v384 = vld [vmem:[%s318 + $0x8c] sm:$0x1]
        %v385 = vld [vmem:[%s318 + $0x98] sm:$0x1]
        %v386 = vld [vmem:[%s318 + $0xa4] sm:$0x1]
        %v387 = vld [vmem:[%s318 + $0xb0] sm:$0x1]
        %v388 = vld [vmem:[%s318 + $0xbc] sm:$0x1]
        %vm389 = vsmask.f32 3328
        %vm390 = vsmask.f32 7440
        %vm391 = vmor %vm389, %vm390
        %v393 = vshrl.u32 %v325, 16
        %v395 = vrot.slane %v393, 4
        %v396 = vshll.u32 %v325, 16
        %v398 = vrot.slane %v396, 5
        %v399 = vor.u32 %v395, %v398
        %v400 = vrot.slane %v399, 4
        %v402 = vshll.u32 %v326, 16
        %v404 = vrot.slane %v402, 5
        %v405 = vsel %vm391, %v400, %v404
        %v406 = vshrl.u32 %v326, 16
        %v408 = vrot.slane %v406, 4
        %v409 = vor.u32 %v408, %v404
        %v410 = vrot.slane %v409, 4
        %v412 = vshll.u32 %v373, 16
        %v414 = vrot.slane %v412, 5
        %v415 = vsel %vm391, %v410, %v414
        %v417 = vshrl.u32 %v327, 16
        %v419 = vrot.slane %v417, 4
        %v420 = vshll.u32 %v327, 16
        %v422 = vrot.slane %v420, 5
        %v423 = vor.u32 %v419, %v422
        %v424 = vrot.slane %v423, 4
        %v426 = vshll.u32 %v328, 16
        %v428 = vrot.slane %v426, 5
        %v429 = vsel %vm391, %v424, %v428
        %v430 = vshrl.u32 %v328, 16
        %v432 = vrot.slane %v430, 4
        %v433 = vor.u32 %v432, %v428
        %v434 = vrot.slane %v433, 4
        %v436 = vshll.u32 %v374, 16
        %v438 = vrot.slane %v436, 5
        %v439 = vsel %vm391, %v434, %v438
        %v441 = vshrl.u32 %v329, 16
        %v443 = vrot.slane %v441, 4
        %v444 = vshll.u32 %v329, 16
        %v446 = vrot.slane %v444, 5
        %v447 = vor.u32 %v443, %v446
        %v448 = vrot.slane %v447, 4
        %v450 = vshll.u32 %v330, 16
        %v452 = vrot.slane %v450, 5
        %v453 = vsel %vm391, %v448, %v452
        %v454 = vshrl.u32 %v330, 16
        %v456 = vrot.slane %v454, 4
        %v457 = vor.u32 %v456, %v452
        %v458 = vrot.slane %v457, 4
        %v460 = vshll.u32 %v375, 16
        %v462 = vrot.slane %v460, 5
        %v463 = vsel %vm391, %v458, %v462
        %v465 = vshrl.u32 %v331, 16
        %v467 = vrot.slane %v465, 4
        %v468 = vshll.u32 %v331, 16
        %v470 = vrot.slane %v468, 5
        %v471 = vor.u32 %v467, %v470
        %v472 = vrot.slane %v471, 4
        %v474 = vshll.u32 %v332, 16
        %v476 = vrot.slane %v474, 5
        %v477 = vsel %vm391, %v472, %v476
        %v478 = vshrl.u32 %v332, 16
        %v480 = vrot.slane %v478, 4
        %v481 = vor.u32 %v480, %v476
        %v482 = vrot.slane %v481, 4
        %v484 = vshll.u32 %v376, 16
        %v486 = vrot.slane %v484, 5
        %v487 = vsel %vm391, %v482, %v486
        %v489 = vshrl.u32 %v333, 16
        %v491 = vrot.slane %v489, 4
        %v492 = vshll.u32 %v333, 16
        %v494 = vrot.slane %v492, 5
        %v495 = vor.u32 %v491, %v494
        %v496 = vrot.slane %v495, 4
        %v498 = vshll.u32 %v334, 16
        %v500 = vrot.slane %v498, 5
        %v501 = vsel %vm391, %v496, %v500
        %v502 = vshrl.u32 %v334, 16
        %v504 = vrot.slane %v502, 4
        %v505 = vor.u32 %v504, %v500
        %v506 = vrot.slane %v505, 4
        %v508 = vshll.u32 %v377, 16
        %v510 = vrot.slane %v508, 5
        %v511 = vsel %vm391, %v506, %v510
        %v513 = vshrl.u32 %v335, 16
        %v515 = vrot.slane %v513, 4
        %v516 = vshll.u32 %v335, 16
        %v518 = vrot.slane %v516, 5
        %v519 = vor.u32 %v515, %v518
        %v520 = vrot.slane %v519, 4
        %v522 = vshll.u32 %v336, 16
        %v524 = vrot.slane %v522, 5
        %v525 = vsel %vm391, %v520, %v524
        %v526 = vshrl.u32 %v336, 16
        %v528 = vrot.slane %v526, 4
        %v529 = vor.u32 %v528, %v524
        %v530 = vrot.slane %v529, 4
        %v532 = vshll.u32 %v378, 16
        %v534 = vrot.slane %v532, 5
        %v535 = vsel %vm391, %v530, %v534
        %v537 = vshrl.u32 %v337, 16
        %v539 = vrot.slane %v537, 4
        %v540 = vshll.u32 %v337, 16
        %v542 = vrot.slane %v540, 5
        %v543 = vor.u32 %v539, %v542
        %v544 = vrot.slane %v543, 4
        %v546 = vshll.u32 %v338, 16
        %v548 = vrot.slane %v546, 5
        %v549 = vsel %vm391, %v544, %v548
        %v550 = vshrl.u32 %v338, 16
        %v552 = vrot.slane %v550, 4
        %v553 = vor.u32 %v552, %v548
        %v554 = vrot.slane %v553, 4
        %v556 = vshll.u32 %v379, 16
        %v558 = vrot.slane %v556, 5
        %v559 = vsel %vm391, %v554, %v558
        %v561 = vshrl.u32 %v339, 16
        %v563 = vrot.slane %v561, 4
        %v564 = vshll.u32 %v339, 16
        %v566 = vrot.slane %v564, 5
        %v567 = vor.u32 %v563, %v566
        %v568 = vrot.slane %v567, 4
        %v570 = vshll.u32 %v340, 16
        %v572 = vrot.slane %v570, 5
        %v573 = vsel %vm391, %v568, %v572
        %v574 = vshrl.u32 %v340, 16
        %v576 = vrot.slane %v574, 4
        %v577 = vor.u32 %v576, %v572
        %v578 = vrot.slane %v577, 4
        %v580 = vshll.u32 %v380, 16
        %v582 = vrot.slane %v580, 5
        %v583 = vsel %vm391, %v578, %v582
        %v585 = vshrl.u32 %v341, 16
        %v587 = vrot.slane %v585, 4
        %v588 = vshll.u32 %v341, 16
        %v590 = vrot.slane %v588, 5
        %v591 = vor.u32 %v587, %v590
        %v592 = vrot.slane %v591, 4
        %v594 = vshll.u32 %v342, 16
        %v596 = vrot.slane %v594, 5
        %v597 = vsel %vm391, %v592, %v596
        %v598 = vshrl.u32 %v342, 16
        %v600 = vrot.slane %v598, 4
        %v601 = vor.u32 %v600, %v596
        %v602 = vrot.slane %v601, 4
        %v604 = vshll.u32 %v381, 16
        %v606 = vrot.slane %v604, 5
        %v607 = vsel %vm391, %v602, %v606
        %v609 = vshrl.u32 %v343, 16
        %v611 = vrot.slane %v609, 4
        %v612 = vshll.u32 %v343, 16
        %v614 = vrot.slane %v612, 5
        %v615 = vor.u32 %v611, %v614
        %v616 = vrot.slane %v615, 4
        %v618 = vshll.u32 %v344, 16
        %v620 = vrot.slane %v618, 5
        %v621 = vsel %vm391, %v616, %v620
        %v622 = vshrl.u32 %v344, 16
        %v624 = vrot.slane %v622, 4
        %v625 = vor.u32 %v624, %v620
        %v626 = vrot.slane %v625, 4
        %v628 = vshll.u32 %v382, 16
        %v630 = vrot.slane %v628, 5
        %v631 = vsel %vm391, %v626, %v630
        %v633 = vshrl.u32 %v345, 16
        %v635 = vrot.slane %v633, 4
        %v636 = vshll.u32 %v345, 16
        %v638 = vrot.slane %v636, 5
        %v639 = vor.u32 %v635, %v638
        %v640 = vrot.slane %v639, 4
        %v642 = vshll.u32 %v346, 16
        %v644 = vrot.slane %v642, 5
        %v645 = vsel %vm391, %v640, %v644
        %v646 = vshrl.u32 %v346, 16
        %v648 = vrot.slane %v646, 4
        %v649 = vor.u32 %v648, %v644
        %v650 = vrot.slane %v649, 4
        %v652 = vshll.u32 %v383, 16
        %v654 = vrot.slane %v652, 5
        %v655 = vsel %vm391, %v650, %v654
        %v657 = vshrl.u32 %v347, 16
        %v659 = vrot.slane %v657, 4
        %v660 = vshll.u32 %v347, 16
        %v662 = vrot.slane %v660, 5
        %v663 = vor.u32 %v659, %v662
        %v664 = vrot.slane %v663, 4
        %v666 = vshll.u32 %v348, 16
        %v668 = vrot.slane %v666, 5
        %v669 = vsel %vm391, %v664, %v668
        %v670 = vshrl.u32 %v348, 16
        %v672 = vrot.slane %v670, 4
        %v673 = vor.u32 %v672, %v668
        %v674 = vrot.slane %v673, 4
        %v676 = vshll.u32 %v384, 16
        %v678 = vrot.slane %v676, 5
        %v679 = vsel %vm391, %v674, %v678
        %v681 = vshrl.u32 %v349, 16
        %v683 = vrot.slane %v681, 4
        %v684 = vshll.u32 %v349, 16
        %v686 = vrot.slane %v684, 5
        %v687 = vor.u32 %v683, %v686
        %v688 = vrot.slane %v687, 4
        %v690 = vshll.u32 %v350, 16
        %v692 = vrot.slane %v690, 5
        %v693 = vsel %vm391, %v688, %v692
        %v694 = vshrl.u32 %v350, 16
        %v696 = vrot.slane %v694, 4
        %v697 = vor.u32 %v696, %v692
        %v698 = vrot.slane %v697, 4
        %v700 = vshll.u32 %v385, 16
        %v702 = vrot.slane %v700, 5
        %v703 = vsel %vm391, %v698, %v702
        %v705 = vshrl.u32 %v351, 16
        %v707 = vrot.slane %v705, 4
        %v708 = vshll.u32 %v351, 16
        %v710 = vrot.slane %v708, 5
        %v711 = vor.u32 %v707, %v710
        %v712 = vrot.slane %v711, 4
        %v714 = vshll.u32 %v352, 16
        %v716 = vrot.slane %v714, 5
        %v717 = vsel %vm391, %v712, %v716
        %v718 = vshrl.u32 %v352, 16
        %v720 = vrot.slane %v718, 4
        %v721 = vor.u32 %v720, %v716
        %v722 = vrot.slane %v721, 4
        %v724 = vshll.u32 %v386, 16
        %v726 = vrot.slane %v724, 5
        %v727 = vsel %vm391, %v722, %v726
        %v729 = vshrl.u32 %v353, 16
        %v731 = vrot.slane %v729, 4
        %v732 = vshll.u32 %v353, 16
        %v734 = vrot.slane %v732, 5
        %v735 = vor.u32 %v731, %v734
        %v736 = vrot.slane %v735, 4
        %v738 = vshll.u32 %v354, 16
        %v740 = vrot.slane %v738, 5
        %v741 = vsel %vm391, %v736, %v740
        %v742 = vshrl.u32 %v354, 16
        %v744 = vrot.slane %v742, 4
        %v745 = vor.u32 %v744, %v740
        %v746 = vrot.slane %v745, 4
        %v748 = vshll.u32 %v387, 16
        %v750 = vrot.slane %v748, 5
        %v751 = vsel %vm391, %v746, %v750
        %v753 = vshrl.u32 %v355, 16
        %v755 = vrot.slane %v753, 4
        %v756 = vshll.u32 %v355, 16
        %v758 = vrot.slane %v756, 5
        %v759 = vor.u32 %v755, %v758
        %v760 = vrot.slane %v759, 4
        %v762 = vshll.u32 %v356, 16
        %v764 = vrot.slane %v762, 5
        %v765 = vsel %vm391, %v760, %v764
        %v766 = vshrl.u32 %v356, 16
        %v768 = vrot.slane %v766, 4
        %v769 = vor.u32 %v768, %v764
        %v770 = vrot.slane %v769, 4
        %v772 = vshll.u32 %v388, 16
        %v774 = vrot.slane %v772, 5
        %v775 = vsel %vm391, %v770, %v774
        %s776 = scalar_lea.vmem %s2, 64
        %v777 = vld [vmem:[%s776] sm:$0xf]
        %v778 = vld [vmem:[%s776 + $0x4] sm:$0xf]
        %v779 = vld [vmem:[%s776 + $0x8] sm:$0xf]
        %v780 = vld [vmem:[%s776 + $0xc] sm:$0xf]
        %v781 = vld [vmem:[%s776 + $0x10] sm:$0xf]
        %v782 = vld [vmem:[%s776 + $0x14] sm:$0xf]
        %v783 = vld [vmem:[%s776 + $0x18] sm:$0xf]
        %v784 = vld [vmem:[%s776 + $0x1c] sm:$0xf]
        %v785 = vld [vmem:[%s776 + $0x20] sm:$0xf]
        %v786 = vld [vmem:[%s776 + $0x24] sm:$0xf]
        %v787 = vld [vmem:[%s776 + $0x28] sm:$0xf]
        %v788 = vld [vmem:[%s776 + $0x2c] sm:$0xf]
        %v789 = vld [vmem:[%s776 + $0x30] sm:$0xf]
        %v790 = vld [vmem:[%s776 + $0x34] sm:$0xf]
        %v791 = vld [vmem:[%s776 + $0x38] sm:$0xf]
        %v792 = vld [vmem:[%s776 + $0x3c] sm:$0xf]
        %v793 = vunpack.c.l.b16 %v405
        %v794 = vunpack.c.l.b16 %v415
        %v795 = vunpack.c.l.b16 %v429
        %v796 = vunpack.c.l.b16 %v439
        %v797 = vunpack.c.l.b16 %v453
        %v798 = vunpack.c.l.b16 %v463
        %v799 = vunpack.c.l.b16 %v477
        %v800 = vunpack.c.l.b16 %v487
        %v801 = vunpack.c.l.b16 %v501
        %v802 = vunpack.c.l.b16 %v511
        %v803 = vunpack.c.l.b16 %v525
        %v804 = vunpack.c.l.b16 %v535
        %v805 = vunpack.c.l.b16 %v549
        %v806 = vunpack.c.l.b16 %v559
        %v807 = vunpack.c.l.b16 %v573
        %v808 = vunpack.c.l.b16 %v583
        %v809 = vunpack.c.l.b16 %v597
        %v810 = vunpack.c.l.b16 %v607
        %v811 = vunpack.c.l.b16 %v621
        %v812 = vunpack.c.l.b16 %v631
        %v813 = vunpack.c.l.b16 %v645
        %v814 = vunpack.c.l.b16 %v655
        %v815 = vunpack.c.l.b16 %v669
        %v816 = vunpack.c.l.b16 %v679
        %v817 = vunpack.c.l.b16 %v693
        %v818 = vunpack.c.l.b16 %v703
        %v819 = vunpack.c.l.b16 %v717
        %v820 = vunpack.c.l.b16 %v727
        %v821 = vunpack.c.l.b16 %v741
        %v822 = vunpack.c.l.b16 %v751
        %v823 = vunpack.c.l.b16 %v765
        %v824 = vunpack.c.l.b16 %v775
        %v825 = vpack.c.b16 %v794, %v793
        %v826 = vpack.c.b16 %v796, %v795
        %v827 = vpack.c.b16 %v798, %v797
        %v828 = vpack.c.b16 %v800, %v799
        %v829 = vpack.c.b16 %v802, %v801
        %v830 = vpack.c.b16 %v804, %v803
        %v831 = vpack.c.b16 %v806, %v805
        %v832 = vpack.c.b16 %v808, %v807
        %v833 = vpack.c.b16 %v810, %v809
        %v834 = vpack.c.b16 %v812, %v811
        %v835 = vpack.c.b16 %v814, %v813
        %v836 = vpack.c.b16 %v816, %v815
        %v837 = vpack.c.b16 %v818, %v817
        %v838 = vpack.c.b16 %v820, %v819
        %v839 = vpack.c.b16 %v822, %v821
        %v840 = vpack.c.b16 %v824, %v823
        %v873 = vunpack.c.l.b16 %v777
        %v874 = vunpack.c.l.b16 %v778
        %v875 = vunpack.c.l.b16 %v779
        %v876 = vunpack.c.l.b16 %v780
        %v877 = vunpack.c.l.b16 %v781
        %v878 = vunpack.c.l.b16 %v782
        %v879 = vunpack.c.l.b16 %v783
        %v880 = vunpack.c.l.b16 %v784
        %v881 = vunpack.c.l.b16 %v785
        %v882 = vunpack.c.l.b16 %v786
        %v883 = vunpack.c.l.b16 %v787
        %v884 = vunpack.c.l.b16 %v788
        %v885 = vunpack.c.l.b16 %v789
        %v886 = vunpack.c.l.b16 %v790
        %v887 = vunpack.c.l.b16 %v791
        %v888 = vunpack.c.l.b16 %v792
        %v889 = vpack.c.b16 %v874, %v873
        %v890 = vpack.c.b16 %v876, %v875
        %v891 = vpack.c.b16 %v878, %v877
        %v892 = vpack.c.b16 %v880, %v879
        %v893 = vpack.c.b16 %v882, %v881
        %v894 = vpack.c.b16 %v884, %v883
        %v895 = vpack.c.b16 %v886, %v885
        %v896 = vpack.c.b16 %v888, %v887
        %905 = vmatprep.subr.bf16.mxu0 0
        %906 = vmatpush1.bf16.msra.mxu0 %v896
        %907 = vmatprep.subr.bf16.mxu0 0
        %908 = vmatpush1.bf16.msra.mxu0 %v895
        %909 = vmatprep.subr.bf16.mxu0 0
        %910 = vmatpush1.bf16.msra.mxu0 %v894
        %911 = vmatprep.subr.bf16.mxu0 0
        %912 = vmatpush1.bf16.msra.mxu0 %v893
        %913 = vmatprep.subr.bf16.mxu0 0
        %914 = vmatpush1.bf16.msra.mxu0 %v892
        %915 = vmatprep.subr.bf16.mxu0 0
        %916 = vmatpush1.bf16.msra.mxu0 %v891
        %917 = vmatprep.subr.bf16.mxu0 0
        %918 = vmatpush1.bf16.msra.mxu0 %v890
        %919 = vmatprep.subr.bf16.mxu0 0
        %920 = vmatpush1.bf16.msra.mxu0 %v889
        %921 = vmatprep.subr.bf16.mxu0 0
        %922 = vmatpush2.bf16.msra.mxu0 0
        %923 = vmatprep.subr.bf16.mxu0 0
        %924 = vmatpush2.bf16.msra.mxu0 0
        %925 = vmatprep.subr.bf16.mxu0 0
        %926 = vmatpush2.bf16.msra.mxu0 0
        %927 = vmatprep.subr.bf16.mxu0 0
        %928 = vmatpush2.bf16.msra.mxu0 0
        %929 = vmatprep.subr.bf16.mxu0 0
        %930 = vmatpush2.bf16.msra.mxu0 0
        %931 = vmatprep.subr.bf16.mxu0 0
        %932 = vmatpush2.bf16.msra.mxu0 0
        %933 = vmatprep.subr.bf16.mxu0 0
        %934 = vmatpush2.bf16.msra.mxu0 0
        %935 = vmatprep.subr.bf16.mxu0 0
        %936 = vmatpush2.bf16.msra.mxu0 0
        %937 = vmatprep.mubr.bf16.mxu0 0
        %938 = vmatmul.mubr.bf16.gmra.mxu0 %v825
        %v939 = vpop.f32.mrf.mxu0
        %v940 = vadd.f32 0.0, %v939
        %v941 = vpop.f32.mrf.mxu0
        %v942 = vpop.f32.mrf.mxu0
        %v943 = vadd.f32 0.0, %v942
        %v944 = vpop.f32.mrf.mxu0
        %945 = vmatprep.mubr.bf16.mxu0 0
        %946 = vmatmul.mubr.bf16.gmra.mxu0 %v826
        %v947 = vpop.f32.mrf.mxu0
        %v948 = vadd.f32 0.0, %v947
        %v949 = vpop.f32.mrf.mxu0
        %v950 = vpop.f32.mrf.mxu0
        %v951 = vadd.f32 0.0, %v950
        %v952 = vpop.f32.mrf.mxu0
        %953 = vmatprep.mubr.bf16.mxu0 0
        %954 = vmatmul.mubr.bf16.gmra.mxu0 %v827
        %v955 = vpop.f32.mrf.mxu0
        %v956 = vadd.f32 0.0, %v955
        %v957 = vpop.f32.mrf.mxu0
        %v958 = vpop.f32.mrf.mxu0
        %v959 = vadd.f32 0.0, %v958
        %v960 = vpop.f32.mrf.mxu0
        %961 = vmatprep.mubr.bf16.mxu0 0
        %962 = vmatmul.mubr.bf16.gmra.mxu0 %v828
        %v963 = vpop.f32.mrf.mxu0
        %v964 = vadd.f32 0.0, %v963
        %v965 = vpop.f32.mrf.mxu0
        %v966 = vpop.f32.mrf.mxu0
        %v967 = vadd.f32 0.0, %v966
        %v968 = vpop.f32.mrf.mxu0
        %969 = vmatprep.mubr.bf16.mxu0 0
        %970 = vmatmul.mubr.bf16.gmra.mxu0 %v829
        %v971 = vpop.f32.mrf.mxu0
        %v972 = vadd.f32 0.0, %v971
        %v973 = vpop.f32.mrf.mxu0
        %v974 = vpop.f32.mrf.mxu0
        %v975 = vadd.f32 0.0, %v974
        %v976 = vpop.f32.mrf.mxu0
        %977 = vmatprep.mubr.bf16.mxu0 0
        %978 = vmatmul.mubr.bf16.gmra.mxu0 %v830
        %v979 = vpop.f32.mrf.mxu0
        %v980 = vadd.f32 0.0, %v979
        %v981 = vpop.f32.mrf.mxu0
        %v982 = vpop.f32.mrf.mxu0
        %v983 = vadd.f32 0.0, %v982
        %v984 = vpop.f32.mrf.mxu0
        %985 = vmatprep.mubr.bf16.mxu0 0
        %986 = vmatmul.mubr.bf16.gmra.mxu0 %v831
        %v987 = vpop.f32.mrf.mxu0
        %v988 = vadd.f32 0.0, %v987
        %v989 = vpop.f32.mrf.mxu0
        %v990 = vpop.f32.mrf.mxu0
        %v991 = vadd.f32 0.0, %v990
        %v992 = vpop.f32.mrf.mxu0
        %993 = vmatprep.mubr.bf16.mxu0 0
        %994 = vmatmul.mubr.bf16.gmra.mxu0 %v832
        %v995 = vpop.f32.mrf.mxu0
        %v996 = vadd.f32 0.0, %v995
        %v997 = vpop.f32.mrf.mxu0
        %v998 = vpop.f32.mrf.mxu0
        %v999 = vadd.f32 0.0, %v998
        %v1000 = vpop.f32.mrf.mxu0
        %1001 = vmatprep.mubr.bf16.mxu0 0
        %1002 = vmatmul.mubr.bf16.gmra.mxu0 %v833
        %v1003 = vpop.f32.mrf.mxu0
        %v1004 = vadd.f32 0.0, %v1003
        %v1005 = vpop.f32.mrf.mxu0
        %v1006 = vpop.f32.mrf.mxu0
        %v1007 = vadd.f32 0.0, %v1006
        %v1008 = vpop.f32.mrf.mxu0
        %1009 = vmatprep.mubr.bf16.mxu0 0
        %1010 = vmatmul.mubr.bf16.gmra.mxu0 %v834
        %v1011 = vpop.f32.mrf.mxu0
        %v1012 = vadd.f32 0.0, %v1011
        %v1013 = vpop.f32.mrf.mxu0
        %v1014 = vpop.f32.mrf.mxu0
        %v1015 = vadd.f32 0.0, %v1014
        %v1016 = vpop.f32.mrf.mxu0
        %1017 = vmatprep.mubr.bf16.mxu0 0
        %1018 = vmatmul.mubr.bf16.gmra.mxu0 %v835
        %v1019 = vpop.f32.mrf.mxu0
        %v1020 = vadd.f32 0.0, %v1019
        %v1021 = vpop.f32.mrf.mxu0
        %v1022 = vpop.f32.mrf.mxu0
        %v1023 = vadd.f32 0.0, %v1022
        %v1024 = vpop.f32.mrf.mxu0
        %1025 = vmatprep.mubr.bf16.mxu0 0
        %1026 = vmatmul.mubr.bf16.gmra.mxu0 %v836
        %v1027 = vpop.f32.mrf.mxu0
        %v1028 = vadd.f32 0.0, %v1027
        %v1029 = vpop.f32.mrf.mxu0
        %v1030 = vpop.f32.mrf.mxu0
        %v1031 = vadd.f32 0.0, %v1030
        %v1032 = vpop.f32.mrf.mxu0
        %1033 = vmatprep.mubr.bf16.mxu0 0
        %1034 = vmatmul.mubr.bf16.gmra.mxu0 %v837
        %v1035 = vpop.f32.mrf.mxu0
        %v1036 = vadd.f32 0.0, %v1035
        %v1037 = vpop.f32.mrf.mxu0
        %v1038 = vpop.f32.mrf.mxu0
        %v1039 = vadd.f32 0.0, %v1038
        %v1040 = vpop.f32.mrf.mxu0
        %1041 = vmatprep.mubr.bf16.mxu0 0
        %1042 = vmatmul.mubr.bf16.gmra.mxu0 %v838
        %v1043 = vpop.f32.mrf.mxu0
        %v1044 = vadd.f32 0.0, %v1043
        %v1045 = vpop.f32.mrf.mxu0
        %v1046 = vpop.f32.mrf.mxu0
        %v1047 = vadd.f32 0.0, %v1046
        %v1048 = vpop.f32.mrf.mxu0
        %1049 = vmatprep.mubr.bf16.mxu0 0
        %1050 = vmatmul.mubr.bf16.gmra.mxu0 %v839
        %v1051 = vpop.f32.mrf.mxu0
        %v1052 = vadd.f32 0.0, %v1051
        %v1053 = vpop.f32.mrf.mxu0
        %v1054 = vpop.f32.mrf.mxu0
        %v1055 = vadd.f32 0.0, %v1054
        %v1056 = vpop.f32.mrf.mxu0
        %1057 = vmatprep.mubr.bf16.mxu0 0
        %1058 = vmatmul.mubr.bf16.gmra.mxu0 %v840
        %v1059 = vpop.f32.mrf.mxu0
        %v1060 = vadd.f32 0.0, %v1059
        %v1061 = vpop.f32.mrf.mxu0
        %v1062 = vpop.f32.mrf.mxu0
        %v1063 = vadd.f32 0.0, %v1062
        %v1064 = vpop.f32.mrf.mxu0
        %1065 = vdwg.mxu0
        %v1098 = vunpack.c.l.b16 %v325
        %v1099 = vunpack.c.l.b16 %v326
        %v1100 = vunpack.c.l.b16 %v327
        %v1101 = vunpack.c.l.b16 %v328
        %v1102 = vunpack.c.l.b16 %v329
        %v1103 = vunpack.c.l.b16 %v330
        %v1104 = vunpack.c.l.b16 %v331
        %v1105 = vunpack.c.l.b16 %v332
        %v1106 = vunpack.c.l.b16 %v333
        %v1107 = vunpack.c.l.b16 %v334
        %v1108 = vunpack.c.l.b16 %v335
        %v1109 = vunpack.c.l.b16 %v336
        %v1110 = vunpack.c.l.b16 %v337
        %v1111 = vunpack.c.l.b16 %v338
        %v1112 = vunpack.c.l.b16 %v339
        %v1113 = vunpack.c.l.b16 %v340
        %v1114 = vunpack.c.l.b16 %v341
        %v1115 = vunpack.c.l.b16 %v342
        %v1116 = vunpack.c.l.b16 %v343
        %v1117 = vunpack.c.l.b16 %v344
        %v1118 = vunpack.c.l.b16 %v345
        %v1119 = vunpack.c.l.b16 %v346
        %v1120 = vunpack.c.l.b16 %v347
        %v1121 = vunpack.c.l.b16 %v348
        %v1122 = vunpack.c.l.b16 %v349
        %v1123 = vunpack.c.l.b16 %v350
        %v1124 = vunpack.c.l.b16 %v351
        %v1125 = vunpack.c.l.b16 %v352
        %v1126 = vunpack.c.l.b16 %v353
        %v1127 = vunpack.c.l.b16 %v354
        %v1128 = vunpack.c.l.b16 %v355
        %v1129 = vunpack.c.l.b16 %v356
        %v1130 = vpack.c.b16 %v1099, %v1098
        %v1131 = vpack.c.b16 %v1101, %v1100
        %v1132 = vpack.c.b16 %v1103, %v1102
        %v1133 = vpack.c.b16 %v1105, %v1104
        %v1134 = vpack.c.b16 %v1107, %v1106
        %v1135 = vpack.c.b16 %v1109, %v1108
        %v1136 = vpack.c.b16 %v1111, %v1110
        %v1137 = vpack.c.b16 %v1113, %v1112
        %v1138 = vpack.c.b16 %v1115, %v1114
        %v1139 = vpack.c.b16 %v1117, %v1116
        %v1140 = vpack.c.b16 %v1119, %v1118
        %v1141 = vpack.c.b16 %v1121, %v1120
        %v1142 = vpack.c.b16 %v1123, %v1122
        %v1143 = vpack.c.b16 %v1125, %v1124
        %v1144 = vpack.c.b16 %v1127, %v1126
        %v1145 = vpack.c.b16 %v1129, %v1128
        %v1178 = vunpack.c.l.b16 %v357
        %v1179 = vunpack.c.l.b16 %v358
        %v1180 = vunpack.c.l.b16 %v359
        %v1181 = vunpack.c.l.b16 %v360
        %v1182 = vunpack.c.l.b16 %v361
        %v1183 = vunpack.c.l.b16 %v362
        %v1184 = vunpack.c.l.b16 %v363
        %v1185 = vunpack.c.l.b16 %v364
        %v1186 = vunpack.c.l.b16 %v365
        %v1187 = vunpack.c.l.b16 %v366
        %v1188 = vunpack.c.l.b16 %v367
        %v1189 = vunpack.c.l.b16 %v368
        %v1190 = vunpack.c.l.b16 %v369
        %v1191 = vunpack.c.l.b16 %v370
        %v1192 = vunpack.c.l.b16 %v371
        %v1193 = vunpack.c.l.b16 %v372
        %v1194 = vpack.c.b16 %v1179, %v1178
        %v1195 = vpack.c.b16 %v1181, %v1180
        %v1196 = vpack.c.b16 %v1183, %v1182
        %v1197 = vpack.c.b16 %v1185, %v1184
        %v1198 = vpack.c.b16 %v1187, %v1186
        %v1199 = vpack.c.b16 %v1189, %v1188
        %v1200 = vpack.c.b16 %v1191, %v1190
        %v1201 = vpack.c.b16 %v1193, %v1192
        %1210 = vmatprep.subr.bf16.mxu0 0
        %1211 = vmatpush1.bf16.msra.mxu0 %v1201
        %1212 = vmatprep.subr.bf16.mxu0 0
        %1213 = vmatpush1.bf16.msra.mxu0 %v1200
        %1214 = vmatprep.subr.bf16.mxu0 0
        %1215 = vmatpush1.bf16.msra.mxu0 %v1199
        %1216 = vmatprep.subr.bf16.mxu0 0
        %1217 = vmatpush1.bf16.msra.mxu0 %v1198
        %1218 = vmatprep.subr.bf16.mxu0 0
        %1219 = vmatpush1.bf16.msra.mxu0 %v1197
        %1220 = vmatprep.subr.bf16.mxu0 0
        %1221 = vmatpush1.bf16.msra.mxu0 %v1196
        %1222 = vmatprep.subr.bf16.mxu0 0
        %1223 = vmatpush1.bf16.msra.mxu0 %v1195
        %1224 = vmatprep.subr.bf16.mxu0 0
        %1225 = vmatpush1.bf16.msra.mxu0 %v1194
        %1226 = vmatprep.subr.bf16.mxu0 0
        %1227 = vmatpush2.bf16.msra.mxu0 0
        %1228 = vmatprep.subr.bf16.mxu0 0
        %1229 = vmatpush2.bf16.msra.mxu0 0
        %1230 = vmatprep.subr.bf16.mxu0 0
        %1231 = vmatpush2.bf16.msra.mxu0 0
        %1232 = vmatprep.subr.bf16.mxu0 0
        %1233 = vmatpush2.bf16.msra.mxu0 0
        %1234 = vmatprep.subr.bf16.mxu0 0
        %1235 = vmatpush2.bf16.msra.mxu0 0
        %1236 = vmatprep.subr.bf16.mxu0 0
        %1237 = vmatpush2.bf16.msra.mxu0 0
        %1238 = vmatprep.subr.bf16.mxu0 0
        %1239 = vmatpush2.bf16.msra.mxu0 0
        %1240 = vmatprep.subr.bf16.mxu0 0
        %1241 = vmatpush2.bf16.msra.mxu0 0
        %1242 = vmatprep.mubr.bf16.mxu0 0
        %1243 = vmatmul.mubr.bf16.gmra.mxu0 %v1130
        %v1244 = vpop.f32.mrf.mxu0
        %v1245 = vadd.f32 %v940, %v1244
        %v1246 = vpop.f32.mrf.mxu0
        %v1247 = vpop.f32.mrf.mxu0
        %v1248 = vadd.f32 %v943, %v1247
        %v1249 = vpop.f32.mrf.mxu0
        %1250 = vmatprep.mubr.bf16.mxu0 0
        %1251 = vmatmul.mubr.bf16.gmra.mxu0 %v1131
        %v1252 = vpop.f32.mrf.mxu0
        %v1253 = vadd.f32 %v948, %v1252
        %v1254 = vpop.f32.mrf.mxu0
        %v1255 = vpop.f32.mrf.mxu0
        %v1256 = vadd.f32 %v951, %v1255
        %v1257 = vpop.f32.mrf.mxu0
        %1258 = vmatprep.mubr.bf16.mxu0 0
        %1259 = vmatmul.mubr.bf16.gmra.mxu0 %v1132
        %v1260 = vpop.f32.mrf.mxu0
        %v1261 = vadd.f32 %v956, %v1260
        %v1262 = vpop.f32.mrf.mxu0
        %v1263 = vpop.f32.mrf.mxu0
        %v1264 = vadd.f32 %v959, %v1263
        %v1265 = vpop.f32.mrf.mxu0
        %1266 = vmatprep.mubr.bf16.mxu0 0
        %1267 = vmatmul.mubr.bf16.gmra.mxu0 %v1133
        %v1268 = vpop.f32.mrf.mxu0
        %v1269 = vadd.f32 %v964, %v1268
        %v1270 = vpop.f32.mrf.mxu0
        %v1271 = vpop.f32.mrf.mxu0
        %v1272 = vadd.f32 %v967, %v1271
        %v1273 = vpop.f32.mrf.mxu0
        %1274 = vmatprep.mubr.bf16.mxu0 0
        %1275 = vmatmul.mubr.bf16.gmra.mxu0 %v1134
        %v1276 = vpop.f32.mrf.mxu0
        %v1277 = vadd.f32 %v972, %v1276
        %v1278 = vpop.f32.mrf.mxu0
        %v1279 = vpop.f32.mrf.mxu0
        %v1280 = vadd.f32 %v975, %v1279
        %v1281 = vpop.f32.mrf.mxu0
        %1282 = vmatprep.mubr.bf16.mxu0 0
        %1283 = vmatmul.mubr.bf16.gmra.mxu0 %v1135
        %v1284 = vpop.f32.mrf.mxu0
        %v1285 = vadd.f32 %v980, %v1284
        %v1286 = vpop.f32.mrf.mxu0
        %v1287 = vpop.f32.mrf.mxu0
        %v1288 = vadd.f32 %v983, %v1287
        %v1289 = vpop.f32.mrf.mxu0
        %1290 = vmatprep.mubr.bf16.mxu0 0
        %1291 = vmatmul.mubr.bf16.gmra.mxu0 %v1136
        %v1292 = vpop.f32.mrf.mxu0
        %v1293 = vadd.f32 %v988, %v1292
        %v1294 = vpop.f32.mrf.mxu0
        %v1295 = vpop.f32.mrf.mxu0
        %v1296 = vadd.f32 %v991, %v1295
        %v1297 = vpop.f32.mrf.mxu0
        %1298 = vmatprep.mubr.bf16.mxu0 0
        %1299 = vmatmul.mubr.bf16.gmra.mxu0 %v1137
        %v1300 = vpop.f32.mrf.mxu0
        %v1301 = vadd.f32 %v996, %v1300
        %v1302 = vpop.f32.mrf.mxu0
        %v1303 = vpop.f32.mrf.mxu0
        %v1304 = vadd.f32 %v999, %v1303
        %v1305 = vpop.f32.mrf.mxu0
        %1306 = vmatprep.mubr.bf16.mxu0 0
        %1307 = vmatmul.mubr.bf16.gmra.mxu0 %v1138
        %v1308 = vpop.f32.mrf.mxu0
        %v1309 = vadd.f32 %v1004, %v1308
        %v1310 = vpop.f32.mrf.mxu0
        %v1311 = vpop.f32.mrf.mxu0
        %v1312 = vadd.f32 %v1007, %v1311
        %v1313 = vpop.f32.mrf.mxu0
        %1314 = vmatprep.mubr.bf16.mxu0 0
        %1315 = vmatmul.mubr.bf16.gmra.mxu0 %v1139
        %v1316 = vpop.f32.mrf.mxu0
        %v1317 = vadd.f32 %v1012, %v1316
        %v1318 = vpop.f32.mrf.mxu0
        %v1319 = vpop.f32.mrf.mxu0
        %v1320 = vadd.f32 %v1015, %v1319
        %v1321 = vpop.f32.mrf.mxu0
        %1322 = vmatprep.mubr.bf16.mxu0 0
        %1323 = vmatmul.mubr.bf16.gmra.mxu0 %v1140
        %v1324 = vpop.f32.mrf.mxu0
        %v1325 = vadd.f32 %v1020, %v1324
        %v1326 = vpop.f32.mrf.mxu0
        %v1327 = vpop.f32.mrf.mxu0
        %v1328 = vadd.f32 %v1023, %v1327
        %v1329 = vpop.f32.mrf.mxu0
        %1330 = vmatprep.mubr.bf16.mxu0 0
        %1331 = vmatmul.mubr.bf16.gmra.mxu0 %v1141
        %v1332 = vpop.f32.mrf.mxu0
        %v1333 = vadd.f32 %v1028, %v1332
        %v1334 = vpop.f32.mrf.mxu0
        %v1335 = vpop.f32.mrf.mxu0
        %v1336 = vadd.f32 %v1031, %v1335
        %v1337 = vpop.f32.mrf.mxu0
        %1338 = vmatprep.mubr.bf16.mxu0 0
        %1339 = vmatmul.mubr.bf16.gmra.mxu0 %v1142
        %v1340 = vpop.f32.mrf.mxu0
        %v1341 = vadd.f32 %v1036, %v1340
        %v1342 = vpop.f32.mrf.mxu0
        %v1343 = vpop.f32.mrf.mxu0
        %v1344 = vadd.f32 %v1039, %v1343
        %v1345 = vpop.f32.mrf.mxu0
        %1346 = vmatprep.mubr.bf16.mxu0 0
        %1347 = vmatmul.mubr.bf16.gmra.mxu0 %v1143
        %v1348 = vpop.f32.mrf.mxu0
        %v1349 = vadd.f32 %v1044, %v1348
        %v1350 = vpop.f32.mrf.mxu0
        %v1351 = vpop.f32.mrf.mxu0
        %v1352 = vadd.f32 %v1047, %v1351
        %v1353 = vpop.f32.mrf.mxu0
        %1354 = vmatprep.mubr.bf16.mxu0 0
        %1355 = vmatmul.mubr.bf16.gmra.mxu0 %v1144
        %v1356 = vpop.f32.mrf.mxu0
        %v1357 = vadd.f32 %v1052, %v1356
        %v1358 = vpop.f32.mrf.mxu0
        %v1359 = vpop.f32.mrf.mxu0
        %v1360 = vadd.f32 %v1055, %v1359
        %v1361 = vpop.f32.mrf.mxu0
        %1362 = vmatprep.mubr.bf16.mxu0 0
        %1363 = vmatmul.mubr.bf16.gmra.mxu0 %v1145
        %v1364 = vpop.f32.mrf.mxu0
        %v1365 = vadd.f32 %v1060, %v1364
        %v1366 = vpop.f32.mrf.mxu0
        %v1367 = vpop.f32.mrf.mxu0
        %v1368 = vadd.f32 %v1063, %v1367
        %v1369 = vpop.f32.mrf.mxu0
        %1370 = vdwg.mxu0
        %v1371 = vld [vmem:[%s318] sm:$0xe]
        %v1372 = vld [vmem:[%s318 + $0xc] sm:$0xe]
        %v1373 = vld [vmem:[%s318 + $0x18] sm:$0xe]
        %v1374 = vld [vmem:[%s318 + $0x24] sm:$0xe]
        %v1375 = vld [vmem:[%s318 + $0x30] sm:$0xe]
        %v1376 = vld [vmem:[%s318 + $0x3c] sm:$0xe]
        %v1377 = vld [vmem:[%s318 + $0x48] sm:$0xe]
        %v1378 = vld [vmem:[%s318 + $0x54] sm:$0xe]
        %v1379 = vld [vmem:[%s318 + $0x60] sm:$0xe]
        %v1380 = vld [vmem:[%s318 + $0x6c] sm:$0xe]
        %v1381 = vld [vmem:[%s318 + $0x78] sm:$0xe]
        %v1382 = vld [vmem:[%s318 + $0x84] sm:$0xe]
        %v1383 = vld [vmem:[%s318 + $0x90] sm:$0xe]
        %v1384 = vld [vmem:[%s318 + $0x9c] sm:$0xe]
        %v1385 = vld [vmem:[%s318 + $0xa8] sm:$0xe]
        %v1386 = vld [vmem:[%s318 + $0xb4] sm:$0xe]
        %vm1419 = vcmask 1042432
        %vm1420 = vcmask 1046532
        %vm1421 = vmor %vm1419, %vm1420
        %v1422 = vrot.slane %v1371, 5
        %v1423 = vrot.slane %v1422, 4
        %v1424 = vrot.slane %v326, 5
        %v1425 = vsel %vm1421, %v1423, %v1424
        %v1426 = vrot.slane %v1424, 4
        %v1427 = vrot.slane %v373, 5
        %v1428 = vsel %vm1421, %v1426, %v1427
        %v1429 = vrot.slane %v1372, 5
        %v1430 = vrot.slane %v1429, 4
        %v1431 = vrot.slane %v328, 5
        %v1432 = vsel %vm1421, %v1430, %v1431
        %v1433 = vrot.slane %v1431, 4
        %v1434 = vrot.slane %v374, 5
        %v1435 = vsel %vm1421, %v1433, %v1434
        %v1436 = vrot.slane %v1373, 5
        %v1437 = vrot.slane %v1436, 4
        %v1438 = vrot.slane %v330, 5
        %v1439 = vsel %vm1421, %v1437, %v1438
        %v1440 = vrot.slane %v1438, 4
        %v1441 = vrot.slane %v375, 5
        %v1442 = vsel %vm1421, %v1440, %v1441
        %v1443 = vrot.slane %v1374, 5
        %v1444 = vrot.slane %v1443, 4
        %v1445 = vrot.slane %v332, 5
        %v1446 = vsel %vm1421, %v1444, %v1445
        %v1447 = vrot.slane %v1445, 4
        %v1448 = vrot.slane %v376, 5
        %v1449 = vsel %vm1421, %v1447, %v1448
        %v1450 = vrot.slane %v1375, 5
        %v1451 = vrot.slane %v1450, 4
        %v1452 = vrot.slane %v334, 5
        %v1453 = vsel %vm1421, %v1451, %v1452
        %v1454 = vrot.slane %v1452, 4
        %v1455 = vrot.slane %v377, 5
        %v1456 = vsel %vm1421, %v1454, %v1455
        %v1457 = vrot.slane %v1376, 5
        %v1458 = vrot.slane %v1457, 4
        %v1459 = vrot.slane %v336, 5
        %v1460 = vsel %vm1421, %v1458, %v1459
        %v1461 = vrot.slane %v1459, 4
        %v1462 = vrot.slane %v378, 5
        %v1463 = vsel %vm1421, %v1461, %v1462
        %v1464 = vrot.slane %v1377, 5
        %v1465 = vrot.slane %v1464, 4
        %v1466 = vrot.slane %v338, 5
        %v1467 = vsel %vm1421, %v1465, %v1466
        %v1468 = vrot.slane %v1466, 4
        %v1469 = vrot.slane %v379, 5
        %v1470 = vsel %vm1421, %v1468, %v1469
        %v1471 = vrot.slane %v1378, 5
        %v1472 = vrot.slane %v1471, 4
        %v1473 = vrot.slane %v340, 5
        %v1474 = vsel %vm1421, %v1472, %v1473
        %v1475 = vrot.slane %v1473, 4
        %v1476 = vrot.slane %v380, 5
        %v1477 = vsel %vm1421, %v1475, %v1476
        %v1478 = vrot.slane %v1379, 5
        %v1479 = vrot.slane %v1478, 4
        %v1480 = vrot.slane %v342, 5
        %v1481 = vsel %vm1421, %v1479, %v1480
        %v1482 = vrot.slane %v1480, 4
        %v1483 = vrot.slane %v381, 5
        %v1484 = vsel %vm1421, %v1482, %v1483
        %v1485 = vrot.slane %v1380, 5
        %v1486 = vrot.slane %v1485, 4
        %v1487 = vrot.slane %v344, 5
        %v1488 = vsel %vm1421, %v1486, %v1487
        %v1489 = vrot.slane %v1487, 4
        %v1490 = vrot.slane %v382, 5
        %v1491 = vsel %vm1421, %v1489, %v1490
        %v1492 = vrot.slane %v1381, 5
        %v1493 = vrot.slane %v1492, 4
        %v1494 = vrot.slane %v346, 5
        %v1495 = vsel %vm1421, %v1493, %v1494
        %v1496 = vrot.slane %v1494, 4
        %v1497 = vrot.slane %v383, 5
        %v1498 = vsel %vm1421, %v1496, %v1497
        %v1499 = vrot.slane %v1382, 5
        %v1500 = vrot.slane %v1499, 4
        %v1501 = vrot.slane %v348, 5
        %v1502 = vsel %vm1421, %v1500, %v1501
        %v1503 = vrot.slane %v1501, 4
        %v1504 = vrot.slane %v384, 5
        %v1505 = vsel %vm1421, %v1503, %v1504
        %v1506 = vrot.slane %v1383, 5
        %v1507 = vrot.slane %v1506, 4
        %v1508 = vrot.slane %v350, 5
        %v1509 = vsel %vm1421, %v1507, %v1508
        %v1510 = vrot.slane %v1508, 4
        %v1511 = vrot.slane %v385, 5
        %v1512 = vsel %vm1421, %v1510, %v1511
        %v1513 = vrot.slane %v1384, 5
        %v1514 = vrot.slane %v1513, 4
        %v1515 = vrot.slane %v352, 5
        %v1516 = vsel %vm1421, %v1514, %v1515
        %v1517 = vrot.slane %v1515, 4
        %v1518 = vrot.slane %v386, 5
        %v1519 = vsel %vm1421, %v1517, %v1518
        %v1520 = vrot.slane %v1385, 5
        %v1521 = vrot.slane %v1520, 4
        %v1522 = vrot.slane %v354, 5
        %v1523 = vsel %vm1421, %v1521, %v1522
        %v1524 = vrot.slane %v1522, 4
        %v1525 = vrot.slane %v387, 5
        %v1526 = vsel %vm1421, %v1524, %v1525
        %v1527 = vrot.slane %v1386, 5
        %v1528 = vrot.slane %v1527, 4
        %v1529 = vrot.slane %v356, 5
        %v1530 = vsel %vm1421, %v1528, %v1529
        %v1531 = vrot.slane %v1529, 4
        %v1532 = vrot.slane %v388, 5
        %v1533 = vsel %vm1421, %v1531, %v1532
        %s1534 = scalar_lea.vmem %s2, 128
        %v1535 = vld [vmem:[%s1534] sm:$0xf]
        %v1536 = vld [vmem:[%s1534 + $0x4] sm:$0xf]
        %v1537 = vld [vmem:[%s1534 + $0x8] sm:$0xf]
        %v1538 = vld [vmem:[%s1534 + $0xc] sm:$0xf]
        %v1539 = vld [vmem:[%s1534 + $0x10] sm:$0xf]
        %v1540 = vld [vmem:[%s1534 + $0x14] sm:$0xf]
        %v1541 = vld [vmem:[%s1534 + $0x18] sm:$0xf]
        %v1542 = vld [vmem:[%s1534 + $0x1c] sm:$0xf]
        %v1543 = vld [vmem:[%s1534 + $0x20] sm:$0xf]
        %v1544 = vld [vmem:[%s1534 + $0x24] sm:$0xf]
        %v1545 = vld [vmem:[%s1534 + $0x28] sm:$0xf]
        %v1546 = vld [vmem:[%s1534 + $0x2c] sm:$0xf]
        %v1547 = vld [vmem:[%s1534 + $0x30] sm:$0xf]
        %v1548 = vld [vmem:[%s1534 + $0x34] sm:$0xf]
        %v1549 = vld [vmem:[%s1534 + $0x38] sm:$0xf]
        %v1550 = vld [vmem:[%s1534 + $0x3c] sm:$0xf]
        %v1551 = vunpack.c.l.b16 %v1425
        %v1552 = vunpack.c.l.b16 %v1428
        %v1553 = vunpack.c.l.b16 %v1432
        %v1554 = vunpack.c.l.b16 %v1435
        %v1555 = vunpack.c.l.b16 %v1439
        %v1556 = vunpack.c.l.b16 %v1442
        %v1557 = vunpack.c.l.b16 %v1446
        %v1558 = vunpack.c.l.b16 %v1449
        %v1559 = vunpack.c.l.b16 %v1453
        %v1560 = vunpack.c.l.b16 %v1456
        %v1561 = vunpack.c.l.b16 %v1460
        %v1562 = vunpack.c.l.b16 %v1463
        %v1563 = vunpack.c.l.b16 %v1467
        %v1564 = vunpack.c.l.b16 %v1470
        %v1565 = vunpack.c.l.b16 %v1474
        %v1566 = vunpack.c.l.b16 %v1477
        %v1567 = vunpack.c.l.b16 %v1481
        %v1568 = vunpack.c.l.b16 %v1484
        %v1569 = vunpack.c.l.b16 %v1488
        %v1570 = vunpack.c.l.b16 %v1491
        %v1571 = vunpack.c.l.b16 %v1495
        %v1572 = vunpack.c.l.b16 %v1498
        %v1573 = vunpack.c.l.b16 %v1502
        %v1574 = vunpack.c.l.b16 %v1505
        %v1575 = vunpack.c.l.b16 %v1509
        %v1576 = vunpack.c.l.b16 %v1512
        %v1577 = vunpack.c.l.b16 %v1516
        %v1578 = vunpack.c.l.b16 %v1519
        %v1579 = vunpack.c.l.b16 %v1523
        %v1580 = vunpack.c.l.b16 %v1526
        %v1581 = vunpack.c.l.b16 %v1530
        %v1582 = vunpack.c.l.b16 %v1533
        %v1583 = vpack.c.b16 %v1552, %v1551
        %v1584 = vpack.c.b16 %v1554, %v1553
        %v1585 = vpack.c.b16 %v1556, %v1555
        %v1586 = vpack.c.b16 %v1558, %v1557
        %v1587 = vpack.c.b16 %v1560, %v1559
        %v1588 = vpack.c.b16 %v1562, %v1561
        %v1589 = vpack.c.b16 %v1564, %v1563
        %v1590 = vpack.c.b16 %v1566, %v1565
        %v1591 = vpack.c.b16 %v1568, %v1567
        %v1592 = vpack.c.b16 %v1570, %v1569
        %v1593 = vpack.c.b16 %v1572, %v1571
        %v1594 = vpack.c.b16 %v1574, %v1573
        %v1595 = vpack.c.b16 %v1576, %v1575
        %v1596 = vpack.c.b16 %v1578, %v1577
        %v1597 = vpack.c.b16 %v1580, %v1579
        %v1598 = vpack.c.b16 %v1582, %v1581
        %v1631 = vunpack.c.l.b16 %v1535
        %v1632 = vunpack.c.l.b16 %v1536
        %v1633 = vunpack.c.l.b16 %v1537
        %v1634 = vunpack.c.l.b16 %v1538
        %v1635 = vunpack.c.l.b16 %v1539
        %v1636 = vunpack.c.l.b16 %v1540
        %v1637 = vunpack.c.l.b16 %v1541
        %v1638 = vunpack.c.l.b16 %v1542
        %v1639 = vunpack.c.l.b16 %v1543
        %v1640 = vunpack.c.l.b16 %v1544
        %v1641 = vunpack.c.l.b16 %v1545
        %v1642 = vunpack.c.l.b16 %v1546
        %v1643 = vunpack.c.l.b16 %v1547
        %v1644 = vunpack.c.l.b16 %v1548
        %v1645 = vunpack.c.l.b16 %v1549
        %v1646 = vunpack.c.l.b16 %v1550
        %v1647 = vpack.c.b16 %v1632, %v1631
        %v1648 = vpack.c.b16 %v1634, %v1633
        %v1649 = vpack.c.b16 %v1636, %v1635
        %v1650 = vpack.c.b16 %v1638, %v1637
        %v1651 = vpack.c.b16 %v1640, %v1639
        %v1652 = vpack.c.b16 %v1642, %v1641
        %v1653 = vpack.c.b16 %v1644, %v1643
        %v1654 = vpack.c.b16 %v1646, %v1645
        %1663 = vmatprep.subr.bf16.mxu0 0
        %1664 = vmatpush1.bf16.msra.mxu0 %v1654
        %1665 = vmatprep.subr.bf16.mxu0 0
        %1666 = vmatpush1.bf16.msra.mxu0 %v1653
        %1667 = vmatprep.subr.bf16.mxu0 0
        %1668 = vmatpush1.bf16.msra.mxu0 %v1652
        %1669 = vmatprep.subr.bf16.mxu0 0
        %1670 = vmatpush1.bf16.msra.mxu0 %v1651
        %1671 = vmatprep.subr.bf16.mxu0 0
        %1672 = vmatpush1.bf16.msra.mxu0 %v1650
        %1673 = vmatprep.subr.bf16.mxu0 0
        %1674 = vmatpush1.bf16.msra.mxu0 %v1649
        %1675 = vmatprep.subr.bf16.mxu0 0
        %1676 = vmatpush1.bf16.msra.mxu0 %v1648
        %1677 = vmatprep.subr.bf16.mxu0 0
        %1678 = vmatpush1.bf16.msra.mxu0 %v1647
        %1679 = vmatprep.subr.bf16.mxu0 0
        %1680 = vmatpush2.bf16.msra.mxu0 0
        %1681 = vmatprep.subr.bf16.mxu0 0
        %1682 = vmatpush2.bf16.msra.mxu0 0
        %1683 = vmatprep.subr.bf16.mxu0 0
        %1684 = vmatpush2.bf16.msra.mxu0 0
        %1685 = vmatprep.subr.bf16.mxu0 0
        %1686 = vmatpush2.bf16.msra.mxu0 0
        %1687 = vmatprep.subr.bf16.mxu0 0
        %1688 = vmatpush2.bf16.msra.mxu0 0
        %1689 = vmatprep.subr.bf16.mxu0 0
        %1690 = vmatpush2.bf16.msra.mxu0 0
        %1691 = vmatprep.subr.bf16.mxu0 0
        %1692 = vmatpush2.bf16.msra.mxu0 0
        %1693 = vmatprep.subr.bf16.mxu0 0
        %1694 = vmatpush2.bf16.msra.mxu0 0
        %1695 = vmatprep.mubr.bf16.mxu0 0
        %1696 = vmatmul.mubr.bf16.gmra.mxu0 %v1583
        %v1697 = vpop.f32.mrf.mxu0
        %v1698 = vadd.f32 0.0, %v1697
        %v1699 = vpop.f32.mrf.mxu0
        %v1700 = vpop.f32.mrf.mxu0
        %v1701 = vadd.f32 0.0, %v1700
        %v1702 = vpop.f32.mrf.mxu0
        %1703 = vmatprep.mubr.bf16.mxu0 0
        %1704 = vmatmul.mubr.bf16.gmra.mxu0 %v1584
        %v1705 = vpop.f32.mrf.mxu0
        %v1706 = vadd.f32 0.0, %v1705
        %v1707 = vpop.f32.mrf.mxu0
        %v1708 = vpop.f32.mrf.mxu0
        %v1709 = vadd.f32 0.0, %v1708
        %v1710 = vpop.f32.mrf.mxu0
        %1711 = vmatprep.mubr.bf16.mxu0 0
        %1712 = vmatmul.mubr.bf16.gmra.mxu0 %v1585
        %v1713 = vpop.f32.mrf.mxu0
        %v1714 = vadd.f32 0.0, %v1713
        %v1715 = vpop.f32.mrf.mxu0
        %v1716 = vpop.f32.mrf.mxu0
        %v1717 = vadd.f32 0.0, %v1716
        %v1718 = vpop.f32.mrf.mxu0
        %1719 = vmatprep.mubr.bf16.mxu0 0
        %1720 = vmatmul.mubr.bf16.gmra.mxu0 %v1586
        %v1721 = vpop.f32.mrf.mxu0
        %v1722 = vadd.f32 0.0, %v1721
        %v1723 = vpop.f32.mrf.mxu0
        %v1724 = vpop.f32.mrf.mxu0
        %v1725 = vadd.f32 0.0, %v1724
        %v1726 = vpop.f32.mrf.mxu0
        %1727 = vmatprep.mubr.bf16.mxu0 0
        %1728 = vmatmul.mubr.bf16.gmra.mxu0 %v1587
        %v1729 = vpop.f32.mrf.mxu0
        %v1730 = vadd.f32 0.0, %v1729
        %v1731 = vpop.f32.mrf.mxu0
        %v1732 = vpop.f32.mrf.mxu0
        %v1733 = vadd.f32 0.0, %v1732
        %v1734 = vpop.f32.mrf.mxu0
        %1735 = vmatprep.mubr.bf16.mxu0 0
        %1736 = vmatmul.mubr.bf16.gmra.mxu0 %v1588
        %v1737 = vpop.f32.mrf.mxu0
        %v1738 = vadd.f32 0.0, %v1737
        %v1739 = vpop.f32.mrf.mxu0
        %v1740 = vpop.f32.mrf.mxu0
        %v1741 = vadd.f32 0.0, %v1740
        %v1742 = vpop.f32.mrf.mxu0
        %1743 = vmatprep.mubr.bf16.mxu0 0
        %1744 = vmatmul.mubr.bf16.gmra.mxu0 %v1589
        %v1745 = vpop.f32.mrf.mxu0
        %v1746 = vadd.f32 0.0, %v1745
        %v1747 = vpop.f32.mrf.mxu0
        %v1748 = vpop.f32.mrf.mxu0
        %v1749 = vadd.f32 0.0, %v1748
        %v1750 = vpop.f32.mrf.mxu0
        %1751 = vmatprep.mubr.bf16.mxu0 0
        %1752 = vmatmul.mubr.bf16.gmra.mxu0 %v1590
        %v1753 = vpop.f32.mrf.mxu0
        %v1754 = vadd.f32 0.0, %v1753
        %v1755 = vpop.f32.mrf.mxu0
        %v1756 = vpop.f32.mrf.mxu0
        %v1757 = vadd.f32 0.0, %v1756
        %v1758 = vpop.f32.mrf.mxu0
        %1759 = vmatprep.mubr.bf16.mxu0 0
        %1760 = vmatmul.mubr.bf16.gmra.mxu0 %v1591
        %v1761 = vpop.f32.mrf.mxu0
        %v1762 = vadd.f32 0.0, %v1761
        %v1763 = vpop.f32.mrf.mxu0
        %v1764 = vpop.f32.mrf.mxu0
        %v1765 = vadd.f32 0.0, %v1764
        %v1766 = vpop.f32.mrf.mxu0
        %1767 = vmatprep.mubr.bf16.mxu0 0
        %1768 = vmatmul.mubr.bf16.gmra.mxu0 %v1592
        %v1769 = vpop.f32.mrf.mxu0
        %v1770 = vadd.f32 0.0, %v1769
        %v1771 = vpop.f32.mrf.mxu0
        %v1772 = vpop.f32.mrf.mxu0
        %v1773 = vadd.f32 0.0, %v1772
        %v1774 = vpop.f32.mrf.mxu0
        %1775 = vmatprep.mubr.bf16.mxu0 0
        %1776 = vmatmul.mubr.bf16.gmra.mxu0 %v1593
        %v1777 = vpop.f32.mrf.mxu0
        %v1778 = vadd.f32 0.0, %v1777
        %v1779 = vpop.f32.mrf.mxu0
        %v1780 = vpop.f32.mrf.mxu0
        %v1781 = vadd.f32 0.0, %v1780
        %v1782 = vpop.f32.mrf.mxu0
        %1783 = vmatprep.mubr.bf16.mxu0 0
        %1784 = vmatmul.mubr.bf16.gmra.mxu0 %v1594
        %v1785 = vpop.f32.mrf.mxu0
        %v1786 = vadd.f32 0.0, %v1785
        %v1787 = vpop.f32.mrf.mxu0
        %v1788 = vpop.f32.mrf.mxu0
        %v1789 = vadd.f32 0.0, %v1788
        %v1790 = vpop.f32.mrf.mxu0
        %1791 = vmatprep.mubr.bf16.mxu0 0
        %1792 = vmatmul.mubr.bf16.gmra.mxu0 %v1595
        %v1793 = vpop.f32.mrf.mxu0
        %v1794 = vadd.f32 0.0, %v1793
        %v1795 = vpop.f32.mrf.mxu0
        %v1796 = vpop.f32.mrf.mxu0
        %v1797 = vadd.f32 0.0, %v1796
        %v1798 = vpop.f32.mrf.mxu0
        %1799 = vmatprep.mubr.bf16.mxu0 0
        %1800 = vmatmul.mubr.bf16.gmra.mxu0 %v1596
        %v1801 = vpop.f32.mrf.mxu0
        %v1802 = vadd.f32 0.0, %v1801
        %v1803 = vpop.f32.mrf.mxu0
        %v1804 = vpop.f32.mrf.mxu0
        %v1805 = vadd.f32 0.0, %v1804
        %v1806 = vpop.f32.mrf.mxu0
        %1807 = vmatprep.mubr.bf16.mxu0 0
        %1808 = vmatmul.mubr.bf16.gmra.mxu0 %v1597
        %v1809 = vpop.f32.mrf.mxu0
        %v1810 = vadd.f32 0.0, %v1809
        %v1811 = vpop.f32.mrf.mxu0
        %v1812 = vpop.f32.mrf.mxu0
        %v1813 = vadd.f32 0.0, %v1812
        %v1814 = vpop.f32.mrf.mxu0
        %1815 = vmatprep.mubr.bf16.mxu0 0
        %1816 = vmatmul.mubr.bf16.gmra.mxu0 %v1598
        %v1817 = vpop.f32.mrf.mxu0
        %v1818 = vadd.f32 0.0, %v1817
        %v1819 = vpop.f32.mrf.mxu0
        %v1820 = vpop.f32.mrf.mxu0
        %v1821 = vadd.f32 0.0, %v1820
        %v1822 = vpop.f32.mrf.mxu0
        %1823 = vdwg.mxu0
        %v1824 = vadd.f32 %v1245, %v1698
        %v1825 = vadd.f32 %v1248, %v1701
        %v1826 = vadd.f32 %v1253, %v1706
        %v1827 = vadd.f32 %v1256, %v1709
        %v1828 = vadd.f32 %v1261, %v1714
        %v1829 = vadd.f32 %v1264, %v1717
        %v1830 = vadd.f32 %v1269, %v1722
        %v1831 = vadd.f32 %v1272, %v1725
        %v1832 = vadd.f32 %v1277, %v1730
        %v1833 = vadd.f32 %v1280, %v1733
        %v1834 = vadd.f32 %v1285, %v1738
        %v1835 = vadd.f32 %v1288, %v1741
        %v1836 = vadd.f32 %v1293, %v1746
        %v1837 = vadd.f32 %v1296, %v1749
        %v1838 = vadd.f32 %v1301, %v1754
        %v1839 = vadd.f32 %v1304, %v1757
        %v1840 = vadd.f32 %v1309, %v1762
        %v1841 = vadd.f32 %v1312, %v1765
        %v1842 = vadd.f32 %v1317, %v1770
        %v1843 = vadd.f32 %v1320, %v1773
        %v1844 = vadd.f32 %v1325, %v1778
        %v1845 = vadd.f32 %v1328, %v1781
        %v1846 = vadd.f32 %v1333, %v1786
        %v1847 = vadd.f32 %v1336, %v1789
        %v1848 = vadd.f32 %v1341, %v1794
        %v1849 = vadd.f32 %v1344, %v1797
        %v1850 = vadd.f32 %v1349, %v1802
        %v1851 = vadd.f32 %v1352, %v1805
        %v1852 = vadd.f32 %v1357, %v1810
        %v1853 = vadd.f32 %v1360, %v1813
        %v1854 = vadd.f32 %v1365, %v1818
        %v1855 = vadd.f32 %v1368, %v1821
        %s1856 = scalar_lea.vmem %s318, 12
        %v1857 = vld [vmem:[%s1856] sm:$0xf]
        %v1858 = vld [vmem:[%s1856 + $0x4] sm:$0xf]
        %v1859 = vld [vmem:[%s1856 + $0xc] sm:$0xf]
        %v1860 = vld [vmem:[%s1856 + $0x10] sm:$0xf]
        %v1861 = vld [vmem:[%s1856 + $0x18] sm:$0xf]
        %v1862 = vld [vmem:[%s1856 + $0x1c] sm:$0xf]
        %v1863 = vld [vmem:[%s1856 + $0x24] sm:$0xf]
        %v1864 = vld [vmem:[%s1856 + $0x28] sm:$0xf]
        %v1865 = vld [vmem:[%s1856 + $0x30] sm:$0xf]
        %v1866 = vld [vmem:[%s1856 + $0x34] sm:$0xf]
        %v1867 = vld [vmem:[%s1856 + $0x3c] sm:$0xf]
        %v1868 = vld [vmem:[%s1856 + $0x40] sm:$0xf]
        %v1869 = vld [vmem:[%s1856 + $0x48] sm:$0xf]
        %v1870 = vld [vmem:[%s1856 + $0x4c] sm:$0xf]
        %v1871 = vld [vmem:[%s1856 + $0x54] sm:$0xf]
        %v1872 = vld [vmem:[%s1856 + $0x58] sm:$0xf]
        %v1873 = vld [vmem:[%s1856 + $0x60] sm:$0xf]
        %v1874 = vld [vmem:[%s1856 + $0x64] sm:$0xf]
        %v1875 = vld [vmem:[%s1856 + $0x6c] sm:$0xf]
        %v1876 = vld [vmem:[%s1856 + $0x70] sm:$0xf]
        %v1877 = vld [vmem:[%s1856 + $0x78] sm:$0xf]
        %v1878 = vld [vmem:[%s1856 + $0x7c] sm:$0xf]
        %v1879 = vld [vmem:[%s1856 + $0x84] sm:$0xf]
        %v1880 = vld [vmem:[%s1856 + $0x88] sm:$0xf]
        %v1881 = vld [vmem:[%s1856 + $0x90] sm:$0xf]
        %v1882 = vld [vmem:[%s1856 + $0x94] sm:$0xf]
        %v1883 = vld [vmem:[%s1856 + $0x9c] sm:$0xf]
        %v1884 = vld [vmem:[%s1856 + $0xa0] sm:$0xf]
        %v1885 = vld [vmem:[%s1856 + $0xa8] sm:$0xf]
        %v1886 = vld [vmem:[%s1856 + $0xac] sm:$0xf]
        %v1887 = vld [vmem:[%s1856 + $0xb4] sm:$0xf]
        %v1888 = vld [vmem:[%s1856 + $0xb8] sm:$0xf]
        %s1889 = scalar_lea.vmem %s2, 192
        %v1890 = vld [vmem:[%s1889] sm:$0xf]
        %v1891 = vld [vmem:[%s1889 + $0x4] sm:$0xf]
        %v1892 = vld [vmem:[%s1889 + $0x8] sm:$0xf]
        %v1893 = vld [vmem:[%s1889 + $0xc] sm:$0xf]
        %v1894 = vld [vmem:[%s1889 + $0x10] sm:$0xf]
        %v1895 = vld [vmem:[%s1889 + $0x14] sm:$0xf]
        %v1896 = vld [vmem:[%s1889 + $0x18] sm:$0xf]
        %v1897 = vld [vmem:[%s1889 + $0x1c] sm:$0xf]
        %v1898 = vld [vmem:[%s1889 + $0x20] sm:$0xf]
        %v1899 = vld [vmem:[%s1889 + $0x24] sm:$0xf]
        %v1900 = vld [vmem:[%s1889 + $0x28] sm:$0xf]
        %v1901 = vld [vmem:[%s1889 + $0x2c] sm:$0xf]
        %v1902 = vld [vmem:[%s1889 + $0x30] sm:$0xf]
        %v1903 = vld [vmem:[%s1889 + $0x34] sm:$0xf]
        %v1904 = vld [vmem:[%s1889 + $0x38] sm:$0xf]
        %v1905 = vld [vmem:[%s1889 + $0x3c] sm:$0xf]
        %v1938 = vunpack.c.l.b16 %v1857
        %v1939 = vunpack.c.l.b16 %v1858
        %v1940 = vunpack.c.l.b16 %v1859
        %v1941 = vunpack.c.l.b16 %v1860
        %v1942 = vunpack.c.l.b16 %v1861
        %v1943 = vunpack.c.l.b16 %v1862
        %v1944 = vunpack.c.l.b16 %v1863
        %v1945 = vunpack.c.l.b16 %v1864
        %v1946 = vunpack.c.l.b16 %v1865
        %v1947 = vunpack.c.l.b16 %v1866
        %v1948 = vunpack.c.l.b16 %v1867
        %v1949 = vunpack.c.l.b16 %v1868
        %v1950 = vunpack.c.l.b16 %v1869
        %v1951 = vunpack.c.l.b16 %v1870
        %v1952 = vunpack.c.l.b16 %v1871
        %v1953 = vunpack.c.l.b16 %v1872
        %v1954 = vunpack.c.l.b16 %v1873
        %v1955 = vunpack.c.l.b16 %v1874
        %v1956 = vunpack.c.l.b16 %v1875
        %v1957 = vunpack.c.l.b16 %v1876
        %v1958 = vunpack.c.l.b16 %v1877
        %v1959 = vunpack.c.l.b16 %v1878
        %v1960 = vunpack.c.l.b16 %v1879
        %v1961 = vunpack.c.l.b16 %v1880
        %v1962 = vunpack.c.l.b16 %v1881
        %v1963 = vunpack.c.l.b16 %v1882
        %v1964 = vunpack.c.l.b16 %v1883
        %v1965 = vunpack.c.l.b16 %v1884
        %v1966 = vunpack.c.l.b16 %v1885
        %v1967 = vunpack.c.l.b16 %v1886
        %v1968 = vunpack.c.l.b16 %v1887
        %v1969 = vunpack.c.l.b16 %v1888
        %v1970 = vpack.c.b16 %v1939, %v1938
        %v1971 = vpack.c.b16 %v1941, %v1940
        %v1972 = vpack.c.b16 %v1943, %v1942
        %v1973 = vpack.c.b16 %v1945, %v1944
        %v1974 = vpack.c.b16 %v1947, %v1946
        %v1975 = vpack.c.b16 %v1949, %v1948
        %v1976 = vpack.c.b16 %v1951, %v1950
        %v1977 = vpack.c.b16 %v1953, %v1952
        %v1978 = vpack.c.b16 %v1955, %v1954
        %v1979 = vpack.c.b16 %v1957, %v1956
        %v1980 = vpack.c.b16 %v1959, %v1958
        %v1981 = vpack.c.b16 %v1961, %v1960
        %v1982 = vpack.c.b16 %v1963, %v1962
        %v1983 = vpack.c.b16 %v1965, %v1964
        %v1984 = vpack.c.b16 %v1967, %v1966
        %v1985 = vpack.c.b16 %v1969, %v1968
        %v2018 = vunpack.c.l.b16 %v1890
        %v2019 = vunpack.c.l.b16 %v1891
        %v2020 = vunpack.c.l.b16 %v1892
        %v2021 = vunpack.c.l.b16 %v1893
        %v2022 = vunpack.c.l.b16 %v1894
        %v2023 = vunpack.c.l.b16 %v1895
        %v2024 = vunpack.c.l.b16 %v1896
        %v2025 = vunpack.c.l.b16 %v1897
        %v2026 = vunpack.c.l.b16 %v1898
        %v2027 = vunpack.c.l.b16 %v1899
        %v2028 = vunpack.c.l.b16 %v1900
        %v2029 = vunpack.c.l.b16 %v1901
        %v2030 = vunpack.c.l.b16 %v1902
        %v2031 = vunpack.c.l.b16 %v1903
        %v2032 = vunpack.c.l.b16 %v1904
        %v2033 = vunpack.c.l.b16 %v1905
        %v2034 = vpack.c.b16 %v2019, %v2018
        %v2035 = vpack.c.b16 %v2021, %v2020
        %v2036 = vpack.c.b16 %v2023, %v2022
        %v2037 = vpack.c.b16 %v2025, %v2024
        %v2038 = vpack.c.b16 %v2027, %v2026
        %v2039 = vpack.c.b16 %v2029, %v2028
        %v2040 = vpack.c.b16 %v2031, %v2030
        %v2041 = vpack.c.b16 %v2033, %v2032
        %2050 = vmatprep.subr.bf16.mxu0 0
        %2051 = vmatpush1.bf16.msra.mxu0 %v2041
        %2052 = vmatprep.subr.bf16.mxu0 0
        %2053 = vmatpush1.bf16.msra.mxu0 %v2040
        %2054 = vmatprep.subr.bf16.mxu0 0
        %2055 = vmatpush1.bf16.msra.mxu0 %v2039
        %2056 = vmatprep.subr.bf16.mxu0 0
        %2057 = vmatpush1.bf16.msra.mxu0 %v2038
        %2058 = vmatprep.subr.bf16.mxu0 0
        %2059 = vmatpush1.bf16.msra.mxu0 %v2037
        %2060 = vmatprep.subr.bf16.mxu0 0
        %2061 = vmatpush1.bf16.msra.mxu0 %v2036
        %2062 = vmatprep.subr.bf16.mxu0 0
        %2063 = vmatpush1.bf16.msra.mxu0 %v2035
        %2064 = vmatprep.subr.bf16.mxu0 0
        %2065 = vmatpush1.bf16.msra.mxu0 %v2034
        %2066 = vmatprep.subr.bf16.mxu0 0
        %2067 = vmatpush2.bf16.msra.mxu0 0
        %2068 = vmatprep.subr.bf16.mxu0 0
        %2069 = vmatpush2.bf16.msra.mxu0 0
        %2070 = vmatprep.subr.bf16.mxu0 0
        %2071 = vmatpush2.bf16.msra.mxu0 0
        %2072 = vmatprep.subr.bf16.mxu0 0
        %2073 = vmatpush2.bf16.msra.mxu0 0
        %2074 = vmatprep.subr.bf16.mxu0 0
        %2075 = vmatpush2.bf16.msra.mxu0 0
        %2076 = vmatprep.subr.bf16.mxu0 0
        %2077 = vmatpush2.bf16.msra.mxu0 0
        %2078 = vmatprep.subr.bf16.mxu0 0
        %2079 = vmatpush2.bf16.msra.mxu0 0
        %2080 = vmatprep.subr.bf16.mxu0 0
        %2081 = vmatpush2.bf16.msra.mxu0 0
        %2082 = vmatprep.mubr.bf16.mxu0 0
        %2083 = vmatmul.mubr.bf16.gmra.mxu0 %v1970
        %v2084 = vpop.f32.mrf.mxu0
        %v2085 = vadd.f32 0.0, %v2084
        %v2086 = vpop.f32.mrf.mxu0
        %v2087 = vpop.f32.mrf.mxu0
        %v2088 = vadd.f32 0.0, %v2087
        %v2089 = vpop.f32.mrf.mxu0
        %2090 = vmatprep.mubr.bf16.mxu0 0
        %2091 = vmatmul.mubr.bf16.gmra.mxu0 %v1971
        %v2092 = vpop.f32.mrf.mxu0
        %v2093 = vadd.f32 0.0, %v2092
        %v2094 = vpop.f32.mrf.mxu0
        %v2095 = vpop.f32.mrf.mxu0
        %v2096 = vadd.f32 0.0, %v2095
        %v2097 = vpop.f32.mrf.mxu0
        %2098 = vmatprep.mubr.bf16.mxu0 0
        %2099 = vmatmul.mubr.bf16.gmra.mxu0 %v1972
        %v2100 = vpop.f32.mrf.mxu0
        %v2101 = vadd.f32 0.0, %v2100
        %v2102 = vpop.f32.mrf.mxu0
        %v2103 = vpop.f32.mrf.mxu0
        %v2104 = vadd.f32 0.0, %v2103
        %v2105 = vpop.f32.mrf.mxu0
        %2106 = vmatprep.mubr.bf16.mxu0 0
        %2107 = vmatmul.mubr.bf16.gmra.mxu0 %v1973
        %v2108 = vpop.f32.mrf.mxu0
        %v2109 = vadd.f32 0.0, %v2108
        %v2110 = vpop.f32.mrf.mxu0
        %v2111 = vpop.f32.mrf.mxu0
        %v2112 = vadd.f32 0.0, %v2111
        %v2113 = vpop.f32.mrf.mxu0
        %2114 = vmatprep.mubr.bf16.mxu0 0
        %2115 = vmatmul.mubr.bf16.gmra.mxu0 %v1974
        %v2116 = vpop.f32.mrf.mxu0
        %v2117 = vadd.f32 0.0, %v2116
        %v2118 = vpop.f32.mrf.mxu0
        %v2119 = vpop.f32.mrf.mxu0
        %v2120 = vadd.f32 0.0, %v2119
        %v2121 = vpop.f32.mrf.mxu0
        %2122 = vmatprep.mubr.bf16.mxu0 0
        %2123 = vmatmul.mubr.bf16.gmra.mxu0 %v1975
        %v2124 = vpop.f32.mrf.mxu0
        %v2125 = vadd.f32 0.0, %v2124
        %v2126 = vpop.f32.mrf.mxu0
        %v2127 = vpop.f32.mrf.mxu0
        %v2128 = vadd.f32 0.0, %v2127
        %v2129 = vpop.f32.mrf.mxu0
        %2130 = vmatprep.mubr.bf16.mxu0 0
        %2131 = vmatmul.mubr.bf16.gmra.mxu0 %v1976
        %v2132 = vpop.f32.mrf.mxu0
        %v2133 = vadd.f32 0.0, %v2132
        %v2134 = vpop.f32.mrf.mxu0
        %v2135 = vpop.f32.mrf.mxu0
        %v2136 = vadd.f32 0.0, %v2135
        %v2137 = vpop.f32.mrf.mxu0
        %2138 = vmatprep.mubr.bf16.mxu0 0
        %2139 = vmatmul.mubr.bf16.gmra.mxu0 %v1977
        %v2140 = vpop.f32.mrf.mxu0
        %v2141 = vadd.f32 0.0, %v2140
        %v2142 = vpop.f32.mrf.mxu0
        %v2143 = vpop.f32.mrf.mxu0
        %v2144 = vadd.f32 0.0, %v2143
        %v2145 = vpop.f32.mrf.mxu0
        %2146 = vmatprep.mubr.bf16.mxu0 0
        %2147 = vmatmul.mubr.bf16.gmra.mxu0 %v1978
        %v2148 = vpop.f32.mrf.mxu0
        %v2149 = vadd.f32 0.0, %v2148
        %v2150 = vpop.f32.mrf.mxu0
        %v2151 = vpop.f32.mrf.mxu0
        %v2152 = vadd.f32 0.0, %v2151
        %v2153 = vpop.f32.mrf.mxu0
        %2154 = vmatprep.mubr.bf16.mxu0 0
        %2155 = vmatmul.mubr.bf16.gmra.mxu0 %v1979
        %v2156 = vpop.f32.mrf.mxu0
        %v2157 = vadd.f32 0.0, %v2156
        %v2158 = vpop.f32.mrf.mxu0
        %v2159 = vpop.f32.mrf.mxu0
        %v2160 = vadd.f32 0.0, %v2159
        %v2161 = vpop.f32.mrf.mxu0
        %2162 = vmatprep.mubr.bf16.mxu0 0
        %2163 = vmatmul.mubr.bf16.gmra.mxu0 %v1980
        %v2164 = vpop.f32.mrf.mxu0
        %v2165 = vadd.f32 0.0, %v2164
        %v2166 = vpop.f32.mrf.mxu0
        %v2167 = vpop.f32.mrf.mxu0
        %v2168 = vadd.f32 0.0, %v2167
        %v2169 = vpop.f32.mrf.mxu0
        %2170 = vmatprep.mubr.bf16.mxu0 0
        %2171 = vmatmul.mubr.bf16.gmra.mxu0 %v1981
        %v2172 = vpop.f32.mrf.mxu0
        %v2173 = vadd.f32 0.0, %v2172
        %v2174 = vpop.f32.mrf.mxu0
        %v2175 = vpop.f32.mrf.mxu0
        %v2176 = vadd.f32 0.0, %v2175
        %v2177 = vpop.f32.mrf.mxu0
        %2178 = vmatprep.mubr.bf16.mxu0 0
        %2179 = vmatmul.mubr.bf16.gmra.mxu0 %v1982
        %v2180 = vpop.f32.mrf.mxu0
        %v2181 = vadd.f32 0.0, %v2180
        %v2182 = vpop.f32.mrf.mxu0
        %v2183 = vpop.f32.mrf.mxu0
        %v2184 = vadd.f32 0.0, %v2183
        %v2185 = vpop.f32.mrf.mxu0
        %2186 = vmatprep.mubr.bf16.mxu0 0
        %2187 = vmatmul.mubr.bf16.gmra.mxu0 %v1983
        %v2188 = vpop.f32.mrf.mxu0
        %v2189 = vadd.f32 0.0, %v2188
        %v2190 = vpop.f32.mrf.mxu0
        %v2191 = vpop.f32.mrf.mxu0
        %v2192 = vadd.f32 0.0, %v2191
        %v2193 = vpop.f32.mrf.mxu0
        %2194 = vmatprep.mubr.bf16.mxu0 0
        %2195 = vmatmul.mubr.bf16.gmra.mxu0 %v1984
        %v2196 = vpop.f32.mrf.mxu0
        %v2197 = vadd.f32 0.0, %v2196
        %v2198 = vpop.f32.mrf.mxu0
        %v2199 = vpop.f32.mrf.mxu0
        %v2200 = vadd.f32 0.0, %v2199
        %v2201 = vpop.f32.mrf.mxu0
        %2202 = vmatprep.mubr.bf16.mxu0 0
        %2203 = vmatmul.mubr.bf16.gmra.mxu0 %v1985
        %v2204 = vpop.f32.mrf.mxu0
        %v2205 = vadd.f32 0.0, %v2204
        %v2206 = vpop.f32.mrf.mxu0
        %v2207 = vpop.f32.mrf.mxu0
        %v2208 = vadd.f32 0.0, %v2207
        %v2209 = vpop.f32.mrf.mxu0
        %2210 = vdwg.mxu0
        %v2211 = vadd.f32 %v1824, %v2085
        %v2212 = vadd.f32 %v1825, %v2088
        %v2213 = vadd.f32 %v1826, %v2093
        %v2214 = vadd.f32 %v1827, %v2096
        %v2215 = vadd.f32 %v1828, %v2101
        %v2216 = vadd.f32 %v1829, %v2104
        %v2217 = vadd.f32 %v1830, %v2109
        %v2218 = vadd.f32 %v1831, %v2112
        %v2219 = vadd.f32 %v1832, %v2117
        %v2220 = vadd.f32 %v1833, %v2120
        %v2221 = vadd.f32 %v1834, %v2125
        %v2222 = vadd.f32 %v1835, %v2128
        %v2223 = vadd.f32 %v1836, %v2133
        %v2224 = vadd.f32 %v1837, %v2136
        %v2225 = vadd.f32 %v1838, %v2141
        %v2226 = vadd.f32 %v1839, %v2144
        %v2227 = vadd.f32 %v1840, %v2149
        %v2228 = vadd.f32 %v1841, %v2152
        %v2229 = vadd.f32 %v1842, %v2157
        %v2230 = vadd.f32 %v1843, %v2160
        %v2231 = vadd.f32 %v1844, %v2165
        %v2232 = vadd.f32 %v1845, %v2168
        %v2233 = vadd.f32 %v1846, %v2173
        %v2234 = vadd.f32 %v1847, %v2176
        %v2235 = vadd.f32 %v1848, %v2181
        %v2236 = vadd.f32 %v1849, %v2184
        %v2237 = vadd.f32 %v1850, %v2189
        %v2238 = vadd.f32 %v1851, %v2192
        %v2239 = vadd.f32 %v1852, %v2197
        %v2240 = vadd.f32 %v1853, %v2200
        %v2241 = vadd.f32 %v1854, %v2205
        %v2242 = vadd.f32 %v1855, %v2208
        %v2243 = vld [vmem:[%s1856] sm:$0xf]
        %v2244 = vld [vmem:[%s1856 + $0x4] sm:$0xf]
        %v2245 = vld [vmem:[%s1856 + $0x8] sm:$0x1]
        %v2246 = vld [vmem:[%s1856 + $0xc] sm:$0xf]
        %v2247 = vld [vmem:[%s1856 + $0x10] sm:$0xf]
        %v2248 = vld [vmem:[%s1856 + $0x14] sm:$0x1]
        %v2249 = vld [vmem:[%s1856 + $0x18] sm:$0xf]
        %v2250 = vld [vmem:[%s1856 + $0x1c] sm:$0xf]
        %v2251 = vld [vmem:[%s1856 + $0x20] sm:$0x1]
        %v2252 = vld [vmem:[%s1856 + $0x24] sm:$0xf]
        %v2253 = vld [vmem:[%s1856 + $0x28] sm:$0xf]
        %v2254 = vld [vmem:[%s1856 + $0x2c] sm:$0x1]
        %v2255 = vld [vmem:[%s1856 + $0x30] sm:$0xf]
        %v2256 = vld [vmem:[%s1856 + $0x34] sm:$0xf]
        %v2257 = vld [vmem:[%s1856 + $0x38] sm:$0x1]
        %v2258 = vld [vmem:[%s1856 + $0x3c] sm:$0xf]
        %v2259 = vld [vmem:[%s1856 + $0x40] sm:$0xf]
        %v2260 = vld [vmem:[%s1856 + $0x44] sm:$0x1]
        %v2261 = vld [vmem:[%s1856 + $0x48] sm:$0xf]
        %v2262 = vld [vmem:[%s1856 + $0x4c] sm:$0xf]
        %v2263 = vld [vmem:[%s1856 + $0x50] sm:$0x1]
        %v2264 = vld [vmem:[%s1856 + $0x54] sm:$0xf]
        %v2265 = vld [vmem:[%s1856 + $0x58] sm:$0xf]
        %v2266 = vld [vmem:[%s1856 + $0x5c] sm:$0x1]
        %v2267 = vld [vmem:[%s1856 + $0x60] sm:$0xf]
        %v2268 = vld [vmem:[%s1856 + $0x64] sm:$0xf]
        %v2269 = vld [vmem:[%s1856 + $0x68] sm:$0x1]
        %v2270 = vld [vmem:[%s1856 + $0x6c] sm:$0xf]
        %v2271 = vld [vmem:[%s1856 + $0x70] sm:$0xf]
        %v2272 = vld [vmem:[%s1856 + $0x74] sm:$0x1]
        %v2273 = vld [vmem:[%s1856 + $0x78] sm:$0xf]
        %v2274 = vld [vmem:[%s1856 + $0x7c] sm:$0xf]
        %v2275 = vld [vmem:[%s1856 + $0x80] sm:$0x1]
        %v2276 = vld [vmem:[%s1856 + $0x84] sm:$0xf]
        %v2277 = vld [vmem:[%s1856 + $0x88] sm:$0xf]
        %v2278 = vld [vmem:[%s1856 + $0x8c] sm:$0x1]
        %v2279 = vld [vmem:[%s1856 + $0x90] sm:$0xf]
        %v2280 = vld [vmem:[%s1856 + $0x94] sm:$0xf]
        %v2281 = vld [vmem:[%s1856 + $0x98] sm:$0x1]
        %v2282 = vld [vmem:[%s1856 + $0x9c] sm:$0xf]
        %v2283 = vld [vmem:[%s1856 + $0xa0] sm:$0xf]
        %v2284 = vld [vmem:[%s1856 + $0xa4] sm:$0x1]
        %v2285 = vld [vmem:[%s1856 + $0xa8] sm:$0xf]
        %v2286 = vld [vmem:[%s1856 + $0xac] sm:$0xf]
        %v2287 = vld [vmem:[%s1856 + $0xb0] sm:$0x1]
        %v2288 = vld [vmem:[%s1856 + $0xb4] sm:$0xf]
        %v2289 = vld [vmem:[%s1856 + $0xb8] sm:$0xf]
        %v2290 = vld [vmem:[%s1856 + $0xbc] sm:$0x1]
        %v2292 = vshrl.u32 %v2243, 16
        %v2294 = vrot.slane %v2292, 4
        %v2295 = vshll.u32 %v2243, 16
        %v2297 = vrot.slane %v2295, 5
        %v2298 = vor.u32 %v2294, %v2297
        %v2299 = vrot.slane %v2298, 4
        %v2301 = vshll.u32 %v2244, 16
        %v2303 = vrot.slane %v2301, 5
        %v2304 = vsel %vm391, %v2299, %v2303
        %v2305 = vshrl.u32 %v2244, 16
        %v2307 = vrot.slane %v2305, 4
        %v2308 = vor.u32 %v2307, %v2303
        %v2309 = vrot.slane %v2308, 4
        %v2311 = vshll.u32 %v2245, 16
        %v2313 = vrot.slane %v2311, 5
        %v2314 = vsel %vm391, %v2309, %v2313
        %v2316 = vshrl.u32 %v2246, 16
        %v2318 = vrot.slane %v2316, 4
        %v2319 = vshll.u32 %v2246, 16
        %v2321 = vrot.slane %v2319, 5
        %v2322 = vor.u32 %v2318, %v2321
        %v2323 = vrot.slane %v2322, 4
        %v2325 = vshll.u32 %v2247, 16
        %v2327 = vrot.slane %v2325, 5
        %v2328 = vsel %vm391, %v2323, %v2327
        %v2329 = vshrl.u32 %v2247, 16
        %v2331 = vrot.slane %v2329, 4
        %v2332 = vor.u32 %v2331, %v2327
        %v2333 = vrot.slane %v2332, 4
        %v2335 = vshll.u32 %v2248, 16
        %v2337 = vrot.slane %v2335, 5
        %v2338 = vsel %vm391, %v2333, %v2337
        %v2340 = vshrl.u32 %v2249, 16
        %v2342 = vrot.slane %v2340, 4
        %v2343 = vshll.u32 %v2249, 16
        %v2345 = vrot.slane %v2343, 5
        %v2346 = vor.u32 %v2342, %v2345
        %v2347 = vrot.slane %v2346, 4
        %v2349 = vshll.u32 %v2250, 16
        %v2351 = vrot.slane %v2349, 5
        %v2352 = vsel %vm391, %v2347, %v2351
        %v2353 = vshrl.u32 %v2250, 16
        %v2355 = vrot.slane %v2353, 4
        %v2356 = vor.u32 %v2355, %v2351
        %v2357 = vrot.slane %v2356, 4
        %v2359 = vshll.u32 %v2251, 16
        %v2361 = vrot.slane %v2359, 5
        %v2362 = vsel %vm391, %v2357, %v2361
        %v2364 = vshrl.u32 %v2252, 16
        %v2366 = vrot.slane %v2364, 4
        %v2367 = vshll.u32 %v2252, 16
        %v2369 = vrot.slane %v2367, 5
        %v2370 = vor.u32 %v2366, %v2369
        %v2371 = vrot.slane %v2370, 4
        %v2373 = vshll.u32 %v2253, 16
        %v2375 = vrot.slane %v2373, 5
        %v2376 = vsel %vm391, %v2371, %v2375
        %v2377 = vshrl.u32 %v2253, 16
        %v2379 = vrot.slane %v2377, 4
        %v2380 = vor.u32 %v2379, %v2375
        %v2381 = vrot.slane %v2380, 4
        %v2383 = vshll.u32 %v2254, 16
        %v2385 = vrot.slane %v2383, 5
        %v2386 = vsel %vm391, %v2381, %v2385
        %v2388 = vshrl.u32 %v2255, 16
        %v2390 = vrot.slane %v2388, 4
        %v2391 = vshll.u32 %v2255, 16
        %v2393 = vrot.slane %v2391, 5
        %v2394 = vor.u32 %v2390, %v2393
        %v2395 = vrot.slane %v2394, 4
        %v2397 = vshll.u32 %v2256, 16
        %v2399 = vrot.slane %v2397, 5
        %v2400 = vsel %vm391, %v2395, %v2399
        %v2401 = vshrl.u32 %v2256, 16
        %v2403 = vrot.slane %v2401, 4
        %v2404 = vor.u32 %v2403, %v2399
        %v2405 = vrot.slane %v2404, 4
        %v2407 = vshll.u32 %v2257, 16
        %v2409 = vrot.slane %v2407, 5
        %v2410 = vsel %vm391, %v2405, %v2409
        %v2412 = vshrl.u32 %v2258, 16
        %v2414 = vrot.slane %v2412, 4
        %v2415 = vshll.u32 %v2258, 16
        %v2417 = vrot.slane %v2415, 5
        %v2418 = vor.u32 %v2414, %v2417
        %v2419 = vrot.slane %v2418, 4
        %v2421 = vshll.u32 %v2259, 16
        %v2423 = vrot.slane %v2421, 5
        %v2424 = vsel %vm391, %v2419, %v2423
        %v2425 = vshrl.u32 %v2259, 16
        %v2427 = vrot.slane %v2425, 4
        %v2428 = vor.u32 %v2427, %v2423
        %v2429 = vrot.slane %v2428, 4
        %v2431 = vshll.u32 %v2260, 16
        %v2433 = vrot.slane %v2431, 5
        %v2434 = vsel %vm391, %v2429, %v2433
        %v2436 = vshrl.u32 %v2261, 16
        %v2438 = vrot.slane %v2436, 4
        %v2439 = vshll.u32 %v2261, 16
        %v2441 = vrot.slane %v2439, 5
        %v2442 = vor.u32 %v2438, %v2441
        %v2443 = vrot.slane %v2442, 4
        %v2445 = vshll.u32 %v2262, 16
        %v2447 = vrot.slane %v2445, 5
        %v2448 = vsel %vm391, %v2443, %v2447
        %v2449 = vshrl.u32 %v2262, 16
        %v2451 = vrot.slane %v2449, 4
        %v2452 = vor.u32 %v2451, %v2447
        %v2453 = vrot.slane %v2452, 4
        %v2455 = vshll.u32 %v2263, 16
        %v2457 = vrot.slane %v2455, 5
        %v2458 = vsel %vm391, %v2453, %v2457
        %v2460 = vshrl.u32 %v2264, 16
        %v2462 = vrot.slane %v2460, 4
        %v2463 = vshll.u32 %v2264, 16
        %v2465 = vrot.slane %v2463, 5
        %v2466 = vor.u32 %v2462, %v2465
        %v2467 = vrot.slane %v2466, 4
        %v2469 = vshll.u32 %v2265, 16
        %v2471 = vrot.slane %v2469, 5
        %v2472 = vsel %vm391, %v2467, %v2471
        %v2473 = vshrl.u32 %v2265, 16
        %v2475 = vrot.slane %v2473, 4
        %v2476 = vor.u32 %v2475, %v2471
        %v2477 = vrot.slane %v2476, 4
        %v2479 = vshll.u32 %v2266, 16
        %v2481 = vrot.slane %v2479, 5
        %v2482 = vsel %vm391, %v2477, %v2481
        %v2484 = vshrl.u32 %v2267, 16
        %v2486 = vrot.slane %v2484, 4
        %v2487 = vshll.u32 %v2267, 16
        %v2489 = vrot.slane %v2487, 5
        %v2490 = vor.u32 %v2486, %v2489
        %v2491 = vrot.slane %v2490, 4
        %v2493 = vshll.u32 %v2268, 16
        %v2495 = vrot.slane %v2493, 5
        %v2496 = vsel %vm391, %v2491, %v2495
        %v2497 = vshrl.u32 %v2268, 16
        %v2499 = vrot.slane %v2497, 4
        %v2500 = vor.u32 %v2499, %v2495
        %v2501 = vrot.slane %v2500, 4
        %v2503 = vshll.u32 %v2269, 16
        %v2505 = vrot.slane %v2503, 5
        %v2506 = vsel %vm391, %v2501, %v2505
        %v2508 = vshrl.u32 %v2270, 16
        %v2510 = vrot.slane %v2508, 4
        %v2511 = vshll.u32 %v2270, 16
        %v2513 = vrot.slane %v2511, 5
        %v2514 = vor.u32 %v2510, %v2513
        %v2515 = vrot.slane %v2514, 4
        %v2517 = vshll.u32 %v2271, 16
        %v2519 = vrot.slane %v2517, 5
        %v2520 = vsel %vm391, %v2515, %v2519
        %v2521 = vshrl.u32 %v2271, 16
        %v2523 = vrot.slane %v2521, 4
        %v2524 = vor.u32 %v2523, %v2519
        %v2525 = vrot.slane %v2524, 4
        %v2527 = vshll.u32 %v2272, 16
        %v2529 = vrot.slane %v2527, 5
        %v2530 = vsel %vm391, %v2525, %v2529
        %v2532 = vshrl.u32 %v2273, 16
        %v2534 = vrot.slane %v2532, 4
        %v2535 = vshll.u32 %v2273, 16
        %v2537 = vrot.slane %v2535, 5
        %v2538 = vor.u32 %v2534, %v2537
        %v2539 = vrot.slane %v2538, 4
        %v2541 = vshll.u32 %v2274, 16
        %v2543 = vrot.slane %v2541, 5
        %v2544 = vsel %vm391, %v2539, %v2543
        %v2545 = vshrl.u32 %v2274, 16
        %v2547 = vrot.slane %v2545, 4
        %v2548 = vor.u32 %v2547, %v2543
        %v2549 = vrot.slane %v2548, 4
        %v2551 = vshll.u32 %v2275, 16
        %v2553 = vrot.slane %v2551, 5
        %v2554 = vsel %vm391, %v2549, %v2553
        %v2556 = vshrl.u32 %v2276, 16
        %v2558 = vrot.slane %v2556, 4
        %v2559 = vshll.u32 %v2276, 16
        %v2561 = vrot.slane %v2559, 5
        %v2562 = vor.u32 %v2558, %v2561
        %v2563 = vrot.slane %v2562, 4
        %v2565 = vshll.u32 %v2277, 16
        %v2567 = vrot.slane %v2565, 5
        %v2568 = vsel %vm391, %v2563, %v2567
        %v2569 = vshrl.u32 %v2277, 16
        %v2571 = vrot.slane %v2569, 4
        %v2572 = vor.u32 %v2571, %v2567
        %v2573 = vrot.slane %v2572, 4
        %v2575 = vshll.u32 %v2278, 16
        %v2577 = vrot.slane %v2575, 5
        %v2578 = vsel %vm391, %v2573, %v2577
        %v2580 = vshrl.u32 %v2279, 16
        %v2582 = vrot.slane %v2580, 4
        %v2583 = vshll.u32 %v2279, 16
        %v2585 = vrot.slane %v2583, 5
        %v2586 = vor.u32 %v2582, %v2585
        %v2587 = vrot.slane %v2586, 4
        %v2589 = vshll.u32 %v2280, 16
        %v2591 = vrot.slane %v2589, 5
        %v2592 = vsel %vm391, %v2587, %v2591
        %v2593 = vshrl.u32 %v2280, 16
        %v2595 = vrot.slane %v2593, 4
        %v2596 = vor.u32 %v2595, %v2591
        %v2597 = vrot.slane %v2596, 4
        %v2599 = vshll.u32 %v2281, 16
        %v2601 = vrot.slane %v2599, 5
        %v2602 = vsel %vm391, %v2597, %v2601
        %v2604 = vshrl.u32 %v2282, 16
        %v2606 = vrot.slane %v2604, 4
        %v2607 = vshll.u32 %v2282, 16
        %v2609 = vrot.slane %v2607, 5
        %v2610 = vor.u32 %v2606, %v2609
        %v2611 = vrot.slane %v2610, 4
        %v2613 = vshll.u32 %v2283, 16
        %v2615 = vrot.slane %v2613, 5
        %v2616 = vsel %vm391, %v2611, %v2615
        %v2617 = vshrl.u32 %v2283, 16
        %v2619 = vrot.slane %v2617, 4
        %v2620 = vor.u32 %v2619, %v2615
        %v2621 = vrot.slane %v2620, 4
        %v2623 = vshll.u32 %v2284, 16
        %v2625 = vrot.slane %v2623, 5
        %v2626 = vsel %vm391, %v2621, %v2625
        %v2628 = vshrl.u32 %v2285, 16
        %v2630 = vrot.slane %v2628, 4
        %v2631 = vshll.u32 %v2285, 16
        %v2633 = vrot.slane %v2631, 5
        %v2634 = vor.u32 %v2630, %v2633
        %v2635 = vrot.slane %v2634, 4
        %v2637 = vshll.u32 %v2286, 16
        %v2639 = vrot.slane %v2637, 5
        %v2640 = vsel %vm391, %v2635, %v2639
        %v2641 = vshrl.u32 %v2286, 16
        %v2643 = vrot.slane %v2641, 4
        %v2644 = vor.u32 %v2643, %v2639
        %v2645 = vrot.slane %v2644, 4
        %v2647 = vshll.u32 %v2287, 16
        %v2649 = vrot.slane %v2647, 5
        %v2650 = vsel %vm391, %v2645, %v2649
        %v2652 = vshrl.u32 %v2288, 16
        %v2654 = vrot.slane %v2652, 4
        %v2655 = vshll.u32 %v2288, 16
        %v2657 = vrot.slane %v2655, 5
        %v2658 = vor.u32 %v2654, %v2657
        %v2659 = vrot.slane %v2658, 4
        %v2661 = vshll.u32 %v2289, 16
        %v2663 = vrot.slane %v2661, 5
        %v2664 = vsel %vm391, %v2659, %v2663
        %v2665 = vshrl.u32 %v2289, 16
        %v2667 = vrot.slane %v2665, 4
        %v2668 = vor.u32 %v2667, %v2663
        %v2669 = vrot.slane %v2668, 4
        %v2671 = vshll.u32 %v2290, 16
        %v2673 = vrot.slane %v2671, 5
        %v2674 = vsel %vm391, %v2669, %v2673
        %s2675 = scalar_lea.vmem %s2, 256
        %v2676 = vld [vmem:[%s2675] sm:$0xf]
        %v2677 = vld [vmem:[%s2675 + $0x4] sm:$0xf]
        %v2678 = vld [vmem:[%s2675 + $0x8] sm:$0xf]
        %v2679 = vld [vmem:[%s2675 + $0xc] sm:$0xf]
        %v2680 = vld [vmem:[%s2675 + $0x10] sm:$0xf]
        %v2681 = vld [vmem:[%s2675 + $0x14] sm:$0xf]
        %v2682 = vld [vmem:[%s2675 + $0x18] sm:$0xf]
        %v2683 = vld [vmem:[%s2675 + $0x1c] sm:$0xf]
        %v2684 = vld [vmem:[%s2675 + $0x20] sm:$0xf]
        %v2685 = vld [vmem:[%s2675 + $0x24] sm:$0xf]
        %v2686 = vld [vmem:[%s2675 + $0x28] sm:$0xf]
        %v2687 = vld [vmem:[%s2675 + $0x2c] sm:$0xf]
        %v2688 = vld [vmem:[%s2675 + $0x30] sm:$0xf]
        %v2689 = vld [vmem:[%s2675 + $0x34] sm:$0xf]
        %v2690 = vld [vmem:[%s2675 + $0x38] sm:$0xf]
        %v2691 = vld [vmem:[%s2675 + $0x3c] sm:$0xf]
        %v2692 = vunpack.c.l.b16 %v2304
        %v2693 = vunpack.c.l.b16 %v2314
        %v2694 = vunpack.c.l.b16 %v2328
        %v2695 = vunpack.c.l.b16 %v2338
        %v2696 = vunpack.c.l.b16 %v2352
        %v2697 = vunpack.c.l.b16 %v2362
        %v2698 = vunpack.c.l.b16 %v2376
        %v2699 = vunpack.c.l.b16 %v2386
        %v2700 = vunpack.c.l.b16 %v2400
        %v2701 = vunpack.c.l.b16 %v2410
        %v2702 = vunpack.c.l.b16 %v2424
        %v2703 = vunpack.c.l.b16 %v2434
        %v2704 = vunpack.c.l.b16 %v2448
        %v2705 = vunpack.c.l.b16 %v2458
        %v2706 = vunpack.c.l.b16 %v2472
        %v2707 = vunpack.c.l.b16 %v2482
        %v2708 = vunpack.c.l.b16 %v2496
        %v2709 = vunpack.c.l.b16 %v2506
        %v2710 = vunpack.c.l.b16 %v2520
        %v2711 = vunpack.c.l.b16 %v2530
        %v2712 = vunpack.c.l.b16 %v2544
        %v2713 = vunpack.c.l.b16 %v2554
        %v2714 = vunpack.c.l.b16 %v2568
        %v2715 = vunpack.c.l.b16 %v2578
        %v2716 = vunpack.c.l.b16 %v2592
        %v2717 = vunpack.c.l.b16 %v2602
        %v2718 = vunpack.c.l.b16 %v2616
        %v2719 = vunpack.c.l.b16 %v2626
        %v2720 = vunpack.c.l.b16 %v2640
        %v2721 = vunpack.c.l.b16 %v2650
        %v2722 = vunpack.c.l.b16 %v2664
        %v2723 = vunpack.c.l.b16 %v2674
        %v2724 = vpack.c.b16 %v2693, %v2692
        %v2725 = vpack.c.b16 %v2695, %v2694
        %v2726 = vpack.c.b16 %v2697, %v2696
        %v2727 = vpack.c.b16 %v2699, %v2698
        %v2728 = vpack.c.b16 %v2701, %v2700
        %v2729 = vpack.c.b16 %v2703, %v2702
        %v2730 = vpack.c.b16 %v2705, %v2704
        %v2731 = vpack.c.b16 %v2707, %v2706
        %v2732 = vpack.c.b16 %v2709, %v2708
        %v2733 = vpack.c.b16 %v2711, %v2710
        %v2734 = vpack.c.b16 %v2713, %v2712
        %v2735 = vpack.c.b16 %v2715, %v2714
        %v2736 = vpack.c.b16 %v2717, %v2716
        %v2737 = vpack.c.b16 %v2719, %v2718
        %v2738 = vpack.c.b16 %v2721, %v2720
        %v2739 = vpack.c.b16 %v2723, %v2722
        %v2772 = vunpack.c.l.b16 %v2676
        %v2773 = vunpack.c.l.b16 %v2677
        %v2774 = vunpack.c.l.b16 %v2678
        %v2775 = vunpack.c.l.b16 %v2679
        %v2776 = vunpack.c.l.b16 %v2680
        %v2777 = vunpack.c.l.b16 %v2681
        %v2778 = vunpack.c.l.b16 %v2682
        %v2779 = vunpack.c.l.b16 %v2683
        %v2780 = vunpack.c.l.b16 %v2684
        %v2781 = vunpack.c.l.b16 %v2685
        %v2782 = vunpack.c.l.b16 %v2686
        %v2783 = vunpack.c.l.b16 %v2687
        %v2784 = vunpack.c.l.b16 %v2688
        %v2785 = vunpack.c.l.b16 %v2689
        %v2786 = vunpack.c.l.b16 %v2690
        %v2787 = vunpack.c.l.b16 %v2691
        %v2788 = vpack.c.b16 %v2773, %v2772
        %v2789 = vpack.c.b16 %v2775, %v2774
        %v2790 = vpack.c.b16 %v2777, %v2776
        %v2791 = vpack.c.b16 %v2779, %v2778
        %v2792 = vpack.c.b16 %v2781, %v2780
        %v2793 = vpack.c.b16 %v2783, %v2782
        %v2794 = vpack.c.b16 %v2785, %v2784
        %v2795 = vpack.c.b16 %v2787, %v2786
        %2804 = vmatprep.subr.bf16.mxu0 0
        %2805 = vmatpush1.bf16.msra.mxu0 %v2795
        %2806 = vmatprep.subr.bf16.mxu0 0
        %2807 = vmatpush1.bf16.msra.mxu0 %v2794
        %2808 = vmatprep.subr.bf16.mxu0 0
        %2809 = vmatpush1.bf16.msra.mxu0 %v2793
        %2810 = vmatprep.subr.bf16.mxu0 0
        %2811 = vmatpush1.bf16.msra.mxu0 %v2792
        %2812 = vmatprep.subr.bf16.mxu0 0
        %2813 = vmatpush1.bf16.msra.mxu0 %v2791
        %2814 = vmatprep.subr.bf16.mxu0 0
        %2815 = vmatpush1.bf16.msra.mxu0 %v2790
        %2816 = vmatprep.subr.bf16.mxu0 0
        %2817 = vmatpush1.bf16.msra.mxu0 %v2789
        %2818 = vmatprep.subr.bf16.mxu0 0
        %2819 = vmatpush1.bf16.msra.mxu0 %v2788
        %2820 = vmatprep.subr.bf16.mxu0 0
        %2821 = vmatpush2.bf16.msra.mxu0 0
        %2822 = vmatprep.subr.bf16.mxu0 0
        %2823 = vmatpush2.bf16.msra.mxu0 0
        %2824 = vmatprep.subr.bf16.mxu0 0
        %2825 = vmatpush2.bf16.msra.mxu0 0
        %2826 = vmatprep.subr.bf16.mxu0 0
        %2827 = vmatpush2.bf16.msra.mxu0 0
        %2828 = vmatprep.subr.bf16.mxu0 0
        %2829 = vmatpush2.bf16.msra.mxu0 0
        %2830 = vmatprep.subr.bf16.mxu0 0
        %2831 = vmatpush2.bf16.msra.mxu0 0
        %2832 = vmatprep.subr.bf16.mxu0 0
        %2833 = vmatpush2.bf16.msra.mxu0 0
        %2834 = vmatprep.subr.bf16.mxu0 0
        %2835 = vmatpush2.bf16.msra.mxu0 0
        %2836 = vmatprep.mubr.bf16.mxu0 0
        %2837 = vmatmul.mubr.bf16.gmra.mxu0 %v2724
        %v2838 = vpop.f32.mrf.mxu0
        %v2839 = vadd.f32 0.0, %v2838
        %v2840 = vpop.f32.mrf.mxu0
        %v2841 = vpop.f32.mrf.mxu0
        %v2842 = vadd.f32 0.0, %v2841
        %v2843 = vpop.f32.mrf.mxu0
        %2844 = vmatprep.mubr.bf16.mxu0 0
        %2845 = vmatmul.mubr.bf16.gmra.mxu0 %v2725
        %v2846 = vpop.f32.mrf.mxu0
        %v2847 = vadd.f32 0.0, %v2846
        %v2848 = vpop.f32.mrf.mxu0
        %v2849 = vpop.f32.mrf.mxu0
        %v2850 = vadd.f32 0.0, %v2849
        %v2851 = vpop.f32.mrf.mxu0
        %2852 = vmatprep.mubr.bf16.mxu0 0
        %2853 = vmatmul.mubr.bf16.gmra.mxu0 %v2726
        %v2854 = vpop.f32.mrf.mxu0
        %v2855 = vadd.f32 0.0, %v2854
        %v2856 = vpop.f32.mrf.mxu0
        %v2857 = vpop.f32.mrf.mxu0
        %v2858 = vadd.f32 0.0, %v2857
        %v2859 = vpop.f32.mrf.mxu0
        %2860 = vmatprep.mubr.bf16.mxu0 0
        %2861 = vmatmul.mubr.bf16.gmra.mxu0 %v2727
        %v2862 = vpop.f32.mrf.mxu0
        %v2863 = vadd.f32 0.0, %v2862
        %v2864 = vpop.f32.mrf.mxu0
        %v2865 = vpop.f32.mrf.mxu0
        %v2866 = vadd.f32 0.0, %v2865
        %v2867 = vpop.f32.mrf.mxu0
        %2868 = vmatprep.mubr.bf16.mxu0 0
        %2869 = vmatmul.mubr.bf16.gmra.mxu0 %v2728
        %v2870 = vpop.f32.mrf.mxu0
        %v2871 = vadd.f32 0.0, %v2870
        %v2872 = vpop.f32.mrf.mxu0
        %v2873 = vpop.f32.mrf.mxu0
        %v2874 = vadd.f32 0.0, %v2873
        %v2875 = vpop.f32.mrf.mxu0
        %2876 = vmatprep.mubr.bf16.mxu0 0
        %2877 = vmatmul.mubr.bf16.gmra.mxu0 %v2729
        %v2878 = vpop.f32.mrf.mxu0
        %v2879 = vadd.f32 0.0, %v2878
        %v2880 = vpop.f32.mrf.mxu0
        %v2881 = vpop.f32.mrf.mxu0
        %v2882 = vadd.f32 0.0, %v2881
        %v2883 = vpop.f32.mrf.mxu0
        %2884 = vmatprep.mubr.bf16.mxu0 0
        %2885 = vmatmul.mubr.bf16.gmra.mxu0 %v2730
        %v2886 = vpop.f32.mrf.mxu0
        %v2887 = vadd.f32 0.0, %v2886
        %v2888 = vpop.f32.mrf.mxu0
        %v2889 = vpop.f32.mrf.mxu0
        %v2890 = vadd.f32 0.0, %v2889
        %v2891 = vpop.f32.mrf.mxu0
        %2892 = vmatprep.mubr.bf16.mxu0 0
        %2893 = vmatmul.mubr.bf16.gmra.mxu0 %v2731
        %v2894 = vpop.f32.mrf.mxu0
        %v2895 = vadd.f32 0.0, %v2894
        %v2896 = vpop.f32.mrf.mxu0
        %v2897 = vpop.f32.mrf.mxu0
        %v2898 = vadd.f32 0.0, %v2897
        %v2899 = vpop.f32.mrf.mxu0
        %2900 = vmatprep.mubr.bf16.mxu0 0
        %2901 = vmatmul.mubr.bf16.gmra.mxu0 %v2732
        %v2902 = vpop.f32.mrf.mxu0
        %v2903 = vadd.f32 0.0, %v2902
        %v2904 = vpop.f32.mrf.mxu0
        %v2905 = vpop.f32.mrf.mxu0
        %v2906 = vadd.f32 0.0, %v2905
        %v2907 = vpop.f32.mrf.mxu0
        %2908 = vmatprep.mubr.bf16.mxu0 0
        %2909 = vmatmul.mubr.bf16.gmra.mxu0 %v2733
        %v2910 = vpop.f32.mrf.mxu0
        %v2911 = vadd.f32 0.0, %v2910
        %v2912 = vpop.f32.mrf.mxu0
        %v2913 = vpop.f32.mrf.mxu0
        %v2914 = vadd.f32 0.0, %v2913
        %v2915 = vpop.f32.mrf.mxu0
        %2916 = vmatprep.mubr.bf16.mxu0 0
        %2917 = vmatmul.mubr.bf16.gmra.mxu0 %v2734
        %v2918 = vpop.f32.mrf.mxu0
        %v2919 = vadd.f32 0.0, %v2918
        %v2920 = vpop.f32.mrf.mxu0
        %v2921 = vpop.f32.mrf.mxu0
        %v2922 = vadd.f32 0.0, %v2921
        %v2923 = vpop.f32.mrf.mxu0
        %2924 = vmatprep.mubr.bf16.mxu0 0
        %2925 = vmatmul.mubr.bf16.gmra.mxu0 %v2735
        %v2926 = vpop.f32.mrf.mxu0
        %v2927 = vadd.f32 0.0, %v2926
        %v2928 = vpop.f32.mrf.mxu0
        %v2929 = vpop.f32.mrf.mxu0
        %v2930 = vadd.f32 0.0, %v2929
        %v2931 = vpop.f32.mrf.mxu0
        %2932 = vmatprep.mubr.bf16.mxu0 0
        %2933 = vmatmul.mubr.bf16.gmra.mxu0 %v2736
        %v2934 = vpop.f32.mrf.mxu0
        %v2935 = vadd.f32 0.0, %v2934
        %v2936 = vpop.f32.mrf.mxu0
        %v2937 = vpop.f32.mrf.mxu0
        %v2938 = vadd.f32 0.0, %v2937
        %v2939 = vpop.f32.mrf.mxu0
        %2940 = vmatprep.mubr.bf16.mxu0 0
        %2941 = vmatmul.mubr.bf16.gmra.mxu0 %v2737
        %v2942 = vpop.f32.mrf.mxu0
        %v2943 = vadd.f32 0.0, %v2942
        %v2944 = vpop.f32.mrf.mxu0
        %v2945 = vpop.f32.mrf.mxu0
        %v2946 = vadd.f32 0.0, %v2945
        %v2947 = vpop.f32.mrf.mxu0
        %2948 = vmatprep.mubr.bf16.mxu0 0
        %2949 = vmatmul.mubr.bf16.gmra.mxu0 %v2738
        %v2950 = vpop.f32.mrf.mxu0
        %v2951 = vadd.f32 0.0, %v2950
        %v2952 = vpop.f32.mrf.mxu0
        %v2953 = vpop.f32.mrf.mxu0
        %v2954 = vadd.f32 0.0, %v2953
        %v2955 = vpop.f32.mrf.mxu0
        %2956 = vmatprep.mubr.bf16.mxu0 0
        %2957 = vmatmul.mubr.bf16.gmra.mxu0 %v2739
        %v2958 = vpop.f32.mrf.mxu0
        %v2959 = vadd.f32 0.0, %v2958
        %v2960 = vpop.f32.mrf.mxu0
        %v2961 = vpop.f32.mrf.mxu0
        %v2962 = vadd.f32 0.0, %v2961
        %v2963 = vpop.f32.mrf.mxu0
        %2964 = vdwg.mxu0
        %v2965 = vadd.f32 %v2211, %v2839
        %v2966 = vadd.f32 %v2212, %v2842
        %v2967 = vadd.f32 %v2213, %v2847
        %v2968 = vadd.f32 %v2214, %v2850
        %v2969 = vadd.f32 %v2215, %v2855
        %v2970 = vadd.f32 %v2216, %v2858
        %v2971 = vadd.f32 %v2217, %v2863
        %v2972 = vadd.f32 %v2218, %v2866
        %v2973 = vadd.f32 %v2219, %v2871
        %v2974 = vadd.f32 %v2220, %v2874
        %v2975 = vadd.f32 %v2221, %v2879
        %v2976 = vadd.f32 %v2222, %v2882
        %v2977 = vadd.f32 %v2223, %v2887
        %v2978 = vadd.f32 %v2224, %v2890
        %v2979 = vadd.f32 %v2225, %v2895
        %v2980 = vadd.f32 %v2226, %v2898
        %v2981 = vadd.f32 %v2227, %v2903
        %v2982 = vadd.f32 %v2228, %v2906
        %v2983 = vadd.f32 %v2229, %v2911
        %v2984 = vadd.f32 %v2230, %v2914
        %v2985 = vadd.f32 %v2231, %v2919
        %v2986 = vadd.f32 %v2232, %v2922
        %v2987 = vadd.f32 %v2233, %v2927
        %v2988 = vadd.f32 %v2234, %v2930
        %v2989 = vadd.f32 %v2235, %v2935
        %v2990 = vadd.f32 %v2236, %v2938
        %v2991 = vadd.f32 %v2237, %v2943
        %v2992 = vadd.f32 %v2238, %v2946
        %v2993 = vadd.f32 %v2239, %v2951
        %v2994 = vadd.f32 %v2240, %v2954
        %v2995 = vadd.f32 %v2241, %v2959
        %v2996 = vadd.f32 %v2242, %v2962
        %v2997 = vld [vmem:[%s1856] sm:$0xe]
        %v2998 = vld [vmem:[%s1856 + $0xc] sm:$0xe]
        %v2999 = vld [vmem:[%s1856 + $0x18] sm:$0xe]
        %v3000 = vld [vmem:[%s1856 + $0x24] sm:$0xe]
        %v3001 = vld [vmem:[%s1856 + $0x30] sm:$0xe]
        %v3002 = vld [vmem:[%s1856 + $0x3c] sm:$0xe]
        %v3003 = vld [vmem:[%s1856 + $0x48] sm:$0xe]
        %v3004 = vld [vmem:[%s1856 + $0x54] sm:$0xe]
        %v3005 = vld [vmem:[%s1856 + $0x60] sm:$0xe]
        %v3006 = vld [vmem:[%s1856 + $0x6c] sm:$0xe]
        %v3007 = vld [vmem:[%s1856 + $0x78] sm:$0xe]
        %v3008 = vld [vmem:[%s1856 + $0x84] sm:$0xe]
        %v3009 = vld [vmem:[%s1856 + $0x90] sm:$0xe]
        %v3010 = vld [vmem:[%s1856 + $0x9c] sm:$0xe]
        %v3011 = vld [vmem:[%s1856 + $0xa8] sm:$0xe]
        %v3012 = vld [vmem:[%s1856 + $0xb4] sm:$0xe]
        %v3061 = vrot.slane %v2997, 5
        %v3062 = vrot.slane %v3061, 4
        %v3063 = vrot.slane %v2244, 5
        %v3064 = vsel %vm1421, %v3062, %v3063
        %v3065 = vrot.slane %v3063, 4
        %v3066 = vrot.slane %v2245, 5
        %v3067 = vsel %vm1421, %v3065, %v3066
        %v3068 = vrot.slane %v2998, 5
        %v3069 = vrot.slane %v3068, 4
        %v3070 = vrot.slane %v2247, 5
        %v3071 = vsel %vm1421, %v3069, %v3070
        %v3072 = vrot.slane %v3070, 4
        %v3073 = vrot.slane %v2248, 5
        %v3074 = vsel %vm1421, %v3072, %v3073
        %v3075 = vrot.slane %v2999, 5
        %v3076 = vrot.slane %v3075, 4
        %v3077 = vrot.slane %v2250, 5
        %v3078 = vsel %vm1421, %v3076, %v3077
        %v3079 = vrot.slane %v3077, 4
        %v3080 = vrot.slane %v2251, 5
        %v3081 = vsel %vm1421, %v3079, %v3080
        %v3082 = vrot.slane %v3000, 5
        %v3083 = vrot.slane %v3082, 4
        %v3084 = vrot.slane %v2253, 5
        %v3085 = vsel %vm1421, %v3083, %v3084
        %v3086 = vrot.slane %v3084, 4
        %v3087 = vrot.slane %v2254, 5
        %v3088 = vsel %vm1421, %v3086, %v3087
        %v3089 = vrot.slane %v3001, 5
        %v3090 = vrot.slane %v3089, 4
        %v3091 = vrot.slane %v2256, 5
        %v3092 = vsel %vm1421, %v3090, %v3091
        %v3093 = vrot.slane %v3091, 4
        %v3094 = vrot.slane %v2257, 5
        %v3095 = vsel %vm1421, %v3093, %v3094
        %v3096 = vrot.slane %v3002, 5
        %v3097 = vrot.slane %v3096, 4
        %v3098 = vrot.slane %v2259, 5
        %v3099 = vsel %vm1421, %v3097, %v3098
        %v3100 = vrot.slane %v3098, 4
        %v3101 = vrot.slane %v2260, 5
        %v3102 = vsel %vm1421, %v3100, %v3101
        %v3103 = vrot.slane %v3003, 5
        %v3104 = vrot.slane %v3103, 4
        %v3105 = vrot.slane %v2262, 5
        %v3106 = vsel %vm1421, %v3104, %v3105
        %v3107 = vrot.slane %v3105, 4
        %v3108 = vrot.slane %v2263, 5
        %v3109 = vsel %vm1421, %v3107, %v3108
        %v3110 = vrot.slane %v3004, 5
        %v3111 = vrot.slane %v3110, 4
        %v3112 = vrot.slane %v2265, 5
        %v3113 = vsel %vm1421, %v3111, %v3112
        %v3114 = vrot.slane %v3112, 4
        %v3115 = vrot.slane %v2266, 5
        %v3116 = vsel %vm1421, %v3114, %v3115
        %v3117 = vrot.slane %v3005, 5
        %v3118 = vrot.slane %v3117, 4
        %v3119 = vrot.slane %v2268, 5
        %v3120 = vsel %vm1421, %v3118, %v3119
        %v3121 = vrot.slane %v3119, 4
        %v3122 = vrot.slane %v2269, 5
        %v3123 = vsel %vm1421, %v3121, %v3122
        %v3124 = vrot.slane %v3006, 5
        %v3125 = vrot.slane %v3124, 4
        %v3126 = vrot.slane %v2271, 5
        %v3127 = vsel %vm1421, %v3125, %v3126
        %v3128 = vrot.slane %v3126, 4
        %v3129 = vrot.slane %v2272, 5
        %v3130 = vsel %vm1421, %v3128, %v3129
        %v3131 = vrot.slane %v3007, 5
        %v3132 = vrot.slane %v3131, 4
        %v3133 = vrot.slane %v2274, 5
        %v3134 = vsel %vm1421, %v3132, %v3133
        %v3135 = vrot.slane %v3133, 4
        %v3136 = vrot.slane %v2275, 5
        %v3137 = vsel %vm1421, %v3135, %v3136
        %v3138 = vrot.slane %v3008, 5
        %v3139 = vrot.slane %v3138, 4
        %v3140 = vrot.slane %v2277, 5
        %v3141 = vsel %vm1421, %v3139, %v3140
        %v3142 = vrot.slane %v3140, 4
        %v3143 = vrot.slane %v2278, 5
        %v3144 = vsel %vm1421, %v3142, %v3143
        %v3145 = vrot.slane %v3009, 5
        %v3146 = vrot.slane %v3145, 4
        %v3147 = vrot.slane %v2280, 5
        %v3148 = vsel %vm1421, %v3146, %v3147
        %v3149 = vrot.slane %v3147, 4
        %v3150 = vrot.slane %v2281, 5
        %v3151 = vsel %vm1421, %v3149, %v3150
        %v3152 = vrot.slane %v3010, 5
        %v3153 = vrot.slane %v3152, 4
        %v3154 = vrot.slane %v2283, 5
        %v3155 = vsel %vm1421, %v3153, %v3154
        %v3156 = vrot.slane %v3154, 4
        %v3157 = vrot.slane %v2284, 5
        %v3158 = vsel %vm1421, %v3156, %v3157
        %v3159 = vrot.slane %v3011, 5
        %v3160 = vrot.slane %v3159, 4
        %v3161 = vrot.slane %v2286, 5
        %v3162 = vsel %vm1421, %v3160, %v3161
        %v3163 = vrot.slane %v3161, 4
        %v3164 = vrot.slane %v2287, 5
        %v3165 = vsel %vm1421, %v3163, %v3164
        %v3166 = vrot.slane %v3012, 5
        %v3167 = vrot.slane %v3166, 4
        %v3168 = vrot.slane %v2289, 5
        %v3169 = vsel %vm1421, %v3167, %v3168
        %v3170 = vrot.slane %v3168, 4
        %v3171 = vrot.slane %v2290, 5
        %v3172 = vsel %vm1421, %v3170, %v3171
        %s3173 = scalar_lea.vmem %s2, 320
        %v3174 = vld [vmem:[%s3173] sm:$0xf]
        %v3175 = vld [vmem:[%s3173 + $0x4] sm:$0xf]
        %v3176 = vld [vmem:[%s3173 + $0x8] sm:$0xf]
        %v3177 = vld [vmem:[%s3173 + $0xc] sm:$0xf]
        %v3178 = vld [vmem:[%s3173 + $0x10] sm:$0xf]
        %v3179 = vld [vmem:[%s3173 + $0x14] sm:$0xf]
        %v3180 = vld [vmem:[%s3173 + $0x18] sm:$0xf]
        %v3181 = vld [vmem:[%s3173 + $0x1c] sm:$0xf]
        %v3182 = vld [vmem:[%s3173 + $0x20] sm:$0xf]
        %v3183 = vld [vmem:[%s3173 + $0x24] sm:$0xf]
        %v3184 = vld [vmem:[%s3173 + $0x28] sm:$0xf]
        %v3185 = vld [vmem:[%s3173 + $0x2c] sm:$0xf]
        %v3186 = vld [vmem:[%s3173 + $0x30] sm:$0xf]
        %v3187 = vld [vmem:[%s3173 + $0x34] sm:$0xf]
        %v3188 = vld [vmem:[%s3173 + $0x38] sm:$0xf]
        %v3189 = vld [vmem:[%s3173 + $0x3c] sm:$0xf]
        %v3190 = vunpack.c.l.b16 %v3064
        %v3191 = vunpack.c.l.b16 %v3067
        %v3192 = vunpack.c.l.b16 %v3071
        %v3193 = vunpack.c.l.b16 %v3074
        %v3194 = vunpack.c.l.b16 %v3078
        %v3195 = vunpack.c.l.b16 %v3081
        %v3196 = vunpack.c.l.b16 %v3085
        %v3197 = vunpack.c.l.b16 %v3088
        %v3198 = vunpack.c.l.b16 %v3092
        %v3199 = vunpack.c.l.b16 %v3095
        %v3200 = vunpack.c.l.b16 %v3099
        %v3201 = vunpack.c.l.b16 %v3102
        %v3202 = vunpack.c.l.b16 %v3106
        %v3203 = vunpack.c.l.b16 %v3109
        %v3204 = vunpack.c.l.b16 %v3113
        %v3205 = vunpack.c.l.b16 %v3116
        %v3206 = vunpack.c.l.b16 %v3120
        %v3207 = vunpack.c.l.b16 %v3123
        %v3208 = vunpack.c.l.b16 %v3127
        %v3209 = vunpack.c.l.b16 %v3130
        %v3210 = vunpack.c.l.b16 %v3134
        %v3211 = vunpack.c.l.b16 %v3137
        %v3212 = vunpack.c.l.b16 %v3141
        %v3213 = vunpack.c.l.b16 %v3144
        %v3214 = vunpack.c.l.b16 %v3148
        %v3215 = vunpack.c.l.b16 %v3151
        %v3216 = vunpack.c.l.b16 %v3155
        %v3217 = vunpack.c.l.b16 %v3158
        %v3218 = vunpack.c.l.b16 %v3162
        %v3219 = vunpack.c.l.b16 %v3165
        %v3220 = vunpack.c.l.b16 %v3169
        %v3221 = vunpack.c.l.b16 %v3172
        %v3222 = vpack.c.b16 %v3191, %v3190
        %v3223 = vpack.c.b16 %v3193, %v3192
        %v3224 = vpack.c.b16 %v3195, %v3194
        %v3225 = vpack.c.b16 %v3197, %v3196
        %v3226 = vpack.c.b16 %v3199, %v3198
        %v3227 = vpack.c.b16 %v3201, %v3200
        %v3228 = vpack.c.b16 %v3203, %v3202
        %v3229 = vpack.c.b16 %v3205, %v3204
        %v3230 = vpack.c.b16 %v3207, %v3206
        %v3231 = vpack.c.b16 %v3209, %v3208
        %v3232 = vpack.c.b16 %v3211, %v3210
        %v3233 = vpack.c.b16 %v3213, %v3212
        %v3234 = vpack.c.b16 %v3215, %v3214
        %v3235 = vpack.c.b16 %v3217, %v3216
        %v3236 = vpack.c.b16 %v3219, %v3218
        %v3237 = vpack.c.b16 %v3221, %v3220
        %v3270 = vunpack.c.l.b16 %v3174
        %v3271 = vunpack.c.l.b16 %v3175
        %v3272 = vunpack.c.l.b16 %v3176
        %v3273 = vunpack.c.l.b16 %v3177
        %v3274 = vunpack.c.l.b16 %v3178
        %v3275 = vunpack.c.l.b16 %v3179
        %v3276 = vunpack.c.l.b16 %v3180
        %v3277 = vunpack.c.l.b16 %v3181
        %v3278 = vunpack.c.l.b16 %v3182
        %v3279 = vunpack.c.l.b16 %v3183
        %v3280 = vunpack.c.l.b16 %v3184
        %v3281 = vunpack.c.l.b16 %v3185
        %v3282 = vunpack.c.l.b16 %v3186
        %v3283 = vunpack.c.l.b16 %v3187
        %v3284 = vunpack.c.l.b16 %v3188
        %v3285 = vunpack.c.l.b16 %v3189
        %v3286 = vpack.c.b16 %v3271, %v3270
        %v3287 = vpack.c.b16 %v3273, %v3272
        %v3288 = vpack.c.b16 %v3275, %v3274
        %v3289 = vpack.c.b16 %v3277, %v3276
        %v3290 = vpack.c.b16 %v3279, %v3278
        %v3291 = vpack.c.b16 %v3281, %v3280
        %v3292 = vpack.c.b16 %v3283, %v3282
        %v3293 = vpack.c.b16 %v3285, %v3284
        %3302 = vmatprep.subr.bf16.mxu0 0
        %3303 = vmatpush1.bf16.msra.mxu0 %v3293
        %3304 = vmatprep.subr.bf16.mxu0 0
        %3305 = vmatpush1.bf16.msra.mxu0 %v3292
        %3306 = vmatprep.subr.bf16.mxu0 0
        %3307 = vmatpush1.bf16.msra.mxu0 %v3291
        %3308 = vmatprep.subr.bf16.mxu0 0
        %3309 = vmatpush1.bf16.msra.mxu0 %v3290
        %3310 = vmatprep.subr.bf16.mxu0 0
        %3311 = vmatpush1.bf16.msra.mxu0 %v3289
        %3312 = vmatprep.subr.bf16.mxu0 0
        %3313 = vmatpush1.bf16.msra.mxu0 %v3288
        %3314 = vmatprep.subr.bf16.mxu0 0
        %3315 = vmatpush1.bf16.msra.mxu0 %v3287
        %3316 = vmatprep.subr.bf16.mxu0 0
        %3317 = vmatpush1.bf16.msra.mxu0 %v3286
        %3318 = vmatprep.subr.bf16.mxu0 0
        %3319 = vmatpush2.bf16.msra.mxu0 0
        %3320 = vmatprep.subr.bf16.mxu0 0
        %3321 = vmatpush2.bf16.msra.mxu0 0
        %3322 = vmatprep.subr.bf16.mxu0 0
        %3323 = vmatpush2.bf16.msra.mxu0 0
        %3324 = vmatprep.subr.bf16.mxu0 0
        %3325 = vmatpush2.bf16.msra.mxu0 0
        %3326 = vmatprep.subr.bf16.mxu0 0
        %3327 = vmatpush2.bf16.msra.mxu0 0
        %3328 = vmatprep.subr.bf16.mxu0 0
        %3329 = vmatpush2.bf16.msra.mxu0 0
        %3330 = vmatprep.subr.bf16.mxu0 0
        %3331 = vmatpush2.bf16.msra.mxu0 0
        %3332 = vmatprep.subr.bf16.mxu0 0
        %3333 = vmatpush2.bf16.msra.mxu0 0
        %3334 = vmatprep.mubr.bf16.mxu0 0
        %3335 = vmatmul.mubr.bf16.gmra.mxu0 %v3222
        %v3336 = vpop.f32.mrf.mxu0
        %v3337 = vadd.f32 0.0, %v3336
        %v3338 = vpop.f32.mrf.mxu0
        %v3339 = vpop.f32.mrf.mxu0
        %v3340 = vadd.f32 0.0, %v3339
        %v3341 = vpop.f32.mrf.mxu0
        %3342 = vmatprep.mubr.bf16.mxu0 0
        %3343 = vmatmul.mubr.bf16.gmra.mxu0 %v3223
        %v3344 = vpop.f32.mrf.mxu0
        %v3345 = vadd.f32 0.0, %v3344
        %v3346 = vpop.f32.mrf.mxu0
        %v3347 = vpop.f32.mrf.mxu0
        %v3348 = vadd.f32 0.0, %v3347
        %v3349 = vpop.f32.mrf.mxu0
        %3350 = vmatprep.mubr.bf16.mxu0 0
        %3351 = vmatmul.mubr.bf16.gmra.mxu0 %v3224
        %v3352 = vpop.f32.mrf.mxu0
        %v3353 = vadd.f32 0.0, %v3352
        %v3354 = vpop.f32.mrf.mxu0
        %v3355 = vpop.f32.mrf.mxu0
        %v3356 = vadd.f32 0.0, %v3355
        %v3357 = vpop.f32.mrf.mxu0
        %3358 = vmatprep.mubr.bf16.mxu0 0
        %3359 = vmatmul.mubr.bf16.gmra.mxu0 %v3225
        %v3360 = vpop.f32.mrf.mxu0
        %v3361 = vadd.f32 0.0, %v3360
        %v3362 = vpop.f32.mrf.mxu0
        %v3363 = vpop.f32.mrf.mxu0
        %v3364 = vadd.f32 0.0, %v3363
        %v3365 = vpop.f32.mrf.mxu0
        %3366 = vmatprep.mubr.bf16.mxu0 0
        %3367 = vmatmul.mubr.bf16.gmra.mxu0 %v3226
        %v3368 = vpop.f32.mrf.mxu0
        %v3369 = vadd.f32 0.0, %v3368
        %v3370 = vpop.f32.mrf.mxu0
        %v3371 = vpop.f32.mrf.mxu0
        %v3372 = vadd.f32 0.0, %v3371
        %v3373 = vpop.f32.mrf.mxu0
        %3374 = vmatprep.mubr.bf16.mxu0 0
        %3375 = vmatmul.mubr.bf16.gmra.mxu0 %v3227
        %v3376 = vpop.f32.mrf.mxu0
        %v3377 = vadd.f32 0.0, %v3376
        %v3378 = vpop.f32.mrf.mxu0
        %v3379 = vpop.f32.mrf.mxu0
        %v3380 = vadd.f32 0.0, %v3379
        %v3381 = vpop.f32.mrf.mxu0
        %3382 = vmatprep.mubr.bf16.mxu0 0
        %3383 = vmatmul.mubr.bf16.gmra.mxu0 %v3228
        %v3384 = vpop.f32.mrf.mxu0
        %v3385 = vadd.f32 0.0, %v3384
        %v3386 = vpop.f32.mrf.mxu0
        %v3387 = vpop.f32.mrf.mxu0
        %v3388 = vadd.f32 0.0, %v3387
        %v3389 = vpop.f32.mrf.mxu0
        %3390 = vmatprep.mubr.bf16.mxu0 0
        %3391 = vmatmul.mubr.bf16.gmra.mxu0 %v3229
        %v3392 = vpop.f32.mrf.mxu0
        %v3393 = vadd.f32 0.0, %v3392
        %v3394 = vpop.f32.mrf.mxu0
        %v3395 = vpop.f32.mrf.mxu0
        %v3396 = vadd.f32 0.0, %v3395
        %v3397 = vpop.f32.mrf.mxu0
        %3398 = vmatprep.mubr.bf16.mxu0 0
        %3399 = vmatmul.mubr.bf16.gmra.mxu0 %v3230
        %v3400 = vpop.f32.mrf.mxu0
        %v3401 = vadd.f32 0.0, %v3400
        %v3402 = vpop.f32.mrf.mxu0
        %v3403 = vpop.f32.mrf.mxu0
        %v3404 = vadd.f32 0.0, %v3403
        %v3405 = vpop.f32.mrf.mxu0
        %3406 = vmatprep.mubr.bf16.mxu0 0
        %3407 = vmatmul.mubr.bf16.gmra.mxu0 %v3231
        %v3408 = vpop.f32.mrf.mxu0
        %v3409 = vadd.f32 0.0, %v3408
        %v3410 = vpop.f32.mrf.mxu0
        %v3411 = vpop.f32.mrf.mxu0
        %v3412 = vadd.f32 0.0, %v3411
        %v3413 = vpop.f32.mrf.mxu0
        %3414 = vmatprep.mubr.bf16.mxu0 0
        %3415 = vmatmul.mubr.bf16.gmra.mxu0 %v3232
        %v3416 = vpop.f32.mrf.mxu0
        %v3417 = vadd.f32 0.0, %v3416
        %v3418 = vpop.f32.mrf.mxu0
        %v3419 = vpop.f32.mrf.mxu0
        %v3420 = vadd.f32 0.0, %v3419
        %v3421 = vpop.f32.mrf.mxu0
        %3422 = vmatprep.mubr.bf16.mxu0 0
        %3423 = vmatmul.mubr.bf16.gmra.mxu0 %v3233
        %v3424 = vpop.f32.mrf.mxu0
        %v3425 = vadd.f32 0.0, %v3424
        %v3426 = vpop.f32.mrf.mxu0
        %v3427 = vpop.f32.mrf.mxu0
        %v3428 = vadd.f32 0.0, %v3427
        %v3429 = vpop.f32.mrf.mxu0
        %3430 = vmatprep.mubr.bf16.mxu0 0
        %3431 = vmatmul.mubr.bf16.gmra.mxu0 %v3234
        %v3432 = vpop.f32.mrf.mxu0
        %v3433 = vadd.f32 0.0, %v3432
        %v3434 = vpop.f32.mrf.mxu0
        %v3435 = vpop.f32.mrf.mxu0
        %v3436 = vadd.f32 0.0, %v3435
        %v3437 = vpop.f32.mrf.mxu0
        %3438 = vmatprep.mubr.bf16.mxu0 0
        %3439 = vmatmul.mubr.bf16.gmra.mxu0 %v3235
        %v3440 = vpop.f32.mrf.mxu0
        %v3441 = vadd.f32 0.0, %v3440
        %v3442 = vpop.f32.mrf.mxu0
        %v3443 = vpop.f32.mrf.mxu0
        %v3444 = vadd.f32 0.0, %v3443
        %v3445 = vpop.f32.mrf.mxu0
        %3446 = vmatprep.mubr.bf16.mxu0 0
        %3447 = vmatmul.mubr.bf16.gmra.mxu0 %v3236
        %v3448 = vpop.f32.mrf.mxu0
        %v3449 = vadd.f32 0.0, %v3448
        %v3450 = vpop.f32.mrf.mxu0
        %v3451 = vpop.f32.mrf.mxu0
        %v3452 = vadd.f32 0.0, %v3451
        %v3453 = vpop.f32.mrf.mxu0
        %3454 = vmatprep.mubr.bf16.mxu0 0
        %3455 = vmatmul.mubr.bf16.gmra.mxu0 %v3237
        %v3456 = vpop.f32.mrf.mxu0
        %v3457 = vadd.f32 0.0, %v3456
        %v3458 = vpop.f32.mrf.mxu0
        %v3459 = vpop.f32.mrf.mxu0
        %v3460 = vadd.f32 0.0, %v3459
        %v3461 = vpop.f32.mrf.mxu0
        %3462 = vdwg.mxu0
        %v3463 = vadd.f32 %v2965, %v3337
        %v3464 = vadd.f32 %v2966, %v3340
        %v3465 = vadd.f32 %v2967, %v3345
        %v3466 = vadd.f32 %v2968, %v3348
        %v3467 = vadd.f32 %v2969, %v3353
        %v3468 = vadd.f32 %v2970, %v3356
        %v3469 = vadd.f32 %v2971, %v3361
        %v3470 = vadd.f32 %v2972, %v3364
        %v3471 = vadd.f32 %v2973, %v3369
        %v3472 = vadd.f32 %v2974, %v3372
        %v3473 = vadd.f32 %v2975, %v3377
        %v3474 = vadd.f32 %v2976, %v3380
        %v3475 = vadd.f32 %v2977, %v3385
        %v3476 = vadd.f32 %v2978, %v3388
        %v3477 = vadd.f32 %v2979, %v3393
        %v3478 = vadd.f32 %v2980, %v3396
        %v3479 = vadd.f32 %v2981, %v3401
        %v3480 = vadd.f32 %v2982, %v3404
        %v3481 = vadd.f32 %v2983, %v3409
        %v3482 = vadd.f32 %v2984, %v3412
        %v3483 = vadd.f32 %v2985, %v3417
        %v3484 = vadd.f32 %v2986, %v3420
        %v3485 = vadd.f32 %v2987, %v3425
        %v3486 = vadd.f32 %v2988, %v3428
        %v3487 = vadd.f32 %v2989, %v3433
        %v3488 = vadd.f32 %v2990, %v3436
        %v3489 = vadd.f32 %v2991, %v3441
        %v3490 = vadd.f32 %v2992, %v3444
        %v3491 = vadd.f32 %v2993, %v3449
        %v3492 = vadd.f32 %v2994, %v3452
        %v3493 = vadd.f32 %v2995, %v3457
        %v3494 = vadd.f32 %v2996, %v3460
        %s3495 = scalar_lea.vmem %s318, 24
        %v3496 = vld [vmem:[%s3495] sm:$0xf]
        %v3497 = vld [vmem:[%s3495 + $0x4] sm:$0xf]
        %v3498 = vld [vmem:[%s3495 + $0xc] sm:$0xf]
        %v3499 = vld [vmem:[%s3495 + $0x10] sm:$0xf]
        %v3500 = vld [vmem:[%s3495 + $0x18] sm:$0xf]
        %v3501 = vld [vmem:[%s3495 + $0x1c] sm:$0xf]
        %v3502 = vld [vmem:[%s3495 + $0x24] sm:$0xf]
        %v3503 = vld [vmem:[%s3495 + $0x28] sm:$0xf]
        %v3504 = vld [vmem:[%s3495 + $0x30] sm:$0xf]
        %v3505 = vld [vmem:[%s3495 + $0x34] sm:$0xf]
        %v3506 = vld [vmem:[%s3495 + $0x3c] sm:$0xf]
        %v3507 = vld [vmem:[%s3495 + $0x40] sm:$0xf]
        %v3508 = vld [vmem:[%s3495 + $0x48] sm:$0xf]
        %v3509 = vld [vmem:[%s3495 + $0x4c] sm:$0xf]
        %v3510 = vld [vmem:[%s3495 + $0x54] sm:$0xf]
        %v3511 = vld [vmem:[%s3495 + $0x58] sm:$0xf]
        %v3512 = vld [vmem:[%s3495 + $0x60] sm:$0xf]
        %v3513 = vld [vmem:[%s3495 + $0x64] sm:$0xf]
        %v3514 = vld [vmem:[%s3495 + $0x6c] sm:$0xf]
        %v3515 = vld [vmem:[%s3495 + $0x70] sm:$0xf]
        %v3516 = vld [vmem:[%s3495 + $0x78] sm:$0xf]
        %v3517 = vld [vmem:[%s3495 + $0x7c] sm:$0xf]
        %v3518 = vld [vmem:[%s3495 + $0x84] sm:$0xf]
        %v3519 = vld [vmem:[%s3495 + $0x88] sm:$0xf]
        %v3520 = vld [vmem:[%s3495 + $0x90] sm:$0xf]
        %v3521 = vld [vmem:[%s3495 + $0x94] sm:$0xf]
        %v3522 = vld [vmem:[%s3495 + $0x9c] sm:$0xf]
        %v3523 = vld [vmem:[%s3495 + $0xa0] sm:$0xf]
        %v3524 = vld [vmem:[%s3495 + $0xa8] sm:$0xf]
        %v3525 = vld [vmem:[%s3495 + $0xac] sm:$0xf]
        %v3526 = vld [vmem:[%s3495 + $0xb4] sm:$0xf]
        %v3527 = vld [vmem:[%s3495 + $0xb8] sm:$0xf]
        %s3528 = scalar_lea.vmem %s2, 384
        %v3529 = vld [vmem:[%s3528] sm:$0xf]
        %v3530 = vld [vmem:[%s3528 + $0x4] sm:$0xf]
        %v3531 = vld [vmem:[%s3528 + $0x8] sm:$0xf]
        %v3532 = vld [vmem:[%s3528 + $0xc] sm:$0xf]
        %v3533 = vld [vmem:[%s3528 + $0x10] sm:$0xf]
        %v3534 = vld [vmem:[%s3528 + $0x14] sm:$0xf]
        %v3535 = vld [vmem:[%s3528 + $0x18] sm:$0xf]
        %v3536 = vld [vmem:[%s3528 + $0x1c] sm:$0xf]
        %v3537 = vld [vmem:[%s3528 + $0x20] sm:$0xf]
        %v3538 = vld [vmem:[%s3528 + $0x24] sm:$0xf]
        %v3539 = vld [vmem:[%s3528 + $0x28] sm:$0xf]
        %v3540 = vld [vmem:[%s3528 + $0x2c] sm:$0xf]
        %v3541 = vld [vmem:[%s3528 + $0x30] sm:$0xf]
        %v3542 = vld [vmem:[%s3528 + $0x34] sm:$0xf]
        %v3543 = vld [vmem:[%s3528 + $0x38] sm:$0xf]
        %v3544 = vld [vmem:[%s3528 + $0x3c] sm:$0xf]
        %v3577 = vunpack.c.l.b16 %v3496
        %v3578 = vunpack.c.l.b16 %v3497
        %v3579 = vunpack.c.l.b16 %v3498
        %v3580 = vunpack.c.l.b16 %v3499
        %v3581 = vunpack.c.l.b16 %v3500
        %v3582 = vunpack.c.l.b16 %v3501
        %v3583 = vunpack.c.l.b16 %v3502
        %v3584 = vunpack.c.l.b16 %v3503
        %v3585 = vunpack.c.l.b16 %v3504
        %v3586 = vunpack.c.l.b16 %v3505
        %v3587 = vunpack.c.l.b16 %v3506
        %v3588 = vunpack.c.l.b16 %v3507
        %v3589 = vunpack.c.l.b16 %v3508
        %v3590 = vunpack.c.l.b16 %v3509
        %v3591 = vunpack.c.l.b16 %v3510
        %v3592 = vunpack.c.l.b16 %v3511
        %v3593 = vunpack.c.l.b16 %v3512
        %v3594 = vunpack.c.l.b16 %v3513
        %v3595 = vunpack.c.l.b16 %v3514
        %v3596 = vunpack.c.l.b16 %v3515
        %v3597 = vunpack.c.l.b16 %v3516
        %v3598 = vunpack.c.l.b16 %v3517
        %v3599 = vunpack.c.l.b16 %v3518
        %v3600 = vunpack.c.l.b16 %v3519
        %v3601 = vunpack.c.l.b16 %v3520
        %v3602 = vunpack.c.l.b16 %v3521
        %v3603 = vunpack.c.l.b16 %v3522
        %v3604 = vunpack.c.l.b16 %v3523
        %v3605 = vunpack.c.l.b16 %v3524
        %v3606 = vunpack.c.l.b16 %v3525
        %v3607 = vunpack.c.l.b16 %v3526
        %v3608 = vunpack.c.l.b16 %v3527
        %v3609 = vpack.c.b16 %v3578, %v3577
        %v3610 = vpack.c.b16 %v3580, %v3579
        %v3611 = vpack.c.b16 %v3582, %v3581
        %v3612 = vpack.c.b16 %v3584, %v3583
        %v3613 = vpack.c.b16 %v3586, %v3585
        %v3614 = vpack.c.b16 %v3588, %v3587
        %v3615 = vpack.c.b16 %v3590, %v3589
        %v3616 = vpack.c.b16 %v3592, %v3591
        %v3617 = vpack.c.b16 %v3594, %v3593
        %v3618 = vpack.c.b16 %v3596, %v3595
        %v3619 = vpack.c.b16 %v3598, %v3597
        %v3620 = vpack.c.b16 %v3600, %v3599
        %v3621 = vpack.c.b16 %v3602, %v3601
        %v3622 = vpack.c.b16 %v3604, %v3603
        %v3623 = vpack.c.b16 %v3606, %v3605
        %v3624 = vpack.c.b16 %v3608, %v3607
        %v3657 = vunpack.c.l.b16 %v3529
        %v3658 = vunpack.c.l.b16 %v3530
        %v3659 = vunpack.c.l.b16 %v3531
        %v3660 = vunpack.c.l.b16 %v3532
        %v3661 = vunpack.c.l.b16 %v3533
        %v3662 = vunpack.c.l.b16 %v3534
        %v3663 = vunpack.c.l.b16 %v3535
        %v3664 = vunpack.c.l.b16 %v3536
        %v3665 = vunpack.c.l.b16 %v3537
        %v3666 = vunpack.c.l.b16 %v3538
        %v3667 = vunpack.c.l.b16 %v3539
        %v3668 = vunpack.c.l.b16 %v3540
        %v3669 = vunpack.c.l.b16 %v3541
        %v3670 = vunpack.c.l.b16 %v3542
        %v3671 = vunpack.c.l.b16 %v3543
        %v3672 = vunpack.c.l.b16 %v3544
        %v3673 = vpack.c.b16 %v3658, %v3657
        %v3674 = vpack.c.b16 %v3660, %v3659
        %v3675 = vpack.c.b16 %v3662, %v3661
        %v3676 = vpack.c.b16 %v3664, %v3663
        %v3677 = vpack.c.b16 %v3666, %v3665
        %v3678 = vpack.c.b16 %v3668, %v3667
        %v3679 = vpack.c.b16 %v3670, %v3669
        %v3680 = vpack.c.b16 %v3672, %v3671
        %3689 = vmatprep.subr.bf16.mxu0 0
        %3690 = vmatpush1.bf16.msra.mxu0 %v3680
        %3691 = vmatprep.subr.bf16.mxu0 0
        %3692 = vmatpush1.bf16.msra.mxu0 %v3679
        %3693 = vmatprep.subr.bf16.mxu0 0
        %3694 = vmatpush1.bf16.msra.mxu0 %v3678
        %3695 = vmatprep.subr.bf16.mxu0 0
        %3696 = vmatpush1.bf16.msra.mxu0 %v3677
        %3697 = vmatprep.subr.bf16.mxu0 0
        %3698 = vmatpush1.bf16.msra.mxu0 %v3676
        %3699 = vmatprep.subr.bf16.mxu0 0
        %3700 = vmatpush1.bf16.msra.mxu0 %v3675
        %3701 = vmatprep.subr.bf16.mxu0 0
        %3702 = vmatpush1.bf16.msra.mxu0 %v3674
        %3703 = vmatprep.subr.bf16.mxu0 0
        %3704 = vmatpush1.bf16.msra.mxu0 %v3673
        %3705 = vmatprep.subr.bf16.mxu0 0
        %3706 = vmatpush2.bf16.msra.mxu0 0
        %3707 = vmatprep.subr.bf16.mxu0 0
        %3708 = vmatpush2.bf16.msra.mxu0 0
        %3709 = vmatprep.subr.bf16.mxu0 0
        %3710 = vmatpush2.bf16.msra.mxu0 0
        %3711 = vmatprep.subr.bf16.mxu0 0
        %3712 = vmatpush2.bf16.msra.mxu0 0
        %3713 = vmatprep.subr.bf16.mxu0 0
        %3714 = vmatpush2.bf16.msra.mxu0 0
        %3715 = vmatprep.subr.bf16.mxu0 0
        %3716 = vmatpush2.bf16.msra.mxu0 0
        %3717 = vmatprep.subr.bf16.mxu0 0
        %3718 = vmatpush2.bf16.msra.mxu0 0
        %3719 = vmatprep.subr.bf16.mxu0 0
        %3720 = vmatpush2.bf16.msra.mxu0 0
        %3721 = vmatprep.mubr.bf16.mxu0 0
        %3722 = vmatmul.mubr.bf16.gmra.mxu0 %v3609
        %v3723 = vpop.f32.mrf.mxu0
        %v3724 = vadd.f32 0.0, %v3723
        %v3725 = vpop.f32.mrf.mxu0
        %v3726 = vpop.f32.mrf.mxu0
        %v3727 = vadd.f32 0.0, %v3726
        %v3728 = vpop.f32.mrf.mxu0
        %3729 = vmatprep.mubr.bf16.mxu0 0
        %3730 = vmatmul.mubr.bf16.gmra.mxu0 %v3610
        %v3731 = vpop.f32.mrf.mxu0
        %v3732 = vadd.f32 0.0, %v3731
        %v3733 = vpop.f32.mrf.mxu0
        %v3734 = vpop.f32.mrf.mxu0
        %v3735 = vadd.f32 0.0, %v3734
        %v3736 = vpop.f32.mrf.mxu0
        %3737 = vmatprep.mubr.bf16.mxu0 0
        %3738 = vmatmul.mubr.bf16.gmra.mxu0 %v3611
        %v3739 = vpop.f32.mrf.mxu0
        %v3740 = vadd.f32 0.0, %v3739
        %v3741 = vpop.f32.mrf.mxu0
        %v3742 = vpop.f32.mrf.mxu0
        %v3743 = vadd.f32 0.0, %v3742
        %v3744 = vpop.f32.mrf.mxu0
        %3745 = vmatprep.mubr.bf16.mxu0 0
        %3746 = vmatmul.mubr.bf16.gmra.mxu0 %v3612
        %v3747 = vpop.f32.mrf.mxu0
        %v3748 = vadd.f32 0.0, %v3747
        %v3749 = vpop.f32.mrf.mxu0
        %v3750 = vpop.f32.mrf.mxu0
        %v3751 = vadd.f32 0.0, %v3750
        %v3752 = vpop.f32.mrf.mxu0
        %3753 = vmatprep.mubr.bf16.mxu0 0
        %3754 = vmatmul.mubr.bf16.gmra.mxu0 %v3613
        %v3755 = vpop.f32.mrf.mxu0
        %v3756 = vadd.f32 0.0, %v3755
        %v3757 = vpop.f32.mrf.mxu0
        %v3758 = vpop.f32.mrf.mxu0
        %v3759 = vadd.f32 0.0, %v3758
        %v3760 = vpop.f32.mrf.mxu0
        %3761 = vmatprep.mubr.bf16.mxu0 0
        %3762 = vmatmul.mubr.bf16.gmra.mxu0 %v3614
        %v3763 = vpop.f32.mrf.mxu0
        %v3764 = vadd.f32 0.0, %v3763
        %v3765 = vpop.f32.mrf.mxu0
        %v3766 = vpop.f32.mrf.mxu0
        %v3767 = vadd.f32 0.0, %v3766
        %v3768 = vpop.f32.mrf.mxu0
        %3769 = vmatprep.mubr.bf16.mxu0 0
        %3770 = vmatmul.mubr.bf16.gmra.mxu0 %v3615
        %v3771 = vpop.f32.mrf.mxu0
        %v3772 = vadd.f32 0.0, %v3771
        %v3773 = vpop.f32.mrf.mxu0
        %v3774 = vpop.f32.mrf.mxu0
        %v3775 = vadd.f32 0.0, %v3774
        %v3776 = vpop.f32.mrf.mxu0
        %3777 = vmatprep.mubr.bf16.mxu0 0
        %3778 = vmatmul.mubr.bf16.gmra.mxu0 %v3616
        %v3779 = vpop.f32.mrf.mxu0
        %v3780 = vadd.f32 0.0, %v3779
        %v3781 = vpop.f32.mrf.mxu0
        %v3782 = vpop.f32.mrf.mxu0
        %v3783 = vadd.f32 0.0, %v3782
        %v3784 = vpop.f32.mrf.mxu0
        %3785 = vmatprep.mubr.bf16.mxu0 0
        %3786 = vmatmul.mubr.bf16.gmra.mxu0 %v3617
        %v3787 = vpop.f32.mrf.mxu0
        %v3788 = vadd.f32 0.0, %v3787
        %v3789 = vpop.f32.mrf.mxu0
        %v3790 = vpop.f32.mrf.mxu0
        %v3791 = vadd.f32 0.0, %v3790
        %v3792 = vpop.f32.mrf.mxu0
        %3793 = vmatprep.mubr.bf16.mxu0 0
        %3794 = vmatmul.mubr.bf16.gmra.mxu0 %v3618
        %v3795 = vpop.f32.mrf.mxu0
        %v3796 = vadd.f32 0.0, %v3795
        %v3797 = vpop.f32.mrf.mxu0
        %v3798 = vpop.f32.mrf.mxu0
        %v3799 = vadd.f32 0.0, %v3798
        %v3800 = vpop.f32.mrf.mxu0
        %3801 = vmatprep.mubr.bf16.mxu0 0
        %3802 = vmatmul.mubr.bf16.gmra.mxu0 %v3619
        %v3803 = vpop.f32.mrf.mxu0
        %v3804 = vadd.f32 0.0, %v3803
        %v3805 = vpop.f32.mrf.mxu0
        %v3806 = vpop.f32.mrf.mxu0
        %v3807 = vadd.f32 0.0, %v3806
        %v3808 = vpop.f32.mrf.mxu0
        %3809 = vmatprep.mubr.bf16.mxu0 0
        %3810 = vmatmul.mubr.bf16.gmra.mxu0 %v3620
        %v3811 = vpop.f32.mrf.mxu0
        %v3812 = vadd.f32 0.0, %v3811
        %v3813 = vpop.f32.mrf.mxu0
        %v3814 = vpop.f32.mrf.mxu0
        %v3815 = vadd.f32 0.0, %v3814
        %v3816 = vpop.f32.mrf.mxu0
        %3817 = vmatprep.mubr.bf16.mxu0 0
        %3818 = vmatmul.mubr.bf16.gmra.mxu0 %v3621
        %v3819 = vpop.f32.mrf.mxu0
        %v3820 = vadd.f32 0.0, %v3819
        %v3821 = vpop.f32.mrf.mxu0
        %v3822 = vpop.f32.mrf.mxu0
        %v3823 = vadd.f32 0.0, %v3822
        %v3824 = vpop.f32.mrf.mxu0
        %3825 = vmatprep.mubr.bf16.mxu0 0
        %3826 = vmatmul.mubr.bf16.gmra.mxu0 %v3622
        %v3827 = vpop.f32.mrf.mxu0
        %v3828 = vadd.f32 0.0, %v3827
        %v3829 = vpop.f32.mrf.mxu0
        %v3830 = vpop.f32.mrf.mxu0
        %v3831 = vadd.f32 0.0, %v3830
        %v3832 = vpop.f32.mrf.mxu0
        %3833 = vmatprep.mubr.bf16.mxu0 0
        %3834 = vmatmul.mubr.bf16.gmra.mxu0 %v3623
        %v3835 = vpop.f32.mrf.mxu0
        %v3836 = vadd.f32 0.0, %v3835
        %v3837 = vpop.f32.mrf.mxu0
        %v3838 = vpop.f32.mrf.mxu0
        %v3839 = vadd.f32 0.0, %v3838
        %v3840 = vpop.f32.mrf.mxu0
        %3841 = vmatprep.mubr.bf16.mxu0 0
        %3842 = vmatmul.mubr.bf16.gmra.mxu0 %v3624
        %v3843 = vpop.f32.mrf.mxu0
        %v3844 = vadd.f32 0.0, %v3843
        %v3845 = vpop.f32.mrf.mxu0
        %v3846 = vpop.f32.mrf.mxu0
        %v3847 = vadd.f32 0.0, %v3846
        %v3848 = vpop.f32.mrf.mxu0
        %3849 = vdwg.mxu0
        %v3850 = vadd.f32 %v3463, %v3724
        %v3851 = vadd.f32 %v3464, %v3727
        %v3852 = vadd.f32 %v3465, %v3732
        %v3853 = vadd.f32 %v3466, %v3735
        %v3854 = vadd.f32 %v3467, %v3740
        %v3855 = vadd.f32 %v3468, %v3743
        %v3856 = vadd.f32 %v3469, %v3748
        %v3857 = vadd.f32 %v3470, %v3751
        %v3858 = vadd.f32 %v3471, %v3756
        %v3859 = vadd.f32 %v3472, %v3759
        %v3860 = vadd.f32 %v3473, %v3764
        %v3861 = vadd.f32 %v3474, %v3767
        %v3862 = vadd.f32 %v3475, %v3772
        %v3863 = vadd.f32 %v3476, %v3775
        %v3864 = vadd.f32 %v3477, %v3780
        %v3865 = vadd.f32 %v3478, %v3783
        %v3866 = vadd.f32 %v3479, %v3788
        %v3867 = vadd.f32 %v3480, %v3791
        %v3868 = vadd.f32 %v3481, %v3796
        %v3869 = vadd.f32 %v3482, %v3799
        %v3870 = vadd.f32 %v3483, %v3804
        %v3871 = vadd.f32 %v3484, %v3807
        %v3872 = vadd.f32 %v3485, %v3812
        %v3873 = vadd.f32 %v3486, %v3815
        %v3874 = vadd.f32 %v3487, %v3820
        %v3875 = vadd.f32 %v3488, %v3823
        %v3876 = vadd.f32 %v3489, %v3828
        %v3877 = vadd.f32 %v3490, %v3831
        %v3878 = vadd.f32 %v3491, %v3836
        %v3879 = vadd.f32 %v3492, %v3839
        %v3880 = vadd.f32 %v3493, %v3844
        %v3881 = vadd.f32 %v3494, %v3847
        %v3882 = vld [vmem:[%s3495] sm:$0xf]
        %v3883 = vld [vmem:[%s3495 + $0x4] sm:$0xf]
        %v3884 = vld [vmem:[%s3495 + $0x8] sm:$0x1]
        %v3885 = vld [vmem:[%s3495 + $0xc] sm:$0xf]
        %v3886 = vld [vmem:[%s3495 + $0x10] sm:$0xf]
        %v3887 = vld [vmem:[%s3495 + $0x14] sm:$0x1]
        %v3888 = vld [vmem:[%s3495 + $0x18] sm:$0xf]
        %v3889 = vld [vmem:[%s3495 + $0x1c] sm:$0xf]
        %v3890 = vld [vmem:[%s3495 + $0x20] sm:$0x1]
        %v3891 = vld [vmem:[%s3495 + $0x24] sm:$0xf]
        %v3892 = vld [vmem:[%s3495 + $0x28] sm:$0xf]
        %v3893 = vld [vmem:[%s3495 + $0x2c] sm:$0x1]
        %v3894 = vld [vmem:[%s3495 + $0x30] sm:$0xf]
        %v3895 = vld [vmem:[%s3495 + $0x34] sm:$0xf]
        %v3896 = vld [vmem:[%s3495 + $0x38] sm:$0x1]
        %v3897 = vld [vmem:[%s3495 + $0x3c] sm:$0xf]
        %v3898 = vld [vmem:[%s3495 + $0x40] sm:$0xf]
        %v3899 = vld [vmem:[%s3495 + $0x44] sm:$0x1]
        %v3900 = vld [vmem:[%s3495 + $0x48] sm:$0xf]
        %v3901 = vld [vmem:[%s3495 + $0x4c] sm:$0xf]
        %v3902 = vld [vmem:[%s3495 + $0x50] sm:$0x1]
        %v3903 = vld [vmem:[%s3495 + $0x54] sm:$0xf]
        %v3904 = vld [vmem:[%s3495 + $0x58] sm:$0xf]
        %v3905 = vld [vmem:[%s3495 + $0x5c] sm:$0x1]
        %v3906 = vld [vmem:[%s3495 + $0x60] sm:$0xf]
        %v3907 = vld [vmem:[%s3495 + $0x64] sm:$0xf]
        %v3908 = vld [vmem:[%s3495 + $0x68] sm:$0x1]
        %v3909 = vld [vmem:[%s3495 + $0x6c] sm:$0xf]
        %v3910 = vld [vmem:[%s3495 + $0x70] sm:$0xf]
        %v3911 = vld [vmem:[%s3495 + $0x74] sm:$0x1]
        %v3912 = vld [vmem:[%s3495 + $0x78] sm:$0xf]
        %v3913 = vld [vmem:[%s3495 + $0x7c] sm:$0xf]
        %v3914 = vld [vmem:[%s3495 + $0x80] sm:$0x1]
        %v3915 = vld [vmem:[%s3495 + $0x84] sm:$0xf]
        %v3916 = vld [vmem:[%s3495 + $0x88] sm:$0xf]
        %v3917 = vld [vmem:[%s3495 + $0x8c] sm:$0x1]
        %v3918 = vld [vmem:[%s3495 + $0x90] sm:$0xf]
        %v3919 = vld [vmem:[%s3495 + $0x94] sm:$0xf]
        %v3920 = vld [vmem:[%s3495 + $0x98] sm:$0x1]
        %v3921 = vld [vmem:[%s3495 + $0x9c] sm:$0xf]
        %v3922 = vld [vmem:[%s3495 + $0xa0] sm:$0xf]
        %v3923 = vld [vmem:[%s3495 + $0xa4] sm:$0x1]
        %v3924 = vld [vmem:[%s3495 + $0xa8] sm:$0xf]
        %v3925 = vld [vmem:[%s3495 + $0xac] sm:$0xf]
        %v3926 = vld [vmem:[%s3495 + $0xb0] sm:$0x1]
        %v3927 = vld [vmem:[%s3495 + $0xb4] sm:$0xf]
        %v3928 = vld [vmem:[%s3495 + $0xb8] sm:$0xf]
        %v3929 = vld [vmem:[%s3495 + $0xbc] sm:$0x1]
        %v3931 = vshrl.u32 %v3882, 16
        %v3933 = vrot.slane %v3931, 4
        %v3934 = vshll.u32 %v3882, 16
        %v3936 = vrot.slane %v3934, 5
        %v3937 = vor.u32 %v3933, %v3936
        %v3938 = vrot.slane %v3937, 4
        %v3940 = vshll.u32 %v3883, 16
        %v3942 = vrot.slane %v3940, 5
        %v3943 = vsel %vm391, %v3938, %v3942
        %v3944 = vshrl.u32 %v3883, 16
        %v3946 = vrot.slane %v3944, 4
        %v3947 = vor.u32 %v3946, %v3942
        %v3948 = vrot.slane %v3947, 4
        %v3950 = vshll.u32 %v3884, 16
        %v3952 = vrot.slane %v3950, 5
        %v3953 = vsel %vm391, %v3948, %v3952
        %v3955 = vshrl.u32 %v3885, 16
        %v3957 = vrot.slane %v3955, 4
        %v3958 = vshll.u32 %v3885, 16
        %v3960 = vrot.slane %v3958, 5
        %v3961 = vor.u32 %v3957, %v3960
        %v3962 = vrot.slane %v3961, 4
        %v3964 = vshll.u32 %v3886, 16
        %v3966 = vrot.slane %v3964, 5
        %v3967 = vsel %vm391, %v3962, %v3966
        %v3968 = vshrl.u32 %v3886, 16
        %v3970 = vrot.slane %v3968, 4
        %v3971 = vor.u32 %v3970, %v3966
        %v3972 = vrot.slane %v3971, 4
        %v3974 = vshll.u32 %v3887, 16
        %v3976 = vrot.slane %v3974, 5
        %v3977 = vsel %vm391, %v3972, %v3976
        %v3979 = vshrl.u32 %v3888, 16
        %v3981 = vrot.slane %v3979, 4
        %v3982 = vshll.u32 %v3888, 16
        %v3984 = vrot.slane %v3982, 5
        %v3985 = vor.u32 %v3981, %v3984
        %v3986 = vrot.slane %v3985, 4
        %v3988 = vshll.u32 %v3889, 16
        %v3990 = vrot.slane %v3988, 5
        %v3991 = vsel %vm391, %v3986, %v3990
        %v3992 = vshrl.u32 %v3889, 16
        %v3994 = vrot.slane %v3992, 4
        %v3995 = vor.u32 %v3994, %v3990
        %v3996 = vrot.slane %v3995, 4
        %v3998 = vshll.u32 %v3890, 16
        %v4000 = vrot.slane %v3998, 5
        %v4001 = vsel %vm391, %v3996, %v4000
        %v4003 = vshrl.u32 %v3891, 16
        %v4005 = vrot.slane %v4003, 4
        %v4006 = vshll.u32 %v3891, 16
        %v4008 = vrot.slane %v4006, 5
        %v4009 = vor.u32 %v4005, %v4008
        %v4010 = vrot.slane %v4009, 4
        %v4012 = vshll.u32 %v3892, 16
        %v4014 = vrot.slane %v4012, 5
        %v4015 = vsel %vm391, %v4010, %v4014
        %v4016 = vshrl.u32 %v3892, 16
        %v4018 = vrot.slane %v4016, 4
        %v4019 = vor.u32 %v4018, %v4014
        %v4020 = vrot.slane %v4019, 4
        %v4022 = vshll.u32 %v3893, 16
        %v4024 = vrot.slane %v4022, 5
        %v4025 = vsel %vm391, %v4020, %v4024
        %v4027 = vshrl.u32 %v3894, 16
        %v4029 = vrot.slane %v4027, 4
        %v4030 = vshll.u32 %v3894, 16
        %v4032 = vrot.slane %v4030, 5
        %v4033 = vor.u32 %v4029, %v4032
        %v4034 = vrot.slane %v4033, 4
        %v4036 = vshll.u32 %v3895, 16
        %v4038 = vrot.slane %v4036, 5
        %v4039 = vsel %vm391, %v4034, %v4038
        %v4040 = vshrl.u32 %v3895, 16
        %v4042 = vrot.slane %v4040, 4
        %v4043 = vor.u32 %v4042, %v4038
        %v4044 = vrot.slane %v4043, 4
        %v4046 = vshll.u32 %v3896, 16
        %v4048 = vrot.slane %v4046, 5
        %v4049 = vsel %vm391, %v4044, %v4048
        %v4051 = vshrl.u32 %v3897, 16
        %v4053 = vrot.slane %v4051, 4
        %v4054 = vshll.u32 %v3897, 16
        %v4056 = vrot.slane %v4054, 5
        %v4057 = vor.u32 %v4053, %v4056
        %v4058 = vrot.slane %v4057, 4
        %v4060 = vshll.u32 %v3898, 16
        %v4062 = vrot.slane %v4060, 5
        %v4063 = vsel %vm391, %v4058, %v4062
        %v4064 = vshrl.u32 %v3898, 16
        %v4066 = vrot.slane %v4064, 4
        %v4067 = vor.u32 %v4066, %v4062
        %v4068 = vrot.slane %v4067, 4
        %v4070 = vshll.u32 %v3899, 16
        %v4072 = vrot.slane %v4070, 5
        %v4073 = vsel %vm391, %v4068, %v4072
        %v4075 = vshrl.u32 %v3900, 16
        %v4077 = vrot.slane %v4075, 4
        %v4078 = vshll.u32 %v3900, 16
        %v4080 = vrot.slane %v4078, 5
        %v4081 = vor.u32 %v4077, %v4080
        %v4082 = vrot.slane %v4081, 4
        %v4084 = vshll.u32 %v3901, 16
        %v4086 = vrot.slane %v4084, 5
        %v4087 = vsel %vm391, %v4082, %v4086
        %v4088 = vshrl.u32 %v3901, 16
        %v4090 = vrot.slane %v4088, 4
        %v4091 = vor.u32 %v4090, %v4086
        %v4092 = vrot.slane %v4091, 4
        %v4094 = vshll.u32 %v3902, 16
        %v4096 = vrot.slane %v4094, 5
        %v4097 = vsel %vm391, %v4092, %v4096
        %v4099 = vshrl.u32 %v3903, 16
        %v4101 = vrot.slane %v4099, 4
        %v4102 = vshll.u32 %v3903, 16
        %v4104 = vrot.slane %v4102, 5
        %v4105 = vor.u32 %v4101, %v4104
        %v4106 = vrot.slane %v4105, 4
        %v4108 = vshll.u32 %v3904, 16
        %v4110 = vrot.slane %v4108, 5
        %v4111 = vsel %vm391, %v4106, %v4110
        %v4112 = vshrl.u32 %v3904, 16
        %v4114 = vrot.slane %v4112, 4
        %v4115 = vor.u32 %v4114, %v4110
        %v4116 = vrot.slane %v4115, 4
        %v4118 = vshll.u32 %v3905, 16
        %v4120 = vrot.slane %v4118, 5
        %v4121 = vsel %vm391, %v4116, %v4120
        %v4123 = vshrl.u32 %v3906, 16
        %v4125 = vrot.slane %v4123, 4
        %v4126 = vshll.u32 %v3906, 16
        %v4128 = vrot.slane %v4126, 5
        %v4129 = vor.u32 %v4125, %v4128
        %v4130 = vrot.slane %v4129, 4
        %v4132 = vshll.u32 %v3907, 16
        %v4134 = vrot.slane %v4132, 5
        %v4135 = vsel %vm391, %v4130, %v4134
        %v4136 = vshrl.u32 %v3907, 16
        %v4138 = vrot.slane %v4136, 4
        %v4139 = vor.u32 %v4138, %v4134
        %v4140 = vrot.slane %v4139, 4
        %v4142 = vshll.u32 %v3908, 16
        %v4144 = vrot.slane %v4142, 5
        %v4145 = vsel %vm391, %v4140, %v4144
        %v4147 = vshrl.u32 %v3909, 16
        %v4149 = vrot.slane %v4147, 4
        %v4150 = vshll.u32 %v3909, 16
        %v4152 = vrot.slane %v4150, 5
        %v4153 = vor.u32 %v4149, %v4152
        %v4154 = vrot.slane %v4153, 4
        %v4156 = vshll.u32 %v3910, 16
        %v4158 = vrot.slane %v4156, 5
        %v4159 = vsel %vm391, %v4154, %v4158
        %v4160 = vshrl.u32 %v3910, 16
        %v4162 = vrot.slane %v4160, 4
        %v4163 = vor.u32 %v4162, %v4158
        %v4164 = vrot.slane %v4163, 4
        %v4166 = vshll.u32 %v3911, 16
        %v4168 = vrot.slane %v4166, 5
        %v4169 = vsel %vm391, %v4164, %v4168
        %v4171 = vshrl.u32 %v3912, 16
        %v4173 = vrot.slane %v4171, 4
        %v4174 = vshll.u32 %v3912, 16
        %v4176 = vrot.slane %v4174, 5
        %v4177 = vor.u32 %v4173, %v4176
        %v4178 = vrot.slane %v4177, 4
        %v4180 = vshll.u32 %v3913, 16
        %v4182 = vrot.slane %v4180, 5
        %v4183 = vsel %vm391, %v4178, %v4182
        %v4184 = vshrl.u32 %v3913, 16
        %v4186 = vrot.slane %v4184, 4
        %v4187 = vor.u32 %v4186, %v4182
        %v4188 = vrot.slane %v4187, 4
        %v4190 = vshll.u32 %v3914, 16
        %v4192 = vrot.slane %v4190, 5
        %v4193 = vsel %vm391, %v4188, %v4192
        %v4195 = vshrl.u32 %v3915, 16
        %v4197 = vrot.slane %v4195, 4
        %v4198 = vshll.u32 %v3915, 16
        %v4200 = vrot.slane %v4198, 5
        %v4201 = vor.u32 %v4197, %v4200
        %v4202 = vrot.slane %v4201, 4
        %v4204 = vshll.u32 %v3916, 16
        %v4206 = vrot.slane %v4204, 5
        %v4207 = vsel %vm391, %v4202, %v4206
        %v4208 = vshrl.u32 %v3916, 16
        %v4210 = vrot.slane %v4208, 4
        %v4211 = vor.u32 %v4210, %v4206
        %v4212 = vrot.slane %v4211, 4
        %v4214 = vshll.u32 %v3917, 16
        %v4216 = vrot.slane %v4214, 5
        %v4217 = vsel %vm391, %v4212, %v4216
        %v4219 = vshrl.u32 %v3918, 16
        %v4221 = vrot.slane %v4219, 4
        %v4222 = vshll.u32 %v3918, 16
        %v4224 = vrot.slane %v4222, 5
        %v4225 = vor.u32 %v4221, %v4224
        %v4226 = vrot.slane %v4225, 4
        %v4228 = vshll.u32 %v3919, 16
        %v4230 = vrot.slane %v4228, 5
        %v4231 = vsel %vm391, %v4226, %v4230
        %v4232 = vshrl.u32 %v3919, 16
        %v4234 = vrot.slane %v4232, 4
        %v4235 = vor.u32 %v4234, %v4230
        %v4236 = vrot.slane %v4235, 4
        %v4238 = vshll.u32 %v3920, 16
        %v4240 = vrot.slane %v4238, 5
        %v4241 = vsel %vm391, %v4236, %v4240
        %v4243 = vshrl.u32 %v3921, 16
        %v4245 = vrot.slane %v4243, 4
        %v4246 = vshll.u32 %v3921, 16
        %v4248 = vrot.slane %v4246, 5
        %v4249 = vor.u32 %v4245, %v4248
        %v4250 = vrot.slane %v4249, 4
        %v4252 = vshll.u32 %v3922, 16
        %v4254 = vrot.slane %v4252, 5
        %v4255 = vsel %vm391, %v4250, %v4254
        %v4256 = vshrl.u32 %v3922, 16
        %v4258 = vrot.slane %v4256, 4
        %v4259 = vor.u32 %v4258, %v4254
        %v4260 = vrot.slane %v4259, 4
        %v4262 = vshll.u32 %v3923, 16
        %v4264 = vrot.slane %v4262, 5
        %v4265 = vsel %vm391, %v4260, %v4264
        %v4267 = vshrl.u32 %v3924, 16
        %v4269 = vrot.slane %v4267, 4
        %v4270 = vshll.u32 %v3924, 16
        %v4272 = vrot.slane %v4270, 5
        %v4273 = vor.u32 %v4269, %v4272
        %v4274 = vrot.slane %v4273, 4
        %v4276 = vshll.u32 %v3925, 16
        %v4278 = vrot.slane %v4276, 5
        %v4279 = vsel %vm391, %v4274, %v4278
        %v4280 = vshrl.u32 %v3925, 16
        %v4282 = vrot.slane %v4280, 4
        %v4283 = vor.u32 %v4282, %v4278
        %v4284 = vrot.slane %v4283, 4
        %v4286 = vshll.u32 %v3926, 16
        %v4288 = vrot.slane %v4286, 5
        %v4289 = vsel %vm391, %v4284, %v4288
        %v4291 = vshrl.u32 %v3927, 16
        %v4293 = vrot.slane %v4291, 4
        %v4294 = vshll.u32 %v3927, 16
        %v4296 = vrot.slane %v4294, 5
        %v4297 = vor.u32 %v4293, %v4296
        %v4298 = vrot.slane %v4297, 4
        %v4300 = vshll.u32 %v3928, 16
        %v4302 = vrot.slane %v4300, 5
        %v4303 = vsel %vm391, %v4298, %v4302
        %v4304 = vshrl.u32 %v3928, 16
        %v4306 = vrot.slane %v4304, 4
        %v4307 = vor.u32 %v4306, %v4302
        %v4308 = vrot.slane %v4307, 4
        %v4310 = vshll.u32 %v3929, 16
        %v4312 = vrot.slane %v4310, 5
        %v4313 = vsel %vm391, %v4308, %v4312
        %s4314 = scalar_lea.vmem %s2, 448
        %v4315 = vld [vmem:[%s4314] sm:$0xf]
        %v4316 = vld [vmem:[%s4314 + $0x4] sm:$0xf]
        %v4317 = vld [vmem:[%s4314 + $0x8] sm:$0xf]
        %v4318 = vld [vmem:[%s4314 + $0xc] sm:$0xf]
        %v4319 = vld [vmem:[%s4314 + $0x10] sm:$0xf]
        %v4320 = vld [vmem:[%s4314 + $0x14] sm:$0xf]
        %v4321 = vld [vmem:[%s4314 + $0x18] sm:$0xf]
        %v4322 = vld [vmem:[%s4314 + $0x1c] sm:$0xf]
        %v4323 = vld [vmem:[%s4314 + $0x20] sm:$0xf]
        %v4324 = vld [vmem:[%s4314 + $0x24] sm:$0xf]
        %v4325 = vld [vmem:[%s4314 + $0x28] sm:$0xf]
        %v4326 = vld [vmem:[%s4314 + $0x2c] sm:$0xf]
        %v4327 = vld [vmem:[%s4314 + $0x30] sm:$0xf]
        %v4328 = vld [vmem:[%s4314 + $0x34] sm:$0xf]
        %v4329 = vld [vmem:[%s4314 + $0x38] sm:$0xf]
        %v4330 = vld [vmem:[%s4314 + $0x3c] sm:$0xf]
        %v4331 = vunpack.c.l.b16 %v3943
        %v4332 = vunpack.c.l.b16 %v3953
        %v4333 = vunpack.c.l.b16 %v3967
        %v4334 = vunpack.c.l.b16 %v3977
        %v4335 = vunpack.c.l.b16 %v3991
        %v4336 = vunpack.c.l.b16 %v4001
        %v4337 = vunpack.c.l.b16 %v4015
        %v4338 = vunpack.c.l.b16 %v4025
        %v4339 = vunpack.c.l.b16 %v4039
        %v4340 = vunpack.c.l.b16 %v4049
        %v4341 = vunpack.c.l.b16 %v4063
        %v4342 = vunpack.c.l.b16 %v4073
        %v4343 = vunpack.c.l.b16 %v4087
        %v4344 = vunpack.c.l.b16 %v4097
        %v4345 = vunpack.c.l.b16 %v4111
        %v4346 = vunpack.c.l.b16 %v4121
        %v4347 = vunpack.c.l.b16 %v4135
        %v4348 = vunpack.c.l.b16 %v4145
        %v4349 = vunpack.c.l.b16 %v4159
        %v4350 = vunpack.c.l.b16 %v4169
        %v4351 = vunpack.c.l.b16 %v4183
        %v4352 = vunpack.c.l.b16 %v4193
        %v4353 = vunpack.c.l.b16 %v4207
        %v4354 = vunpack.c.l.b16 %v4217
        %v4355 = vunpack.c.l.b16 %v4231
        %v4356 = vunpack.c.l.b16 %v4241
        %v4357 = vunpack.c.l.b16 %v4255
        %v4358 = vunpack.c.l.b16 %v4265
        %v4359 = vunpack.c.l.b16 %v4279
        %v4360 = vunpack.c.l.b16 %v4289
        %v4361 = vunpack.c.l.b16 %v4303
        %v4362 = vunpack.c.l.b16 %v4313
        %v4363 = vpack.c.b16 %v4332, %v4331
        %v4364 = vpack.c.b16 %v4334, %v4333
        %v4365 = vpack.c.b16 %v4336, %v4335
        %v4366 = vpack.c.b16 %v4338, %v4337
        %v4367 = vpack.c.b16 %v4340, %v4339
        %v4368 = vpack.c.b16 %v4342, %v4341
        %v4369 = vpack.c.b16 %v4344, %v4343
        %v4370 = vpack.c.b16 %v4346, %v4345
        %v4371 = vpack.c.b16 %v4348, %v4347
        %v4372 = vpack.c.b16 %v4350, %v4349
        %v4373 = vpack.c.b16 %v4352, %v4351
        %v4374 = vpack.c.b16 %v4354, %v4353
        %v4375 = vpack.c.b16 %v4356, %v4355
        %v4376 = vpack.c.b16 %v4358, %v4357
        %v4377 = vpack.c.b16 %v4360, %v4359
        %v4378 = vpack.c.b16 %v4362, %v4361
        %v4411 = vunpack.c.l.b16 %v4315
        %v4412 = vunpack.c.l.b16 %v4316
        %v4413 = vunpack.c.l.b16 %v4317
        %v4414 = vunpack.c.l.b16 %v4318
        %v4415 = vunpack.c.l.b16 %v4319
        %v4416 = vunpack.c.l.b16 %v4320
        %v4417 = vunpack.c.l.b16 %v4321
        %v4418 = vunpack.c.l.b16 %v4322
        %v4419 = vunpack.c.l.b16 %v4323
        %v4420 = vunpack.c.l.b16 %v4324
        %v4421 = vunpack.c.l.b16 %v4325
        %v4422 = vunpack.c.l.b16 %v4326
        %v4423 = vunpack.c.l.b16 %v4327
        %v4424 = vunpack.c.l.b16 %v4328
        %v4425 = vunpack.c.l.b16 %v4329
        %v4426 = vunpack.c.l.b16 %v4330
        %v4427 = vpack.c.b16 %v4412, %v4411
        %v4428 = vpack.c.b16 %v4414, %v4413
        %v4429 = vpack.c.b16 %v4416, %v4415
        %v4430 = vpack.c.b16 %v4418, %v4417
        %v4431 = vpack.c.b16 %v4420, %v4419
        %v4432 = vpack.c.b16 %v4422, %v4421
        %v4433 = vpack.c.b16 %v4424, %v4423
        %v4434 = vpack.c.b16 %v4426, %v4425
        %4443 = vmatprep.subr.bf16.mxu0 0
        %4444 = vmatpush1.bf16.msra.mxu0 %v4434
        %4445 = vmatprep.subr.bf16.mxu0 0
        %4446 = vmatpush1.bf16.msra.mxu0 %v4433
        %4447 = vmatprep.subr.bf16.mxu0 0
        %4448 = vmatpush1.bf16.msra.mxu0 %v4432
        %4449 = vmatprep.subr.bf16.mxu0 0
        %4450 = vmatpush1.bf16.msra.mxu0 %v4431
        %4451 = vmatprep.subr.bf16.mxu0 0
        %4452 = vmatpush1.bf16.msra.mxu0 %v4430
        %4453 = vmatprep.subr.bf16.mxu0 0
        %4454 = vmatpush1.bf16.msra.mxu0 %v4429
        %4455 = vmatprep.subr.bf16.mxu0 0
        %4456 = vmatpush1.bf16.msra.mxu0 %v4428
        %4457 = vmatprep.subr.bf16.mxu0 0
        %4458 = vmatpush1.bf16.msra.mxu0 %v4427
        %4459 = vmatprep.subr.bf16.mxu0 0
        %4460 = vmatpush2.bf16.msra.mxu0 0
        %4461 = vmatprep.subr.bf16.mxu0 0
        %4462 = vmatpush2.bf16.msra.mxu0 0
        %4463 = vmatprep.subr.bf16.mxu0 0
        %4464 = vmatpush2.bf16.msra.mxu0 0
        %4465 = vmatprep.subr.bf16.mxu0 0
        %4466 = vmatpush2.bf16.msra.mxu0 0
        %4467 = vmatprep.subr.bf16.mxu0 0
        %4468 = vmatpush2.bf16.msra.mxu0 0
        %4469 = vmatprep.subr.bf16.mxu0 0
        %4470 = vmatpush2.bf16.msra.mxu0 0
        %4471 = vmatprep.subr.bf16.mxu0 0
        %4472 = vmatpush2.bf16.msra.mxu0 0
        %4473 = vmatprep.subr.bf16.mxu0 0
        %4474 = vmatpush2.bf16.msra.mxu0 0
        %4475 = vmatprep.mubr.bf16.mxu0 0
        %4476 = vmatmul.mubr.bf16.gmra.mxu0 %v4363
        %v4477 = vpop.f32.mrf.mxu0
        %v4478 = vadd.f32 0.0, %v4477
        %v4479 = vpop.f32.mrf.mxu0
        %v4480 = vpop.f32.mrf.mxu0
        %v4481 = vadd.f32 0.0, %v4480
        %v4482 = vpop.f32.mrf.mxu0
        %4483 = vmatprep.mubr.bf16.mxu0 0
        %4484 = vmatmul.mubr.bf16.gmra.mxu0 %v4364
        %v4485 = vpop.f32.mrf.mxu0
        %v4486 = vadd.f32 0.0, %v4485
        %v4487 = vpop.f32.mrf.mxu0
        %v4488 = vpop.f32.mrf.mxu0
        %v4489 = vadd.f32 0.0, %v4488
        %v4490 = vpop.f32.mrf.mxu0
        %4491 = vmatprep.mubr.bf16.mxu0 0
        %4492 = vmatmul.mubr.bf16.gmra.mxu0 %v4365
        %v4493 = vpop.f32.mrf.mxu0
        %v4494 = vadd.f32 0.0, %v4493
        %v4495 = vpop.f32.mrf.mxu0
        %v4496 = vpop.f32.mrf.mxu0
        %v4497 = vadd.f32 0.0, %v4496
        %v4498 = vpop.f32.mrf.mxu0
        %4499 = vmatprep.mubr.bf16.mxu0 0
        %4500 = vmatmul.mubr.bf16.gmra.mxu0 %v4366
        %v4501 = vpop.f32.mrf.mxu0
        %v4502 = vadd.f32 0.0, %v4501
        %v4503 = vpop.f32.mrf.mxu0
        %v4504 = vpop.f32.mrf.mxu0
        %v4505 = vadd.f32 0.0, %v4504
        %v4506 = vpop.f32.mrf.mxu0
        %4507 = vmatprep.mubr.bf16.mxu0 0
        %4508 = vmatmul.mubr.bf16.gmra.mxu0 %v4367
        %v4509 = vpop.f32.mrf.mxu0
        %v4510 = vadd.f32 0.0, %v4509
        %v4511 = vpop.f32.mrf.mxu0
        %v4512 = vpop.f32.mrf.mxu0
        %v4513 = vadd.f32 0.0, %v4512
        %v4514 = vpop.f32.mrf.mxu0
        %4515 = vmatprep.mubr.bf16.mxu0 0
        %4516 = vmatmul.mubr.bf16.gmra.mxu0 %v4368
        %v4517 = vpop.f32.mrf.mxu0
        %v4518 = vadd.f32 0.0, %v4517
        %v4519 = vpop.f32.mrf.mxu0
        %v4520 = vpop.f32.mrf.mxu0
        %v4521 = vadd.f32 0.0, %v4520
        %v4522 = vpop.f32.mrf.mxu0
        %4523 = vmatprep.mubr.bf16.mxu0 0
        %4524 = vmatmul.mubr.bf16.gmra.mxu0 %v4369
        %v4525 = vpop.f32.mrf.mxu0
        %v4526 = vadd.f32 0.0, %v4525
        %v4527 = vpop.f32.mrf.mxu0
        %v4528 = vpop.f32.mrf.mxu0
        %v4529 = vadd.f32 0.0, %v4528
        %v4530 = vpop.f32.mrf.mxu0
        %4531 = vmatprep.mubr.bf16.mxu0 0
        %4532 = vmatmul.mubr.bf16.gmra.mxu0 %v4370
        %v4533 = vpop.f32.mrf.mxu0
        %v4534 = vadd.f32 0.0, %v4533
        %v4535 = vpop.f32.mrf.mxu0
        %v4536 = vpop.f32.mrf.mxu0
        %v4537 = vadd.f32 0.0, %v4536
        %v4538 = vpop.f32.mrf.mxu0
        %4539 = vmatprep.mubr.bf16.mxu0 0
        %4540 = vmatmul.mubr.bf16.gmra.mxu0 %v4371
        %v4541 = vpop.f32.mrf.mxu0
        %v4542 = vadd.f32 0.0, %v4541
        %v4543 = vpop.f32.mrf.mxu0
        %v4544 = vpop.f32.mrf.mxu0
        %v4545 = vadd.f32 0.0, %v4544
        %v4546 = vpop.f32.mrf.mxu0
        %4547 = vmatprep.mubr.bf16.mxu0 0
        %4548 = vmatmul.mubr.bf16.gmra.mxu0 %v4372
        %v4549 = vpop.f32.mrf.mxu0
        %v4550 = vadd.f32 0.0, %v4549
        %v4551 = vpop.f32.mrf.mxu0
        %v4552 = vpop.f32.mrf.mxu0
        %v4553 = vadd.f32 0.0, %v4552
        %v4554 = vpop.f32.mrf.mxu0
        %4555 = vmatprep.mubr.bf16.mxu0 0
        %4556 = vmatmul.mubr.bf16.gmra.mxu0 %v4373
        %v4557 = vpop.f32.mrf.mxu0
        %v4558 = vadd.f32 0.0, %v4557
        %v4559 = vpop.f32.mrf.mxu0
        %v4560 = vpop.f32.mrf.mxu0
        %v4561 = vadd.f32 0.0, %v4560
        %v4562 = vpop.f32.mrf.mxu0
        %4563 = vmatprep.mubr.bf16.mxu0 0
        %4564 = vmatmul.mubr.bf16.gmra.mxu0 %v4374
        %v4565 = vpop.f32.mrf.mxu0
        %v4566 = vadd.f32 0.0, %v4565
        %v4567 = vpop.f32.mrf.mxu0
        %v4568 = vpop.f32.mrf.mxu0
        %v4569 = vadd.f32 0.0, %v4568
        %v4570 = vpop.f32.mrf.mxu0
        %4571 = vmatprep.mubr.bf16.mxu0 0
        %4572 = vmatmul.mubr.bf16.gmra.mxu0 %v4375
        %v4573 = vpop.f32.mrf.mxu0
        %v4574 = vadd.f32 0.0, %v4573
        %v4575 = vpop.f32.mrf.mxu0
        %v4576 = vpop.f32.mrf.mxu0
        %v4577 = vadd.f32 0.0, %v4576
        %v4578 = vpop.f32.mrf.mxu0
        %4579 = vmatprep.mubr.bf16.mxu0 0
        %4580 = vmatmul.mubr.bf16.gmra.mxu0 %v4376
        %v4581 = vpop.f32.mrf.mxu0
        %v4582 = vadd.f32 0.0, %v4581
        %v4583 = vpop.f32.mrf.mxu0
        %v4584 = vpop.f32.mrf.mxu0
        %v4585 = vadd.f32 0.0, %v4584
        %v4586 = vpop.f32.mrf.mxu0
        %4587 = vmatprep.mubr.bf16.mxu0 0
        %4588 = vmatmul.mubr.bf16.gmra.mxu0 %v4377
        %v4589 = vpop.f32.mrf.mxu0
        %v4590 = vadd.f32 0.0, %v4589
        %v4591 = vpop.f32.mrf.mxu0
        %v4592 = vpop.f32.mrf.mxu0
        %v4593 = vadd.f32 0.0, %v4592
        %v4594 = vpop.f32.mrf.mxu0
        %4595 = vmatprep.mubr.bf16.mxu0 0
        %4596 = vmatmul.mubr.bf16.gmra.mxu0 %v4378
        %v4597 = vpop.f32.mrf.mxu0
        %v4598 = vadd.f32 0.0, %v4597
        %v4599 = vpop.f32.mrf.mxu0
        %v4600 = vpop.f32.mrf.mxu0
        %v4601 = vadd.f32 0.0, %v4600
        %v4602 = vpop.f32.mrf.mxu0
        %4603 = vdwg.mxu0
        %v4604 = vadd.f32 %v3850, %v4478
        %v4605 = vadd.f32 %v3851, %v4481
        %v4606 = vadd.f32 %v3852, %v4486
        %v4607 = vadd.f32 %v3853, %v4489
        %v4608 = vadd.f32 %v3854, %v4494
        %v4609 = vadd.f32 %v3855, %v4497
        %v4610 = vadd.f32 %v3856, %v4502
        %v4611 = vadd.f32 %v3857, %v4505
        %v4612 = vadd.f32 %v3858, %v4510
        %v4613 = vadd.f32 %v3859, %v4513
        %v4614 = vadd.f32 %v3860, %v4518
        %v4615 = vadd.f32 %v3861, %v4521
        %v4616 = vadd.f32 %v3862, %v4526
        %v4617 = vadd.f32 %v3863, %v4529
        %v4618 = vadd.f32 %v3864, %v4534
        %v4619 = vadd.f32 %v3865, %v4537
        %v4620 = vadd.f32 %v3866, %v4542
        %v4621 = vadd.f32 %v3867, %v4545
        %v4622 = vadd.f32 %v3868, %v4550
        %v4623 = vadd.f32 %v3869, %v4553
        %v4624 = vadd.f32 %v3870, %v4558
        %v4625 = vadd.f32 %v3871, %v4561
        %v4626 = vadd.f32 %v3872, %v4566
        %v4627 = vadd.f32 %v3873, %v4569
        %v4628 = vadd.f32 %v3874, %v4574
        %v4629 = vadd.f32 %v3875, %v4577
        %v4630 = vadd.f32 %v3876, %v4582
        %v4631 = vadd.f32 %v3877, %v4585
        %v4632 = vadd.f32 %v3878, %v4590
        %v4633 = vadd.f32 %v3879, %v4593
        %v4634 = vadd.f32 %v3880, %v4598
        %v4635 = vadd.f32 %v3881, %v4601
        %v4636 = vld [vmem:[%s3495] sm:$0xe]
        %v4637 = vld [vmem:[%s3495 + $0xc] sm:$0xe]
        %v4638 = vld [vmem:[%s3495 + $0x18] sm:$0xe]
        %v4639 = vld [vmem:[%s3495 + $0x24] sm:$0xe]
        %v4640 = vld [vmem:[%s3495 + $0x30] sm:$0xe]
        %v4641 = vld [vmem:[%s3495 + $0x3c] sm:$0xe]
        %v4642 = vld [vmem:[%s3495 + $0x48] sm:$0xe]
        %v4643 = vld [vmem:[%s3495 + $0x54] sm:$0xe]
        %v4644 = vld [vmem:[%s3495 + $0x60] sm:$0xe]
        %v4645 = vld [vmem:[%s3495 + $0x6c] sm:$0xe]
        %v4646 = vld [vmem:[%s3495 + $0x78] sm:$0xe]
        %v4647 = vld [vmem:[%s3495 + $0x84] sm:$0xe]
        %v4648 = vld [vmem:[%s3495 + $0x90] sm:$0xe]
        %v4649 = vld [vmem:[%s3495 + $0x9c] sm:$0xe]
        %v4650 = vld [vmem:[%s3495 + $0xa8] sm:$0xe]
        %v4651 = vld [vmem:[%s3495 + $0xb4] sm:$0xe]
        %v4700 = vrot.slane %v4636, 5
        %v4701 = vrot.slane %v4700, 4
        %v4702 = vrot.slane %v3883, 5
        %v4703 = vsel %vm1421, %v4701, %v4702
        %v4704 = vrot.slane %v4702, 4
        %v4705 = vrot.slane %v3884, 5
        %v4706 = vsel %vm1421, %v4704, %v4705
        %v4707 = vrot.slane %v4637, 5
        %v4708 = vrot.slane %v4707, 4
        %v4709 = vrot.slane %v3886, 5
        %v4710 = vsel %vm1421, %v4708, %v4709
        %v4711 = vrot.slane %v4709, 4
        %v4712 = vrot.slane %v3887, 5
        %v4713 = vsel %vm1421, %v4711, %v4712
        %v4714 = vrot.slane %v4638, 5
        %v4715 = vrot.slane %v4714, 4
        %v4716 = vrot.slane %v3889, 5
        %v4717 = vsel %vm1421, %v4715, %v4716
        %v4718 = vrot.slane %v4716, 4
        %v4719 = vrot.slane %v3890, 5
        %v4720 = vsel %vm1421, %v4718, %v4719
        %v4721 = vrot.slane %v4639, 5
        %v4722 = vrot.slane %v4721, 4
        %v4723 = vrot.slane %v3892, 5
        %v4724 = vsel %vm1421, %v4722, %v4723
        %v4725 = vrot.slane %v4723, 4
        %v4726 = vrot.slane %v3893, 5
        %v4727 = vsel %vm1421, %v4725, %v4726
        %v4728 = vrot.slane %v4640, 5
        %v4729 = vrot.slane %v4728, 4
        %v4730 = vrot.slane %v3895, 5
        %v4731 = vsel %vm1421, %v4729, %v4730
        %v4732 = vrot.slane %v4730, 4
        %v4733 = vrot.slane %v3896, 5
        %v4734 = vsel %vm1421, %v4732, %v4733
        %v4735 = vrot.slane %v4641, 5
        %v4736 = vrot.slane %v4735, 4
        %v4737 = vrot.slane %v3898, 5
        %v4738 = vsel %vm1421, %v4736, %v4737
        %v4739 = vrot.slane %v4737, 4
        %v4740 = vrot.slane %v3899, 5
        %v4741 = vsel %vm1421, %v4739, %v4740
        %v4742 = vrot.slane %v4642, 5
        %v4743 = vrot.slane %v4742, 4
        %v4744 = vrot.slane %v3901, 5
        %v4745 = vsel %vm1421, %v4743, %v4744
        %v4746 = vrot.slane %v4744, 4
        %v4747 = vrot.slane %v3902, 5
        %v4748 = vsel %vm1421, %v4746, %v4747
        %v4749 = vrot.slane %v4643, 5
        %v4750 = vrot.slane %v4749, 4
        %v4751 = vrot.slane %v3904, 5
        %v4752 = vsel %vm1421, %v4750, %v4751
        %v4753 = vrot.slane %v4751, 4
        %v4754 = vrot.slane %v3905, 5
        %v4755 = vsel %vm1421, %v4753, %v4754
        %v4756 = vrot.slane %v4644, 5
        %v4757 = vrot.slane %v4756, 4
        %v4758 = vrot.slane %v3907, 5
        %v4759 = vsel %vm1421, %v4757, %v4758
        %v4760 = vrot.slane %v4758, 4
        %v4761 = vrot.slane %v3908, 5
        %v4762 = vsel %vm1421, %v4760, %v4761
        %v4763 = vrot.slane %v4645, 5
        %v4764 = vrot.slane %v4763, 4
        %v4765 = vrot.slane %v3910, 5
        %v4766 = vsel %vm1421, %v4764, %v4765
        %v4767 = vrot.slane %v4765, 4
        %v4768 = vrot.slane %v3911, 5
        %v4769 = vsel %vm1421, %v4767, %v4768
        %v4770 = vrot.slane %v4646, 5
        %v4771 = vrot.slane %v4770, 4
        %v4772 = vrot.slane %v3913, 5
        %v4773 = vsel %vm1421, %v4771, %v4772
        %v4774 = vrot.slane %v4772, 4
        %v4775 = vrot.slane %v3914, 5
        %v4776 = vsel %vm1421, %v4774, %v4775
        %v4777 = vrot.slane %v4647, 5
        %v4778 = vrot.slane %v4777, 4
        %v4779 = vrot.slane %v3916, 5
        %v4780 = vsel %vm1421, %v4778, %v4779
        %v4781 = vrot.slane %v4779, 4
        %v4782 = vrot.slane %v3917, 5
        %v4783 = vsel %vm1421, %v4781, %v4782
        %v4784 = vrot.slane %v4648, 5
        %v4785 = vrot.slane %v4784, 4
        %v4786 = vrot.slane %v3919, 5
        %v4787 = vsel %vm1421, %v4785, %v4786
        %v4788 = vrot.slane %v4786, 4
        %v4789 = vrot.slane %v3920, 5
        %v4790 = vsel %vm1421, %v4788, %v4789
        %v4791 = vrot.slane %v4649, 5
        %v4792 = vrot.slane %v4791, 4
        %v4793 = vrot.slane %v3922, 5
        %v4794 = vsel %vm1421, %v4792, %v4793
        %v4795 = vrot.slane %v4793, 4
        %v4796 = vrot.slane %v3923, 5
        %v4797 = vsel %vm1421, %v4795, %v4796
        %v4798 = vrot.slane %v4650, 5
        %v4799 = vrot.slane %v4798, 4
        %v4800 = vrot.slane %v3925, 5
        %v4801 = vsel %vm1421, %v4799, %v4800
        %v4802 = vrot.slane %v4800, 4
        %v4803 = vrot.slane %v3926, 5
        %v4804 = vsel %vm1421, %v4802, %v4803
        %v4805 = vrot.slane %v4651, 5
        %v4806 = vrot.slane %v4805, 4
        %v4807 = vrot.slane %v3928, 5
        %v4808 = vsel %vm1421, %v4806, %v4807
        %v4809 = vrot.slane %v4807, 4
        %v4810 = vrot.slane %v3929, 5
        %v4811 = vsel %vm1421, %v4809, %v4810
        %s4812 = scalar_lea.vmem %s2, 512
        %v4813 = vld [vmem:[%s4812] sm:$0xf]
        %v4814 = vld [vmem:[%s4812 + $0x4] sm:$0xf]
        %v4815 = vld [vmem:[%s4812 + $0x8] sm:$0xf]
        %v4816 = vld [vmem:[%s4812 + $0xc] sm:$0xf]
        %v4817 = vld [vmem:[%s4812 + $0x10] sm:$0xf]
        %v4818 = vld [vmem:[%s4812 + $0x14] sm:$0xf]
        %v4819 = vld [vmem:[%s4812 + $0x18] sm:$0xf]
        %v4820 = vld [vmem:[%s4812 + $0x1c] sm:$0xf]
        %v4821 = vld [vmem:[%s4812 + $0x20] sm:$0xf]
        %v4822 = vld [vmem:[%s4812 + $0x24] sm:$0xf]
        %v4823 = vld [vmem:[%s4812 + $0x28] sm:$0xf]
        %v4824 = vld [vmem:[%s4812 + $0x2c] sm:$0xf]
        %v4825 = vld [vmem:[%s4812 + $0x30] sm:$0xf]
        %v4826 = vld [vmem:[%s4812 + $0x34] sm:$0xf]
        %v4827 = vld [vmem:[%s4812 + $0x38] sm:$0xf]
        %v4828 = vld [vmem:[%s4812 + $0x3c] sm:$0xf]
        %v4829 = vunpack.c.l.b16 %v4703
        %v4830 = vunpack.c.l.b16 %v4706
        %v4831 = vunpack.c.l.b16 %v4710
        %v4832 = vunpack.c.l.b16 %v4713
        %v4833 = vunpack.c.l.b16 %v4717
        %v4834 = vunpack.c.l.b16 %v4720
        %v4835 = vunpack.c.l.b16 %v4724
        %v4836 = vunpack.c.l.b16 %v4727
        %v4837 = vunpack.c.l.b16 %v4731
        %v4838 = vunpack.c.l.b16 %v4734
        %v4839 = vunpack.c.l.b16 %v4738
        %v4840 = vunpack.c.l.b16 %v4741
        %v4841 = vunpack.c.l.b16 %v4745
        %v4842 = vunpack.c.l.b16 %v4748
        %v4843 = vunpack.c.l.b16 %v4752
        %v4844 = vunpack.c.l.b16 %v4755
        %v4845 = vunpack.c.l.b16 %v4759
        %v4846 = vunpack.c.l.b16 %v4762
        %v4847 = vunpack.c.l.b16 %v4766
        %v4848 = vunpack.c.l.b16 %v4769
        %v4849 = vunpack.c.l.b16 %v4773
        %v4850 = vunpack.c.l.b16 %v4776
        %v4851 = vunpack.c.l.b16 %v4780
        %v4852 = vunpack.c.l.b16 %v4783
        %v4853 = vunpack.c.l.b16 %v4787
        %v4854 = vunpack.c.l.b16 %v4790
        %v4855 = vunpack.c.l.b16 %v4794
        %v4856 = vunpack.c.l.b16 %v4797
        %v4857 = vunpack.c.l.b16 %v4801
        %v4858 = vunpack.c.l.b16 %v4804
        %v4859 = vunpack.c.l.b16 %v4808
        %v4860 = vunpack.c.l.b16 %v4811
        %v4861 = vpack.c.b16 %v4830, %v4829
        %v4862 = vpack.c.b16 %v4832, %v4831
        %v4863 = vpack.c.b16 %v4834, %v4833
        %v4864 = vpack.c.b16 %v4836, %v4835
        %v4865 = vpack.c.b16 %v4838, %v4837
        %v4866 = vpack.c.b16 %v4840, %v4839
        %v4867 = vpack.c.b16 %v4842, %v4841
        %v4868 = vpack.c.b16 %v4844, %v4843
        %v4869 = vpack.c.b16 %v4846, %v4845
        %v4870 = vpack.c.b16 %v4848, %v4847
        %v4871 = vpack.c.b16 %v4850, %v4849
        %v4872 = vpack.c.b16 %v4852, %v4851
        %v4873 = vpack.c.b16 %v4854, %v4853
        %v4874 = vpack.c.b16 %v4856, %v4855
        %v4875 = vpack.c.b16 %v4858, %v4857
        %v4876 = vpack.c.b16 %v4860, %v4859
        %v4909 = vunpack.c.l.b16 %v4813
        %v4910 = vunpack.c.l.b16 %v4814
        %v4911 = vunpack.c.l.b16 %v4815
        %v4912 = vunpack.c.l.b16 %v4816
        %v4913 = vunpack.c.l.b16 %v4817
        %v4914 = vunpack.c.l.b16 %v4818
        %v4915 = vunpack.c.l.b16 %v4819
        %v4916 = vunpack.c.l.b16 %v4820
        %v4917 = vunpack.c.l.b16 %v4821
        %v4918 = vunpack.c.l.b16 %v4822
        %v4919 = vunpack.c.l.b16 %v4823
        %v4920 = vunpack.c.l.b16 %v4824
        %v4921 = vunpack.c.l.b16 %v4825
        %v4922 = vunpack.c.l.b16 %v4826
        %v4923 = vunpack.c.l.b16 %v4827
        %v4924 = vunpack.c.l.b16 %v4828
        %v4925 = vpack.c.b16 %v4910, %v4909
        %v4926 = vpack.c.b16 %v4912, %v4911
        %v4927 = vpack.c.b16 %v4914, %v4913
        %v4928 = vpack.c.b16 %v4916, %v4915
        %v4929 = vpack.c.b16 %v4918, %v4917
        %v4930 = vpack.c.b16 %v4920, %v4919
        %v4931 = vpack.c.b16 %v4922, %v4921
        %v4932 = vpack.c.b16 %v4924, %v4923
        %4941 = vmatprep.subr.bf16.mxu0 0
        %4942 = vmatpush1.bf16.msra.mxu0 %v4932
        %4943 = vmatprep.subr.bf16.mxu0 0
        %4944 = vmatpush1.bf16.msra.mxu0 %v4931
        %4945 = vmatprep.subr.bf16.mxu0 0
        %4946 = vmatpush1.bf16.msra.mxu0 %v4930
        %4947 = vmatprep.subr.bf16.mxu0 0
        %4948 = vmatpush1.bf16.msra.mxu0 %v4929
        %4949 = vmatprep.subr.bf16.mxu0 0
        %4950 = vmatpush1.bf16.msra.mxu0 %v4928
        %4951 = vmatprep.subr.bf16.mxu0 0
        %4952 = vmatpush1.bf16.msra.mxu0 %v4927
        %4953 = vmatprep.subr.bf16.mxu0 0
        %4954 = vmatpush1.bf16.msra.mxu0 %v4926
        %4955 = vmatprep.subr.bf16.mxu0 0
        %4956 = vmatpush1.bf16.msra.mxu0 %v4925
        %4957 = vmatprep.subr.bf16.mxu0 0
        %4958 = vmatpush2.bf16.msra.mxu0 0
        %4959 = vmatprep.subr.bf16.mxu0 0
        %4960 = vmatpush2.bf16.msra.mxu0 0
        %4961 = vmatprep.subr.bf16.mxu0 0
        %4962 = vmatpush2.bf16.msra.mxu0 0
        %4963 = vmatprep.subr.bf16.mxu0 0
        %4964 = vmatpush2.bf16.msra.mxu0 0
        %4965 = vmatprep.subr.bf16.mxu0 0
        %4966 = vmatpush2.bf16.msra.mxu0 0
        %4967 = vmatprep.subr.bf16.mxu0 0
        %4968 = vmatpush2.bf16.msra.mxu0 0
        %4969 = vmatprep.subr.bf16.mxu0 0
        %4970 = vmatpush2.bf16.msra.mxu0 0
        %4971 = vmatprep.subr.bf16.mxu0 0
        %4972 = vmatpush2.bf16.msra.mxu0 0
        %4973 = vmatprep.mubr.bf16.mxu0 0
        %4974 = vmatmul.mubr.bf16.gmra.mxu0 %v4861
        %v4975 = vpop.f32.mrf.mxu0
        %v4976 = vadd.f32 0.0, %v4975
        %v4977 = vpop.f32.mrf.mxu0
        %v4978 = vpop.f32.mrf.mxu0
        %v4979 = vadd.f32 0.0, %v4978
        %v4980 = vpop.f32.mrf.mxu0
        %4981 = vmatprep.mubr.bf16.mxu0 0
        %4982 = vmatmul.mubr.bf16.gmra.mxu0 %v4862
        %v4983 = vpop.f32.mrf.mxu0
        %v4984 = vadd.f32 0.0, %v4983
        %v4985 = vpop.f32.mrf.mxu0
        %v4986 = vpop.f32.mrf.mxu0
        %v4987 = vadd.f32 0.0, %v4986
        %v4988 = vpop.f32.mrf.mxu0
        %4989 = vmatprep.mubr.bf16.mxu0 0
        %4990 = vmatmul.mubr.bf16.gmra.mxu0 %v4863
        %v4991 = vpop.f32.mrf.mxu0
        %v4992 = vadd.f32 0.0, %v4991
        %v4993 = vpop.f32.mrf.mxu0
        %v4994 = vpop.f32.mrf.mxu0
        %v4995 = vadd.f32 0.0, %v4994
        %v4996 = vpop.f32.mrf.mxu0
        %4997 = vmatprep.mubr.bf16.mxu0 0
        %4998 = vmatmul.mubr.bf16.gmra.mxu0 %v4864
        %v4999 = vpop.f32.mrf.mxu0
        %v5000 = vadd.f32 0.0, %v4999
        %v5001 = vpop.f32.mrf.mxu0
        %v5002 = vpop.f32.mrf.mxu0
        %v5003 = vadd.f32 0.0, %v5002
        %v5004 = vpop.f32.mrf.mxu0
        %5005 = vmatprep.mubr.bf16.mxu0 0
        %5006 = vmatmul.mubr.bf16.gmra.mxu0 %v4865
        %v5007 = vpop.f32.mrf.mxu0
        %v5008 = vadd.f32 0.0, %v5007
        %v5009 = vpop.f32.mrf.mxu0
        %v5010 = vpop.f32.mrf.mxu0
        %v5011 = vadd.f32 0.0, %v5010
        %v5012 = vpop.f32.mrf.mxu0
        %5013 = vmatprep.mubr.bf16.mxu0 0
        %5014 = vmatmul.mubr.bf16.gmra.mxu0 %v4866
        %v5015 = vpop.f32.mrf.mxu0
        %v5016 = vadd.f32 0.0, %v5015
        %v5017 = vpop.f32.mrf.mxu0
        %v5018 = vpop.f32.mrf.mxu0
        %v5019 = vadd.f32 0.0, %v5018
        %v5020 = vpop.f32.mrf.mxu0
        %5021 = vmatprep.mubr.bf16.mxu0 0
        %5022 = vmatmul.mubr.bf16.gmra.mxu0 %v4867
        %v5023 = vpop.f32.mrf.mxu0
        %v5024 = vadd.f32 0.0, %v5023
        %v5025 = vpop.f32.mrf.mxu0
        %v5026 = vpop.f32.mrf.mxu0
        %v5027 = vadd.f32 0.0, %v5026
        %v5028 = vpop.f32.mrf.mxu0
        %5029 = vmatprep.mubr.bf16.mxu0 0
        %5030 = vmatmul.mubr.bf16.gmra.mxu0 %v4868
        %v5031 = vpop.f32.mrf.mxu0
        %v5032 = vadd.f32 0.0, %v5031
        %v5033 = vpop.f32.mrf.mxu0
        %v5034 = vpop.f32.mrf.mxu0
        %v5035 = vadd.f32 0.0, %v5034
        %v5036 = vpop.f32.mrf.mxu0
        %5037 = vmatprep.mubr.bf16.mxu0 0
        %5038 = vmatmul.mubr.bf16.gmra.mxu0 %v4869
        %v5039 = vpop.f32.mrf.mxu0
        %v5040 = vadd.f32 0.0, %v5039
        %v5041 = vpop.f32.mrf.mxu0
        %v5042 = vpop.f32.mrf.mxu0
        %v5043 = vadd.f32 0.0, %v5042
        %v5044 = vpop.f32.mrf.mxu0
        %5045 = vmatprep.mubr.bf16.mxu0 0
        %5046 = vmatmul.mubr.bf16.gmra.mxu0 %v4870
        %v5047 = vpop.f32.mrf.mxu0
        %v5048 = vadd.f32 0.0, %v5047
        %v5049 = vpop.f32.mrf.mxu0
        %v5050 = vpop.f32.mrf.mxu0
        %v5051 = vadd.f32 0.0, %v5050
        %v5052 = vpop.f32.mrf.mxu0
        %5053 = vmatprep.mubr.bf16.mxu0 0
        %5054 = vmatmul.mubr.bf16.gmra.mxu0 %v4871
        %v5055 = vpop.f32.mrf.mxu0
        %v5056 = vadd.f32 0.0, %v5055
        %v5057 = vpop.f32.mrf.mxu0
        %v5058 = vpop.f32.mrf.mxu0
        %v5059 = vadd.f32 0.0, %v5058
        %v5060 = vpop.f32.mrf.mxu0
        %5061 = vmatprep.mubr.bf16.mxu0 0
        %5062 = vmatmul.mubr.bf16.gmra.mxu0 %v4872
        %v5063 = vpop.f32.mrf.mxu0
        %v5064 = vadd.f32 0.0, %v5063
        %v5065 = vpop.f32.mrf.mxu0
        %v5066 = vpop.f32.mrf.mxu0
        %v5067 = vadd.f32 0.0, %v5066
        %v5068 = vpop.f32.mrf.mxu0
        %5069 = vmatprep.mubr.bf16.mxu0 0
        %5070 = vmatmul.mubr.bf16.gmra.mxu0 %v4873
        %v5071 = vpop.f32.mrf.mxu0
        %v5072 = vadd.f32 0.0, %v5071
        %v5073 = vpop.f32.mrf.mxu0
        %v5074 = vpop.f32.mrf.mxu0
        %v5075 = vadd.f32 0.0, %v5074
        %v5076 = vpop.f32.mrf.mxu0
        %5077 = vmatprep.mubr.bf16.mxu0 0
        %5078 = vmatmul.mubr.bf16.gmra.mxu0 %v4874
        %v5079 = vpop.f32.mrf.mxu0
        %v5080 = vadd.f32 0.0, %v5079
        %v5081 = vpop.f32.mrf.mxu0
        %v5082 = vpop.f32.mrf.mxu0
        %v5083 = vadd.f32 0.0, %v5082
        %v5084 = vpop.f32.mrf.mxu0
        %5085 = vmatprep.mubr.bf16.mxu0 0
        %5086 = vmatmul.mubr.bf16.gmra.mxu0 %v4875
        %v5087 = vpop.f32.mrf.mxu0
        %v5088 = vadd.f32 0.0, %v5087
        %v5089 = vpop.f32.mrf.mxu0
        %v5090 = vpop.f32.mrf.mxu0
        %v5091 = vadd.f32 0.0, %v5090
        %v5092 = vpop.f32.mrf.mxu0
        %5093 = vmatprep.mubr.bf16.mxu0 0
        %5094 = vmatmul.mubr.bf16.gmra.mxu0 %v4876
        %v5095 = vpop.f32.mrf.mxu0
        %v5096 = vadd.f32 0.0, %v5095
        %v5097 = vpop.f32.mrf.mxu0
        %v5098 = vpop.f32.mrf.mxu0
        %v5099 = vadd.f32 0.0, %v5098
        %v5100 = vpop.f32.mrf.mxu0
        %5101 = vdwg.mxu0
        %v5102 = vadd.f32 %v4604, %v4976
        %v5103 = vadd.f32 %v4605, %v4979
        %v5104 = vadd.f32 %v4606, %v4984
        %v5105 = vadd.f32 %v4607, %v4987
        %v5106 = vadd.f32 %v4608, %v4992
        %v5107 = vadd.f32 %v4609, %v4995
        %v5108 = vadd.f32 %v4610, %v5000
        %v5109 = vadd.f32 %v4611, %v5003
        %v5110 = vadd.f32 %v4612, %v5008
        %v5111 = vadd.f32 %v4613, %v5011
        %v5112 = vadd.f32 %v4614, %v5016
        %v5113 = vadd.f32 %v4615, %v5019
        %v5114 = vadd.f32 %v4616, %v5024
        %v5115 = vadd.f32 %v4617, %v5027
        %v5116 = vadd.f32 %v4618, %v5032
        %v5117 = vadd.f32 %v4619, %v5035
        %v5118 = vadd.f32 %v4620, %v5040
        %v5119 = vadd.f32 %v4621, %v5043
        %v5120 = vadd.f32 %v4622, %v5048
        %v5121 = vadd.f32 %v4623, %v5051
        %v5122 = vadd.f32 %v4624, %v5056
        %v5123 = vadd.f32 %v4625, %v5059
        %v5124 = vadd.f32 %v4626, %v5064
        %v5125 = vadd.f32 %v4627, %v5067
        %v5126 = vadd.f32 %v4628, %v5072
        %v5127 = vadd.f32 %v4629, %v5075
        %v5128 = vadd.f32 %v4630, %v5080
        %v5129 = vadd.f32 %v4631, %v5083
        %v5130 = vadd.f32 %v4632, %v5088
        %v5131 = vadd.f32 %v4633, %v5091
        %v5132 = vadd.f32 %v4634, %v5096
        %v5133 = vadd.f32 %v4635, %v5099
        %v5134 = vld [vmem:[%s3] sm:$0x1]
        %v5136 = vlaneseq
        %v5137 = vshrl.u32 %v5136, 7
        %v5138 = vsub.s32 0, %v5137
        %v5139 = vrot.slane %v5134, %v5138
        %v5141 = vadd.f32 %v5102, %v5139
        %v5142 = vadd.f32 %v5103, %v5139
        %v5143 = vadd.f32 %v5104, %v5139
        %v5144 = vadd.f32 %v5105, %v5139
        %v5145 = vadd.f32 %v5106, %v5139
        %v5146 = vadd.f32 %v5107, %v5139
        %v5147 = vadd.f32 %v5108, %v5139
        %v5148 = vadd.f32 %v5109, %v5139
        %v5149 = vadd.f32 %v5110, %v5139
        %v5150 = vadd.f32 %v5111, %v5139
        %v5151 = vadd.f32 %v5112, %v5139
        %v5152 = vadd.f32 %v5113, %v5139
        %v5153 = vadd.f32 %v5114, %v5139
        %v5154 = vadd.f32 %v5115, %v5139
        %v5155 = vadd.f32 %v5116, %v5139
        %v5156 = vadd.f32 %v5117, %v5139
        %v5157 = vadd.f32 %v5118, %v5139
        %v5158 = vadd.f32 %v5119, %v5139
        %v5159 = vadd.f32 %v5120, %v5139
        %v5160 = vadd.f32 %v5121, %v5139
        %v5161 = vadd.f32 %v5122, %v5139
        %v5162 = vadd.f32 %v5123, %v5139
        %v5163 = vadd.f32 %v5124, %v5139
        %v5164 = vadd.f32 %v5125, %v5139
        %v5165 = vadd.f32 %v5126, %v5139
        %v5166 = vadd.f32 %v5127, %v5139
        %v5167 = vadd.f32 %v5128, %v5139
        %v5168 = vadd.f32 %v5129, %v5139
        %v5169 = vadd.f32 %v5130, %v5139
        %v5170 = vadd.f32 %v5131, %v5139
        %v5171 = vadd.f32 %v5132, %v5139
        %v5172 = vadd.f32 %v5133, %v5139
        %v5173 = vmax.f32 %v5141, 0.0
        %v5174 = vmax.f32 %v5142, 0.0
        %v5175 = vmax.f32 %v5143, 0.0
        %v5176 = vmax.f32 %v5144, 0.0
        %v5177 = vmax.f32 %v5145, 0.0
        %v5178 = vmax.f32 %v5146, 0.0
        %v5179 = vmax.f32 %v5147, 0.0
        %v5180 = vmax.f32 %v5148, 0.0
        %v5181 = vmax.f32 %v5149, 0.0
        %v5182 = vmax.f32 %v5150, 0.0
        %v5183 = vmax.f32 %v5151, 0.0
        %v5184 = vmax.f32 %v5152, 0.0
        %v5185 = vmax.f32 %v5153, 0.0
        %v5186 = vmax.f32 %v5154, 0.0
        %v5187 = vmax.f32 %v5155, 0.0
        %v5188 = vmax.f32 %v5156, 0.0
        %v5189 = vmax.f32 %v5157, 0.0
        %v5190 = vmax.f32 %v5158, 0.0
        %v5191 = vmax.f32 %v5159, 0.0
        %v5192 = vmax.f32 %v5160, 0.0
        %v5193 = vmax.f32 %v5161, 0.0
        %v5194 = vmax.f32 %v5162, 0.0
        %v5195 = vmax.f32 %v5163, 0.0
        %v5196 = vmax.f32 %v5164, 0.0
        %v5197 = vmax.f32 %v5165, 0.0
        %v5198 = vmax.f32 %v5166, 0.0
        %v5199 = vmax.f32 %v5167, 0.0
        %v5200 = vmax.f32 %v5168, 0.0
        %v5201 = vmax.f32 %v5169, 0.0
        %v5202 = vmax.f32 %v5170, 0.0
        %v5203 = vmax.f32 %v5171, 0.0
        %v5204 = vmax.f32 %v5172, 0.0
        %5205 = vst [vmem:[#allocation2] sm:$0xff] 0.0
        %5206 = vst [vmem:[#allocation2 + $0x8] sm:$0xff] 0.0
        %5207 = vst [vmem:[#allocation2 + $0x10] sm:$0x3] 0.0
        %5208 = vst [vmem:[#allocation2 + $0x18] sm:$0xff] 0.0
        %5209 = vst [vmem:[#allocation2 + $0x20] sm:$0xff] 0.0
        %5210 = vst [vmem:[#allocation2 + $0x28] sm:$0x3] 0.0
        %5211 = vst [vmem:[#allocation2 + $0x30] sm:$0xff] 0.0
        %5212 = vst [vmem:[#allocation2 + $0x38] sm:$0xff] 0.0
        %5213 = vst [vmem:[#allocation2 + $0x40] sm:$0x3] 0.0
        %5214 = vst [vmem:[#allocation2 + $0x48] sm:$0xff] 0.0
        %5215 = vst [vmem:[#allocation2 + $0x50] sm:$0xff] 0.0
        %5216 = vst [vmem:[#allocation2 + $0x58] sm:$0x3] 0.0
        %5217 = vst [vmem:[#allocation2 + $0x60] sm:$0xff] 0.0
        %5218 = vst [vmem:[#allocation2 + $0x68] sm:$0xff] 0.0
        %5219 = vst [vmem:[#allocation2 + $0x70] sm:$0x3] 0.0
        %5220 = vst [vmem:[#allocation2 + $0x78] sm:$0xff] 0.0
        %5221 = vst [vmem:[#allocation2 + $0x80] sm:$0xff] 0.0
        %5222 = vst [vmem:[#allocation2 + $0x88] sm:$0x3] 0.0
        %5223 = vst [vmem:[#allocation2 + $0x90] sm:$0xff] 0.0
        %5224 = vst [vmem:[#allocation2 + $0x98] sm:$0xff] 0.0
        %5225 = vst [vmem:[#allocation2 + $0xa0] sm:$0x3] 0.0
        %5226 = vst [vmem:[#allocation2 + $0xa8] sm:$0xff] 0.0
        %5227 = vst [vmem:[#allocation2 + $0xb0] sm:$0xff] 0.0
        %5228 = vst [vmem:[#allocation2 + $0xb8] sm:$0x3] 0.0
        %5229 = vst [vmem:[#allocation2 + $0xc0] sm:$0xff] 0.0
        %5230 = vst [vmem:[#allocation2 + $0xc8] sm:$0xff] 0.0
        %5231 = vst [vmem:[#allocation2 + $0xd0] sm:$0x3] 0.0
        %5232 = vst [vmem:[#allocation2 + $0xd8] sm:$0xff] 0.0
        %5233 = vst [vmem:[#allocation2 + $0xe0] sm:$0xff] 0.0
        %5234 = vst [vmem:[#allocation2 + $0xe8] sm:$0x3] 0.0
        %5235 = vst [vmem:[#allocation2 + $0xf0] sm:$0xff] 0.0
        %5236 = vst [vmem:[#allocation2 + $0xf8] sm:$0xff] 0.0
        %5237 = vst [vmem:[#allocation2 + $0x100] sm:$0x3] 0.0
        %5238 = vst [vmem:[#allocation2 + $0x108] sm:$0xff] 0.0
        %5239 = vst [vmem:[#allocation2 + $0x110] sm:$0xff] 0.0
        %5240 = vst [vmem:[#allocation2 + $0x118] sm:$0x3] 0.0
        %5241 = vst [vmem:[#allocation2 + $0x120] sm:$0xff] 0.0
        %5242 = vst [vmem:[#allocation2 + $0x128] sm:$0xff] 0.0
        %5243 = vst [vmem:[#allocation2 + $0x130] sm:$0x3] 0.0
        %5244 = vst [vmem:[#allocation2 + $0x138] sm:$0xff] 0.0
        %5245 = vst [vmem:[#allocation2 + $0x140] sm:$0xff] 0.0
        %5246 = vst [vmem:[#allocation2 + $0x148] sm:$0x3] 0.0
        %5247 = vst [vmem:[#allocation2 + $0x150] sm:$0xff] 0.0
        %5248 = vst [vmem:[#allocation2 + $0x158] sm:$0xff] 0.0
        %5249 = vst [vmem:[#allocation2 + $0x160] sm:$0x3] 0.0
        %5250 = vst [vmem:[#allocation2 + $0x168] sm:$0xff] 0.0
        %5251 = vst [vmem:[#allocation2 + $0x170] sm:$0xff] 0.0
        %5252 = vst [vmem:[#allocation2 + $0x178] sm:$0x3] 0.0
        %5253 = vst [vmem:[#allocation2 + $0x180] sm:$0xff] 0.0
        %5254 = vst [vmem:[#allocation2 + $0x188] sm:$0xff] 0.0
        %5255 = vst [vmem:[#allocation2 + $0x190] sm:$0x3] 0.0
        %5256 = vst [vmem:[#allocation2 + $0x198] sm:$0xff] 0.0
        %5257 = vst [vmem:[#allocation2 + $0x1a0] sm:$0xff] 0.0
        %5258 = vst [vmem:[#allocation2 + $0x1a8] sm:$0x3] 0.0
        %s5259 = scalar_lea.vmem [#allocation2], 24
        %5260 = vst [vmem:[%s5259 + $0x1] sm:$0xff] %v5173
        %5261 = vst [vmem:[%s5259 + $0x9] sm:$0xff] %v5174
        %5262 = vst [vmem:[%s5259 + $0x19] sm:$0xff] %v5175
        %5263 = vst [vmem:[%s5259 + $0x21] sm:$0xff] %v5176
        %5264 = vst [vmem:[%s5259 + $0x31] sm:$0xff] %v5177
        %5265 = vst [vmem:[%s5259 + $0x39] sm:$0xff] %v5178
        %5266 = vst [vmem:[%s5259 + $0x49] sm:$0xff] %v5179
        %5267 = vst [vmem:[%s5259 + $0x51] sm:$0xff] %v5180
        %5268 = vst [vmem:[%s5259 + $0x61] sm:$0xff] %v5181
        %5269 = vst [vmem:[%s5259 + $0x69] sm:$0xff] %v5182
        %5270 = vst [vmem:[%s5259 + $0x79] sm:$0xff] %v5183
        %5271 = vst [vmem:[%s5259 + $0x81] sm:$0xff] %v5184
        %5272 = vst [vmem:[%s5259 + $0x91] sm:$0xff] %v5185
        %5273 = vst [vmem:[%s5259 + $0x99] sm:$0xff] %v5186
        %5274 = vst [vmem:[%s5259 + $0xa9] sm:$0xff] %v5187
        %5275 = vst [vmem:[%s5259 + $0xb1] sm:$0xff] %v5188
        %5276 = vst [vmem:[%s5259 + $0xc1] sm:$0xff] %v5189
        %5277 = vst [vmem:[%s5259 + $0xc9] sm:$0xff] %v5190
        %5278 = vst [vmem:[%s5259 + $0xd9] sm:$0xff] %v5191
        %5279 = vst [vmem:[%s5259 + $0xe1] sm:$0xff] %v5192
        %5280 = vst [vmem:[%s5259 + $0xf1] sm:$0xff] %v5193
        %5281 = vst [vmem:[%s5259 + $0xf9] sm:$0xff] %v5194
        %5282 = vst [vmem:[%s5259 + $0x109] sm:$0xff] %v5195
        %5283 = vst [vmem:[%s5259 + $0x111] sm:$0xff] %v5196
        %5284 = vst [vmem:[%s5259 + $0x121] sm:$0xff] %v5197
        %5285 = vst [vmem:[%s5259 + $0x129] sm:$0xff] %v5198
        %5286 = vst [vmem:[%s5259 + $0x139] sm:$0xff] %v5199
        %5287 = vst [vmem:[%s5259 + $0x141] sm:$0xff] %v5200
        %5288 = vst [vmem:[%s5259 + $0x151] sm:$0xff] %v5201
        %5289 = vst [vmem:[%s5259 + $0x159] sm:$0xff] %v5202
        %5290 = vst [vmem:[%s5259 + $0x169] sm:$0xff] %v5203
        %5291 = vst [vmem:[%s5259 + $0x171] sm:$0xff] %v5204
        %v5292 = vld [vmem:[#allocation2] sm:$0xff]
        %v5293 = vld [vmem:[#allocation2 + $0x8] sm:$0xff]
        %v5294 = vld [vmem:[#allocation2 + $0x18] sm:$0xff]
        %v5295 = vld [vmem:[#allocation2 + $0x20] sm:$0xff]
        %v5296 = vld [vmem:[#allocation2 + $0x30] sm:$0xff]
        %v5297 = vld [vmem:[#allocation2 + $0x38] sm:$0xff]
        %v5298 = vld [vmem:[#allocation2 + $0x48] sm:$0xff]
        %v5299 = vld [vmem:[#allocation2 + $0x50] sm:$0xff]
        %v5300 = vld [vmem:[#allocation2 + $0x60] sm:$0xff]
        %v5301 = vld [vmem:[#allocation2 + $0x68] sm:$0xff]
        %v5302 = vld [vmem:[#allocation2 + $0x78] sm:$0xff]
        %v5303 = vld [vmem:[#allocation2 + $0x80] sm:$0xff]
        %v5304 = vld [vmem:[#allocation2 + $0x90] sm:$0xff]
        %v5305 = vld [vmem:[#allocation2 + $0x98] sm:$0xff]
        %v5306 = vld [vmem:[#allocation2 + $0xa8] sm:$0xff]
        %v5307 = vld [vmem:[#allocation2 + $0xb0] sm:$0xff]
        %v5308 = vld [vmem:[#allocation2 + $0xc0] sm:$0xff]
        %v5309 = vld [vmem:[#allocation2 + $0xc8] sm:$0xff]
        %v5310 = vld [vmem:[#allocation2 + $0xd8] sm:$0xff]
        %v5311 = vld [vmem:[#allocation2 + $0xe0] sm:$0xff]
        %v5312 = vld [vmem:[#allocation2 + $0xf0] sm:$0xff]
        %v5313 = vld [vmem:[#allocation2 + $0xf8] sm:$0xff]
        %v5314 = vld [vmem:[#allocation2 + $0x108] sm:$0xff]
        %v5315 = vld [vmem:[#allocation2 + $0x110] sm:$0xff]
        %v5316 = vld [vmem:[#allocation2 + $0x120] sm:$0xff]
        %v5317 = vld [vmem:[#allocation2 + $0x128] sm:$0xff]
        %v5318 = vld [vmem:[#allocation2 + $0x138] sm:$0xff]
        %v5319 = vld [vmem:[#allocation2 + $0x140] sm:$0xff]
        %v5320 = vld [vmem:[#allocation2 + $0x150] sm:$0xff]
        %v5321 = vld [vmem:[#allocation2 + $0x158] sm:$0xff]
        %v5322 = vld [vmem:[#allocation2 + $0x168] sm:$0xff]
        %v5323 = vld [vmem:[#allocation2 + $0x170] sm:$0xff]
        %v5324 = vpack.c.bf16 %v5293, %v5292
        %v5325 = vpack.c.bf16 %v5295, %v5294
        %v5326 = vpack.c.bf16 %v5297, %v5296
        %v5327 = vpack.c.bf16 %v5299, %v5298
        %v5328 = vpack.c.bf16 %v5301, %v5300
        %v5329 = vpack.c.bf16 %v5303, %v5302
        %v5330 = vpack.c.bf16 %v5305, %v5304
        %v5331 = vpack.c.bf16 %v5307, %v5306
        %v5332 = vpack.c.bf16 %v5309, %v5308
        %v5333 = vpack.c.bf16 %v5311, %v5310
        %v5334 = vpack.c.bf16 %v5313, %v5312
        %v5335 = vpack.c.bf16 %v5315, %v5314
        %v5336 = vpack.c.bf16 %v5317, %v5316
        %v5337 = vpack.c.bf16 %v5319, %v5318
        %v5338 = vpack.c.bf16 %v5321, %v5320
        %v5339 = vpack.c.bf16 %v5323, %v5322
        %v5340 = vld [vmem:[%s4] sm:$0xf]
        %v5341 = vld [vmem:[%s4 + $0x4] sm:$0xf]
        %v5342 = vld [vmem:[%s4 + $0x8] sm:$0xf]
        %v5343 = vld [vmem:[%s4 + $0xc] sm:$0xf]
        %v5344 = vld [vmem:[%s4 + $0x10] sm:$0xf]
        %v5345 = vld [vmem:[%s4 + $0x14] sm:$0xf]
        %v5346 = vld [vmem:[%s4 + $0x18] sm:$0xf]
        %v5347 = vld [vmem:[%s4 + $0x1c] sm:$0xf]
        %v5348 = vld [vmem:[%s4 + $0x20] sm:$0xf]
        %v5349 = vld [vmem:[%s4 + $0x24] sm:$0xf]
        %v5350 = vld [vmem:[%s4 + $0x28] sm:$0xf]
        %v5351 = vld [vmem:[%s4 + $0x2c] sm:$0xf]
        %v5352 = vld [vmem:[%s4 + $0x30] sm:$0xf]
        %v5353 = vld [vmem:[%s4 + $0x34] sm:$0xf]
        %v5354 = vld [vmem:[%s4 + $0x38] sm:$0xf]
        %v5355 = vld [vmem:[%s4 + $0x3c] sm:$0xf]
        %v5356 = vld [vmem:[#allocation2 + $0x1] sm:$0xff]
        %v5357 = vld [vmem:[#allocation2 + $0x9] sm:$0xff]
        %v5358 = vld [vmem:[#allocation2 + $0x19] sm:$0xff]
        %v5359 = vld [vmem:[#allocation2 + $0x21] sm:$0xff]
        %v5360 = vld [vmem:[#allocation2 + $0x31] sm:$0xff]
        %v5361 = vld [vmem:[#allocation2 + $0x39] sm:$0xff]
        %v5362 = vld [vmem:[#allocation2 + $0x49] sm:$0xff]
        %v5363 = vld [vmem:[#allocation2 + $0x51] sm:$0xff]
        %v5364 = vld [vmem:[#allocation2 + $0x61] sm:$0xff]
        %v5365 = vld [vmem:[#allocation2 + $0x69] sm:$0xff]
        %v5366 = vld [vmem:[#allocation2 + $0x79] sm:$0xff]
        %v5367 = vld [vmem:[#allocation2 + $0x81] sm:$0xff]
        %v5368 = vld [vmem:[#allocation2 + $0x91] sm:$0xff]
        %v5369 = vld [vmem:[#allocation2 + $0x99] sm:$0xff]
        %v5370 = vld [vmem:[#allocation2 + $0xa9] sm:$0xff]
        %v5371 = vld [vmem:[#allocation2 + $0xb1] sm:$0xff]
        %v5372 = vld [vmem:[#allocation2 + $0xc1] sm:$0xff]
        %v5373 = vld [vmem:[#allocation2 + $0xc9] sm:$0xff]
        %v5374 = vld [vmem:[#allocation2 + $0xd9] sm:$0xff]
        %v5375 = vld [vmem:[#allocation2 + $0xe1] sm:$0xff]
        %v5376 = vld [vmem:[#allocation2 + $0xf1] sm:$0xff]
        %v5377 = vld [vmem:[#allocation2 + $0xf9] sm:$0xff]
        %v5378 = vld [vmem:[#allocation2 + $0x109] sm:$0xff]
        %v5379 = vld [vmem:[#allocation2 + $0x111] sm:$0xff]
        %v5380 = vld [vmem:[#allocation2 + $0x121] sm:$0xff]
        %v5381 = vld [vmem:[#allocation2 + $0x129] sm:$0xff]
        %v5382 = vld [vmem:[#allocation2 + $0x139] sm:$0xff]
        %v5383 = vld [vmem:[#allocation2 + $0x141] sm:$0xff]
        %v5384 = vld [vmem:[#allocation2 + $0x151] sm:$0xff]
        %v5385 = vld [vmem:[#allocation2 + $0x159] sm:$0xff]
        %v5386 = vld [vmem:[#allocation2 + $0x169] sm:$0xff]
        %v5387 = vld [vmem:[#allocation2 + $0x171] sm:$0xff]
        %v5388 = vpack.c.bf16 %v5357, %v5356
        %v5389 = vpack.c.bf16 %v5359, %v5358
        %v5390 = vpack.c.bf16 %v5361, %v5360
        %v5391 = vpack.c.bf16 %v5363, %v5362
        %v5392 = vpack.c.bf16 %v5365, %v5364
        %v5393 = vpack.c.bf16 %v5367, %v5366
        %v5394 = vpack.c.bf16 %v5369, %v5368
        %v5395 = vpack.c.bf16 %v5371, %v5370
        %v5396 = vpack.c.bf16 %v5373, %v5372
        %v5397 = vpack.c.bf16 %v5375, %v5374
        %v5398 = vpack.c.bf16 %v5377, %v5376
        %v5399 = vpack.c.bf16 %v5379, %v5378
        %v5400 = vpack.c.bf16 %v5381, %v5380
        %v5401 = vpack.c.bf16 %v5383, %v5382
        %v5402 = vpack.c.bf16 %v5385, %v5384
        %v5403 = vpack.c.bf16 %v5387, %v5386
        %s5404 = scalar_lea.vmem %s4, 64
        %v5405 = vld [vmem:[%s5404] sm:$0xf]
        %v5406 = vld [vmem:[%s5404 + $0x4] sm:$0xf]
        %v5407 = vld [vmem:[%s5404 + $0x8] sm:$0xf]
        %v5408 = vld [vmem:[%s5404 + $0xc] sm:$0xf]
        %v5409 = vld [vmem:[%s5404 + $0x10] sm:$0xf]
        %v5410 = vld [vmem:[%s5404 + $0x14] sm:$0xf]
        %v5411 = vld [vmem:[%s5404 + $0x18] sm:$0xf]
        %v5412 = vld [vmem:[%s5404 + $0x1c] sm:$0xf]
        %v5413 = vld [vmem:[%s5404 + $0x20] sm:$0xf]
        %v5414 = vld [vmem:[%s5404 + $0x24] sm:$0xf]
        %v5415 = vld [vmem:[%s5404 + $0x28] sm:$0xf]
        %v5416 = vld [vmem:[%s5404 + $0x2c] sm:$0xf]
        %v5417 = vld [vmem:[%s5404 + $0x30] sm:$0xf]
        %v5418 = vld [vmem:[%s5404 + $0x34] sm:$0xf]
        %v5419 = vld [vmem:[%s5404 + $0x38] sm:$0xf]
        %v5420 = vld [vmem:[%s5404 + $0x3c] sm:$0xf]
        %v5437 = vunpack.c.l.b16 %v5405
        %v5438 = vunpack.c.l.b16 %v5406
        %v5439 = vunpack.c.l.b16 %v5407
        %v5440 = vunpack.c.l.b16 %v5408
        %v5441 = vunpack.c.l.b16 %v5409
        %v5442 = vunpack.c.l.b16 %v5410
        %v5443 = vunpack.c.l.b16 %v5411
        %v5444 = vunpack.c.l.b16 %v5412
        %v5445 = vunpack.c.l.b16 %v5413
        %v5446 = vunpack.c.l.b16 %v5414
        %v5447 = vunpack.c.l.b16 %v5415
        %v5448 = vunpack.c.l.b16 %v5416
        %v5449 = vunpack.c.l.b16 %v5417
        %v5450 = vunpack.c.l.b16 %v5418
        %v5451 = vunpack.c.l.b16 %v5419
        %v5452 = vunpack.c.l.b16 %v5420
        %v5453 = vpack.c.b16 %v5438, %v5437
        %v5454 = vpack.c.b16 %v5440, %v5439
        %v5455 = vpack.c.b16 %v5442, %v5441
        %v5456 = vpack.c.b16 %v5444, %v5443
        %v5457 = vpack.c.b16 %v5446, %v5445
        %v5458 = vpack.c.b16 %v5448, %v5447
        %v5459 = vpack.c.b16 %v5450, %v5449
        %v5460 = vpack.c.b16 %v5452, %v5451
        %5469 = vmatprep.subr.bf16.mxu0 0
        %5470 = vmatpush1.bf16.msra.mxu0 %v5460
        %5471 = vmatprep.subr.bf16.mxu0 0
        %5472 = vmatpush1.bf16.msra.mxu0 %v5459
        %5473 = vmatprep.subr.bf16.mxu0 0
        %5474 = vmatpush1.bf16.msra.mxu0 %v5458
        %5475 = vmatprep.subr.bf16.mxu0 0
        %5476 = vmatpush1.bf16.msra.mxu0 %v5457
        %5477 = vmatprep.subr.bf16.mxu0 0
        %5478 = vmatpush1.bf16.msra.mxu0 %v5456
        %5479 = vmatprep.subr.bf16.mxu0 0
        %5480 = vmatpush1.bf16.msra.mxu0 %v5455
        %5481 = vmatprep.subr.bf16.mxu0 0
        %5482 = vmatpush1.bf16.msra.mxu0 %v5454
        %5483 = vmatprep.subr.bf16.mxu0 0
        %5484 = vmatpush1.bf16.msra.mxu0 %v5453
        %5485 = vmatprep.subr.bf16.mxu0 0
        %5486 = vmatpush2.bf16.msra.mxu0 0
        %5487 = vmatprep.subr.bf16.mxu0 0
        %5488 = vmatpush2.bf16.msra.mxu0 0
        %5489 = vmatprep.subr.bf16.mxu0 0
        %5490 = vmatpush2.bf16.msra.mxu0 0
        %5491 = vmatprep.subr.bf16.mxu0 0
        %5492 = vmatpush2.bf16.msra.mxu0 0
        %5493 = vmatprep.subr.bf16.mxu0 0
        %5494 = vmatpush2.bf16.msra.mxu0 0
        %5495 = vmatprep.subr.bf16.mxu0 0
        %5496 = vmatpush2.bf16.msra.mxu0 0
        %5497 = vmatprep.subr.bf16.mxu0 0
        %5498 = vmatpush2.bf16.msra.mxu0 0
        %5499 = vmatprep.subr.bf16.mxu0 0
        %5500 = vmatpush2.bf16.msra.mxu0 0
        %5501 = vmatprep.mubr.bf16.mxu0 0
        %5502 = vmatmul.mubr.bf16.gmra.mxu0 %v5388
        %v5503 = vpop.f32.mrf.mxu0
        %v5504 = vadd.f32 0.0, %v5503
        %v5505 = vpop.f32.mrf.mxu0
        %v5506 = vpop.f32.mrf.mxu0
        %v5507 = vadd.f32 0.0, %v5506
        %v5508 = vpop.f32.mrf.mxu0
        %5509 = vmatprep.mubr.bf16.mxu0 0
        %5510 = vmatmul.mubr.bf16.gmra.mxu0 %v5389
        %v5511 = vpop.f32.mrf.mxu0
        %v5512 = vadd.f32 0.0, %v5511
        %v5513 = vpop.f32.mrf.mxu0
        %v5514 = vpop.f32.mrf.mxu0
        %v5515 = vadd.f32 0.0, %v5514
        %v5516 = vpop.f32.mrf.mxu0
        %5517 = vmatprep.mubr.bf16.mxu0 0
        %5518 = vmatmul.mubr.bf16.gmra.mxu0 %v5390
        %v5519 = vpop.f32.mrf.mxu0
        %v5520 = vadd.f32 0.0, %v5519
        %v5521 = vpop.f32.mrf.mxu0
        %v5522 = vpop.f32.mrf.mxu0
        %v5523 = vadd.f32 0.0, %v5522
        %v5524 = vpop.f32.mrf.mxu0
        %5525 = vmatprep.mubr.bf16.mxu0 0
        %5526 = vmatmul.mubr.bf16.gmra.mxu0 %v5391
        %v5527 = vpop.f32.mrf.mxu0
        %v5528 = vadd.f32 0.0, %v5527
        %v5529 = vpop.f32.mrf.mxu0
        %v5530 = vpop.f32.mrf.mxu0
        %v5531 = vadd.f32 0.0, %v5530
        %v5532 = vpop.f32.mrf.mxu0
        %5533 = vmatprep.mubr.bf16.mxu0 0
        %5534 = vmatmul.mubr.bf16.gmra.mxu0 %v5392
        %v5535 = vpop.f32.mrf.mxu0
        %v5536 = vadd.f32 0.0, %v5535
        %v5537 = vpop.f32.mrf.mxu0
        %v5538 = vpop.f32.mrf.mxu0
        %v5539 = vadd.f32 0.0, %v5538
        %v5540 = vpop.f32.mrf.mxu0
        %5541 = vmatprep.mubr.bf16.mxu0 0
        %5542 = vmatmul.mubr.bf16.gmra.mxu0 %v5393
        %v5543 = vpop.f32.mrf.mxu0
        %v5544 = vadd.f32 0.0, %v5543
        %v5545 = vpop.f32.mrf.mxu0
        %v5546 = vpop.f32.mrf.mxu0
        %v5547 = vadd.f32 0.0, %v5546
        %v5548 = vpop.f32.mrf.mxu0
        %5549 = vmatprep.mubr.bf16.mxu0 0
        %5550 = vmatmul.mubr.bf16.gmra.mxu0 %v5394
        %v5551 = vpop.f32.mrf.mxu0
        %v5552 = vadd.f32 0.0, %v5551
        %v5553 = vpop.f32.mrf.mxu0
        %v5554 = vpop.f32.mrf.mxu0
        %v5555 = vadd.f32 0.0, %v5554
        %v5556 = vpop.f32.mrf.mxu0
        %5557 = vmatprep.mubr.bf16.mxu0 0
        %5558 = vmatmul.mubr.bf16.gmra.mxu0 %v5395
        %v5559 = vpop.f32.mrf.mxu0
        %v5560 = vadd.f32 0.0, %v5559
        %v5561 = vpop.f32.mrf.mxu0
        %v5562 = vpop.f32.mrf.mxu0
        %v5563 = vadd.f32 0.0, %v5562
        %v5564 = vpop.f32.mrf.mxu0
        %5565 = vmatprep.mubr.bf16.mxu0 0
        %5566 = vmatmul.mubr.bf16.gmra.mxu0 %v5396
        %v5567 = vpop.f32.mrf.mxu0
        %v5568 = vadd.f32 0.0, %v5567
        %v5569 = vpop.f32.mrf.mxu0
        %v5570 = vpop.f32.mrf.mxu0
        %v5571 = vadd.f32 0.0, %v5570
        %v5572 = vpop.f32.mrf.mxu0
        %5573 = vmatprep.mubr.bf16.mxu0 0
        %5574 = vmatmul.mubr.bf16.gmra.mxu0 %v5397
        %v5575 = vpop.f32.mrf.mxu0
        %v5576 = vadd.f32 0.0, %v5575
        %v5577 = vpop.f32.mrf.mxu0
        %v5578 = vpop.f32.mrf.mxu0
        %v5579 = vadd.f32 0.0, %v5578
        %v5580 = vpop.f32.mrf.mxu0
        %5581 = vmatprep.mubr.bf16.mxu0 0
        %5582 = vmatmul.mubr.bf16.gmra.mxu0 %v5398
        %v5583 = vpop.f32.mrf.mxu0
        %v5584 = vadd.f32 0.0, %v5583
        %v5585 = vpop.f32.mrf.mxu0
        %v5586 = vpop.f32.mrf.mxu0
        %v5587 = vadd.f32 0.0, %v5586
        %v5588 = vpop.f32.mrf.mxu0
        %5589 = vmatprep.mubr.bf16.mxu0 0
        %5590 = vmatmul.mubr.bf16.gmra.mxu0 %v5399
        %v5591 = vpop.f32.mrf.mxu0
        %v5592 = vadd.f32 0.0, %v5591
        %v5593 = vpop.f32.mrf.mxu0
        %v5594 = vpop.f32.mrf.mxu0
        %v5595 = vadd.f32 0.0, %v5594
        %v5596 = vpop.f32.mrf.mxu0
        %5597 = vmatprep.mubr.bf16.mxu0 0
        %5598 = vmatmul.mubr.bf16.gmra.mxu0 %v5400
        %v5599 = vpop.f32.mrf.mxu0
        %v5600 = vadd.f32 0.0, %v5599
        %v5601 = vpop.f32.mrf.mxu0
        %v5602 = vpop.f32.mrf.mxu0
        %v5603 = vadd.f32 0.0, %v5602
        %v5604 = vpop.f32.mrf.mxu0
        %5605 = vmatprep.mubr.bf16.mxu0 0
        %5606 = vmatmul.mubr.bf16.gmra.mxu0 %v5401
        %v5607 = vpop.f32.mrf.mxu0
        %v5608 = vadd.f32 0.0, %v5607
        %v5609 = vpop.f32.mrf.mxu0
        %v5610 = vpop.f32.mrf.mxu0
        %v5611 = vadd.f32 0.0, %v5610
        %v5612 = vpop.f32.mrf.mxu0
        %5613 = vmatprep.mubr.bf16.mxu0 0
        %5614 = vmatmul.mubr.bf16.gmra.mxu0 %v5402
        %v5615 = vpop.f32.mrf.mxu0
        %v5616 = vadd.f32 0.0, %v5615
        %v5617 = vpop.f32.mrf.mxu0
        %v5618 = vpop.f32.mrf.mxu0
        %v5619 = vadd.f32 0.0, %v5618
        %v5620 = vpop.f32.mrf.mxu0
        %5621 = vmatprep.mubr.bf16.mxu0 0
        %5622 = vmatmul.mubr.bf16.gmra.mxu0 %v5403
        %v5623 = vpop.f32.mrf.mxu0
        %v5624 = vadd.f32 0.0, %v5623
        %v5625 = vpop.f32.mrf.mxu0
        %v5626 = vpop.f32.mrf.mxu0
        %v5627 = vadd.f32 0.0, %v5626
        %v5628 = vpop.f32.mrf.mxu0
        %5629 = vdwg.mxu0
        %v5646 = vunpack.c.l.b16 %v5340
        %v5647 = vunpack.c.l.b16 %v5341
        %v5648 = vunpack.c.l.b16 %v5342
        %v5649 = vunpack.c.l.b16 %v5343
        %v5650 = vunpack.c.l.b16 %v5344
        %v5651 = vunpack.c.l.b16 %v5345
        %v5652 = vunpack.c.l.b16 %v5346
        %v5653 = vunpack.c.l.b16 %v5347
        %v5654 = vunpack.c.l.b16 %v5348
        %v5655 = vunpack.c.l.b16 %v5349
        %v5656 = vunpack.c.l.b16 %v5350
        %v5657 = vunpack.c.l.b16 %v5351
        %v5658 = vunpack.c.l.b16 %v5352
        %v5659 = vunpack.c.l.b16 %v5353
        %v5660 = vunpack.c.l.b16 %v5354
        %v5661 = vunpack.c.l.b16 %v5355
        %v5662 = vpack.c.b16 %v5647, %v5646
        %v5663 = vpack.c.b16 %v5649, %v5648
        %v5664 = vpack.c.b16 %v5651, %v5650
        %v5665 = vpack.c.b16 %v5653, %v5652
        %v5666 = vpack.c.b16 %v5655, %v5654
        %v5667 = vpack.c.b16 %v5657, %v5656
        %v5668 = vpack.c.b16 %v5659, %v5658
        %v5669 = vpack.c.b16 %v5661, %v5660
        %5678 = vmatprep.subr.bf16.mxu0 0
        %5679 = vmatpush1.bf16.msra.mxu0 %v5669
        %5680 = vmatprep.subr.bf16.mxu0 0
        %5681 = vmatpush1.bf16.msra.mxu0 %v5668
        %5682 = vmatprep.subr.bf16.mxu0 0
        %5683 = vmatpush1.bf16.msra.mxu0 %v5667
        %5684 = vmatprep.subr.bf16.mxu0 0
        %5685 = vmatpush1.bf16.msra.mxu0 %v5666
        %5686 = vmatprep.subr.bf16.mxu0 0
        %5687 = vmatpush1.bf16.msra.mxu0 %v5665
        %5688 = vmatprep.subr.bf16.mxu0 0
        %5689 = vmatpush1.bf16.msra.mxu0 %v5664
        %5690 = vmatprep.subr.bf16.mxu0 0
        %5691 = vmatpush1.bf16.msra.mxu0 %v5663
        %5692 = vmatprep.subr.bf16.mxu0 0
        %5693 = vmatpush1.bf16.msra.mxu0 %v5662
        %5694 = vmatprep.subr.bf16.mxu0 0
        %5695 = vmatpush2.bf16.msra.mxu0 0
        %5696 = vmatprep.subr.bf16.mxu0 0
        %5697 = vmatpush2.bf16.msra.mxu0 0
        %5698 = vmatprep.subr.bf16.mxu0 0
        %5699 = vmatpush2.bf16.msra.mxu0 0
        %5700 = vmatprep.subr.bf16.mxu0 0
        %5701 = vmatpush2.bf16.msra.mxu0 0
        %5702 = vmatprep.subr.bf16.mxu0 0
        %5703 = vmatpush2.bf16.msra.mxu0 0
        %5704 = vmatprep.subr.bf16.mxu0 0
        %5705 = vmatpush2.bf16.msra.mxu0 0
        %5706 = vmatprep.subr.bf16.mxu0 0
        %5707 = vmatpush2.bf16.msra.mxu0 0
        %5708 = vmatprep.subr.bf16.mxu0 0
        %5709 = vmatpush2.bf16.msra.mxu0 0
        %5710 = vmatprep.mubr.bf16.mxu0 0
        %5711 = vmatmul.mubr.bf16.gmra.mxu0 %v5324
        %v5712 = vpop.f32.mrf.mxu0
        %v5713 = vadd.f32 %v5504, %v5712
        %v5714 = vpop.f32.mrf.mxu0
        %v5715 = vpop.f32.mrf.mxu0
        %v5716 = vadd.f32 %v5507, %v5715
        %v5717 = vpop.f32.mrf.mxu0
        %5718 = vmatprep.mubr.bf16.mxu0 0
        %5719 = vmatmul.mubr.bf16.gmra.mxu0 %v5325
        %v5720 = vpop.f32.mrf.mxu0
        %v5721 = vadd.f32 %v5512, %v5720
        %v5722 = vpop.f32.mrf.mxu0
        %v5723 = vpop.f32.mrf.mxu0
        %v5724 = vadd.f32 %v5515, %v5723
        %v5725 = vpop.f32.mrf.mxu0
        %5726 = vmatprep.mubr.bf16.mxu0 0
        %5727 = vmatmul.mubr.bf16.gmra.mxu0 %v5326
        %v5728 = vpop.f32.mrf.mxu0
        %v5729 = vadd.f32 %v5520, %v5728
        %v5730 = vpop.f32.mrf.mxu0
        %v5731 = vpop.f32.mrf.mxu0
        %v5732 = vadd.f32 %v5523, %v5731
        %v5733 = vpop.f32.mrf.mxu0
        %5734 = vmatprep.mubr.bf16.mxu0 0
        %5735 = vmatmul.mubr.bf16.gmra.mxu0 %v5327
        %v5736 = vpop.f32.mrf.mxu0
        %v5737 = vadd.f32 %v5528, %v5736
        %v5738 = vpop.f32.mrf.mxu0
        %v5739 = vpop.f32.mrf.mxu0
        %v5740 = vadd.f32 %v5531, %v5739
        %v5741 = vpop.f32.mrf.mxu0
        %5742 = vmatprep.mubr.bf16.mxu0 0
        %5743 = vmatmul.mubr.bf16.gmra.mxu0 %v5328
        %v5744 = vpop.f32.mrf.mxu0
        %v5745 = vadd.f32 %v5536, %v5744
        %v5746 = vpop.f32.mrf.mxu0
        %v5747 = vpop.f32.mrf.mxu0
        %v5748 = vadd.f32 %v5539, %v5747
        %v5749 = vpop.f32.mrf.mxu0
        %5750 = vmatprep.mubr.bf16.mxu0 0
        %5751 = vmatmul.mubr.bf16.gmra.mxu0 %v5329
        %v5752 = vpop.f32.mrf.mxu0
        %v5753 = vadd.f32 %v5544, %v5752
        %v5754 = vpop.f32.mrf.mxu0
        %v5755 = vpop.f32.mrf.mxu0
        %v5756 = vadd.f32 %v5547, %v5755
        %v5757 = vpop.f32.mrf.mxu0
        %5758 = vmatprep.mubr.bf16.mxu0 0
        %5759 = vmatmul.mubr.bf16.gmra.mxu0 %v5330
        %v5760 = vpop.f32.mrf.mxu0
        %v5761 = vadd.f32 %v5552, %v5760
        %v5762 = vpop.f32.mrf.mxu0
        %v5763 = vpop.f32.mrf.mxu0
        %v5764 = vadd.f32 %v5555, %v5763
        %v5765 = vpop.f32.mrf.mxu0
        %5766 = vmatprep.mubr.bf16.mxu0 0
        %5767 = vmatmul.mubr.bf16.gmra.mxu0 %v5331
        %v5768 = vpop.f32.mrf.mxu0
        %v5769 = vadd.f32 %v5560, %v5768
        %v5770 = vpop.f32.mrf.mxu0
        %v5771 = vpop.f32.mrf.mxu0
        %v5772 = vadd.f32 %v5563, %v5771
        %v5773 = vpop.f32.mrf.mxu0
        %5774 = vmatprep.mubr.bf16.mxu0 0
        %5775 = vmatmul.mubr.bf16.gmra.mxu0 %v5332
        %v5776 = vpop.f32.mrf.mxu0
        %v5777 = vadd.f32 %v5568, %v5776
        %v5778 = vpop.f32.mrf.mxu0
        %v5779 = vpop.f32.mrf.mxu0
        %v5780 = vadd.f32 %v5571, %v5779
        %v5781 = vpop.f32.mrf.mxu0
        %5782 = vmatprep.mubr.bf16.mxu0 0
        %5783 = vmatmul.mubr.bf16.gmra.mxu0 %v5333
        %v5784 = vpop.f32.mrf.mxu0
        %v5785 = vadd.f32 %v5576, %v5784
        %v5786 = vpop.f32.mrf.mxu0
        %v5787 = vpop.f32.mrf.mxu0
        %v5788 = vadd.f32 %v5579, %v5787
        %v5789 = vpop.f32.mrf.mxu0
        %5790 = vmatprep.mubr.bf16.mxu0 0
        %5791 = vmatmul.mubr.bf16.gmra.mxu0 %v5334
        %v5792 = vpop.f32.mrf.mxu0
        %v5793 = vadd.f32 %v5584, %v5792
        %v5794 = vpop.f32.mrf.mxu0
        %v5795 = vpop.f32.mrf.mxu0
        %v5796 = vadd.f32 %v5587, %v5795
        %v5797 = vpop.f32.mrf.mxu0
        %5798 = vmatprep.mubr.bf16.mxu0 0
        %5799 = vmatmul.mubr.bf16.gmra.mxu0 %v5335
        %v5800 = vpop.f32.mrf.mxu0
        %v5801 = vadd.f32 %v5592, %v5800
        %v5802 = vpop.f32.mrf.mxu0
        %v5803 = vpop.f32.mrf.mxu0
        %v5804 = vadd.f32 %v5595, %v5803
        %v5805 = vpop.f32.mrf.mxu0
        %5806 = vmatprep.mubr.bf16.mxu0 0
        %5807 = vmatmul.mubr.bf16.gmra.mxu0 %v5336
        %v5808 = vpop.f32.mrf.mxu0
        %v5809 = vadd.f32 %v5600, %v5808
        %v5810 = vpop.f32.mrf.mxu0
        %v5811 = vpop.f32.mrf.mxu0
        %v5812 = vadd.f32 %v5603, %v5811
        %v5813 = vpop.f32.mrf.mxu0
        %5814 = vmatprep.mubr.bf16.mxu0 0
        %5815 = vmatmul.mubr.bf16.gmra.mxu0 %v5337
        %v5816 = vpop.f32.mrf.mxu0
        %v5817 = vadd.f32 %v5608, %v5816
        %v5818 = vpop.f32.mrf.mxu0
        %v5819 = vpop.f32.mrf.mxu0
        %v5820 = vadd.f32 %v5611, %v5819
        %v5821 = vpop.f32.mrf.mxu0
        %5822 = vmatprep.mubr.bf16.mxu0 0
        %5823 = vmatmul.mubr.bf16.gmra.mxu0 %v5338
        %v5824 = vpop.f32.mrf.mxu0
        %v5825 = vadd.f32 %v5616, %v5824
        %v5826 = vpop.f32.mrf.mxu0
        %v5827 = vpop.f32.mrf.mxu0
        %v5828 = vadd.f32 %v5619, %v5827
        %v5829 = vpop.f32.mrf.mxu0
        %5830 = vmatprep.mubr.bf16.mxu0 0
        %5831 = vmatmul.mubr.bf16.gmra.mxu0 %v5339
        %v5832 = vpop.f32.mrf.mxu0
        %v5833 = vadd.f32 %v5624, %v5832
        %v5834 = vpop.f32.mrf.mxu0
        %v5835 = vpop.f32.mrf.mxu0
        %v5836 = vadd.f32 %v5627, %v5835
        %v5837 = vpop.f32.mrf.mxu0
        %5838 = vdwg.mxu0
        %v5839 = vld [vmem:[#allocation2 + $0x2] sm:$0xff]
        %v5840 = vld [vmem:[#allocation2 + $0xa] sm:$0xff]
        %v5841 = vld [vmem:[#allocation2 + $0x1a] sm:$0xff]
        %v5842 = vld [vmem:[#allocation2 + $0x22] sm:$0xff]
        %v5843 = vld [vmem:[#allocation2 + $0x32] sm:$0xff]
        %v5844 = vld [vmem:[#allocation2 + $0x3a] sm:$0xff]
        %v5845 = vld [vmem:[#allocation2 + $0x4a] sm:$0xff]
        %v5846 = vld [vmem:[#allocation2 + $0x52] sm:$0xff]
        %v5847 = vld [vmem:[#allocation2 + $0x62] sm:$0xff]
        %v5848 = vld [vmem:[#allocation2 + $0x6a] sm:$0xff]
        %v5849 = vld [vmem:[#allocation2 + $0x7a] sm:$0xff]
        %v5850 = vld [vmem:[#allocation2 + $0x82] sm:$0xff]
        %v5851 = vld [vmem:[#allocation2 + $0x92] sm:$0xff]
        %v5852 = vld [vmem:[#allocation2 + $0x9a] sm:$0xff]
        %v5853 = vld [vmem:[#allocation2 + $0xaa] sm:$0xff]
        %v5854 = vld [vmem:[#allocation2 + $0xb2] sm:$0xff]
        %v5855 = vld [vmem:[#allocation2 + $0xc2] sm:$0xff]
        %v5856 = vld [vmem:[#allocation2 + $0xca] sm:$0xff]
        %v5857 = vld [vmem:[#allocation2 + $0xda] sm:$0xff]
        %v5858 = vld [vmem:[#allocation2 + $0xe2] sm:$0xff]
        %v5859 = vld [vmem:[#allocation2 + $0xf2] sm:$0xff]
        %v5860 = vld [vmem:[#allocation2 + $0xfa] sm:$0xff]
        %v5861 = vld [vmem:[#allocation2 + $0x10a] sm:$0xff]
        %v5862 = vld [vmem:[#allocation2 + $0x112] sm:$0xff]
        %v5863 = vld [vmem:[#allocation2 + $0x122] sm:$0xff]
        %v5864 = vld [vmem:[#allocation2 + $0x12a] sm:$0xff]
        %v5865 = vld [vmem:[#allocation2 + $0x13a] sm:$0xff]
        %v5866 = vld [vmem:[#allocation2 + $0x142] sm:$0xff]
        %v5867 = vld [vmem:[#allocation2 + $0x152] sm:$0xff]
        %v5868 = vld [vmem:[#allocation2 + $0x15a] sm:$0xff]
        %v5869 = vld [vmem:[#allocation2 + $0x16a] sm:$0xff]
        %v5870 = vld [vmem:[#allocation2 + $0x172] sm:$0xff]
        %v5871 = vpack.c.bf16 %v5840, %v5839
        %v5872 = vpack.c.bf16 %v5842, %v5841
        %v5873 = vpack.c.bf16 %v5844, %v5843
        %v5874 = vpack.c.bf16 %v5846, %v5845
        %v5875 = vpack.c.bf16 %v5848, %v5847
        %v5876 = vpack.c.bf16 %v5850, %v5849
        %v5877 = vpack.c.bf16 %v5852, %v5851
        %v5878 = vpack.c.bf16 %v5854, %v5853
        %v5879 = vpack.c.bf16 %v5856, %v5855
        %v5880 = vpack.c.bf16 %v5858, %v5857
        %v5881 = vpack.c.bf16 %v5860, %v5859
        %v5882 = vpack.c.bf16 %v5862, %v5861
        %v5883 = vpack.c.bf16 %v5864, %v5863
        %v5884 = vpack.c.bf16 %v5866, %v5865
        %v5885 = vpack.c.bf16 %v5868, %v5867
        %v5886 = vpack.c.bf16 %v5870, %v5869
        %s5887 = scalar_lea.vmem %s4, 128
        %v5888 = vld [vmem:[%s5887] sm:$0xf]
        %v5889 = vld [vmem:[%s5887 + $0x4] sm:$0xf]
        %v5890 = vld [vmem:[%s5887 + $0x8] sm:$0xf]
        %v5891 = vld [vmem:[%s5887 + $0xc] sm:$0xf]
        %v5892 = vld [vmem:[%s5887 + $0x10] sm:$0xf]
        %v5893 = vld [vmem:[%s5887 + $0x14] sm:$0xf]
        %v5894 = vld [vmem:[%s5887 + $0x18] sm:$0xf]
        %v5895 = vld [vmem:[%s5887 + $0x1c] sm:$0xf]
        %v5896 = vld [vmem:[%s5887 + $0x20] sm:$0xf]
        %v5897 = vld [vmem:[%s5887 + $0x24] sm:$0xf]
        %v5898 = vld [vmem:[%s5887 + $0x28] sm:$0xf]
        %v5899 = vld [vmem:[%s5887 + $0x2c] sm:$0xf]
        %v5900 = vld [vmem:[%s5887 + $0x30] sm:$0xf]
        %v5901 = vld [vmem:[%s5887 + $0x34] sm:$0xf]
        %v5902 = vld [vmem:[%s5887 + $0x38] sm:$0xf]
        %v5903 = vld [vmem:[%s5887 + $0x3c] sm:$0xf]
        %v5920 = vunpack.c.l.b16 %v5888
        %v5921 = vunpack.c.l.b16 %v5889
        %v5922 = vunpack.c.l.b16 %v5890
        %v5923 = vunpack.c.l.b16 %v5891
        %v5924 = vunpack.c.l.b16 %v5892
        %v5925 = vunpack.c.l.b16 %v5893
        %v5926 = vunpack.c.l.b16 %v5894
        %v5927 = vunpack.c.l.b16 %v5895
        %v5928 = vunpack.c.l.b16 %v5896
        %v5929 = vunpack.c.l.b16 %v5897
        %v5930 = vunpack.c.l.b16 %v5898
        %v5931 = vunpack.c.l.b16 %v5899
        %v5932 = vunpack.c.l.b16 %v5900
        %v5933 = vunpack.c.l.b16 %v5901
        %v5934 = vunpack.c.l.b16 %v5902
        %v5935 = vunpack.c.l.b16 %v5903
        %v5936 = vpack.c.b16 %v5921, %v5920
        %v5937 = vpack.c.b16 %v5923, %v5922
        %v5938 = vpack.c.b16 %v5925, %v5924
        %v5939 = vpack.c.b16 %v5927, %v5926
        %v5940 = vpack.c.b16 %v5929, %v5928
        %v5941 = vpack.c.b16 %v5931, %v5930
        %v5942 = vpack.c.b16 %v5933, %v5932
        %v5943 = vpack.c.b16 %v5935, %v5934
        %5952 = vmatprep.subr.bf16.mxu0 0
        %5953 = vmatpush1.bf16.msra.mxu0 %v5943
        %5954 = vmatprep.subr.bf16.mxu0 0
        %5955 = vmatpush1.bf16.msra.mxu0 %v5942
        %5956 = vmatprep.subr.bf16.mxu0 0
        %5957 = vmatpush1.bf16.msra.mxu0 %v5941
        %5958 = vmatprep.subr.bf16.mxu0 0
        %5959 = vmatpush1.bf16.msra.mxu0 %v5940
        %5960 = vmatprep.subr.bf16.mxu0 0
        %5961 = vmatpush1.bf16.msra.mxu0 %v5939
        %5962 = vmatprep.subr.bf16.mxu0 0
        %5963 = vmatpush1.bf16.msra.mxu0 %v5938
        %5964 = vmatprep.subr.bf16.mxu0 0
        %5965 = vmatpush1.bf16.msra.mxu0 %v5937
        %5966 = vmatprep.subr.bf16.mxu0 0
        %5967 = vmatpush1.bf16.msra.mxu0 %v5936
        %5968 = vmatprep.subr.bf16.mxu0 0
        %5969 = vmatpush2.bf16.msra.mxu0 0
        %5970 = vmatprep.subr.bf16.mxu0 0
        %5971 = vmatpush2.bf16.msra.mxu0 0
        %5972 = vmatprep.subr.bf16.mxu0 0
        %5973 = vmatpush2.bf16.msra.mxu0 0
        %5974 = vmatprep.subr.bf16.mxu0 0
        %5975 = vmatpush2.bf16.msra.mxu0 0
        %5976 = vmatprep.subr.bf16.mxu0 0
        %5977 = vmatpush2.bf16.msra.mxu0 0
        %5978 = vmatprep.subr.bf16.mxu0 0
        %5979 = vmatpush2.bf16.msra.mxu0 0
        %5980 = vmatprep.subr.bf16.mxu0 0
        %5981 = vmatpush2.bf16.msra.mxu0 0
        %5982 = vmatprep.subr.bf16.mxu0 0
        %5983 = vmatpush2.bf16.msra.mxu0 0
        %5984 = vmatprep.mubr.bf16.mxu0 0
        %5985 = vmatmul.mubr.bf16.gmra.mxu0 %v5871
        %v5986 = vpop.f32.mrf.mxu0
        %v5987 = vadd.f32 0.0, %v5986
        %v5988 = vpop.f32.mrf.mxu0
        %v5989 = vpop.f32.mrf.mxu0
        %v5990 = vadd.f32 0.0, %v5989
        %v5991 = vpop.f32.mrf.mxu0
        %5992 = vmatprep.mubr.bf16.mxu0 0
        %5993 = vmatmul.mubr.bf16.gmra.mxu0 %v5872
        %v5994 = vpop.f32.mrf.mxu0
        %v5995 = vadd.f32 0.0, %v5994
        %v5996 = vpop.f32.mrf.mxu0
        %v5997 = vpop.f32.mrf.mxu0
        %v5998 = vadd.f32 0.0, %v5997
        %v5999 = vpop.f32.mrf.mxu0
        %6000 = vmatprep.mubr.bf16.mxu0 0
        %6001 = vmatmul.mubr.bf16.gmra.mxu0 %v5873
        %v6002 = vpop.f32.mrf.mxu0
        %v6003 = vadd.f32 0.0, %v6002
        %v6004 = vpop.f32.mrf.mxu0
        %v6005 = vpop.f32.mrf.mxu0
        %v6006 = vadd.f32 0.0, %v6005
        %v6007 = vpop.f32.mrf.mxu0
        %6008 = vmatprep.mubr.bf16.mxu0 0
        %6009 = vmatmul.mubr.bf16.gmra.mxu0 %v5874
        %v6010 = vpop.f32.mrf.mxu0
        %v6011 = vadd.f32 0.0, %v6010
        %v6012 = vpop.f32.mrf.mxu0
        %v6013 = vpop.f32.mrf.mxu0
        %v6014 = vadd.f32 0.0, %v6013
        %v6015 = vpop.f32.mrf.mxu0
        %6016 = vmatprep.mubr.bf16.mxu0 0
        %6017 = vmatmul.mubr.bf16.gmra.mxu0 %v5875
        %v6018 = vpop.f32.mrf.mxu0
        %v6019 = vadd.f32 0.0, %v6018
        %v6020 = vpop.f32.mrf.mxu0
        %v6021 = vpop.f32.mrf.mxu0
        %v6022 = vadd.f32 0.0, %v6021
        %v6023 = vpop.f32.mrf.mxu0
        %6024 = vmatprep.mubr.bf16.mxu0 0
        %6025 = vmatmul.mubr.bf16.gmra.mxu0 %v5876
        %v6026 = vpop.f32.mrf.mxu0
        %v6027 = vadd.f32 0.0, %v6026
        %v6028 = vpop.f32.mrf.mxu0
        %v6029 = vpop.f32.mrf.mxu0
        %v6030 = vadd.f32 0.0, %v6029
        %v6031 = vpop.f32.mrf.mxu0
        %6032 = vmatprep.mubr.bf16.mxu0 0
        %6033 = vmatmul.mubr.bf16.gmra.mxu0 %v5877
        %v6034 = vpop.f32.mrf.mxu0
        %v6035 = vadd.f32 0.0, %v6034
        %v6036 = vpop.f32.mrf.mxu0
        %v6037 = vpop.f32.mrf.mxu0
        %v6038 = vadd.f32 0.0, %v6037
        %v6039 = vpop.f32.mrf.mxu0
        %6040 = vmatprep.mubr.bf16.mxu0 0
        %6041 = vmatmul.mubr.bf16.gmra.mxu0 %v5878
        %v6042 = vpop.f32.mrf.mxu0
        %v6043 = vadd.f32 0.0, %v6042
        %v6044 = vpop.f32.mrf.mxu0
        %v6045 = vpop.f32.mrf.mxu0
        %v6046 = vadd.f32 0.0, %v6045
        %v6047 = vpop.f32.mrf.mxu0
        %6048 = vmatprep.mubr.bf16.mxu0 0
        %6049 = vmatmul.mubr.bf16.gmra.mxu0 %v5879
        %v6050 = vpop.f32.mrf.mxu0
        %v6051 = vadd.f32 0.0, %v6050
        %v6052 = vpop.f32.mrf.mxu0
        %v6053 = vpop.f32.mrf.mxu0
        %v6054 = vadd.f32 0.0, %v6053
        %v6055 = vpop.f32.mrf.mxu0
        %6056 = vmatprep.mubr.bf16.mxu0 0
        %6057 = vmatmul.mubr.bf16.gmra.mxu0 %v5880
        %v6058 = vpop.f32.mrf.mxu0
        %v6059 = vadd.f32 0.0, %v6058
        %v6060 = vpop.f32.mrf.mxu0
        %v6061 = vpop.f32.mrf.mxu0
        %v6062 = vadd.f32 0.0, %v6061
        %v6063 = vpop.f32.mrf.mxu0
        %6064 = vmatprep.mubr.bf16.mxu0 0
        %6065 = vmatmul.mubr.bf16.gmra.mxu0 %v5881
        %v6066 = vpop.f32.mrf.mxu0
        %v6067 = vadd.f32 0.0, %v6066
        %v6068 = vpop.f32.mrf.mxu0
        %v6069 = vpop.f32.mrf.mxu0
        %v6070 = vadd.f32 0.0, %v6069
        %v6071 = vpop.f32.mrf.mxu0
        %6072 = vmatprep.mubr.bf16.mxu0 0
        %6073 = vmatmul.mubr.bf16.gmra.mxu0 %v5882
        %v6074 = vpop.f32.mrf.mxu0
        %v6075 = vadd.f32 0.0, %v6074
        %v6076 = vpop.f32.mrf.mxu0
        %v6077 = vpop.f32.mrf.mxu0
        %v6078 = vadd.f32 0.0, %v6077
        %v6079 = vpop.f32.mrf.mxu0
        %6080 = vmatprep.mubr.bf16.mxu0 0
        %6081 = vmatmul.mubr.bf16.gmra.mxu0 %v5883
        %v6082 = vpop.f32.mrf.mxu0
        %v6083 = vadd.f32 0.0, %v6082
        %v6084 = vpop.f32.mrf.mxu0
        %v6085 = vpop.f32.mrf.mxu0
        %v6086 = vadd.f32 0.0, %v6085
        %v6087 = vpop.f32.mrf.mxu0
        %6088 = vmatprep.mubr.bf16.mxu0 0
        %6089 = vmatmul.mubr.bf16.gmra.mxu0 %v5884
        %v6090 = vpop.f32.mrf.mxu0
        %v6091 = vadd.f32 0.0, %v6090
        %v6092 = vpop.f32.mrf.mxu0
        %v6093 = vpop.f32.mrf.mxu0
        %v6094 = vadd.f32 0.0, %v6093
        %v6095 = vpop.f32.mrf.mxu0
        %6096 = vmatprep.mubr.bf16.mxu0 0
        %6097 = vmatmul.mubr.bf16.gmra.mxu0 %v5885
        %v6098 = vpop.f32.mrf.mxu0
        %v6099 = vadd.f32 0.0, %v6098
        %v6100 = vpop.f32.mrf.mxu0
        %v6101 = vpop.f32.mrf.mxu0
        %v6102 = vadd.f32 0.0, %v6101
        %v6103 = vpop.f32.mrf.mxu0
        %6104 = vmatprep.mubr.bf16.mxu0 0
        %6105 = vmatmul.mubr.bf16.gmra.mxu0 %v5886
        %v6106 = vpop.f32.mrf.mxu0
        %v6107 = vadd.f32 0.0, %v6106
        %v6108 = vpop.f32.mrf.mxu0
        %v6109 = vpop.f32.mrf.mxu0
        %v6110 = vadd.f32 0.0, %v6109
        %v6111 = vpop.f32.mrf.mxu0
        %6112 = vdwg.mxu0
        %v6113 = vadd.f32 %v5713, %v5987
        %v6114 = vadd.f32 %v5716, %v5990
        %v6115 = vadd.f32 %v5721, %v5995
        %v6116 = vadd.f32 %v5724, %v5998
        %v6117 = vadd.f32 %v5729, %v6003
        %v6118 = vadd.f32 %v5732, %v6006
        %v6119 = vadd.f32 %v5737, %v6011
        %v6120 = vadd.f32 %v5740, %v6014
        %v6121 = vadd.f32 %v5745, %v6019
        %v6122 = vadd.f32 %v5748, %v6022
        %v6123 = vadd.f32 %v5753, %v6027
        %v6124 = vadd.f32 %v5756, %v6030
        %v6125 = vadd.f32 %v5761, %v6035
        %v6126 = vadd.f32 %v5764, %v6038
        %v6127 = vadd.f32 %v5769, %v6043
        %v6128 = vadd.f32 %v5772, %v6046
        %v6129 = vadd.f32 %v5777, %v6051
        %v6130 = vadd.f32 %v5780, %v6054
        %v6131 = vadd.f32 %v5785, %v6059
        %v6132 = vadd.f32 %v5788, %v6062
        %v6133 = vadd.f32 %v5793, %v6067
        %v6134 = vadd.f32 %v5796, %v6070
        %v6135 = vadd.f32 %v5801, %v6075
        %v6136 = vadd.f32 %v5804, %v6078
        %v6137 = vadd.f32 %v5809, %v6083
        %v6138 = vadd.f32 %v5812, %v6086
        %v6139 = vadd.f32 %v5817, %v6091
        %v6140 = vadd.f32 %v5820, %v6094
        %v6141 = vadd.f32 %v5825, %v6099
        %v6142 = vadd.f32 %v5828, %v6102
        %v6143 = vadd.f32 %v5833, %v6107
        %v6144 = vadd.f32 %v5836, %v6110
        %v6145 = vld [vmem:[%s5259] sm:$0xff]
        %v6146 = vld [vmem:[%s5259 + $0x8] sm:$0xff]
        %v6147 = vld [vmem:[%s5259 + $0x18] sm:$0xff]
        %v6148 = vld [vmem:[%s5259 + $0x20] sm:$0xff]
        %v6149 = vld [vmem:[%s5259 + $0x30] sm:$0xff]
        %v6150 = vld [vmem:[%s5259 + $0x38] sm:$0xff]
        %v6151 = vld [vmem:[%s5259 + $0x48] sm:$0xff]
        %v6152 = vld [vmem:[%s5259 + $0x50] sm:$0xff]
        %v6153 = vld [vmem:[%s5259 + $0x60] sm:$0xff]
        %v6154 = vld [vmem:[%s5259 + $0x68] sm:$0xff]
        %v6155 = vld [vmem:[%s5259 + $0x78] sm:$0xff]
        %v6156 = vld [vmem:[%s5259 + $0x80] sm:$0xff]
        %v6157 = vld [vmem:[%s5259 + $0x90] sm:$0xff]
        %v6158 = vld [vmem:[%s5259 + $0x98] sm:$0xff]
        %v6159 = vld [vmem:[%s5259 + $0xa8] sm:$0xff]
        %v6160 = vld [vmem:[%s5259 + $0xb0] sm:$0xff]
        %v6161 = vld [vmem:[%s5259 + $0xc0] sm:$0xff]
        %v6162 = vld [vmem:[%s5259 + $0xc8] sm:$0xff]
        %v6163 = vld [vmem:[%s5259 + $0xd8] sm:$0xff]
        %v6164 = vld [vmem:[%s5259 + $0xe0] sm:$0xff]
        %v6165 = vld [vmem:[%s5259 + $0xf0] sm:$0xff]
        %v6166 = vld [vmem:[%s5259 + $0xf8] sm:$0xff]
        %v6167 = vld [vmem:[%s5259 + $0x108] sm:$0xff]
        %v6168 = vld [vmem:[%s5259 + $0x110] sm:$0xff]
        %v6169 = vld [vmem:[%s5259 + $0x120] sm:$0xff]
        %v6170 = vld [vmem:[%s5259 + $0x128] sm:$0xff]
        %v6171 = vld [vmem:[%s5259 + $0x138] sm:$0xff]
        %v6172 = vld [vmem:[%s5259 + $0x140] sm:$0xff]
        %v6173 = vld [vmem:[%s5259 + $0x150] sm:$0xff]
        %v6174 = vld [vmem:[%s5259 + $0x158] sm:$0xff]
        %v6175 = vld [vmem:[%s5259 + $0x168] sm:$0xff]
        %v6176 = vld [vmem:[%s5259 + $0x170] sm:$0xff]
        %v6177 = vpack.c.bf16 %v6146, %v6145
        %v6178 = vpack.c.bf16 %v6148, %v6147
        %v6179 = vpack.c.bf16 %v6150, %v6149
        %v6180 = vpack.c.bf16 %v6152, %v6151
        %v6181 = vpack.c.bf16 %v6154, %v6153
        %v6182 = vpack.c.bf16 %v6156, %v6155
        %v6183 = vpack.c.bf16 %v6158, %v6157
        %v6184 = vpack.c.bf16 %v6160, %v6159
        %v6185 = vpack.c.bf16 %v6162, %v6161
        %v6186 = vpack.c.bf16 %v6164, %v6163
        %v6187 = vpack.c.bf16 %v6166, %v6165
        %v6188 = vpack.c.bf16 %v6168, %v6167
        %v6189 = vpack.c.bf16 %v6170, %v6169
        %v6190 = vpack.c.bf16 %v6172, %v6171
        %v6191 = vpack.c.bf16 %v6174, %v6173
        %v6192 = vpack.c.bf16 %v6176, %v6175
        %s6193 = scalar_lea.vmem %s4, 192
        %v6194 = vld [vmem:[%s6193] sm:$0xf]
        %v6195 = vld [vmem:[%s6193 + $0x4] sm:$0xf]
        %v6196 = vld [vmem:[%s6193 + $0x8] sm:$0xf]
        %v6197 = vld [vmem:[%s6193 + $0xc] sm:$0xf]
        %v6198 = vld [vmem:[%s6193 + $0x10] sm:$0xf]
        %v6199 = vld [vmem:[%s6193 + $0x14] sm:$0xf]
        %v6200 = vld [vmem:[%s6193 + $0x18] sm:$0xf]
        %v6201 = vld [vmem:[%s6193 + $0x1c] sm:$0xf]
        %v6202 = vld [vmem:[%s6193 + $0x20] sm:$0xf]
        %v6203 = vld [vmem:[%s6193 + $0x24] sm:$0xf]
        %v6204 = vld [vmem:[%s6193 + $0x28] sm:$0xf]
        %v6205 = vld [vmem:[%s6193 + $0x2c] sm:$0xf]
        %v6206 = vld [vmem:[%s6193 + $0x30] sm:$0xf]
        %v6207 = vld [vmem:[%s6193 + $0x34] sm:$0xf]
        %v6208 = vld [vmem:[%s6193 + $0x38] sm:$0xf]
        %v6209 = vld [vmem:[%s6193 + $0x3c] sm:$0xf]
        %v6226 = vunpack.c.l.b16 %v6194
        %v6227 = vunpack.c.l.b16 %v6195
        %v6228 = vunpack.c.l.b16 %v6196
        %v6229 = vunpack.c.l.b16 %v6197
        %v6230 = vunpack.c.l.b16 %v6198
        %v6231 = vunpack.c.l.b16 %v6199
        %v6232 = vunpack.c.l.b16 %v6200
        %v6233 = vunpack.c.l.b16 %v6201
        %v6234 = vunpack.c.l.b16 %v6202
        %v6235 = vunpack.c.l.b16 %v6203
        %v6236 = vunpack.c.l.b16 %v6204
        %v6237 = vunpack.c.l.b16 %v6205
        %v6238 = vunpack.c.l.b16 %v6206
        %v6239 = vunpack.c.l.b16 %v6207
        %v6240 = vunpack.c.l.b16 %v6208
        %v6241 = vunpack.c.l.b16 %v6209
        %v6242 = vpack.c.b16 %v6227, %v6226
        %v6243 = vpack.c.b16 %v6229, %v6228
        %v6244 = vpack.c.b16 %v6231, %v6230
        %v6245 = vpack.c.b16 %v6233, %v6232
        %v6246 = vpack.c.b16 %v6235, %v6234
        %v6247 = vpack.c.b16 %v6237, %v6236
        %v6248 = vpack.c.b16 %v6239, %v6238
        %v6249 = vpack.c.b16 %v6241, %v6240
        %6258 = vmatprep.subr.bf16.mxu0 0
        %6259 = vmatpush1.bf16.msra.mxu0 %v6249
        %6260 = vmatprep.subr.bf16.mxu0 0
        %6261 = vmatpush1.bf16.msra.mxu0 %v6248
        %6262 = vmatprep.subr.bf16.mxu0 0
        %6263 = vmatpush1.bf16.msra.mxu0 %v6247
        %6264 = vmatprep.subr.bf16.mxu0 0
        %6265 = vmatpush1.bf16.msra.mxu0 %v6246
        %6266 = vmatprep.subr.bf16.mxu0 0
        %6267 = vmatpush1.bf16.msra.mxu0 %v6245
        %6268 = vmatprep.subr.bf16.mxu0 0
        %6269 = vmatpush1.bf16.msra.mxu0 %v6244
        %6270 = vmatprep.subr.bf16.mxu0 0
        %6271 = vmatpush1.bf16.msra.mxu0 %v6243
        %6272 = vmatprep.subr.bf16.mxu0 0
        %6273 = vmatpush1.bf16.msra.mxu0 %v6242
        %6274 = vmatprep.subr.bf16.mxu0 0
        %6275 = vmatpush2.bf16.msra.mxu0 0
        %6276 = vmatprep.subr.bf16.mxu0 0
        %6277 = vmatpush2.bf16.msra.mxu0 0
        %6278 = vmatprep.subr.bf16.mxu0 0
        %6279 = vmatpush2.bf16.msra.mxu0 0
        %6280 = vmatprep.subr.bf16.mxu0 0
        %6281 = vmatpush2.bf16.msra.mxu0 0
        %6282 = vmatprep.subr.bf16.mxu0 0
        %6283 = vmatpush2.bf16.msra.mxu0 0
        %6284 = vmatprep.subr.bf16.mxu0 0
        %6285 = vmatpush2.bf16.msra.mxu0 0
        %6286 = vmatprep.subr.bf16.mxu0 0
        %6287 = vmatpush2.bf16.msra.mxu0 0
        %6288 = vmatprep.subr.bf16.mxu0 0
        %6289 = vmatpush2.bf16.msra.mxu0 0
        %6290 = vmatprep.mubr.bf16.mxu0 0
        %6291 = vmatmul.mubr.bf16.gmra.mxu0 %v6177
        %v6292 = vpop.f32.mrf.mxu0
        %v6293 = vadd.f32 0.0, %v6292
        %v6294 = vpop.f32.mrf.mxu0
        %v6295 = vpop.f32.mrf.mxu0
        %v6296 = vadd.f32 0.0, %v6295
        %v6297 = vpop.f32.mrf.mxu0
        %6298 = vmatprep.mubr.bf16.mxu0 0
        %6299 = vmatmul.mubr.bf16.gmra.mxu0 %v6178
        %v6300 = vpop.f32.mrf.mxu0
        %v6301 = vadd.f32 0.0, %v6300
        %v6302 = vpop.f32.mrf.mxu0
        %v6303 = vpop.f32.mrf.mxu0
        %v6304 = vadd.f32 0.0, %v6303
        %v6305 = vpop.f32.mrf.mxu0
        %6306 = vmatprep.mubr.bf16.mxu0 0
        %6307 = vmatmul.mubr.bf16.gmra.mxu0 %v6179
        %v6308 = vpop.f32.mrf.mxu0
        %v6309 = vadd.f32 0.0, %v6308
        %v6310 = vpop.f32.mrf.mxu0
        %v6311 = vpop.f32.mrf.mxu0
        %v6312 = vadd.f32 0.0, %v6311
        %v6313 = vpop.f32.mrf.mxu0
        %6314 = vmatprep.mubr.bf16.mxu0 0
        %6315 = vmatmul.mubr.bf16.gmra.mxu0 %v6180
        %v6316 = vpop.f32.mrf.mxu0
        %v6317 = vadd.f32 0.0, %v6316
        %v6318 = vpop.f32.mrf.mxu0
        %v6319 = vpop.f32.mrf.mxu0
        %v6320 = vadd.f32 0.0, %v6319
        %v6321 = vpop.f32.mrf.mxu0
        %6322 = vmatprep.mubr.bf16.mxu0 0
        %6323 = vmatmul.mubr.bf16.gmra.mxu0 %v6181
        %v6324 = vpop.f32.mrf.mxu0
        %v6325 = vadd.f32 0.0, %v6324
        %v6326 = vpop.f32.mrf.mxu0
        %v6327 = vpop.f32.mrf.mxu0
        %v6328 = vadd.f32 0.0, %v6327
        %v6329 = vpop.f32.mrf.mxu0
        %6330 = vmatprep.mubr.bf16.mxu0 0
        %6331 = vmatmul.mubr.bf16.gmra.mxu0 %v6182
        %v6332 = vpop.f32.mrf.mxu0
        %v6333 = vadd.f32 0.0, %v6332
        %v6334 = vpop.f32.mrf.mxu0
        %v6335 = vpop.f32.mrf.mxu0
        %v6336 = vadd.f32 0.0, %v6335
        %v6337 = vpop.f32.mrf.mxu0
        %6338 = vmatprep.mubr.bf16.mxu0 0
        %6339 = vmatmul.mubr.bf16.gmra.mxu0 %v6183
        %v6340 = vpop.f32.mrf.mxu0
        %v6341 = vadd.f32 0.0, %v6340
        %v6342 = vpop.f32.mrf.mxu0
        %v6343 = vpop.f32.mrf.mxu0
        %v6344 = vadd.f32 0.0, %v6343
        %v6345 = vpop.f32.mrf.mxu0
        %6346 = vmatprep.mubr.bf16.mxu0 0
        %6347 = vmatmul.mubr.bf16.gmra.mxu0 %v6184
        %v6348 = vpop.f32.mrf.mxu0
        %v6349 = vadd.f32 0.0, %v6348
        %v6350 = vpop.f32.mrf.mxu0
        %v6351 = vpop.f32.mrf.mxu0
        %v6352 = vadd.f32 0.0, %v6351
        %v6353 = vpop.f32.mrf.mxu0
        %6354 = vmatprep.mubr.bf16.mxu0 0
        %6355 = vmatmul.mubr.bf16.gmra.mxu0 %v6185
        %v6356 = vpop.f32.mrf.mxu0
        %v6357 = vadd.f32 0.0, %v6356
        %v6358 = vpop.f32.mrf.mxu0
        %v6359 = vpop.f32.mrf.mxu0
        %v6360 = vadd.f32 0.0, %v6359
        %v6361 = vpop.f32.mrf.mxu0
        %6362 = vmatprep.mubr.bf16.mxu0 0
        %6363 = vmatmul.mubr.bf16.gmra.mxu0 %v6186
        %v6364 = vpop.f32.mrf.mxu0
        %v6365 = vadd.f32 0.0, %v6364
        %v6366 = vpop.f32.mrf.mxu0
        %v6367 = vpop.f32.mrf.mxu0
        %v6368 = vadd.f32 0.0, %v6367
        %v6369 = vpop.f32.mrf.mxu0
        %6370 = vmatprep.mubr.bf16.mxu0 0
        %6371 = vmatmul.mubr.bf16.gmra.mxu0 %v6187
        %v6372 = vpop.f32.mrf.mxu0
        %v6373 = vadd.f32 0.0, %v6372
        %v6374 = vpop.f32.mrf.mxu0
        %v6375 = vpop.f32.mrf.mxu0
        %v6376 = vadd.f32 0.0, %v6375
        %v6377 = vpop.f32.mrf.mxu0
        %6378 = vmatprep.mubr.bf16.mxu0 0
        %6379 = vmatmul.mubr.bf16.gmra.mxu0 %v6188
        %v6380 = vpop.f32.mrf.mxu0
        %v6381 = vadd.f32 0.0, %v6380
        %v6382 = vpop.f32.mrf.mxu0
        %v6383 = vpop.f32.mrf.mxu0
        %v6384 = vadd.f32 0.0, %v6383
        %v6385 = vpop.f32.mrf.mxu0
        %6386 = vmatprep.mubr.bf16.mxu0 0
        %6387 = vmatmul.mubr.bf16.gmra.mxu0 %v6189
        %v6388 = vpop.f32.mrf.mxu0
        %v6389 = vadd.f32 0.0, %v6388
        %v6390 = vpop.f32.mrf.mxu0
        %v6391 = vpop.f32.mrf.mxu0
        %v6392 = vadd.f32 0.0, %v6391
        %v6393 = vpop.f32.mrf.mxu0
        %6394 = vmatprep.mubr.bf16.mxu0 0
        %6395 = vmatmul.mubr.bf16.gmra.mxu0 %v6190
        %v6396 = vpop.f32.mrf.mxu0
        %v6397 = vadd.f32 0.0, %v6396
        %v6398 = vpop.f32.mrf.mxu0
        %v6399 = vpop.f32.mrf.mxu0
        %v6400 = vadd.f32 0.0, %v6399
        %v6401 = vpop.f32.mrf.mxu0
        %6402 = vmatprep.mubr.bf16.mxu0 0
        %6403 = vmatmul.mubr.bf16.gmra.mxu0 %v6191
        %v6404 = vpop.f32.mrf.mxu0
        %v6405 = vadd.f32 0.0, %v6404
        %v6406 = vpop.f32.mrf.mxu0
        %v6407 = vpop.f32.mrf.mxu0
        %v6408 = vadd.f32 0.0, %v6407
        %v6409 = vpop.f32.mrf.mxu0
        %6410 = vmatprep.mubr.bf16.mxu0 0
        %6411 = vmatmul.mubr.bf16.gmra.mxu0 %v6192
        %v6412 = vpop.f32.mrf.mxu0
        %v6413 = vadd.f32 0.0, %v6412
        %v6414 = vpop.f32.mrf.mxu0
        %v6415 = vpop.f32.mrf.mxu0
        %v6416 = vadd.f32 0.0, %v6415
        %v6417 = vpop.f32.mrf.mxu0
        %6418 = vdwg.mxu0
        %v6419 = vadd.f32 %v6113, %v6293
        %v6420 = vadd.f32 %v6114, %v6296
        %v6421 = vadd.f32 %v6115, %v6301
        %v6422 = vadd.f32 %v6116, %v6304
        %v6423 = vadd.f32 %v6117, %v6309
        %v6424 = vadd.f32 %v6118, %v6312
        %v6425 = vadd.f32 %v6119, %v6317
        %v6426 = vadd.f32 %v6120, %v6320
        %v6427 = vadd.f32 %v6121, %v6325
        %v6428 = vadd.f32 %v6122, %v6328
        %v6429 = vadd.f32 %v6123, %v6333
        %v6430 = vadd.f32 %v6124, %v6336
        %v6431 = vadd.f32 %v6125, %v6341
        %v6432 = vadd.f32 %v6126, %v6344
        %v6433 = vadd.f32 %v6127, %v6349
        %v6434 = vadd.f32 %v6128, %v6352
        %v6435 = vadd.f32 %v6129, %v6357
        %v6436 = vadd.f32 %v6130, %v6360
        %v6437 = vadd.f32 %v6131, %v6365
        %v6438 = vadd.f32 %v6132, %v6368
        %v6439 = vadd.f32 %v6133, %v6373
        %v6440 = vadd.f32 %v6134, %v6376
        %v6441 = vadd.f32 %v6135, %v6381
        %v6442 = vadd.f32 %v6136, %v6384
        %v6443 = vadd.f32 %v6137, %v6389
        %v6444 = vadd.f32 %v6138, %v6392
        %v6445 = vadd.f32 %v6139, %v6397
        %v6446 = vadd.f32 %v6140, %v6400
        %v6447 = vadd.f32 %v6141, %v6405
        %v6448 = vadd.f32 %v6142, %v6408
        %v6449 = vadd.f32 %v6143, %v6413
        %v6450 = vadd.f32 %v6144, %v6416
        %v6451 = vld [vmem:[%s5259 + $0x1] sm:$0xff]
        %v6452 = vld [vmem:[%s5259 + $0x9] sm:$0xff]
        %v6453 = vld [vmem:[%s5259 + $0x19] sm:$0xff]
        %v6454 = vld [vmem:[%s5259 + $0x21] sm:$0xff]
        %v6455 = vld [vmem:[%s5259 + $0x31] sm:$0xff]
        %v6456 = vld [vmem:[%s5259 + $0x39] sm:$0xff]
        %v6457 = vld [vmem:[%s5259 + $0x49] sm:$0xff]
        %v6458 = vld [vmem:[%s5259 + $0x51] sm:$0xff]
        %v6459 = vld [vmem:[%s5259 + $0x61] sm:$0xff]
        %v6460 = vld [vmem:[%s5259 + $0x69] sm:$0xff]
        %v6461 = vld [vmem:[%s5259 + $0x79] sm:$0xff]
        %v6462 = vld [vmem:[%s5259 + $0x81] sm:$0xff]
        %v6463 = vld [vmem:[%s5259 + $0x91] sm:$0xff]
        %v6464 = vld [vmem:[%s5259 + $0x99] sm:$0xff]
        %v6465 = vld [vmem:[%s5259 + $0xa9] sm:$0xff]
        %v6466 = vld [vmem:[%s5259 + $0xb1] sm:$0xff]
        %v6467 = vld [vmem:[%s5259 + $0xc1] sm:$0xff]
        %v6468 = vld [vmem:[%s5259 + $0xc9] sm:$0xff]
        %v6469 = vld [vmem:[%s5259 + $0xd9] sm:$0xff]
        %v6470 = vld [vmem:[%s5259 + $0xe1] sm:$0xff]
        %v6471 = vld [vmem:[%s5259 + $0xf1] sm:$0xff]
        %v6472 = vld [vmem:[%s5259 + $0xf9] sm:$0xff]
        %v6473 = vld [vmem:[%s5259 + $0x109] sm:$0xff]
        %v6474 = vld [vmem:[%s5259 + $0x111] sm:$0xff]
        %v6475 = vld [vmem:[%s5259 + $0x121] sm:$0xff]
        %v6476 = vld [vmem:[%s5259 + $0x129] sm:$0xff]
        %v6477 = vld [vmem:[%s5259 + $0x139] sm:$0xff]
        %v6478 = vld [vmem:[%s5259 + $0x141] sm:$0xff]
        %v6479 = vld [vmem:[%s5259 + $0x151] sm:$0xff]
        %v6480 = vld [vmem:[%s5259 + $0x159] sm:$0xff]
        %v6481 = vld [vmem:[%s5259 + $0x169] sm:$0xff]
        %v6482 = vld [vmem:[%s5259 + $0x171] sm:$0xff]
        %v6483 = vpack.c.bf16 %v6452, %v6451
        %v6484 = vpack.c.bf16 %v6454, %v6453
        %v6485 = vpack.c.bf16 %v6456, %v6455
        %v6486 = vpack.c.bf16 %v6458, %v6457
        %v6487 = vpack.c.bf16 %v6460, %v6459
        %v6488 = vpack.c.bf16 %v6462, %v6461
        %v6489 = vpack.c.bf16 %v6464, %v6463
        %v6490 = vpack.c.bf16 %v6466, %v6465
        %v6491 = vpack.c.bf16 %v6468, %v6467
        %v6492 = vpack.c.bf16 %v6470, %v6469
        %v6493 = vpack.c.bf16 %v6472, %v6471
        %v6494 = vpack.c.bf16 %v6474, %v6473
        %v6495 = vpack.c.bf16 %v6476, %v6475
        %v6496 = vpack.c.bf16 %v6478, %v6477
        %v6497 = vpack.c.bf16 %v6480, %v6479
        %v6498 = vpack.c.bf16 %v6482, %v6481
        %s6499 = scalar_lea.vmem %s4, 256
        %v6500 = vld [vmem:[%s6499] sm:$0xf]
        %v6501 = vld [vmem:[%s6499 + $0x4] sm:$0xf]
        %v6502 = vld [vmem:[%s6499 + $0x8] sm:$0xf]
        %v6503 = vld [vmem:[%s6499 + $0xc] sm:$0xf]
        %v6504 = vld [vmem:[%s6499 + $0x10] sm:$0xf]
        %v6505 = vld [vmem:[%s6499 + $0x14] sm:$0xf]
        %v6506 = vld [vmem:[%s6499 + $0x18] sm:$0xf]
        %v6507 = vld [vmem:[%s6499 + $0x1c] sm:$0xf]
        %v6508 = vld [vmem:[%s6499 + $0x20] sm:$0xf]
        %v6509 = vld [vmem:[%s6499 + $0x24] sm:$0xf]
        %v6510 = vld [vmem:[%s6499 + $0x28] sm:$0xf]
        %v6511 = vld [vmem:[%s6499 + $0x2c] sm:$0xf]
        %v6512 = vld [vmem:[%s6499 + $0x30] sm:$0xf]
        %v6513 = vld [vmem:[%s6499 + $0x34] sm:$0xf]
        %v6514 = vld [vmem:[%s6499 + $0x38] sm:$0xf]
        %v6515 = vld [vmem:[%s6499 + $0x3c] sm:$0xf]
        %v6532 = vunpack.c.l.b16 %v6500
        %v6533 = vunpack.c.l.b16 %v6501
        %v6534 = vunpack.c.l.b16 %v6502
        %v6535 = vunpack.c.l.b16 %v6503
        %v6536 = vunpack.c.l.b16 %v6504
        %v6537 = vunpack.c.l.b16 %v6505
        %v6538 = vunpack.c.l.b16 %v6506
        %v6539 = vunpack.c.l.b16 %v6507
        %v6540 = vunpack.c.l.b16 %v6508
        %v6541 = vunpack.c.l.b16 %v6509
        %v6542 = vunpack.c.l.b16 %v6510
        %v6543 = vunpack.c.l.b16 %v6511
        %v6544 = vunpack.c.l.b16 %v6512
        %v6545 = vunpack.c.l.b16 %v6513
        %v6546 = vunpack.c.l.b16 %v6514
        %v6547 = vunpack.c.l.b16 %v6515
        %v6548 = vpack.c.b16 %v6533, %v6532
        %v6549 = vpack.c.b16 %v6535, %v6534
        %v6550 = vpack.c.b16 %v6537, %v6536
        %v6551 = vpack.c.b16 %v6539, %v6538
        %v6552 = vpack.c.b16 %v6541, %v6540
        %v6553 = vpack.c.b16 %v6543, %v6542
        %v6554 = vpack.c.b16 %v6545, %v6544
        %v6555 = vpack.c.b16 %v6547, %v6546
        %6564 = vmatprep.subr.bf16.mxu0 0
        %6565 = vmatpush1.bf16.msra.mxu0 %v6555
        %6566 = vmatprep.subr.bf16.mxu0 0
        %6567 = vmatpush1.bf16.msra.mxu0 %v6554
        %6568 = vmatprep.subr.bf16.mxu0 0
        %6569 = vmatpush1.bf16.msra.mxu0 %v6553
        %6570 = vmatprep.subr.bf16.mxu0 0
        %6571 = vmatpush1.bf16.msra.mxu0 %v6552
        %6572 = vmatprep.subr.bf16.mxu0 0
        %6573 = vmatpush1.bf16.msra.mxu0 %v6551
        %6574 = vmatprep.subr.bf16.mxu0 0
        %6575 = vmatpush1.bf16.msra.mxu0 %v6550
        %6576 = vmatprep.subr.bf16.mxu0 0
        %6577 = vmatpush1.bf16.msra.mxu0 %v6549
        %6578 = vmatprep.subr.bf16.mxu0 0
        %6579 = vmatpush1.bf16.msra.mxu0 %v6548
        %6580 = vmatprep.subr.bf16.mxu0 0
        %6581 = vmatpush2.bf16.msra.mxu0 0
        %6582 = vmatprep.subr.bf16.mxu0 0
        %6583 = vmatpush2.bf16.msra.mxu0 0
        %6584 = vmatprep.subr.bf16.mxu0 0
        %6585 = vmatpush2.bf16.msra.mxu0 0
        %6586 = vmatprep.subr.bf16.mxu0 0
        %6587 = vmatpush2.bf16.msra.mxu0 0
        %6588 = vmatprep.subr.bf16.mxu0 0
        %6589 = vmatpush2.bf16.msra.mxu0 0
        %6590 = vmatprep.subr.bf16.mxu0 0
        %6591 = vmatpush2.bf16.msra.mxu0 0
        %6592 = vmatprep.subr.bf16.mxu0 0
        %6593 = vmatpush2.bf16.msra.mxu0 0
        %6594 = vmatprep.subr.bf16.mxu0 0
        %6595 = vmatpush2.bf16.msra.mxu0 0
        %6596 = vmatprep.mubr.bf16.mxu0 0
        %6597 = vmatmul.mubr.bf16.gmra.mxu0 %v6483
        %v6598 = vpop.f32.mrf.mxu0
        %v6599 = vadd.f32 0.0, %v6598
        %v6600 = vpop.f32.mrf.mxu0
        %v6601 = vpop.f32.mrf.mxu0
        %v6602 = vadd.f32 0.0, %v6601
        %v6603 = vpop.f32.mrf.mxu0
        %6604 = vmatprep.mubr.bf16.mxu0 0
        %6605 = vmatmul.mubr.bf16.gmra.mxu0 %v6484
        %v6606 = vpop.f32.mrf.mxu0
        %v6607 = vadd.f32 0.0, %v6606
        %v6608 = vpop.f32.mrf.mxu0
        %v6609 = vpop.f32.mrf.mxu0
        %v6610 = vadd.f32 0.0, %v6609
        %v6611 = vpop.f32.mrf.mxu0
        %6612 = vmatprep.mubr.bf16.mxu0 0
        %6613 = vmatmul.mubr.bf16.gmra.mxu0 %v6485
        %v6614 = vpop.f32.mrf.mxu0
        %v6615 = vadd.f32 0.0, %v6614
        %v6616 = vpop.f32.mrf.mxu0
        %v6617 = vpop.f32.mrf.mxu0
        %v6618 = vadd.f32 0.0, %v6617
        %v6619 = vpop.f32.mrf.mxu0
        %6620 = vmatprep.mubr.bf16.mxu0 0
        %6621 = vmatmul.mubr.bf16.gmra.mxu0 %v6486
        %v6622 = vpop.f32.mrf.mxu0
        %v6623 = vadd.f32 0.0, %v6622
        %v6624 = vpop.f32.mrf.mxu0
        %v6625 = vpop.f32.mrf.mxu0
        %v6626 = vadd.f32 0.0, %v6625
        %v6627 = vpop.f32.mrf.mxu0
        %6628 = vmatprep.mubr.bf16.mxu0 0
        %6629 = vmatmul.mubr.bf16.gmra.mxu0 %v6487
        %v6630 = vpop.f32.mrf.mxu0
        %v6631 = vadd.f32 0.0, %v6630
        %v6632 = vpop.f32.mrf.mxu0
        %v6633 = vpop.f32.mrf.mxu0
        %v6634 = vadd.f32 0.0, %v6633
        %v6635 = vpop.f32.mrf.mxu0
        %6636 = vmatprep.mubr.bf16.mxu0 0
        %6637 = vmatmul.mubr.bf16.gmra.mxu0 %v6488
        %v6638 = vpop.f32.mrf.mxu0
        %v6639 = vadd.f32 0.0, %v6638
        %v6640 = vpop.f32.mrf.mxu0
        %v6641 = vpop.f32.mrf.mxu0
        %v6642 = vadd.f32 0.0, %v6641
        %v6643 = vpop.f32.mrf.mxu0
        %6644 = vmatprep.mubr.bf16.mxu0 0
        %6645 = vmatmul.mubr.bf16.gmra.mxu0 %v6489
        %v6646 = vpop.f32.mrf.mxu0
        %v6647 = vadd.f32 0.0, %v6646
        %v6648 = vpop.f32.mrf.mxu0
        %v6649 = vpop.f32.mrf.mxu0
        %v6650 = vadd.f32 0.0, %v6649
        %v6651 = vpop.f32.mrf.mxu0
        %6652 = vmatprep.mubr.bf16.mxu0 0
        %6653 = vmatmul.mubr.bf16.gmra.mxu0 %v6490
        %v6654 = vpop.f32.mrf.mxu0
        %v6655 = vadd.f32 0.0, %v6654
        %v6656 = vpop.f32.mrf.mxu0
        %v6657 = vpop.f32.mrf.mxu0
        %v6658 = vadd.f32 0.0, %v6657
        %v6659 = vpop.f32.mrf.mxu0
        %6660 = vmatprep.mubr.bf16.mxu0 0
        %6661 = vmatmul.mubr.bf16.gmra.mxu0 %v6491
        %v6662 = vpop.f32.mrf.mxu0
        %v6663 = vadd.f32 0.0, %v6662
        %v6664 = vpop.f32.mrf.mxu0
        %v6665 = vpop.f32.mrf.mxu0
        %v6666 = vadd.f32 0.0, %v6665
        %v6667 = vpop.f32.mrf.mxu0
        %6668 = vmatprep.mubr.bf16.mxu0 0
        %6669 = vmatmul.mubr.bf16.gmra.mxu0 %v6492
        %v6670 = vpop.f32.mrf.mxu0
        %v6671 = vadd.f32 0.0, %v6670
        %v6672 = vpop.f32.mrf.mxu0
        %v6673 = vpop.f32.mrf.mxu0
        %v6674 = vadd.f32 0.0, %v6673
        %v6675 = vpop.f32.mrf.mxu0
        %6676 = vmatprep.mubr.bf16.mxu0 0
        %6677 = vmatmul.mubr.bf16.gmra.mxu0 %v6493
        %v6678 = vpop.f32.mrf.mxu0
        %v6679 = vadd.f32 0.0, %v6678
        %v6680 = vpop.f32.mrf.mxu0
        %v6681 = vpop.f32.mrf.mxu0
        %v6682 = vadd.f32 0.0, %v6681
        %v6683 = vpop.f32.mrf.mxu0
        %6684 = vmatprep.mubr.bf16.mxu0 0
        %6685 = vmatmul.mubr.bf16.gmra.mxu0 %v6494
        %v6686 = vpop.f32.mrf.mxu0
        %v6687 = vadd.f32 0.0, %v6686
        %v6688 = vpop.f32.mrf.mxu0
        %v6689 = vpop.f32.mrf.mxu0
        %v6690 = vadd.f32 0.0, %v6689
        %v6691 = vpop.f32.mrf.mxu0
        %6692 = vmatprep.mubr.bf16.mxu0 0
        %6693 = vmatmul.mubr.bf16.gmra.mxu0 %v6495
        %v6694 = vpop.f32.mrf.mxu0
        %v6695 = vadd.f32 0.0, %v6694
        %v6696 = vpop.f32.mrf.mxu0
        %v6697 = vpop.f32.mrf.mxu0
        %v6698 = vadd.f32 0.0, %v6697
        %v6699 = vpop.f32.mrf.mxu0
        %6700 = vmatprep.mubr.bf16.mxu0 0
        %6701 = vmatmul.mubr.bf16.gmra.mxu0 %v6496
        %v6702 = vpop.f32.mrf.mxu0
        %v6703 = vadd.f32 0.0, %v6702
        %v6704 = vpop.f32.mrf.mxu0
        %v6705 = vpop.f32.mrf.mxu0
        %v6706 = vadd.f32 0.0, %v6705
        %v6707 = vpop.f32.mrf.mxu0
        %6708 = vmatprep.mubr.bf16.mxu0 0
        %6709 = vmatmul.mubr.bf16.gmra.mxu0 %v6497
        %v6710 = vpop.f32.mrf.mxu0
        %v6711 = vadd.f32 0.0, %v6710
        %v6712 = vpop.f32.mrf.mxu0
        %v6713 = vpop.f32.mrf.mxu0
        %v6714 = vadd.f32 0.0, %v6713
        %v6715 = vpop.f32.mrf.mxu0
        %6716 = vmatprep.mubr.bf16.mxu0 0
        %6717 = vmatmul.mubr.bf16.gmra.mxu0 %v6498
        %v6718 = vpop.f32.mrf.mxu0
        %v6719 = vadd.f32 0.0, %v6718
        %v6720 = vpop.f32.mrf.mxu0
        %v6721 = vpop.f32.mrf.mxu0
        %v6722 = vadd.f32 0.0, %v6721
        %v6723 = vpop.f32.mrf.mxu0
        %6724 = vdwg.mxu0
        %v6725 = vadd.f32 %v6419, %v6599
        %v6726 = vadd.f32 %v6420, %v6602
        %v6727 = vadd.f32 %v6421, %v6607
        %v6728 = vadd.f32 %v6422, %v6610
        %v6729 = vadd.f32 %v6423, %v6615
        %v6730 = vadd.f32 %v6424, %v6618
        %v6731 = vadd.f32 %v6425, %v6623
        %v6732 = vadd.f32 %v6426, %v6626
        %v6733 = vadd.f32 %v6427, %v6631
        %v6734 = vadd.f32 %v6428, %v6634
        %v6735 = vadd.f32 %v6429, %v6639
        %v6736 = vadd.f32 %v6430, %v6642
        %v6737 = vadd.f32 %v6431, %v6647
        %v6738 = vadd.f32 %v6432, %v6650
        %v6739 = vadd.f32 %v6433, %v6655
        %v6740 = vadd.f32 %v6434, %v6658
        %v6741 = vadd.f32 %v6435, %v6663
        %v6742 = vadd.f32 %v6436, %v6666
        %v6743 = vadd.f32 %v6437, %v6671
        %v6744 = vadd.f32 %v6438, %v6674
        %v6745 = vadd.f32 %v6439, %v6679
        %v6746 = vadd.f32 %v6440, %v6682
        %v6747 = vadd.f32 %v6441, %v6687
        %v6748 = vadd.f32 %v6442, %v6690
        %v6749 = vadd.f32 %v6443, %v6695
        %v6750 = vadd.f32 %v6444, %v6698
        %v6751 = vadd.f32 %v6445, %v6703
        %v6752 = vadd.f32 %v6446, %v6706
        %v6753 = vadd.f32 %v6447, %v6711
        %v6754 = vadd.f32 %v6448, %v6714
        %v6755 = vadd.f32 %v6449, %v6719
        %v6756 = vadd.f32 %v6450, %v6722
        %v6757 = vld [vmem:[%s5259 + $0x2] sm:$0xff]
        %v6758 = vld [vmem:[%s5259 + $0xa] sm:$0xff]
        %v6759 = vld [vmem:[%s5259 + $0x1a] sm:$0xff]
        %v6760 = vld [vmem:[%s5259 + $0x22] sm:$0xff]
        %v6761 = vld [vmem:[%s5259 + $0x32] sm:$0xff]
        %v6762 = vld [vmem:[%s5259 + $0x3a] sm:$0xff]
        %v6763 = vld [vmem:[%s5259 + $0x4a] sm:$0xff]
        %v6764 = vld [vmem:[%s5259 + $0x52] sm:$0xff]
        %v6765 = vld [vmem:[%s5259 + $0x62] sm:$0xff]
        %v6766 = vld [vmem:[%s5259 + $0x6a] sm:$0xff]
        %v6767 = vld [vmem:[%s5259 + $0x7a] sm:$0xff]
        %v6768 = vld [vmem:[%s5259 + $0x82] sm:$0xff]
        %v6769 = vld [vmem:[%s5259 + $0x92] sm:$0xff]
        %v6770 = vld [vmem:[%s5259 + $0x9a] sm:$0xff]
        %v6771 = vld [vmem:[%s5259 + $0xaa] sm:$0xff]
        %v6772 = vld [vmem:[%s5259 + $0xb2] sm:$0xff]
        %v6773 = vld [vmem:[%s5259 + $0xc2] sm:$0xff]
        %v6774 = vld [vmem:[%s5259 + $0xca] sm:$0xff]
        %v6775 = vld [vmem:[%s5259 + $0xda] sm:$0xff]
        %v6776 = vld [vmem:[%s5259 + $0xe2] sm:$0xff]
        %v6777 = vld [vmem:[%s5259 + $0xf2] sm:$0xff]
        %v6778 = vld [vmem:[%s5259 + $0xfa] sm:$0xff]
        %v6779 = vld [vmem:[%s5259 + $0x10a] sm:$0xff]
        %v6780 = vld [vmem:[%s5259 + $0x112] sm:$0xff]
        %v6781 = vld [vmem:[%s5259 + $0x122] sm:$0xff]
        %v6782 = vld [vmem:[%s5259 + $0x12a] sm:$0xff]
        %v6783 = vld [vmem:[%s5259 + $0x13a] sm:$0xff]
        %v6784 = vld [vmem:[%s5259 + $0x142] sm:$0xff]
        %v6785 = vld [vmem:[%s5259 + $0x152] sm:$0xff]
        %v6786 = vld [vmem:[%s5259 + $0x15a] sm:$0xff]
        %v6787 = vld [vmem:[%s5259 + $0x16a] sm:$0xff]
        %v6788 = vld [vmem:[%s5259 + $0x172] sm:$0xff]
        %v6789 = vpack.c.bf16 %v6758, %v6757
        %v6790 = vpack.c.bf16 %v6760, %v6759
        %v6791 = vpack.c.bf16 %v6762, %v6761
        %v6792 = vpack.c.bf16 %v6764, %v6763
        %v6793 = vpack.c.bf16 %v6766, %v6765
        %v6794 = vpack.c.bf16 %v6768, %v6767
        %v6795 = vpack.c.bf16 %v6770, %v6769
        %v6796 = vpack.c.bf16 %v6772, %v6771
        %v6797 = vpack.c.bf16 %v6774, %v6773
        %v6798 = vpack.c.bf16 %v6776, %v6775
        %v6799 = vpack.c.bf16 %v6778, %v6777
        %v6800 = vpack.c.bf16 %v6780, %v6779
        %v6801 = vpack.c.bf16 %v6782, %v6781
        %v6802 = vpack.c.bf16 %v6784, %v6783
        %v6803 = vpack.c.bf16 %v6786, %v6785
        %v6804 = vpack.c.bf16 %v6788, %v6787
        %s6805 = scalar_lea.vmem %s4, 320
        %v6806 = vld [vmem:[%s6805] sm:$0xf]
        %v6807 = vld [vmem:[%s6805 + $0x4] sm:$0xf]
        %v6808 = vld [vmem:[%s6805 + $0x8] sm:$0xf]
        %v6809 = vld [vmem:[%s6805 + $0xc] sm:$0xf]
        %v6810 = vld [vmem:[%s6805 + $0x10] sm:$0xf]
        %v6811 = vld [vmem:[%s6805 + $0x14] sm:$0xf]
        %v6812 = vld [vmem:[%s6805 + $0x18] sm:$0xf]
        %v6813 = vld [vmem:[%s6805 + $0x1c] sm:$0xf]
        %v6814 = vld [vmem:[%s6805 + $0x20] sm:$0xf]
        %v6815 = vld [vmem:[%s6805 + $0x24] sm:$0xf]
        %v6816 = vld [vmem:[%s6805 + $0x28] sm:$0xf]
        %v6817 = vld [vmem:[%s6805 + $0x2c] sm:$0xf]
        %v6818 = vld [vmem:[%s6805 + $0x30] sm:$0xf]
        %v6819 = vld [vmem:[%s6805 + $0x34] sm:$0xf]
        %v6820 = vld [vmem:[%s6805 + $0x38] sm:$0xf]
        %v6821 = vld [vmem:[%s6805 + $0x3c] sm:$0xf]
        %v6838 = vunpack.c.l.b16 %v6806
        %v6839 = vunpack.c.l.b16 %v6807
        %v6840 = vunpack.c.l.b16 %v6808
        %v6841 = vunpack.c.l.b16 %v6809
        %v6842 = vunpack.c.l.b16 %v6810
        %v6843 = vunpack.c.l.b16 %v6811
        %v6844 = vunpack.c.l.b16 %v6812
        %v6845 = vunpack.c.l.b16 %v6813
        %v6846 = vunpack.c.l.b16 %v6814
        %v6847 = vunpack.c.l.b16 %v6815
        %v6848 = vunpack.c.l.b16 %v6816
        %v6849 = vunpack.c.l.b16 %v6817
        %v6850 = vunpack.c.l.b16 %v6818
        %v6851 = vunpack.c.l.b16 %v6819
        %v6852 = vunpack.c.l.b16 %v6820
        %v6853 = vunpack.c.l.b16 %v6821
        %v6854 = vpack.c.b16 %v6839, %v6838
        %v6855 = vpack.c.b16 %v6841, %v6840
        %v6856 = vpack.c.b16 %v6843, %v6842
        %v6857 = vpack.c.b16 %v6845, %v6844
        %v6858 = vpack.c.b16 %v6847, %v6846
        %v6859 = vpack.c.b16 %v6849, %v6848
        %v6860 = vpack.c.b16 %v6851, %v6850
        %v6861 = vpack.c.b16 %v6853, %v6852
        %6870 = vmatprep.subr.bf16.mxu0 0
        %6871 = vmatpush1.bf16.msra.mxu0 %v6861
        %6872 = vmatprep.subr.bf16.mxu0 0
        %6873 = vmatpush1.bf16.msra.mxu0 %v6860
        %6874 = vmatprep.subr.bf16.mxu0 0
        %6875 = vmatpush1.bf16.msra.mxu0 %v6859
        %6876 = vmatprep.subr.bf16.mxu0 0
        %6877 = vmatpush1.bf16.msra.mxu0 %v6858
        %6878 = vmatprep.subr.bf16.mxu0 0
        %6879 = vmatpush1.bf16.msra.mxu0 %v6857
        %6880 = vmatprep.subr.bf16.mxu0 0
        %6881 = vmatpush1.bf16.msra.mxu0 %v6856
        %6882 = vmatprep.subr.bf16.mxu0 0
        %6883 = vmatpush1.bf16.msra.mxu0 %v6855
        %6884 = vmatprep.subr.bf16.mxu0 0
        %6885 = vmatpush1.bf16.msra.mxu0 %v6854
        %6886 = vmatprep.subr.bf16.mxu0 0
        %6887 = vmatpush2.bf16.msra.mxu0 0
        %6888 = vmatprep.subr.bf16.mxu0 0
        %6889 = vmatpush2.bf16.msra.mxu0 0
        %6890 = vmatprep.subr.bf16.mxu0 0
        %6891 = vmatpush2.bf16.msra.mxu0 0
        %6892 = vmatprep.subr.bf16.mxu0 0
        %6893 = vmatpush2.bf16.msra.mxu0 0
        %6894 = vmatprep.subr.bf16.mxu0 0
        %6895 = vmatpush2.bf16.msra.mxu0 0
        %6896 = vmatprep.subr.bf16.mxu0 0
        %6897 = vmatpush2.bf16.msra.mxu0 0
        %6898 = vmatprep.subr.bf16.mxu0 0
        %6899 = vmatpush2.bf16.msra.mxu0 0
        %6900 = vmatprep.subr.bf16.mxu0 0
        %6901 = vmatpush2.bf16.msra.mxu0 0
        %6902 = vmatprep.mubr.bf16.mxu0 0
        %6903 = vmatmul.mubr.bf16.gmra.mxu0 %v6789
        %v6904 = vpop.f32.mrf.mxu0
        %v6905 = vadd.f32 0.0, %v6904
        %v6906 = vpop.f32.mrf.mxu0
        %v6907 = vpop.f32.mrf.mxu0
        %v6908 = vadd.f32 0.0, %v6907
        %v6909 = vpop.f32.mrf.mxu0
        %6910 = vmatprep.mubr.bf16.mxu0 0
        %6911 = vmatmul.mubr.bf16.gmra.mxu0 %v6790
        %v6912 = vpop.f32.mrf.mxu0
        %v6913 = vadd.f32 0.0, %v6912
        %v6914 = vpop.f32.mrf.mxu0
        %v6915 = vpop.f32.mrf.mxu0
        %v6916 = vadd.f32 0.0, %v6915
        %v6917 = vpop.f32.mrf.mxu0
        %6918 = vmatprep.mubr.bf16.mxu0 0
        %6919 = vmatmul.mubr.bf16.gmra.mxu0 %v6791
        %v6920 = vpop.f32.mrf.mxu0
        %v6921 = vadd.f32 0.0, %v6920
        %v6922 = vpop.f32.mrf.mxu0
        %v6923 = vpop.f32.mrf.mxu0
        %v6924 = vadd.f32 0.0, %v6923
        %v6925 = vpop.f32.mrf.mxu0
        %6926 = vmatprep.mubr.bf16.mxu0 0
        %6927 = vmatmul.mubr.bf16.gmra.mxu0 %v6792
        %v6928 = vpop.f32.mrf.mxu0
        %v6929 = vadd.f32 0.0, %v6928
        %v6930 = vpop.f32.mrf.mxu0
        %v6931 = vpop.f32.mrf.mxu0
        %v6932 = vadd.f32 0.0, %v6931
        %v6933 = vpop.f32.mrf.mxu0
        %6934 = vmatprep.mubr.bf16.mxu0 0
        %6935 = vmatmul.mubr.bf16.gmra.mxu0 %v6793
        %v6936 = vpop.f32.mrf.mxu0
        %v6937 = vadd.f32 0.0, %v6936
        %v6938 = vpop.f32.mrf.mxu0
        %v6939 = vpop.f32.mrf.mxu0
        %v6940 = vadd.f32 0.0, %v6939
        %v6941 = vpop.f32.mrf.mxu0
        %6942 = vmatprep.mubr.bf16.mxu0 0
        %6943 = vmatmul.mubr.bf16.gmra.mxu0 %v6794
        %v6944 = vpop.f32.mrf.mxu0
        %v6945 = vadd.f32 0.0, %v6944
        %v6946 = vpop.f32.mrf.mxu0
        %v6947 = vpop.f32.mrf.mxu0
        %v6948 = vadd.f32 0.0, %v6947
        %v6949 = vpop.f32.mrf.mxu0
        %6950 = vmatprep.mubr.bf16.mxu0 0
        %6951 = vmatmul.mubr.bf16.gmra.mxu0 %v6795
        %v6952 = vpop.f32.mrf.mxu0
        %v6953 = vadd.f32 0.0, %v6952
        %v6954 = vpop.f32.mrf.mxu0
        %v6955 = vpop.f32.mrf.mxu0
        %v6956 = vadd.f32 0.0, %v6955
        %v6957 = vpop.f32.mrf.mxu0
        %6958 = vmatprep.mubr.bf16.mxu0 0
        %6959 = vmatmul.mubr.bf16.gmra.mxu0 %v6796
        %v6960 = vpop.f32.mrf.mxu0
        %v6961 = vadd.f32 0.0, %v6960
        %v6962 = vpop.f32.mrf.mxu0
        %v6963 = vpop.f32.mrf.mxu0
        %v6964 = vadd.f32 0.0, %v6963
        %v6965 = vpop.f32.mrf.mxu0
        %6966 = vmatprep.mubr.bf16.mxu0 0
        %6967 = vmatmul.mubr.bf16.gmra.mxu0 %v6797
        %v6968 = vpop.f32.mrf.mxu0
        %v6969 = vadd.f32 0.0, %v6968
        %v6970 = vpop.f32.mrf.mxu0
        %v6971 = vpop.f32.mrf.mxu0
        %v6972 = vadd.f32 0.0, %v6971
        %v6973 = vpop.f32.mrf.mxu0
        %6974 = vmatprep.mubr.bf16.mxu0 0
        %6975 = vmatmul.mubr.bf16.gmra.mxu0 %v6798
        %v6976 = vpop.f32.mrf.mxu0
        %v6977 = vadd.f32 0.0, %v6976
        %v6978 = vpop.f32.mrf.mxu0
        %v6979 = vpop.f32.mrf.mxu0
        %v6980 = vadd.f32 0.0, %v6979
        %v6981 = vpop.f32.mrf.mxu0
        %6982 = vmatprep.mubr.bf16.mxu0 0
        %6983 = vmatmul.mubr.bf16.gmra.mxu0 %v6799
        %v6984 = vpop.f32.mrf.mxu0
        %v6985 = vadd.f32 0.0, %v6984
        %v6986 = vpop.f32.mrf.mxu0
        %v6987 = vpop.f32.mrf.mxu0
        %v6988 = vadd.f32 0.0, %v6987
        %v6989 = vpop.f32.mrf.mxu0
        %6990 = vmatprep.mubr.bf16.mxu0 0
        %6991 = vmatmul.mubr.bf16.gmra.mxu0 %v6800
        %v6992 = vpop.f32.mrf.mxu0
        %v6993 = vadd.f32 0.0, %v6992
        %v6994 = vpop.f32.mrf.mxu0
        %v6995 = vpop.f32.mrf.mxu0
        %v6996 = vadd.f32 0.0, %v6995
        %v6997 = vpop.f32.mrf.mxu0
        %6998 = vmatprep.mubr.bf16.mxu0 0
        %6999 = vmatmul.mubr.bf16.gmra.mxu0 %v6801
        %v7000 = vpop.f32.mrf.mxu0
        %v7001 = vadd.f32 0.0, %v7000
        %v7002 = vpop.f32.mrf.mxu0
        %v7003 = vpop.f32.mrf.mxu0
        %v7004 = vadd.f32 0.0, %v7003
        %v7005 = vpop.f32.mrf.mxu0
        %7006 = vmatprep.mubr.bf16.mxu0 0
        %7007 = vmatmul.mubr.bf16.gmra.mxu0 %v6802
        %v7008 = vpop.f32.mrf.mxu0
        %v7009 = vadd.f32 0.0, %v7008
        %v7010 = vpop.f32.mrf.mxu0
        %v7011 = vpop.f32.mrf.mxu0
        %v7012 = vadd.f32 0.0, %v7011
        %v7013 = vpop.f32.mrf.mxu0
        %7014 = vmatprep.mubr.bf16.mxu0 0
        %7015 = vmatmul.mubr.bf16.gmra.mxu0 %v6803
        %v7016 = vpop.f32.mrf.mxu0
        %v7017 = vadd.f32 0.0, %v7016
        %v7018 = vpop.f32.mrf.mxu0
        %v7019 = vpop.f32.mrf.mxu0
        %v7020 = vadd.f32 0.0, %v7019
        %v7021 = vpop.f32.mrf.mxu0
        %7022 = vmatprep.mubr.bf16.mxu0 0
        %7023 = vmatmul.mubr.bf16.gmra.mxu0 %v6804
        %v7024 = vpop.f32.mrf.mxu0
        %v7025 = vadd.f32 0.0, %v7024
        %v7026 = vpop.f32.mrf.mxu0
        %v7027 = vpop.f32.mrf.mxu0
        %v7028 = vadd.f32 0.0, %v7027
        %v7029 = vpop.f32.mrf.mxu0
        %7030 = vdwg.mxu0
        %v7031 = vadd.f32 %v6725, %v6905
        %v7032 = vadd.f32 %v6726, %v6908
        %v7033 = vadd.f32 %v6727, %v6913
        %v7034 = vadd.f32 %v6728, %v6916
        %v7035 = vadd.f32 %v6729, %v6921
        %v7036 = vadd.f32 %v6730, %v6924
        %v7037 = vadd.f32 %v6731, %v6929
        %v7038 = vadd.f32 %v6732, %v6932
        %v7039 = vadd.f32 %v6733, %v6937
        %v7040 = vadd.f32 %v6734, %v6940
        %v7041 = vadd.f32 %v6735, %v6945
        %v7042 = vadd.f32 %v6736, %v6948
        %v7043 = vadd.f32 %v6737, %v6953
        %v7044 = vadd.f32 %v6738, %v6956
        %v7045 = vadd.f32 %v6739, %v6961
        %v7046 = vadd.f32 %v6740, %v6964
        %v7047 = vadd.f32 %v6741, %v6969
        %v7048 = vadd.f32 %v6742, %v6972
        %v7049 = vadd.f32 %v6743, %v6977
        %v7050 = vadd.f32 %v6744, %v6980
        %v7051 = vadd.f32 %v6745, %v6985
        %v7052 = vadd.f32 %v6746, %v6988
        %v7053 = vadd.f32 %v6747, %v6993
        %v7054 = vadd.f32 %v6748, %v6996
        %v7055 = vadd.f32 %v6749, %v7001
        %v7056 = vadd.f32 %v6750, %v7004
        %v7057 = vadd.f32 %v6751, %v7009
        %v7058 = vadd.f32 %v6752, %v7012
        %v7059 = vadd.f32 %v6753, %v7017
        %v7060 = vadd.f32 %v6754, %v7020
        %v7061 = vadd.f32 %v6755, %v7025
        %v7062 = vadd.f32 %v6756, %v7028
        %s7063 = scalar_lea.vmem [#allocation2], 48
        %v7064 = vld [vmem:[%s7063] sm:$0xff]
        %v7065 = vld [vmem:[%s7063 + $0x8] sm:$0xff]
        %v7066 = vld [vmem:[%s7063 + $0x18] sm:$0xff]
        %v7067 = vld [vmem:[%s7063 + $0x20] sm:$0xff]
        %v7068 = vld [vmem:[%s7063 + $0x30] sm:$0xff]
        %v7069 = vld [vmem:[%s7063 + $0x38] sm:$0xff]
        %v7070 = vld [vmem:[%s7063 + $0x48] sm:$0xff]
        %v7071 = vld [vmem:[%s7063 + $0x50] sm:$0xff]
        %v7072 = vld [vmem:[%s7063 + $0x60] sm:$0xff]
        %v7073 = vld [vmem:[%s7063 + $0x68] sm:$0xff]
        %v7074 = vld [vmem:[%s7063 + $0x78] sm:$0xff]
        %v7075 = vld [vmem:[%s7063 + $0x80] sm:$0xff]
        %v7076 = vld [vmem:[%s7063 + $0x90] sm:$0xff]
        %v7077 = vld [vmem:[%s7063 + $0x98] sm:$0xff]
        %v7078 = vld [vmem:[%s7063 + $0xa8] sm:$0xff]
        %v7079 = vld [vmem:[%s7063 + $0xb0] sm:$0xff]
        %v7080 = vld [vmem:[%s7063 + $0xc0] sm:$0xff]
        %v7081 = vld [vmem:[%s7063 + $0xc8] sm:$0xff]
        %v7082 = vld [vmem:[%s7063 + $0xd8] sm:$0xff]
        %v7083 = vld [vmem:[%s7063 + $0xe0] sm:$0xff]
        %v7084 = vld [vmem:[%s7063 + $0xf0] sm:$0xff]
        %v7085 = vld [vmem:[%s7063 + $0xf8] sm:$0xff]
        %v7086 = vld [vmem:[%s7063 + $0x108] sm:$0xff]
        %v7087 = vld [vmem:[%s7063 + $0x110] sm:$0xff]
        %v7088 = vld [vmem:[%s7063 + $0x120] sm:$0xff]
        %v7089 = vld [vmem:[%s7063 + $0x128] sm:$0xff]
        %v7090 = vld [vmem:[%s7063 + $0x138] sm:$0xff]
        %v7091 = vld [vmem:[%s7063 + $0x140] sm:$0xff]
        %v7092 = vld [vmem:[%s7063 + $0x150] sm:$0xff]
        %v7093 = vld [vmem:[%s7063 + $0x158] sm:$0xff]
        %v7094 = vld [vmem:[%s7063 + $0x168] sm:$0xff]
        %v7095 = vld [vmem:[%s7063 + $0x170] sm:$0xff]
        %v7096 = vpack.c.bf16 %v7065, %v7064
        %v7097 = vpack.c.bf16 %v7067, %v7066
        %v7098 = vpack.c.bf16 %v7069, %v7068
        %v7099 = vpack.c.bf16 %v7071, %v7070
        %v7100 = vpack.c.bf16 %v7073, %v7072
        %v7101 = vpack.c.bf16 %v7075, %v7074
        %v7102 = vpack.c.bf16 %v7077, %v7076
        %v7103 = vpack.c.bf16 %v7079, %v7078
        %v7104 = vpack.c.bf16 %v7081, %v7080
        %v7105 = vpack.c.bf16 %v7083, %v7082
        %v7106 = vpack.c.bf16 %v7085, %v7084
        %v7107 = vpack.c.bf16 %v7087, %v7086
        %v7108 = vpack.c.bf16 %v7089, %v7088
        %v7109 = vpack.c.bf16 %v7091, %v7090
        %v7110 = vpack.c.bf16 %v7093, %v7092
        %v7111 = vpack.c.bf16 %v7095, %v7094
        %s7112 = scalar_lea.vmem %s4, 384
        %v7113 = vld [vmem:[%s7112] sm:$0xf]
        %v7114 = vld [vmem:[%s7112 + $0x4] sm:$0xf]
        %v7115 = vld [vmem:[%s7112 + $0x8] sm:$0xf]
        %v7116 = vld [vmem:[%s7112 + $0xc] sm:$0xf]
        %v7117 = vld [vmem:[%s7112 + $0x10] sm:$0xf]
        %v7118 = vld [vmem:[%s7112 + $0x14] sm:$0xf]
        %v7119 = vld [vmem:[%s7112 + $0x18] sm:$0xf]
        %v7120 = vld [vmem:[%s7112 + $0x1c] sm:$0xf]
        %v7121 = vld [vmem:[%s7112 + $0x20] sm:$0xf]
        %v7122 = vld [vmem:[%s7112 + $0x24] sm:$0xf]
        %v7123 = vld [vmem:[%s7112 + $0x28] sm:$0xf]
        %v7124 = vld [vmem:[%s7112 + $0x2c] sm:$0xf]
        %v7125 = vld [vmem:[%s7112 + $0x30] sm:$0xf]
        %v7126 = vld [vmem:[%s7112 + $0x34] sm:$0xf]
        %v7127 = vld [vmem:[%s7112 + $0x38] sm:$0xf]
        %v7128 = vld [vmem:[%s7112 + $0x3c] sm:$0xf]
        %v7145 = vunpack.c.l.b16 %v7113
        %v7146 = vunpack.c.l.b16 %v7114
        %v7147 = vunpack.c.l.b16 %v7115
        %v7148 = vunpack.c.l.b16 %v7116
        %v7149 = vunpack.c.l.b16 %v7117
        %v7150 = vunpack.c.l.b16 %v7118
        %v7151 = vunpack.c.l.b16 %v7119
        %v7152 = vunpack.c.l.b16 %v7120
        %v7153 = vunpack.c.l.b16 %v7121
        %v7154 = vunpack.c.l.b16 %v7122
        %v7155 = vunpack.c.l.b16 %v7123
        %v7156 = vunpack.c.l.b16 %v7124
        %v7157 = vunpack.c.l.b16 %v7125
        %v7158 = vunpack.c.l.b16 %v7126
        %v7159 = vunpack.c.l.b16 %v7127
        %v7160 = vunpack.c.l.b16 %v7128
        %v7161 = vpack.c.b16 %v7146, %v7145
        %v7162 = vpack.c.b16 %v7148, %v7147
        %v7163 = vpack.c.b16 %v7150, %v7149
        %v7164 = vpack.c.b16 %v7152, %v7151
        %v7165 = vpack.c.b16 %v7154, %v7153
        %v7166 = vpack.c.b16 %v7156, %v7155
        %v7167 = vpack.c.b16 %v7158, %v7157
        %v7168 = vpack.c.b16 %v7160, %v7159
        %7177 = vmatprep.subr.bf16.mxu0 0
        %7178 = vmatpush1.bf16.msra.mxu0 %v7168
        %7179 = vmatprep.subr.bf16.mxu0 0
        %7180 = vmatpush1.bf16.msra.mxu0 %v7167
        %7181 = vmatprep.subr.bf16.mxu0 0
        %7182 = vmatpush1.bf16.msra.mxu0 %v7166
        %7183 = vmatprep.subr.bf16.mxu0 0
        %7184 = vmatpush1.bf16.msra.mxu0 %v7165
        %7185 = vmatprep.subr.bf16.mxu0 0
        %7186 = vmatpush1.bf16.msra.mxu0 %v7164
        %7187 = vmatprep.subr.bf16.mxu0 0
        %7188 = vmatpush1.bf16.msra.mxu0 %v7163
        %7189 = vmatprep.subr.bf16.mxu0 0
        %7190 = vmatpush1.bf16.msra.mxu0 %v7162
        %7191 = vmatprep.subr.bf16.mxu0 0
        %7192 = vmatpush1.bf16.msra.mxu0 %v7161
        %7193 = vmatprep.subr.bf16.mxu0 0
        %7194 = vmatpush2.bf16.msra.mxu0 0
        %7195 = vmatprep.subr.bf16.mxu0 0
        %7196 = vmatpush2.bf16.msra.mxu0 0
        %7197 = vmatprep.subr.bf16.mxu0 0
        %7198 = vmatpush2.bf16.msra.mxu0 0
        %7199 = vmatprep.subr.bf16.mxu0 0
        %7200 = vmatpush2.bf16.msra.mxu0 0
        %7201 = vmatprep.subr.bf16.mxu0 0
        %7202 = vmatpush2.bf16.msra.mxu0 0
        %7203 = vmatprep.subr.bf16.mxu0 0
        %7204 = vmatpush2.bf16.msra.mxu0 0
        %7205 = vmatprep.subr.bf16.mxu0 0
        %7206 = vmatpush2.bf16.msra.mxu0 0
        %7207 = vmatprep.subr.bf16.mxu0 0
        %7208 = vmatpush2.bf16.msra.mxu0 0
        %7209 = vmatprep.mubr.bf16.mxu0 0
        %7210 = vmatmul.mubr.bf16.gmra.mxu0 %v7096
        %v7211 = vpop.f32.mrf.mxu0
        %v7212 = vadd.f32 0.0, %v7211
        %v7213 = vpop.f32.mrf.mxu0
        %v7214 = vpop.f32.mrf.mxu0
        %v7215 = vadd.f32 0.0, %v7214
        %v7216 = vpop.f32.mrf.mxu0
        %7217 = vmatprep.mubr.bf16.mxu0 0
        %7218 = vmatmul.mubr.bf16.gmra.mxu0 %v7097
        %v7219 = vpop.f32.mrf.mxu0
        %v7220 = vadd.f32 0.0, %v7219
        %v7221 = vpop.f32.mrf.mxu0
        %v7222 = vpop.f32.mrf.mxu0
        %v7223 = vadd.f32 0.0, %v7222
        %v7224 = vpop.f32.mrf.mxu0
        %7225 = vmatprep.mubr.bf16.mxu0 0
        %7226 = vmatmul.mubr.bf16.gmra.mxu0 %v7098
        %v7227 = vpop.f32.mrf.mxu0
        %v7228 = vadd.f32 0.0, %v7227
        %v7229 = vpop.f32.mrf.mxu0
        %v7230 = vpop.f32.mrf.mxu0
        %v7231 = vadd.f32 0.0, %v7230
        %v7232 = vpop.f32.mrf.mxu0
        %7233 = vmatprep.mubr.bf16.mxu0 0
        %7234 = vmatmul.mubr.bf16.gmra.mxu0 %v7099
        %v7235 = vpop.f32.mrf.mxu0
        %v7236 = vadd.f32 0.0, %v7235
        %v7237 = vpop.f32.mrf.mxu0
        %v7238 = vpop.f32.mrf.mxu0
        %v7239 = vadd.f32 0.0, %v7238
        %v7240 = vpop.f32.mrf.mxu0
        %7241 = vmatprep.mubr.bf16.mxu0 0
        %7242 = vmatmul.mubr.bf16.gmra.mxu0 %v7100
        %v7243 = vpop.f32.mrf.mxu0
        %v7244 = vadd.f32 0.0, %v7243
        %v7245 = vpop.f32.mrf.mxu0
        %v7246 = vpop.f32.mrf.mxu0
        %v7247 = vadd.f32 0.0, %v7246
        %v7248 = vpop.f32.mrf.mxu0
        %7249 = vmatprep.mubr.bf16.mxu0 0
        %7250 = vmatmul.mubr.bf16.gmra.mxu0 %v7101
        %v7251 = vpop.f32.mrf.mxu0
        %v7252 = vadd.f32 0.0, %v7251
        %v7253 = vpop.f32.mrf.mxu0
        %v7254 = vpop.f32.mrf.mxu0
        %v7255 = vadd.f32 0.0, %v7254
        %v7256 = vpop.f32.mrf.mxu0
        %7257 = vmatprep.mubr.bf16.mxu0 0
        %7258 = vmatmul.mubr.bf16.gmra.mxu0 %v7102
        %v7259 = vpop.f32.mrf.mxu0
        %v7260 = vadd.f32 0.0, %v7259
        %v7261 = vpop.f32.mrf.mxu0
        %v7262 = vpop.f32.mrf.mxu0
        %v7263 = vadd.f32 0.0, %v7262
        %v7264 = vpop.f32.mrf.mxu0
        %7265 = vmatprep.mubr.bf16.mxu0 0
        %7266 = vmatmul.mubr.bf16.gmra.mxu0 %v7103
        %v7267 = vpop.f32.mrf.mxu0
        %v7268 = vadd.f32 0.0, %v7267
        %v7269 = vpop.f32.mrf.mxu0
        %v7270 = vpop.f32.mrf.mxu0
        %v7271 = vadd.f32 0.0, %v7270
        %v7272 = vpop.f32.mrf.mxu0
        %7273 = vmatprep.mubr.bf16.mxu0 0
        %7274 = vmatmul.mubr.bf16.gmra.mxu0 %v7104
        %v7275 = vpop.f32.mrf.mxu0
        %v7276 = vadd.f32 0.0, %v7275
        %v7277 = vpop.f32.mrf.mxu0
        %v7278 = vpop.f32.mrf.mxu0
        %v7279 = vadd.f32 0.0, %v7278
        %v7280 = vpop.f32.mrf.mxu0
        %7281 = vmatprep.mubr.bf16.mxu0 0
        %7282 = vmatmul.mubr.bf16.gmra.mxu0 %v7105
        %v7283 = vpop.f32.mrf.mxu0
        %v7284 = vadd.f32 0.0, %v7283
        %v7285 = vpop.f32.mrf.mxu0
        %v7286 = vpop.f32.mrf.mxu0
        %v7287 = vadd.f32 0.0, %v7286
        %v7288 = vpop.f32.mrf.mxu0
        %7289 = vmatprep.mubr.bf16.mxu0 0
        %7290 = vmatmul.mubr.bf16.gmra.mxu0 %v7106
        %v7291 = vpop.f32.mrf.mxu0
        %v7292 = vadd.f32 0.0, %v7291
        %v7293 = vpop.f32.mrf.mxu0
        %v7294 = vpop.f32.mrf.mxu0
        %v7295 = vadd.f32 0.0, %v7294
        %v7296 = vpop.f32.mrf.mxu0
        %7297 = vmatprep.mubr.bf16.mxu0 0
        %7298 = vmatmul.mubr.bf16.gmra.mxu0 %v7107
        %v7299 = vpop.f32.mrf.mxu0
        %v7300 = vadd.f32 0.0, %v7299
        %v7301 = vpop.f32.mrf.mxu0
        %v7302 = vpop.f32.mrf.mxu0
        %v7303 = vadd.f32 0.0, %v7302
        %v7304 = vpop.f32.mrf.mxu0
        %7305 = vmatprep.mubr.bf16.mxu0 0
        %7306 = vmatmul.mubr.bf16.gmra.mxu0 %v7108
        %v7307 = vpop.f32.mrf.mxu0
        %v7308 = vadd.f32 0.0, %v7307
        %v7309 = vpop.f32.mrf.mxu0
        %v7310 = vpop.f32.mrf.mxu0
        %v7311 = vadd.f32 0.0, %v7310
        %v7312 = vpop.f32.mrf.mxu0
        %7313 = vmatprep.mubr.bf16.mxu0 0
        %7314 = vmatmul.mubr.bf16.gmra.mxu0 %v7109
        %v7315 = vpop.f32.mrf.mxu0
        %v7316 = vadd.f32 0.0, %v7315
        %v7317 = vpop.f32.mrf.mxu0
        %v7318 = vpop.f32.mrf.mxu0
        %v7319 = vadd.f32 0.0, %v7318
        %v7320 = vpop.f32.mrf.mxu0
        %7321 = vmatprep.mubr.bf16.mxu0 0
        %7322 = vmatmul.mubr.bf16.gmra.mxu0 %v7110
        %v7323 = vpop.f32.mrf.mxu0
        %v7324 = vadd.f32 0.0, %v7323
        %v7325 = vpop.f32.mrf.mxu0
        %v7326 = vpop.f32.mrf.mxu0
        %v7327 = vadd.f32 0.0, %v7326
        %v7328 = vpop.f32.mrf.mxu0
        %7329 = vmatprep.mubr.bf16.mxu0 0
        %7330 = vmatmul.mubr.bf16.gmra.mxu0 %v7111
        %v7331 = vpop.f32.mrf.mxu0
        %v7332 = vadd.f32 0.0, %v7331
        %v7333 = vpop.f32.mrf.mxu0
        %v7334 = vpop.f32.mrf.mxu0
        %v7335 = vadd.f32 0.0, %v7334
        %v7336 = vpop.f32.mrf.mxu0
        %7337 = vdwg.mxu0
        %v7338 = vadd.f32 %v7031, %v7212
        %v7339 = vadd.f32 %v7032, %v7215
        %v7340 = vadd.f32 %v7033, %v7220
        %v7341 = vadd.f32 %v7034, %v7223
        %v7342 = vadd.f32 %v7035, %v7228
        %v7343 = vadd.f32 %v7036, %v7231
        %v7344 = vadd.f32 %v7037, %v7236
        %v7345 = vadd.f32 %v7038, %v7239
        %v7346 = vadd.f32 %v7039, %v7244
        %v7347 = vadd.f32 %v7040, %v7247
        %v7348 = vadd.f32 %v7041, %v7252
        %v7349 = vadd.f32 %v7042, %v7255
        %v7350 = vadd.f32 %v7043, %v7260
        %v7351 = vadd.f32 %v7044, %v7263
        %v7352 = vadd.f32 %v7045, %v7268
        %v7353 = vadd.f32 %v7046, %v7271
        %v7354 = vadd.f32 %v7047, %v7276
        %v7355 = vadd.f32 %v7048, %v7279
        %v7356 = vadd.f32 %v7049, %v7284
        %v7357 = vadd.f32 %v7050, %v7287
        %v7358 = vadd.f32 %v7051, %v7292
        %v7359 = vadd.f32 %v7052, %v7295
        %v7360 = vadd.f32 %v7053, %v7300
        %v7361 = vadd.f32 %v7054, %v7303
        %v7362 = vadd.f32 %v7055, %v7308
        %v7363 = vadd.f32 %v7056, %v7311
        %v7364 = vadd.f32 %v7057, %v7316
        %v7365 = vadd.f32 %v7058, %v7319
        %v7366 = vadd.f32 %v7059, %v7324
        %v7367 = vadd.f32 %v7060, %v7327
        %v7368 = vadd.f32 %v7061, %v7332
        %v7369 = vadd.f32 %v7062, %v7335
        %v7370 = vld [vmem:[%s7063 + $0x1] sm:$0xff]
        %v7371 = vld [vmem:[%s7063 + $0x9] sm:$0xff]
        %v7372 = vld [vmem:[%s7063 + $0x19] sm:$0xff]
        %v7373 = vld [vmem:[%s7063 + $0x21] sm:$0xff]
        %v7374 = vld [vmem:[%s7063 + $0x31] sm:$0xff]
        %v7375 = vld [vmem:[%s7063 + $0x39] sm:$0xff]
        %v7376 = vld [vmem:[%s7063 + $0x49] sm:$0xff]
        %v7377 = vld [vmem:[%s7063 + $0x51] sm:$0xff]
        %v7378 = vld [vmem:[%s7063 + $0x61] sm:$0xff]
        %v7379 = vld [vmem:[%s7063 + $0x69] sm:$0xff]
        %v7380 = vld [vmem:[%s7063 + $0x79] sm:$0xff]
        %v7381 = vld [vmem:[%s7063 + $0x81] sm:$0xff]
        %v7382 = vld [vmem:[%s7063 + $0x91] sm:$0xff]
        %v7383 = vld [vmem:[%s7063 + $0x99] sm:$0xff]
        %v7384 = vld [vmem:[%s7063 + $0xa9] sm:$0xff]
        %v7385 = vld [vmem:[%s7063 + $0xb1] sm:$0xff]
        %v7386 = vld [vmem:[%s7063 + $0xc1] sm:$0xff]
        %v7387 = vld [vmem:[%s7063 + $0xc9] sm:$0xff]
        %v7388 = vld [vmem:[%s7063 + $0xd9] sm:$0xff]
        %v7389 = vld [vmem:[%s7063 + $0xe1] sm:$0xff]
        %v7390 = vld [vmem:[%s7063 + $0xf1] sm:$0xff]
        %v7391 = vld [vmem:[%s7063 + $0xf9] sm:$0xff]
        %v7392 = vld [vmem:[%s7063 + $0x109] sm:$0xff]
        %v7393 = vld [vmem:[%s7063 + $0x111] sm:$0xff]
        %v7394 = vld [vmem:[%s7063 + $0x121] sm:$0xff]
        %v7395 = vld [vmem:[%s7063 + $0x129] sm:$0xff]
        %v7396 = vld [vmem:[%s7063 + $0x139] sm:$0xff]
        %v7397 = vld [vmem:[%s7063 + $0x141] sm:$0xff]
        %v7398 = vld [vmem:[%s7063 + $0x151] sm:$0xff]
        %v7399 = vld [vmem:[%s7063 + $0x159] sm:$0xff]
        %v7400 = vld [vmem:[%s7063 + $0x169] sm:$0xff]
        %v7401 = vld [vmem:[%s7063 + $0x171] sm:$0xff]
        %v7402 = vpack.c.bf16 %v7371, %v7370
        %v7403 = vpack.c.bf16 %v7373, %v7372
        %v7404 = vpack.c.bf16 %v7375, %v7374
        %v7405 = vpack.c.bf16 %v7377, %v7376
        %v7406 = vpack.c.bf16 %v7379, %v7378
        %v7407 = vpack.c.bf16 %v7381, %v7380
        %v7408 = vpack.c.bf16 %v7383, %v7382
        %v7409 = vpack.c.bf16 %v7385, %v7384
        %v7410 = vpack.c.bf16 %v7387, %v7386
        %v7411 = vpack.c.bf16 %v7389, %v7388
        %v7412 = vpack.c.bf16 %v7391, %v7390
        %v7413 = vpack.c.bf16 %v7393, %v7392
        %v7414 = vpack.c.bf16 %v7395, %v7394
        %v7415 = vpack.c.bf16 %v7397, %v7396
        %v7416 = vpack.c.bf16 %v7399, %v7398
        %v7417 = vpack.c.bf16 %v7401, %v7400
        %s7418 = scalar_lea.vmem %s4, 448
        %v7419 = vld [vmem:[%s7418] sm:$0xf]
        %v7420 = vld [vmem:[%s7418 + $0x4] sm:$0xf]
        %v7421 = vld [vmem:[%s7418 + $0x8] sm:$0xf]
        %v7422 = vld [vmem:[%s7418 + $0xc] sm:$0xf]
        %v7423 = vld [vmem:[%s7418 + $0x10] sm:$0xf]
        %v7424 = vld [vmem:[%s7418 + $0x14] sm:$0xf]
        %v7425 = vld [vmem:[%s7418 + $0x18] sm:$0xf]
        %v7426 = vld [vmem:[%s7418 + $0x1c] sm:$0xf]
        %v7427 = vld [vmem:[%s7418 + $0x20] sm:$0xf]
        %v7428 = vld [vmem:[%s7418 + $0x24] sm:$0xf]
        %v7429 = vld [vmem:[%s7418 + $0x28] sm:$0xf]
        %v7430 = vld [vmem:[%s7418 + $0x2c] sm:$0xf]
        %v7431 = vld [vmem:[%s7418 + $0x30] sm:$0xf]
        %v7432 = vld [vmem:[%s7418 + $0x34] sm:$0xf]
        %v7433 = vld [vmem:[%s7418 + $0x38] sm:$0xf]
        %v7434 = vld [vmem:[%s7418 + $0x3c] sm:$0xf]
        %v7451 = vunpack.c.l.b16 %v7419
        %v7452 = vunpack.c.l.b16 %v7420
        %v7453 = vunpack.c.l.b16 %v7421
        %v7454 = vunpack.c.l.b16 %v7422
        %v7455 = vunpack.c.l.b16 %v7423
        %v7456 = vunpack.c.l.b16 %v7424
        %v7457 = vunpack.c.l.b16 %v7425
        %v7458 = vunpack.c.l.b16 %v7426
        %v7459 = vunpack.c.l.b16 %v7427
        %v7460 = vunpack.c.l.b16 %v7428
        %v7461 = vunpack.c.l.b16 %v7429
        %v7462 = vunpack.c.l.b16 %v7430
        %v7463 = vunpack.c.l.b16 %v7431
        %v7464 = vunpack.c.l.b16 %v7432
        %v7465 = vunpack.c.l.b16 %v7433
        %v7466 = vunpack.c.l.b16 %v7434
        %v7467 = vpack.c.b16 %v7452, %v7451
        %v7468 = vpack.c.b16 %v7454, %v7453
        %v7469 = vpack.c.b16 %v7456, %v7455
        %v7470 = vpack.c.b16 %v7458, %v7457
        %v7471 = vpack.c.b16 %v7460, %v7459
        %v7472 = vpack.c.b16 %v7462, %v7461
        %v7473 = vpack.c.b16 %v7464, %v7463
        %v7474 = vpack.c.b16 %v7466, %v7465
        %7483 = vmatprep.subr.bf16.mxu0 0
        %7484 = vmatpush1.bf16.msra.mxu0 %v7474
        %7485 = vmatprep.subr.bf16.mxu0 0
        %7486 = vmatpush1.bf16.msra.mxu0 %v7473
        %7487 = vmatprep.subr.bf16.mxu0 0
        %7488 = vmatpush1.bf16.msra.mxu0 %v7472
        %7489 = vmatprep.subr.bf16.mxu0 0
        %7490 = vmatpush1.bf16.msra.mxu0 %v7471
        %7491 = vmatprep.subr.bf16.mxu0 0
        %7492 = vmatpush1.bf16.msra.mxu0 %v7470
        %7493 = vmatprep.subr.bf16.mxu0 0
        %7494 = vmatpush1.bf16.msra.mxu0 %v7469
        %7495 = vmatprep.subr.bf16.mxu0 0
        %7496 = vmatpush1.bf16.msra.mxu0 %v7468
        %7497 = vmatprep.subr.bf16.mxu0 0
        %7498 = vmatpush1.bf16.msra.mxu0 %v7467
        %7499 = vmatprep.subr.bf16.mxu0 0
        %7500 = vmatpush2.bf16.msra.mxu0 0
        %7501 = vmatprep.subr.bf16.mxu0 0
        %7502 = vmatpush2.bf16.msra.mxu0 0
        %7503 = vmatprep.subr.bf16.mxu0 0
        %7504 = vmatpush2.bf16.msra.mxu0 0
        %7505 = vmatprep.subr.bf16.mxu0 0
        %7506 = vmatpush2.bf16.msra.mxu0 0
        %7507 = vmatprep.subr.bf16.mxu0 0
        %7508 = vmatpush2.bf16.msra.mxu0 0
        %7509 = vmatprep.subr.bf16.mxu0 0
        %7510 = vmatpush2.bf16.msra.mxu0 0
        %7511 = vmatprep.subr.bf16.mxu0 0
        %7512 = vmatpush2.bf16.msra.mxu0 0
        %7513 = vmatprep.subr.bf16.mxu0 0
        %7514 = vmatpush2.bf16.msra.mxu0 0
        %7515 = vmatprep.mubr.bf16.mxu0 0
        %7516 = vmatmul.mubr.bf16.gmra.mxu0 %v7402
        %v7517 = vpop.f32.mrf.mxu0
        %v7518 = vadd.f32 0.0, %v7517
        %v7519 = vpop.f32.mrf.mxu0
        %v7520 = vpop.f32.mrf.mxu0
        %v7521 = vadd.f32 0.0, %v7520
        %v7522 = vpop.f32.mrf.mxu0
        %7523 = vmatprep.mubr.bf16.mxu0 0
        %7524 = vmatmul.mubr.bf16.gmra.mxu0 %v7403
        %v7525 = vpop.f32.mrf.mxu0
        %v7526 = vadd.f32 0.0, %v7525
        %v7527 = vpop.f32.mrf.mxu0
        %v7528 = vpop.f32.mrf.mxu0
        %v7529 = vadd.f32 0.0, %v7528
        %v7530 = vpop.f32.mrf.mxu0
        %7531 = vmatprep.mubr.bf16.mxu0 0
        %7532 = vmatmul.mubr.bf16.gmra.mxu0 %v7404
        %v7533 = vpop.f32.mrf.mxu0
        %v7534 = vadd.f32 0.0, %v7533
        %v7535 = vpop.f32.mrf.mxu0
        %v7536 = vpop.f32.mrf.mxu0
        %v7537 = vadd.f32 0.0, %v7536
        %v7538 = vpop.f32.mrf.mxu0
        %7539 = vmatprep.mubr.bf16.mxu0 0
        %7540 = vmatmul.mubr.bf16.gmra.mxu0 %v7405
        %v7541 = vpop.f32.mrf.mxu0
        %v7542 = vadd.f32 0.0, %v7541
        %v7543 = vpop.f32.mrf.mxu0
        %v7544 = vpop.f32.mrf.mxu0
        %v7545 = vadd.f32 0.0, %v7544
        %v7546 = vpop.f32.mrf.mxu0
        %7547 = vmatprep.mubr.bf16.mxu0 0
        %7548 = vmatmul.mubr.bf16.gmra.mxu0 %v7406
        %v7549 = vpop.f32.mrf.mxu0
        %v7550 = vadd.f32 0.0, %v7549
        %v7551 = vpop.f32.mrf.mxu0
        %v7552 = vpop.f32.mrf.mxu0
        %v7553 = vadd.f32 0.0, %v7552
        %v7554 = vpop.f32.mrf.mxu0
        %7555 = vmatprep.mubr.bf16.mxu0 0
        %7556 = vmatmul.mubr.bf16.gmra.mxu0 %v7407
        %v7557 = vpop.f32.mrf.mxu0
        %v7558 = vadd.f32 0.0, %v7557
        %v7559 = vpop.f32.mrf.mxu0
        %v7560 = vpop.f32.mrf.mxu0
        %v7561 = vadd.f32 0.0, %v7560
        %v7562 = vpop.f32.mrf.mxu0
        %7563 = vmatprep.mubr.bf16.mxu0 0
        %7564 = vmatmul.mubr.bf16.gmra.mxu0 %v7408
        %v7565 = vpop.f32.mrf.mxu0
        %v7566 = vadd.f32 0.0, %v7565
        %v7567 = vpop.f32.mrf.mxu0
        %v7568 = vpop.f32.mrf.mxu0
        %v7569 = vadd.f32 0.0, %v7568
        %v7570 = vpop.f32.mrf.mxu0
        %7571 = vmatprep.mubr.bf16.mxu0 0
        %7572 = vmatmul.mubr.bf16.gmra.mxu0 %v7409
        %v7573 = vpop.f32.mrf.mxu0
        %v7574 = vadd.f32 0.0, %v7573
        %v7575 = vpop.f32.mrf.mxu0
        %v7576 = vpop.f32.mrf.mxu0
        %v7577 = vadd.f32 0.0, %v7576
        %v7578 = vpop.f32.mrf.mxu0
        %7579 = vmatprep.mubr.bf16.mxu0 0
        %7580 = vmatmul.mubr.bf16.gmra.mxu0 %v7410
        %v7581 = vpop.f32.mrf.mxu0
        %v7582 = vadd.f32 0.0, %v7581
        %v7583 = vpop.f32.mrf.mxu0
        %v7584 = vpop.f32.mrf.mxu0
        %v7585 = vadd.f32 0.0, %v7584
        %v7586 = vpop.f32.mrf.mxu0
        %7587 = vmatprep.mubr.bf16.mxu0 0
        %7588 = vmatmul.mubr.bf16.gmra.mxu0 %v7411
        %v7589 = vpop.f32.mrf.mxu0
        %v7590 = vadd.f32 0.0, %v7589
        %v7591 = vpop.f32.mrf.mxu0
        %v7592 = vpop.f32.mrf.mxu0
        %v7593 = vadd.f32 0.0, %v7592
        %v7594 = vpop.f32.mrf.mxu0
        %7595 = vmatprep.mubr.bf16.mxu0 0
        %7596 = vmatmul.mubr.bf16.gmra.mxu0 %v7412
        %v7597 = vpop.f32.mrf.mxu0
        %v7598 = vadd.f32 0.0, %v7597
        %v7599 = vpop.f32.mrf.mxu0
        %v7600 = vpop.f32.mrf.mxu0
        %v7601 = vadd.f32 0.0, %v7600
        %v7602 = vpop.f32.mrf.mxu0
        %7603 = vmatprep.mubr.bf16.mxu0 0
        %7604 = vmatmul.mubr.bf16.gmra.mxu0 %v7413
        %v7605 = vpop.f32.mrf.mxu0
        %v7606 = vadd.f32 0.0, %v7605
        %v7607 = vpop.f32.mrf.mxu0
        %v7608 = vpop.f32.mrf.mxu0
        %v7609 = vadd.f32 0.0, %v7608
        %v7610 = vpop.f32.mrf.mxu0
        %7611 = vmatprep.mubr.bf16.mxu0 0
        %7612 = vmatmul.mubr.bf16.gmra.mxu0 %v7414
        %v7613 = vpop.f32.mrf.mxu0
        %v7614 = vadd.f32 0.0, %v7613
        %v7615 = vpop.f32.mrf.mxu0
        %v7616 = vpop.f32.mrf.mxu0
        %v7617 = vadd.f32 0.0, %v7616
        %v7618 = vpop.f32.mrf.mxu0
        %7619 = vmatprep.mubr.bf16.mxu0 0
        %7620 = vmatmul.mubr.bf16.gmra.mxu0 %v7415
        %v7621 = vpop.f32.mrf.mxu0
        %v7622 = vadd.f32 0.0, %v7621
        %v7623 = vpop.f32.mrf.mxu0
        %v7624 = vpop.f32.mrf.mxu0
        %v7625 = vadd.f32 0.0, %v7624
        %v7626 = vpop.f32.mrf.mxu0
        %7627 = vmatprep.mubr.bf16.mxu0 0
        %7628 = vmatmul.mubr.bf16.gmra.mxu0 %v7416
        %v7629 = vpop.f32.mrf.mxu0
        %v7630 = vadd.f32 0.0, %v7629
        %v7631 = vpop.f32.mrf.mxu0
        %v7632 = vpop.f32.mrf.mxu0
        %v7633 = vadd.f32 0.0, %v7632
        %v7634 = vpop.f32.mrf.mxu0
        %7635 = vmatprep.mubr.bf16.mxu0 0
        %7636 = vmatmul.mubr.bf16.gmra.mxu0 %v7417
        %v7637 = vpop.f32.mrf.mxu0
        %v7638 = vadd.f32 0.0, %v7637
        %v7639 = vpop.f32.mrf.mxu0
        %v7640 = vpop.f32.mrf.mxu0
        %v7641 = vadd.f32 0.0, %v7640
        %v7642 = vpop.f32.mrf.mxu0
        %7643 = vdwg.mxu0
        %v7644 = vadd.f32 %v7338, %v7518
        %v7645 = vadd.f32 %v7339, %v7521
        %v7646 = vadd.f32 %v7340, %v7526
        %v7647 = vadd.f32 %v7341, %v7529
        %v7648 = vadd.f32 %v7342, %v7534
        %v7649 = vadd.f32 %v7343, %v7537
        %v7650 = vadd.f32 %v7344, %v7542
        %v7651 = vadd.f32 %v7345, %v7545
        %v7652 = vadd.f32 %v7346, %v7550
        %v7653 = vadd.f32 %v7347, %v7553
        %v7654 = vadd.f32 %v7348, %v7558
        %v7655 = vadd.f32 %v7349, %v7561
        %v7656 = vadd.f32 %v7350, %v7566
        %v7657 = vadd.f32 %v7351, %v7569
        %v7658 = vadd.f32 %v7352, %v7574
        %v7659 = vadd.f32 %v7353, %v7577
        %v7660 = vadd.f32 %v7354, %v7582
        %v7661 = vadd.f32 %v7355, %v7585
        %v7662 = vadd.f32 %v7356, %v7590
        %v7663 = vadd.f32 %v7357, %v7593
        %v7664 = vadd.f32 %v7358, %v7598
        %v7665 = vadd.f32 %v7359, %v7601
        %v7666 = vadd.f32 %v7360, %v7606
        %v7667 = vadd.f32 %v7361, %v7609
        %v7668 = vadd.f32 %v7362, %v7614
        %v7669 = vadd.f32 %v7363, %v7617
        %v7670 = vadd.f32 %v7364, %v7622
        %v7671 = vadd.f32 %v7365, %v7625
        %v7672 = vadd.f32 %v7366, %v7630
        %v7673 = vadd.f32 %v7367, %v7633
        %v7674 = vadd.f32 %v7368, %v7638
        %v7675 = vadd.f32 %v7369, %v7641
        %v7676 = vld [vmem:[%s7063 + $0x2] sm:$0xff]
        %v7677 = vld [vmem:[%s7063 + $0xa] sm:$0xff]
        %v7678 = vld [vmem:[%s7063 + $0x1a] sm:$0xff]
        %v7679 = vld [vmem:[%s7063 + $0x22] sm:$0xff]
        %v7680 = vld [vmem:[%s7063 + $0x32] sm:$0xff]
        %v7681 = vld [vmem:[%s7063 + $0x3a] sm:$0xff]
        %v7682 = vld [vmem:[%s7063 + $0x4a] sm:$0xff]
        %v7683 = vld [vmem:[%s7063 + $0x52] sm:$0xff]
        %v7684 = vld [vmem:[%s7063 + $0x62] sm:$0xff]
        %v7685 = vld [vmem:[%s7063 + $0x6a] sm:$0xff]
        %v7686 = vld [vmem:[%s7063 + $0x7a] sm:$0xff]
        %v7687 = vld [vmem:[%s7063 + $0x82] sm:$0xff]
        %v7688 = vld [vmem:[%s7063 + $0x92] sm:$0xff]
        %v7689 = vld [vmem:[%s7063 + $0x9a] sm:$0xff]
        %v7690 = vld [vmem:[%s7063 + $0xaa] sm:$0xff]
        %v7691 = vld [vmem:[%s7063 + $0xb2] sm:$0xff]
        %v7692 = vld [vmem:[%s7063 + $0xc2] sm:$0xff]
        %v7693 = vld [vmem:[%s7063 + $0xca] sm:$0xff]
        %v7694 = vld [vmem:[%s7063 + $0xda] sm:$0xff]
        %v7695 = vld [vmem:[%s7063 + $0xe2] sm:$0xff]
        %v7696 = vld [vmem:[%s7063 + $0xf2] sm:$0xff]
        %v7697 = vld [vmem:[%s7063 + $0xfa] sm:$0xff]
        %v7698 = vld [vmem:[%s7063 + $0x10a] sm:$0xff]
        %v7699 = vld [vmem:[%s7063 + $0x112] sm:$0xff]
        %v7700 = vld [vmem:[%s7063 + $0x122] sm:$0xff]
        %v7701 = vld [vmem:[%s7063 + $0x12a] sm:$0xff]
        %v7702 = vld [vmem:[%s7063 + $0x13a] sm:$0xff]
        %v7703 = vld [vmem:[%s7063 + $0x142] sm:$0xff]
        %v7704 = vld [vmem:[%s7063 + $0x152] sm:$0xff]
        %v7705 = vld [vmem:[%s7063 + $0x15a] sm:$0xff]
        %v7706 = vld [vmem:[%s7063 + $0x16a] sm:$0xff]
        %v7707 = vld [vmem:[%s7063 + $0x172] sm:$0xff]
        %v7708 = vpack.c.bf16 %v7677, %v7676
        %v7709 = vpack.c.bf16 %v7679, %v7678
        %v7710 = vpack.c.bf16 %v7681, %v7680
        %v7711 = vpack.c.bf16 %v7683, %v7682
        %v7712 = vpack.c.bf16 %v7685, %v7684
        %v7713 = vpack.c.bf16 %v7687, %v7686
        %v7714 = vpack.c.bf16 %v7689, %v7688
        %v7715 = vpack.c.bf16 %v7691, %v7690
        %v7716 = vpack.c.bf16 %v7693, %v7692
        %v7717 = vpack.c.bf16 %v7695, %v7694
        %v7718 = vpack.c.bf16 %v7697, %v7696
        %v7719 = vpack.c.bf16 %v7699, %v7698
        %v7720 = vpack.c.bf16 %v7701, %v7700
        %v7721 = vpack.c.bf16 %v7703, %v7702
        %v7722 = vpack.c.bf16 %v7705, %v7704
        %v7723 = vpack.c.bf16 %v7707, %v7706
        %s7724 = scalar_lea.vmem %s4, 512
        %v7725 = vld [vmem:[%s7724] sm:$0xf]
        %v7726 = vld [vmem:[%s7724 + $0x4] sm:$0xf]
        %v7727 = vld [vmem:[%s7724 + $0x8] sm:$0xf]
        %v7728 = vld [vmem:[%s7724 + $0xc] sm:$0xf]
        %v7729 = vld [vmem:[%s7724 + $0x10] sm:$0xf]
        %v7730 = vld [vmem:[%s7724 + $0x14] sm:$0xf]
        %v7731 = vld [vmem:[%s7724 + $0x18] sm:$0xf]
        %v7732 = vld [vmem:[%s7724 + $0x1c] sm:$0xf]
        %v7733 = vld [vmem:[%s7724 + $0x20] sm:$0xf]
        %v7734 = vld [vmem:[%s7724 + $0x24] sm:$0xf]
        %v7735 = vld [vmem:[%s7724 + $0x28] sm:$0xf]
        %v7736 = vld [vmem:[%s7724 + $0x2c] sm:$0xf]
        %v7737 = vld [vmem:[%s7724 + $0x30] sm:$0xf]
        %v7738 = vld [vmem:[%s7724 + $0x34] sm:$0xf]
        %v7739 = vld [vmem:[%s7724 + $0x38] sm:$0xf]
        %v7740 = vld [vmem:[%s7724 + $0x3c] sm:$0xf]
        %v7757 = vunpack.c.l.b16 %v7725
        %v7758 = vunpack.c.l.b16 %v7726
        %v7759 = vunpack.c.l.b16 %v7727
        %v7760 = vunpack.c.l.b16 %v7728
        %v7761 = vunpack.c.l.b16 %v7729
        %v7762 = vunpack.c.l.b16 %v7730
        %v7763 = vunpack.c.l.b16 %v7731
        %v7764 = vunpack.c.l.b16 %v7732
        %v7765 = vunpack.c.l.b16 %v7733
        %v7766 = vunpack.c.l.b16 %v7734
        %v7767 = vunpack.c.l.b16 %v7735
        %v7768 = vunpack.c.l.b16 %v7736
        %v7769 = vunpack.c.l.b16 %v7737
        %v7770 = vunpack.c.l.b16 %v7738
        %v7771 = vunpack.c.l.b16 %v7739
        %v7772 = vunpack.c.l.b16 %v7740
        %v7773 = vpack.c.b16 %v7758, %v7757
        %v7774 = vpack.c.b16 %v7760, %v7759
        %v7775 = vpack.c.b16 %v7762, %v7761
        %v7776 = vpack.c.b16 %v7764, %v7763
        %v7777 = vpack.c.b16 %v7766, %v7765
        %v7778 = vpack.c.b16 %v7768, %v7767
        %v7779 = vpack.c.b16 %v7770, %v7769
        %v7780 = vpack.c.b16 %v7772, %v7771
        %7789 = vmatprep.subr.bf16.mxu0 0
        %7790 = vmatpush1.bf16.msra.mxu0 %v7780
        %7791 = vmatprep.subr.bf16.mxu0 0
        %7792 = vmatpush1.bf16.msra.mxu0 %v7779
        %7793 = vmatprep.subr.bf16.mxu0 0
        %7794 = vmatpush1.bf16.msra.mxu0 %v7778
        %7795 = vmatprep.subr.bf16.mxu0 0
        %7796 = vmatpush1.bf16.msra.mxu0 %v7777
        %7797 = vmatprep.subr.bf16.mxu0 0
        %7798 = vmatpush1.bf16.msra.mxu0 %v7776
        %7799 = vmatprep.subr.bf16.mxu0 0
        %7800 = vmatpush1.bf16.msra.mxu0 %v7775
        %7801 = vmatprep.subr.bf16.mxu0 0
        %7802 = vmatpush1.bf16.msra.mxu0 %v7774
        %7803 = vmatprep.subr.bf16.mxu0 0
        %7804 = vmatpush1.bf16.msra.mxu0 %v7773
        %7805 = vmatprep.subr.bf16.mxu0 0
        %7806 = vmatpush2.bf16.msra.mxu0 0
        %7807 = vmatprep.subr.bf16.mxu0 0
        %7808 = vmatpush2.bf16.msra.mxu0 0
        %7809 = vmatprep.subr.bf16.mxu0 0
        %7810 = vmatpush2.bf16.msra.mxu0 0
        %7811 = vmatprep.subr.bf16.mxu0 0
        %7812 = vmatpush2.bf16.msra.mxu0 0
        %7813 = vmatprep.subr.bf16.mxu0 0
        %7814 = vmatpush2.bf16.msra.mxu0 0
        %7815 = vmatprep.subr.bf16.mxu0 0
        %7816 = vmatpush2.bf16.msra.mxu0 0
        %7817 = vmatprep.subr.bf16.mxu0 0
        %7818 = vmatpush2.bf16.msra.mxu0 0
        %7819 = vmatprep.subr.bf16.mxu0 0
        %7820 = vmatpush2.bf16.msra.mxu0 0
        %7821 = vmatprep.mubr.bf16.mxu0 0
        %7822 = vmatmul.mubr.bf16.gmra.mxu0 %v7708
        %v7823 = vpop.f32.mrf.mxu0
        %v7824 = vadd.f32 0.0, %v7823
        %v7825 = vpop.f32.mrf.mxu0
        %v7826 = vpop.f32.mrf.mxu0
        %v7827 = vadd.f32 0.0, %v7826
        %v7828 = vpop.f32.mrf.mxu0
        %7829 = vmatprep.mubr.bf16.mxu0 0
        %7830 = vmatmul.mubr.bf16.gmra.mxu0 %v7709
        %v7831 = vpop.f32.mrf.mxu0
        %v7832 = vadd.f32 0.0, %v7831
        %v7833 = vpop.f32.mrf.mxu0
        %v7834 = vpop.f32.mrf.mxu0
        %v7835 = vadd.f32 0.0, %v7834
        %v7836 = vpop.f32.mrf.mxu0
        %7837 = vmatprep.mubr.bf16.mxu0 0
        %7838 = vmatmul.mubr.bf16.gmra.mxu0 %v7710
        %v7839 = vpop.f32.mrf.mxu0
        %v7840 = vadd.f32 0.0, %v7839
        %v7841 = vpop.f32.mrf.mxu0
        %v7842 = vpop.f32.mrf.mxu0
        %v7843 = vadd.f32 0.0, %v7842
        %v7844 = vpop.f32.mrf.mxu0
        %7845 = vmatprep.mubr.bf16.mxu0 0
        %7846 = vmatmul.mubr.bf16.gmra.mxu0 %v7711
        %v7847 = vpop.f32.mrf.mxu0
        %v7848 = vadd.f32 0.0, %v7847
        %v7849 = vpop.f32.mrf.mxu0
        %v7850 = vpop.f32.mrf.mxu0
        %v7851 = vadd.f32 0.0, %v7850
        %v7852 = vpop.f32.mrf.mxu0
        %7853 = vmatprep.mubr.bf16.mxu0 0
        %7854 = vmatmul.mubr.bf16.gmra.mxu0 %v7712
        %v7855 = vpop.f32.mrf.mxu0
        %v7856 = vadd.f32 0.0, %v7855
        %v7857 = vpop.f32.mrf.mxu0
        %v7858 = vpop.f32.mrf.mxu0
        %v7859 = vadd.f32 0.0, %v7858
        %v7860 = vpop.f32.mrf.mxu0
        %7861 = vmatprep.mubr.bf16.mxu0 0
        %7862 = vmatmul.mubr.bf16.gmra.mxu0 %v7713
        %v7863 = vpop.f32.mrf.mxu0
        %v7864 = vadd.f32 0.0, %v7863
        %v7865 = vpop.f32.mrf.mxu0
        %v7866 = vpop.f32.mrf.mxu0
        %v7867 = vadd.f32 0.0, %v7866
        %v7868 = vpop.f32.mrf.mxu0
        %7869 = vmatprep.mubr.bf16.mxu0 0
        %7870 = vmatmul.mubr.bf16.gmra.mxu0 %v7714
        %v7871 = vpop.f32.mrf.mxu0
        %v7872 = vadd.f32 0.0, %v7871
        %v7873 = vpop.f32.mrf.mxu0
        %v7874 = vpop.f32.mrf.mxu0
        %v7875 = vadd.f32 0.0, %v7874
        %v7876 = vpop.f32.mrf.mxu0
        %7877 = vmatprep.mubr.bf16.mxu0 0
        %7878 = vmatmul.mubr.bf16.gmra.mxu0 %v7715
        %v7879 = vpop.f32.mrf.mxu0
        %v7880 = vadd.f32 0.0, %v7879
        %v7881 = vpop.f32.mrf.mxu0
        %v7882 = vpop.f32.mrf.mxu0
        %v7883 = vadd.f32 0.0, %v7882
        %v7884 = vpop.f32.mrf.mxu0
        %7885 = vmatprep.mubr.bf16.mxu0 0
        %7886 = vmatmul.mubr.bf16.gmra.mxu0 %v7716
        %v7887 = vpop.f32.mrf.mxu0
        %v7888 = vadd.f32 0.0, %v7887
        %v7889 = vpop.f32.mrf.mxu0
        %v7890 = vpop.f32.mrf.mxu0
        %v7891 = vadd.f32 0.0, %v7890
        %v7892 = vpop.f32.mrf.mxu0
        %7893 = vmatprep.mubr.bf16.mxu0 0
        %7894 = vmatmul.mubr.bf16.gmra.mxu0 %v7717
        %v7895 = vpop.f32.mrf.mxu0
        %v7896 = vadd.f32 0.0, %v7895
        %v7897 = vpop.f32.mrf.mxu0
        %v7898 = vpop.f32.mrf.mxu0
        %v7899 = vadd.f32 0.0, %v7898
        %v7900 = vpop.f32.mrf.mxu0
        %7901 = vmatprep.mubr.bf16.mxu0 0
        %7902 = vmatmul.mubr.bf16.gmra.mxu0 %v7718
        %v7903 = vpop.f32.mrf.mxu0
        %v7904 = vadd.f32 0.0, %v7903
        %v7905 = vpop.f32.mrf.mxu0
        %v7906 = vpop.f32.mrf.mxu0
        %v7907 = vadd.f32 0.0, %v7906
        %v7908 = vpop.f32.mrf.mxu0
        %7909 = vmatprep.mubr.bf16.mxu0 0
        %7910 = vmatmul.mubr.bf16.gmra.mxu0 %v7719
        %v7911 = vpop.f32.mrf.mxu0
        %v7912 = vadd.f32 0.0, %v7911
        %v7913 = vpop.f32.mrf.mxu0
        %v7914 = vpop.f32.mrf.mxu0
        %v7915 = vadd.f32 0.0, %v7914
        %v7916 = vpop.f32.mrf.mxu0
        %7917 = vmatprep.mubr.bf16.mxu0 0
        %7918 = vmatmul.mubr.bf16.gmra.mxu0 %v7720
        %v7919 = vpop.f32.mrf.mxu0
        %v7920 = vadd.f32 0.0, %v7919
        %v7921 = vpop.f32.mrf.mxu0
        %v7922 = vpop.f32.mrf.mxu0
        %v7923 = vadd.f32 0.0, %v7922
        %v7924 = vpop.f32.mrf.mxu0
        %7925 = vmatprep.mubr.bf16.mxu0 0
        %7926 = vmatmul.mubr.bf16.gmra.mxu0 %v7721
        %v7927 = vpop.f32.mrf.mxu0
        %v7928 = vadd.f32 0.0, %v7927
        %v7929 = vpop.f32.mrf.mxu0
        %v7930 = vpop.f32.mrf.mxu0
        %v7931 = vadd.f32 0.0, %v7930
        %v7932 = vpop.f32.mrf.mxu0
        %7933 = vmatprep.mubr.bf16.mxu0 0
        %7934 = vmatmul.mubr.bf16.gmra.mxu0 %v7722
        %v7935 = vpop.f32.mrf.mxu0
        %v7936 = vadd.f32 0.0, %v7935
        %v7937 = vpop.f32.mrf.mxu0
        %v7938 = vpop.f32.mrf.mxu0
        %v7939 = vadd.f32 0.0, %v7938
        %v7940 = vpop.f32.mrf.mxu0
        %7941 = vmatprep.mubr.bf16.mxu0 0
        %7942 = vmatmul.mubr.bf16.gmra.mxu0 %v7723
        %v7943 = vpop.f32.mrf.mxu0
        %v7944 = vadd.f32 0.0, %v7943
        %v7945 = vpop.f32.mrf.mxu0
        %v7946 = vpop.f32.mrf.mxu0
        %v7947 = vadd.f32 0.0, %v7946
        %v7948 = vpop.f32.mrf.mxu0
        %7949 = vdwg.mxu0
        %v7950 = vadd.f32 %v7644, %v7824
        %v7951 = vadd.f32 %v7645, %v7827
        %v7952 = vadd.f32 %v7646, %v7832
        %v7953 = vadd.f32 %v7647, %v7835
        %v7954 = vadd.f32 %v7648, %v7840
        %v7955 = vadd.f32 %v7649, %v7843
        %v7956 = vadd.f32 %v7650, %v7848
        %v7957 = vadd.f32 %v7651, %v7851
        %v7958 = vadd.f32 %v7652, %v7856
        %v7959 = vadd.f32 %v7653, %v7859
        %v7960 = vadd.f32 %v7654, %v7864
        %v7961 = vadd.f32 %v7655, %v7867
        %v7962 = vadd.f32 %v7656, %v7872
        %v7963 = vadd.f32 %v7657, %v7875
        %v7964 = vadd.f32 %v7658, %v7880
        %v7965 = vadd.f32 %v7659, %v7883
        %v7966 = vadd.f32 %v7660, %v7888
        %v7967 = vadd.f32 %v7661, %v7891
        %v7968 = vadd.f32 %v7662, %v7896
        %v7969 = vadd.f32 %v7663, %v7899
        %v7970 = vadd.f32 %v7664, %v7904
        %v7971 = vadd.f32 %v7665, %v7907
        %v7972 = vadd.f32 %v7666, %v7912
        %v7973 = vadd.f32 %v7667, %v7915
        %v7974 = vadd.f32 %v7668, %v7920
        %v7975 = vadd.f32 %v7669, %v7923
        %v7976 = vadd.f32 %v7670, %v7928
        %v7977 = vadd.f32 %v7671, %v7931
        %v7978 = vadd.f32 %v7672, %v7936
        %v7979 = vadd.f32 %v7673, %v7939
        %v7980 = vadd.f32 %v7674, %v7944
        %v7981 = vadd.f32 %v7675, %v7947
        %v7982 = vld [vmem:[%s5] sm:$0x1]
        %v7984 = vlaneseq
        %v7985 = vshrl.u32 %v7984, 7
        %v7986 = vsub.s32 0, %v7985
        %v7987 = vrot.slane %v7982, %v7986
        %v7989 = vadd.f32 %v7950, %v7987
        %v7990 = vadd.f32 %v7951, %v7987
        %v7991 = vadd.f32 %v7952, %v7987
        %v7992 = vadd.f32 %v7953, %v7987
        %v7993 = vadd.f32 %v7954, %v7987
        %v7994 = vadd.f32 %v7955, %v7987
        %v7995 = vadd.f32 %v7956, %v7987
        %v7996 = vadd.f32 %v7957, %v7987
        %v7997 = vadd.f32 %v7958, %v7987
        %v7998 = vadd.f32 %v7959, %v7987
        %v7999 = vadd.f32 %v7960, %v7987
        %v8000 = vadd.f32 %v7961, %v7987
        %v8001 = vadd.f32 %v7962, %v7987
        %v8002 = vadd.f32 %v7963, %v7987
        %v8003 = vadd.f32 %v7964, %v7987
        %v8004 = vadd.f32 %v7965, %v7987
        %v8005 = vadd.f32 %v7966, %v7987
        %v8006 = vadd.f32 %v7967, %v7987
        %v8007 = vadd.f32 %v7968, %v7987
        %v8008 = vadd.f32 %v7969, %v7987
        %v8009 = vadd.f32 %v7970, %v7987
        %v8010 = vadd.f32 %v7971, %v7987
        %v8011 = vadd.f32 %v7972, %v7987
        %v8012 = vadd.f32 %v7973, %v7987
        %v8013 = vadd.f32 %v7974, %v7987
        %v8014 = vadd.f32 %v7975, %v7987
        %v8015 = vadd.f32 %v7976, %v7987
        %v8016 = vadd.f32 %v7977, %v7987
        %v8017 = vadd.f32 %v7978, %v7987
        %v8018 = vadd.f32 %v7979, %v7987
        %v8019 = vadd.f32 %v7980, %v7987
        %v8020 = vadd.f32 %v7981, %v7987
        %v8021 = vld [vmem:[%s323] sm:$0xf]
        %v8022 = vld [vmem:[%s323 + $0x4] sm:$0xf]
        %v8023 = vld [vmem:[%s323 + $0x8] sm:$0xf]
        %v8024 = vld [vmem:[%s323 + $0xc] sm:$0xf]
        %v8025 = vld [vmem:[%s323 + $0x10] sm:$0xf]
        %v8026 = vld [vmem:[%s323 + $0x14] sm:$0xf]
        %v8027 = vld [vmem:[%s323 + $0x18] sm:$0xf]
        %v8028 = vld [vmem:[%s323 + $0x1c] sm:$0xf]
        %v8029 = vld [vmem:[%s323 + $0x20] sm:$0xf]
        %v8030 = vld [vmem:[%s323 + $0x24] sm:$0xf]
        %v8031 = vld [vmem:[%s323 + $0x28] sm:$0xf]
        %v8032 = vld [vmem:[%s323 + $0x2c] sm:$0xf]
        %v8033 = vld [vmem:[%s323 + $0x30] sm:$0xf]
        %v8034 = vld [vmem:[%s323 + $0x34] sm:$0xf]
        %v8035 = vld [vmem:[%s323 + $0x38] sm:$0xf]
        %v8036 = vld [vmem:[%s323 + $0x3c] sm:$0xf]
        %v8037 = vld [vmem:[%s323 + $0x40] sm:$0xf]
        %v8038 = vld [vmem:[%s323 + $0x44] sm:$0xf]
        %v8039 = vld [vmem:[%s323 + $0x48] sm:$0xf]
        %v8040 = vld [vmem:[%s323 + $0x4c] sm:$0xf]
        %v8041 = vld [vmem:[%s323 + $0x50] sm:$0xf]
        %v8042 = vld [vmem:[%s323 + $0x54] sm:$0xf]
        %v8043 = vld [vmem:[%s323 + $0x58] sm:$0xf]
        %v8044 = vld [vmem:[%s323 + $0x5c] sm:$0xf]
        %v8045 = vld [vmem:[%s323 + $0x60] sm:$0xf]
        %v8046 = vld [vmem:[%s323 + $0x64] sm:$0xf]
        %v8047 = vld [vmem:[%s323 + $0x68] sm:$0xf]
        %v8048 = vld [vmem:[%s323 + $0x6c] sm:$0xf]
        %v8049 = vld [vmem:[%s323 + $0x70] sm:$0xf]
        %v8050 = vld [vmem:[%s323 + $0x74] sm:$0xf]
        %v8051 = vld [vmem:[%s323 + $0x78] sm:$0xf]
        %v8052 = vld [vmem:[%s323 + $0x7c] sm:$0xf]
        %v8053 = vld [vmem:[%s6] sm:$0xf]
        %v8054 = vld [vmem:[%s6 + $0x4] sm:$0xf]
        %v8055 = vld [vmem:[%s6 + $0x8] sm:$0xf]
        %v8056 = vld [vmem:[%s6 + $0xc] sm:$0xf]
        %v8057 = vld [vmem:[%s6 + $0x10] sm:$0xf]
        %v8058 = vld [vmem:[%s6 + $0x14] sm:$0xf]
        %v8059 = vld [vmem:[%s6 + $0x18] sm:$0xf]
        %v8060 = vld [vmem:[%s6 + $0x1c] sm:$0xf]
        %v8061 = vld [vmem:[%s6 + $0x20] sm:$0xf]
        %v8062 = vld [vmem:[%s6 + $0x24] sm:$0xf]
        %v8063 = vld [vmem:[%s6 + $0x28] sm:$0xf]
        %v8064 = vld [vmem:[%s6 + $0x2c] sm:$0xf]
        %v8065 = vld [vmem:[%s6 + $0x30] sm:$0xf]
        %v8066 = vld [vmem:[%s6 + $0x34] sm:$0xf]
        %v8067 = vld [vmem:[%s6 + $0x38] sm:$0xf]
        %v8068 = vld [vmem:[%s6 + $0x3c] sm:$0xf]
        %v8069 = vld [vmem:[%s7] sm:$0x1]
        %v8071 = vlaneseq
        %v8072 = vshrl.u32 %v8071, 7
        %v8073 = vsub.s32 0, %v8072
        %v8074 = vrot.slane %v8069, %v8073
        %v8108 = vunpack.c.l.b16 %v8021
        %v8109 = vunpack.c.l.b16 %v8022
        %v8110 = vunpack.c.l.b16 %v8023
        %v8111 = vunpack.c.l.b16 %v8024
        %v8112 = vunpack.c.l.b16 %v8025
        %v8113 = vunpack.c.l.b16 %v8026
        %v8114 = vunpack.c.l.b16 %v8027
        %v8115 = vunpack.c.l.b16 %v8028
        %v8116 = vunpack.c.l.b16 %v8029
        %v8117 = vunpack.c.l.b16 %v8030
        %v8118 = vunpack.c.l.b16 %v8031
        %v8119 = vunpack.c.l.b16 %v8032
        %v8120 = vunpack.c.l.b16 %v8033
        %v8121 = vunpack.c.l.b16 %v8034
        %v8122 = vunpack.c.l.b16 %v8035
        %v8123 = vunpack.c.l.b16 %v8036
        %v8124 = vunpack.c.l.b16 %v8037
        %v8125 = vunpack.c.l.b16 %v8038
        %v8126 = vunpack.c.l.b16 %v8039
        %v8127 = vunpack.c.l.b16 %v8040
        %v8128 = vunpack.c.l.b16 %v8041
        %v8129 = vunpack.c.l.b16 %v8042
        %v8130 = vunpack.c.l.b16 %v8043
        %v8131 = vunpack.c.l.b16 %v8044
        %v8132 = vunpack.c.l.b16 %v8045
        %v8133 = vunpack.c.l.b16 %v8046
        %v8134 = vunpack.c.l.b16 %v8047
        %v8135 = vunpack.c.l.b16 %v8048
        %v8136 = vunpack.c.l.b16 %v8049
        %v8137 = vunpack.c.l.b16 %v8050
        %v8138 = vunpack.c.l.b16 %v8051
        %v8139 = vunpack.c.l.b16 %v8052
        %v8140 = vpack.c.b16 %v8109, %v8108
        %v8141 = vpack.c.b16 %v8111, %v8110
        %v8142 = vpack.c.b16 %v8113, %v8112
        %v8143 = vpack.c.b16 %v8115, %v8114
        %v8144 = vpack.c.b16 %v8117, %v8116
        %v8145 = vpack.c.b16 %v8119, %v8118
        %v8146 = vpack.c.b16 %v8121, %v8120
        %v8147 = vpack.c.b16 %v8123, %v8122
        %v8148 = vpack.c.b16 %v8125, %v8124
        %v8149 = vpack.c.b16 %v8127, %v8126
        %v8150 = vpack.c.b16 %v8129, %v8128
        %v8151 = vpack.c.b16 %v8131, %v8130
        %v8152 = vpack.c.b16 %v8133, %v8132
        %v8153 = vpack.c.b16 %v8135, %v8134
        %v8154 = vpack.c.b16 %v8137, %v8136
        %v8155 = vpack.c.b16 %v8139, %v8138
        %v8188 = vunpack.c.l.b16 %v8053
        %v8189 = vunpack.c.l.b16 %v8054
        %v8190 = vunpack.c.l.b16 %v8055
        %v8191 = vunpack.c.l.b16 %v8056
        %v8192 = vunpack.c.l.b16 %v8057
        %v8193 = vunpack.c.l.b16 %v8058
        %v8194 = vunpack.c.l.b16 %v8059
        %v8195 = vunpack.c.l.b16 %v8060
        %v8196 = vunpack.c.l.b16 %v8061
        %v8197 = vunpack.c.l.b16 %v8062
        %v8198 = vunpack.c.l.b16 %v8063
        %v8199 = vunpack.c.l.b16 %v8064
        %v8200 = vunpack.c.l.b16 %v8065
        %v8201 = vunpack.c.l.b16 %v8066
        %v8202 = vunpack.c.l.b16 %v8067
        %v8203 = vunpack.c.l.b16 %v8068
        %v8204 = vpack.c.b16 %v8189, %v8188
        %v8205 = vpack.c.b16 %v8191, %v8190
        %v8206 = vpack.c.b16 %v8193, %v8192
        %v8207 = vpack.c.b16 %v8195, %v8194
        %v8208 = vpack.c.b16 %v8197, %v8196
        %v8209 = vpack.c.b16 %v8199, %v8198
        %v8210 = vpack.c.b16 %v8201, %v8200
        %v8211 = vpack.c.b16 %v8203, %v8202
        %8220 = vmatprep.subr.bf16.mxu0 0
        %8221 = vmatpush1.bf16.msra.mxu0 %v8211
        %8222 = vmatprep.subr.bf16.mxu0 0
        %8223 = vmatpush1.bf16.msra.mxu0 %v8210
        %8224 = vmatprep.subr.bf16.mxu0 0
        %8225 = vmatpush1.bf16.msra.mxu0 %v8209
        %8226 = vmatprep.subr.bf16.mxu0 0
        %8227 = vmatpush1.bf16.msra.mxu0 %v8208
        %8228 = vmatprep.subr.bf16.mxu0 0
        %8229 = vmatpush1.bf16.msra.mxu0 %v8207
        %8230 = vmatprep.subr.bf16.mxu0 0
        %8231 = vmatpush1.bf16.msra.mxu0 %v8206
        %8232 = vmatprep.subr.bf16.mxu0 0
        %8233 = vmatpush1.bf16.msra.mxu0 %v8205
        %8234 = vmatprep.subr.bf16.mxu0 0
        %8235 = vmatpush1.bf16.msra.mxu0 %v8204
        %8236 = vmatprep.subr.bf16.mxu0 0
        %8237 = vmatpush2.bf16.msra.mxu0 0
        %8238 = vmatprep.subr.bf16.mxu0 0
        %8239 = vmatpush2.bf16.msra.mxu0 0
        %8240 = vmatprep.subr.bf16.mxu0 0
        %8241 = vmatpush2.bf16.msra.mxu0 0
        %8242 = vmatprep.subr.bf16.mxu0 0
        %8243 = vmatpush2.bf16.msra.mxu0 0
        %8244 = vmatprep.subr.bf16.mxu0 0
        %8245 = vmatpush2.bf16.msra.mxu0 0
        %8246 = vmatprep.subr.bf16.mxu0 0
        %8247 = vmatpush2.bf16.msra.mxu0 0
        %8248 = vmatprep.subr.bf16.mxu0 0
        %8249 = vmatpush2.bf16.msra.mxu0 0
        %8250 = vmatprep.subr.bf16.mxu0 0
        %8251 = vmatpush2.bf16.msra.mxu0 0
        %8252 = vmatprep.mubr.bf16.mxu0 0
        %8253 = vmatmul.mubr.bf16.gmra.mxu0 %v8140
        %v8254 = vpop.f32.mrf.mxu0
        %v8255 = vadd.f32 %v8074, %v8254
        %v8256 = vpop.f32.mrf.mxu0
        %v8257 = vpop.f32.mrf.mxu0
        %v8258 = vadd.f32 %v8074, %v8257
        %v8259 = vpop.f32.mrf.mxu0
        %8260 = vmatprep.mubr.bf16.mxu0 0
        %8261 = vmatmul.mubr.bf16.gmra.mxu0 %v8141
        %v8262 = vpop.f32.mrf.mxu0
        %v8263 = vadd.f32 %v8074, %v8262
        %v8264 = vpop.f32.mrf.mxu0
        %v8265 = vpop.f32.mrf.mxu0
        %v8266 = vadd.f32 %v8074, %v8265
        %v8267 = vpop.f32.mrf.mxu0
        %8268 = vmatprep.mubr.bf16.mxu0 0
        %8269 = vmatmul.mubr.bf16.gmra.mxu0 %v8142
        %v8270 = vpop.f32.mrf.mxu0
        %v8271 = vadd.f32 %v8074, %v8270
        %v8272 = vpop.f32.mrf.mxu0
        %v8273 = vpop.f32.mrf.mxu0
        %v8274 = vadd.f32 %v8074, %v8273
        %v8275 = vpop.f32.mrf.mxu0
        %8276 = vmatprep.mubr.bf16.mxu0 0
        %8277 = vmatmul.mubr.bf16.gmra.mxu0 %v8143
        %v8278 = vpop.f32.mrf.mxu0
        %v8279 = vadd.f32 %v8074, %v8278
        %v8280 = vpop.f32.mrf.mxu0
        %v8281 = vpop.f32.mrf.mxu0
        %v8282 = vadd.f32 %v8074, %v8281
        %v8283 = vpop.f32.mrf.mxu0
        %8284 = vmatprep.mubr.bf16.mxu0 0
        %8285 = vmatmul.mubr.bf16.gmra.mxu0 %v8144
        %v8286 = vpop.f32.mrf.mxu0
        %v8287 = vadd.f32 %v8074, %v8286
        %v8288 = vpop.f32.mrf.mxu0
        %v8289 = vpop.f32.mrf.mxu0
        %v8290 = vadd.f32 %v8074, %v8289
        %v8291 = vpop.f32.mrf.mxu0
        %8292 = vmatprep.mubr.bf16.mxu0 0
        %8293 = vmatmul.mubr.bf16.gmra.mxu0 %v8145
        %v8294 = vpop.f32.mrf.mxu0
        %v8295 = vadd.f32 %v8074, %v8294
        %v8296 = vpop.f32.mrf.mxu0
        %v8297 = vpop.f32.mrf.mxu0
        %v8298 = vadd.f32 %v8074, %v8297
        %v8299 = vpop.f32.mrf.mxu0
        %8300 = vmatprep.mubr.bf16.mxu0 0
        %8301 = vmatmul.mubr.bf16.gmra.mxu0 %v8146
        %v8302 = vpop.f32.mrf.mxu0
        %v8303 = vadd.f32 %v8074, %v8302
        %v8304 = vpop.f32.mrf.mxu0
        %v8305 = vpop.f32.mrf.mxu0
        %v8306 = vadd.f32 %v8074, %v8305
        %v8307 = vpop.f32.mrf.mxu0
        %8308 = vmatprep.mubr.bf16.mxu0 0
        %8309 = vmatmul.mubr.bf16.gmra.mxu0 %v8147
        %v8310 = vpop.f32.mrf.mxu0
        %v8311 = vadd.f32 %v8074, %v8310
        %v8312 = vpop.f32.mrf.mxu0
        %v8313 = vpop.f32.mrf.mxu0
        %v8314 = vadd.f32 %v8074, %v8313
        %v8315 = vpop.f32.mrf.mxu0
        %8316 = vmatprep.mubr.bf16.mxu0 0
        %8317 = vmatmul.mubr.bf16.gmra.mxu0 %v8148
        %v8318 = vpop.f32.mrf.mxu0
        %v8319 = vadd.f32 %v8074, %v8318
        %v8320 = vpop.f32.mrf.mxu0
        %v8321 = vpop.f32.mrf.mxu0
        %v8322 = vadd.f32 %v8074, %v8321
        %v8323 = vpop.f32.mrf.mxu0
        %8324 = vmatprep.mubr.bf16.mxu0 0
        %8325 = vmatmul.mubr.bf16.gmra.mxu0 %v8149
        %v8326 = vpop.f32.mrf.mxu0
        %v8327 = vadd.f32 %v8074, %v8326
        %v8328 = vpop.f32.mrf.mxu0
        %v8329 = vpop.f32.mrf.mxu0
        %v8330 = vadd.f32 %v8074, %v8329
        %v8331 = vpop.f32.mrf.mxu0
        %8332 = vmatprep.mubr.bf16.mxu0 0
        %8333 = vmatmul.mubr.bf16.gmra.mxu0 %v8150
        %v8334 = vpop.f32.mrf.mxu0
        %v8335 = vadd.f32 %v8074, %v8334
        %v8336 = vpop.f32.mrf.mxu0
        %v8337 = vpop.f32.mrf.mxu0
        %v8338 = vadd.f32 %v8074, %v8337
        %v8339 = vpop.f32.mrf.mxu0
        %8340 = vmatprep.mubr.bf16.mxu0 0
        %8341 = vmatmul.mubr.bf16.gmra.mxu0 %v8151
        %v8342 = vpop.f32.mrf.mxu0
        %v8343 = vadd.f32 %v8074, %v8342
        %v8344 = vpop.f32.mrf.mxu0
        %v8345 = vpop.f32.mrf.mxu0
        %v8346 = vadd.f32 %v8074, %v8345
        %v8347 = vpop.f32.mrf.mxu0
        %8348 = vmatprep.mubr.bf16.mxu0 0
        %8349 = vmatmul.mubr.bf16.gmra.mxu0 %v8152
        %v8350 = vpop.f32.mrf.mxu0
        %v8351 = vadd.f32 %v8074, %v8350
        %v8352 = vpop.f32.mrf.mxu0
        %v8353 = vpop.f32.mrf.mxu0
        %v8354 = vadd.f32 %v8074, %v8353
        %v8355 = vpop.f32.mrf.mxu0
        %8356 = vmatprep.mubr.bf16.mxu0 0
        %8357 = vmatmul.mubr.bf16.gmra.mxu0 %v8153
        %v8358 = vpop.f32.mrf.mxu0
        %v8359 = vadd.f32 %v8074, %v8358
        %v8360 = vpop.f32.mrf.mxu0
        %v8361 = vpop.f32.mrf.mxu0
        %v8362 = vadd.f32 %v8074, %v8361
        %v8363 = vpop.f32.mrf.mxu0
        %8364 = vmatprep.mubr.bf16.mxu0 0
        %8365 = vmatmul.mubr.bf16.gmra.mxu0 %v8154
        %v8366 = vpop.f32.mrf.mxu0
        %v8367 = vadd.f32 %v8074, %v8366
        %v8368 = vpop.f32.mrf.mxu0
        %v8369 = vpop.f32.mrf.mxu0
        %v8370 = vadd.f32 %v8074, %v8369
        %v8371 = vpop.f32.mrf.mxu0
        %8372 = vmatprep.mubr.bf16.mxu0 0
        %8373 = vmatmul.mubr.bf16.gmra.mxu0 %v8155
        %v8374 = vpop.f32.mrf.mxu0
        %v8375 = vadd.f32 %v8074, %v8374
        %v8376 = vpop.f32.mrf.mxu0
        %v8377 = vpop.f32.mrf.mxu0
        %v8378 = vadd.f32 %v8074, %v8377
        %v8379 = vpop.f32.mrf.mxu0
        %8380 = vdwg.mxu0
        %v8381 = vadd.f32 %v7989, %v8255
        %v8382 = vadd.f32 %v7990, %v8258
        %v8383 = vadd.f32 %v7991, %v8263
        %v8384 = vadd.f32 %v7992, %v8266
        %v8385 = vadd.f32 %v7993, %v8271
        %v8386 = vadd.f32 %v7994, %v8274
        %v8387 = vadd.f32 %v7995, %v8279
        %v8388 = vadd.f32 %v7996, %v8282
        %v8389 = vadd.f32 %v7997, %v8287
        %v8390 = vadd.f32 %v7998, %v8290
        %v8391 = vadd.f32 %v7999, %v8295
        %v8392 = vadd.f32 %v8000, %v8298
        %v8393 = vadd.f32 %v8001, %v8303
        %v8394 = vadd.f32 %v8002, %v8306
        %v8395 = vadd.f32 %v8003, %v8311
        %v8396 = vadd.f32 %v8004, %v8314
        %v8397 = vadd.f32 %v8005, %v8319
        %v8398 = vadd.f32 %v8006, %v8322
        %v8399 = vadd.f32 %v8007, %v8327
        %v8400 = vadd.f32 %v8008, %v8330
        %v8401 = vadd.f32 %v8009, %v8335
        %v8402 = vadd.f32 %v8010, %v8338
        %v8403 = vadd.f32 %v8011, %v8343
        %v8404 = vadd.f32 %v8012, %v8346
        %v8405 = vadd.f32 %v8013, %v8351
        %v8406 = vadd.f32 %v8014, %v8354
        %v8407 = vadd.f32 %v8015, %v8359
        %v8408 = vadd.f32 %v8016, %v8362
        %v8409 = vadd.f32 %v8017, %v8367
        %v8410 = vadd.f32 %v8018, %v8370
        %v8411 = vadd.f32 %v8019, %v8375
        %v8412 = vadd.f32 %v8020, %v8378
        %v8413 = vmax.f32 %v8381, 0.0
        %v8414 = vmax.f32 %v8382, 0.0
        %v8415 = vmax.f32 %v8383, 0.0
        %v8416 = vmax.f32 %v8384, 0.0
        %v8417 = vmax.f32 %v8385, 0.0
        %v8418 = vmax.f32 %v8386, 0.0
        %v8419 = vmax.f32 %v8387, 0.0
        %v8420 = vmax.f32 %v8388, 0.0
        %v8421 = vmax.f32 %v8389, 0.0
        %v8422 = vmax.f32 %v8390, 0.0
        %v8423 = vmax.f32 %v8391, 0.0
        %v8424 = vmax.f32 %v8392, 0.0
        %v8425 = vmax.f32 %v8393, 0.0
        %v8426 = vmax.f32 %v8394, 0.0
        %v8427 = vmax.f32 %v8395, 0.0
        %v8428 = vmax.f32 %v8396, 0.0
        %v8429 = vmax.f32 %v8397, 0.0
        %v8430 = vmax.f32 %v8398, 0.0
        %v8431 = vmax.f32 %v8399, 0.0
        %v8432 = vmax.f32 %v8400, 0.0
        %v8433 = vmax.f32 %v8401, 0.0
        %v8434 = vmax.f32 %v8402, 0.0
        %v8435 = vmax.f32 %v8403, 0.0
        %v8436 = vmax.f32 %v8404, 0.0
        %v8437 = vmax.f32 %v8405, 0.0
        %v8438 = vmax.f32 %v8406, 0.0
        %v8439 = vmax.f32 %v8407, 0.0
        %v8440 = vmax.f32 %v8408, 0.0
        %v8441 = vmax.f32 %v8409, 0.0
        %v8442 = vmax.f32 %v8410, 0.0
        %v8443 = vmax.f32 %v8411, 0.0
        %v8444 = vmax.f32 %v8412, 0.0
        %8445 = vst [vmem:[%s313] sm:$0xff] %v8413
        %8446 = vst [vmem:[%s313 + $0x8] sm:$0xff] %v8414
        %8447 = vst [vmem:[%s313 + $0x10] sm:$0xff] %v8415
        %8448 = vst [vmem:[%s313 + $0x18] sm:$0xff] %v8416
        %8449 = vst [vmem:[%s313 + $0x20] sm:$0xff] %v8417
        %8450 = vst [vmem:[%s313 + $0x28] sm:$0xff] %v8418
        %8451 = vst [vmem:[%s313 + $0x30] sm:$0xff] %v8419
        %8452 = vst [vmem:[%s313 + $0x38] sm:$0xff] %v8420
        %8453 = vst [vmem:[%s313 + $0x40] sm:$0xff] %v8421
        %8454 = vst [vmem:[%s313 + $0x48] sm:$0xff] %v8422
        %8455 = vst [vmem:[%s313 + $0x50] sm:$0xff] %v8423
        %8456 = vst [vmem:[%s313 + $0x58] sm:$0xff] %v8424
        %8457 = vst [vmem:[%s313 + $0x60] sm:$0xff] %v8425
        %8458 = vst [vmem:[%s313 + $0x68] sm:$0xff] %v8426
        %8459 = vst [vmem:[%s313 + $0x70] sm:$0xff] %v8427
        %8460 = vst [vmem:[%s313 + $0x78] sm:$0xff] %v8428
        %8461 = vst [vmem:[%s313 + $0x80] sm:$0xff] %v8429
        %8462 = vst [vmem:[%s313 + $0x88] sm:$0xff] %v8430
        %8463 = vst [vmem:[%s313 + $0x90] sm:$0xff] %v8431
        %8464 = vst [vmem:[%s313 + $0x98] sm:$0xff] %v8432
        %8465 = vst [vmem:[%s313 + $0xa0] sm:$0xff] %v8433
        %8466 = vst [vmem:[%s313 + $0xa8] sm:$0xff] %v8434
        %8467 = vst [vmem:[%s313 + $0xb0] sm:$0xff] %v8435
        %8468 = vst [vmem:[%s313 + $0xb8] sm:$0xff] %v8436
        %8469 = vst [vmem:[%s313 + $0xc0] sm:$0xff] %v8437
        %8470 = vst [vmem:[%s313 + $0xc8] sm:$0xff] %v8438
        %8471 = vst [vmem:[%s313 + $0xd0] sm:$0xff] %v8439
        %8472 = vst [vmem:[%s313 + $0xd8] sm:$0xff] %v8440
        %8473 = vst [vmem:[%s313 + $0xe0] sm:$0xff] %v8441
        %8474 = vst [vmem:[%s313 + $0xe8] sm:$0xff] %v8442
        %8475 = vst [vmem:[%s313 + $0xf0] sm:$0xff] %v8443
        %8476 = vst [vmem:[%s313 + $0xf8] sm:$0xff] %v8444
        %s8477 = sand.u32 %s208, 1
        %s8478 = scalar_lea.sflag [#allocation4], %s8477
        %s8479 = sand.u32 %s208, 1
        %s8480 = smul.addr %s8479, 256
        %s8481 = scalar_lea.vmem [#allocation3], %s8480
        // Predicated region
        $region53: #{basic_block_forward_nhwc.1} parent=51 // pred_check
          %p8482 = pneg %p218
        $region54: #{basic_block_forward_nhwc.1} parent=51 // pred_check_branch
          %8484 = sbr.rel (%p8482) target = $region56
        $region55: #{basic_block_forward_nhwc.1} parent=51 // pred_region
          %s8486 = ssub.s32 4096, 4096
          %8487 = vsyncadd %s8478, %s8486
          %s8488 = smul.addr %s22, 32
          %s8489 = smul.addr %s8488, 128
          %s8490 = scalar_lea.hbm %s8, %s8489
          %s8491 = sshll.u32 %s8481, 4
          %s8492 = int_to_ptr.vmem [resolvable:$true] %s8491
          %8497 = dma.vmem_to_hbm [thread:$0]  %s8492, 4096, %s8490, %s8478, 128, 128, 8
        $region56: #{basic_block_forward_nhwc.1} parent=51 // pred_fallthru
          _
      $region52: #{basic_block_forward_nhwc.1} parent=5 // pred_fallthru
        _
      %p8498 = scmp.le.s32.totalorder 2, %s17
      // Predicated region
      $region57: #{basic_block_forward_nhwc.1} parent=5 // pred_check
        %p8499 = pneg %p8498
      $region58: #{basic_block_forward_nhwc.1} parent=5 // pred_check_branch
        %8501 = sbr.rel (%p8499) target = $region60
      $region59: #{basic_block_forward_nhwc.1} parent=5 // pred_region
        %s8502 = ssub.s32 %s17, 2
        // Predicated region
        $region61: #{basic_block_forward_nhwc.1} parent=59 // pred_check
          %p8503 = pneg %p224
        $region62: #{basic_block_forward_nhwc.1} parent=59 // pred_check_branch
          %8505 = sbr.rel (%p8503) target = $region64
        $region63: #{basic_block_forward_nhwc.1} parent=59 // pred_region
          %s8506 = sand.u32 %s209, 1
          %s8507 = scalar_lea.sflag [#allocation4], %s8506
          %s8508 = sand.u32 %s209, 1
          %s8509 = smul.addr %s8508, 256
          %s8510 = scalar_lea.vmem [#allocation3], %s8509
          %8511 = dma.done %s8507, 4096
        $region64: #{basic_block_forward_nhwc.1} parent=59 // pred_fallthru
          _
      $region60: #{basic_block_forward_nhwc.1} parent=5 // pred_fallthru
        _
    $region6: #{basic_block_forward_nhwc.1} parent=1 // loop_footer
      %s21 = sadd.s32 1, %s17
    $region7: #{basic_block_forward_nhwc.1} parent=1 // loop_footer_branch
      %16 = sbr.rel target = $region3
    $region8: #{basic_block_forward_nhwc.1} parent=1 // loop_exit
      _
    %8512 = vsyncpa [#allocation4], 1
    %s8513 = scalar_lea.sflag [#allocation4], 1
    %8514 = vsyncpa %s8513, 1

</llo_original>
